<compile_context>
chip_gen: v7x
topology: tpu7x:2x2x1
jax: 0.10.0
libtpu: 0.0.40
codegen_flags: <defaults>
</compile_context>

<pallas_src>
import functools

import jax
import jax.numpy as jnp
from jax.experimental import pallas as pl
from jax.experimental.pallas import tpu as pltpu

D = 8            # number of hidden Linear+ReLU layers
W = 256          # hidden width
INPUT_CH = 6
OUTPUT_CH = 1
OUT_LANES = 128  # lane-padded width of the output weight (MXU-friendly)
TM = 1024        # rows per grid step (sweep 1024-2048 on v6e/v7x)


def _mlp_kernel(x_ref, w0_ref, b0_ref, wh_ref, bh_ref, wo_ref, bo_ref, o_ref,
                *, depth):
    # Layer 0: (TM, 6) @ (6, W).  bf16 operands, f32 accumulation.
    acc = jnp.dot(x_ref[...].astype(jnp.bfloat16), w0_ref[...],
                  preferred_element_type=jnp.float32)
    # bf16 epilogue: bias-add + ReLU in bf16 (next layer's LHS is already bf16).
    h = jnp.maximum(acc.astype(jnp.bfloat16) + b0_ref[...], 0)

    # Hidden layers 1..D-1: bf16 x bf16 MXU matmuls, f32 accumulation.
    for i in range(depth - 1):
        acc = jnp.dot(h, wh_ref[i], preferred_element_type=jnp.float32)
        h = jnp.maximum(acc.astype(jnp.bfloat16) + bh_ref[i], 0)

    # Output layer: full-width MXU matmul against the 128-lane padded weight,
    # keep only the real column, add the f32 bias, store a compact (TM, 1).
    out_full = jnp.dot(h, wo_ref[...], preferred_element_type=jnp.float32)
    o_ref[...] = (out_full[:, :OUTPUT_CH] + bo_ref[...]).astype(o_ref.dtype)


def depth_pred_pallas(x_flat, params, *, tm=TM):
    """x_flat: (M, INPUT_CH) float32.  Returns (M, OUTPUT_CH) float32."""
    w0, b0, wh, bh, wo, bo = params
    M = x_flat.shape[0]

    # Pre-cast all weights/biases to bf16 once in the wrapper (tiny arrays).
    w0_bf = w0.astype(jnp.bfloat16)
    b0_bf = b0.astype(jnp.bfloat16)
    wh_bf = wh.astype(jnp.bfloat16)
    bh_bf = bh.astype(jnp.bfloat16)
    # Output weight zero-padded to 128 lanes for a full-width MXU tile.
    wo_p = jnp.zeros((W, OUT_LANES), jnp.float32).at[:, :OUTPUT_CH].set(wo)
    wo_bf = wo_p.astype(jnp.bfloat16)
    bo_f32 = bo.reshape(1, OUTPUT_CH).astype(jnp.float32)   # (1, 1) f32

    # Pad rows to a multiple of tm (single-TC v5e/v6e need no even grid; on
    # v7x one may round the grid length up to even for megacore balance).
    m_pad = pl.cdiv(M, tm) * tm
    x_pad = x_flat if m_pad == M else jnp.pad(x_flat, ((0, m_pad - M), (0, 0)))
    grid = (m_pad // tm,)

    flops = 2 * m_pad * (INPUT_CH * W + (D - 1) * W * W + W * OUT_LANES)
    bytes_accessed = (
        m_pad * INPUT_CH * 4                       # x (f32)
        + (INPUT_CH * W + W) * 2                   # w0, b0 (bf16)
        + (D - 1) * (W * W + W) * 2                # wh, bh (bf16)
        + W * OUT_LANES * 2 + OUTPUT_CH * 4        # wo (bf16), bo (f32)
        + m_pad * OUTPUT_CH * 4)                   # compact output (f32)

    out = pl.pallas_call(
        functools.partial(_mlp_kernel, depth=D),
        out_shape=jax.ShapeDtypeStruct((m_pad, OUTPUT_CH), jnp.float32),
        grid_spec=pltpu.PrefetchScalarGridSpec(
            num_scalar_prefetch=0,
            grid=grid,
            in_specs=[
                pl.BlockSpec((tm, INPUT_CH), lambda i: (i, 0)),       # x tile
                pl.BlockSpec((INPUT_CH, W), lambda i: (0, 0)),        # w0
                pl.BlockSpec((1, W), lambda i: (0, 0)),               # b0
                pl.BlockSpec((D - 1, W, W), lambda i: (0, 0, 0)),     # wh stack
                pl.BlockSpec((D - 1, 1, W), lambda i: (0, 0, 0)),     # bh stack
                pl.BlockSpec((W, OUT_LANES), lambda i: (0, 0)),       # wo (pad)
                pl.BlockSpec((1, OUTPUT_CH), lambda i: (0, 0)),       # bo
            ],
            out_specs=pl.BlockSpec((tm, OUTPUT_CH), lambda i: (i, 0)),
        ),
        compiler_params=pltpu.CompilerParams(
            dimension_semantics=("parallel",),
            vmem_limit_bytes=32 * 1024 * 1024,
        ),
        cost_estimate=pl.CostEstimate(
            flops=flops, transcendentals=0, bytes_accessed=bytes_accessed),
    )(x_pad, w0_bf, b0_bf, wh_bf, bh_bf, wo_bf, bo_f32)

    return out[:M]


def init_params(key):
    """Deterministic init mimicking PyTorch nn.Linear default U[-1/sqrt(fan_in), +)."""
    ks = jax.random.split(key, 2 * (D + 1))

    def linear(kw, kb, fan_in, fan_out):
        bound = 1.0 / jnp.sqrt(fan_in)
        w = jax.random.uniform(kw, (fan_in, fan_out), jnp.float32, -bound, bound)
        b = jax.random.uniform(kb, (1, fan_out), jnp.float32, -bound, bound)
        return w, b

    w0, b0 = linear(ks[0], ks[1], INPUT_CH, W)
    whs, bhs = [], []
    for l in range(D - 1):
        w, b = linear(ks[2 + 2 * l], ks[3 + 2 * l], W, W)
        whs.append(w)
        bhs.append(b)
    wh = jnp.stack(whs, axis=0)              # (D-1, W, W)
    bh = jnp.stack(bhs, axis=0)              # (D-1, 1, W)
    wo, bo = linear(ks[2 * D], ks[2 * D + 1], W, OUTPUT_CH)
    return w0, b0, wh, bh, wo, bo


def depth_pred_reference(x_flat, params):
    """Pure-f32 reference (matches the PyTorch module)."""
    w0, b0, wh, bh, wo, bo = params
    h = jnp.maximum(x_flat @ w0 + b0, 0.0)
    for i in range(D - 1):
        h = jnp.maximum(h @ wh[i] + bh[i], 0.0)
    return h @ wo + bo


def depth_pred_reference_bf16(x_flat, params):
    """Pure-JAX reference applying the same bf16 quantization/epilogue as the kernel."""
    w0, b0, wh, bh, wo, bo = params
    acc = jnp.dot(x_flat.astype(jnp.bfloat16), w0.astype(jnp.bfloat16),
                  preferred_element_type=jnp.float32)
    h = jnp.maximum(acc.astype(jnp.bfloat16) + b0.astype(jnp.bfloat16), 0)
    for i in range(D - 1):
        acc = jnp.dot(h, wh[i].astype(jnp.bfloat16),
                      preferred_element_type=jnp.float32)
        h = jnp.maximum(acc.astype(jnp.bfloat16) + bh[i].astype(jnp.bfloat16), 0)
    out = jnp.dot(h, wo.astype(jnp.bfloat16), preferred_element_type=jnp.float32)
    return out + bo


if __name__ == "__main__":
    key = jax.random.PRNGKey(0)
    k_param, k_x = jax.random.split(key)

    params = init_params(k_param)

    # Small input consistent with the module: 2 ray bundles x 128 samples x 6
    # input channels -> (2, 128, 6), flattened to (256, 6).
    x = jax.random.normal(k_x, (2, 128, INPUT_CH), dtype=jnp.float32)
    x_flat = x.reshape(-1, INPUT_CH)

    out = depth_pred_pallas(x_flat, params)
    out = jax.block_until_ready(out)
    assert out.shape == (x_flat.shape[0], OUTPUT_CH)

    # Tight check vs a pure-JAX reference using the same bf16 quantization.
    ref_bf16 = depth_pred_reference_bf16(x_flat, params)
    assert jnp.allclose(out, ref_bf16, atol=2e-3, rtol=1e-2), \
        "mismatch vs bf16-quantized reference"

    # Loose check vs the full-f32 reference (kernel uses bf16 weights/acts).
    ref_f32 = depth_pred_reference(x_flat, params)
    assert jnp.allclose(out, ref_f32, atol=2e-2, rtol=2e-1), \
        "mismatch vs f32 reference"

    # Reshape back to the module's (..., output_ch) convention.
    _ = out.reshape(x.shape[0], x.shape[1], OUTPUT_CH)

    print("KERNEL_OK")
</pallas_src>

<mosaic_0001>
module attributes {stable_mosaic.version = 11 : i64} {
  func.func @_mlp_kernel(%arg0: i32, %arg1: memref<1024x6xf32, #tpu.memory_space<vmem>>, %arg2: memref<6x256xbf16, #tpu.memory_space<vmem>>, %arg3: memref<1x256xbf16, #tpu.memory_space<vmem>>, %arg4: memref<7x256x256xbf16, #tpu.memory_space<vmem>>, %arg5: memref<7x1x256xbf16, #tpu.memory_space<vmem>>, %arg6: memref<256x128xbf16, #tpu.memory_space<vmem>>, %arg7: memref<1x1xf32, #tpu.memory_space<vmem>>, %arg8: memref<1024x1xf32, #tpu.memory_space<vmem>>) attributes {dimension_semantics = [#tpu.dimension_semantics<parallel>], iteration_bounds = array<i64: 1>, scalar_prefetch = 0 : i64, scratch_operands = 0 : i64, tpu.core_type = #tpu.core_type<tc>, window_params = [{transform_indices = @transform_0, window_bounds = array<i64: 1024, 6>}, {pipeline_mode = #tpu.pipeline_mode<synchronous>, transform_indices = @transform_1, window_bounds = array<i64: 6, 256>}, {pipeline_mode = #tpu.pipeline_mode<synchronous>, transform_indices = @transform_2, window_bounds = array<i64: 1, 256>}, {pipeline_mode = #tpu.pipeline_mode<synchronous>, transform_indices = @transform_3, window_bounds = array<i64: 7, 256, 256>}, {pipeline_mode = #tpu.pipeline_mode<synchronous>, transform_indices = @transform_4, window_bounds = array<i64: 7, 1, 256>}, {pipeline_mode = #tpu.pipeline_mode<synchronous>, transform_indices = @transform_5, window_bounds = array<i64: 256, 128>}, {pipeline_mode = #tpu.pipeline_mode<synchronous>, transform_indices = @transform_6, window_bounds = array<i64: 1, 1>}, {transform_indices = @transform_7, window_bounds = array<i64: 1024, 1>}]} {
    %c0 = arith.constant 0 : index
    %c0_0 = arith.constant 0 : index
    %0 = vector.load %arg1[%c0, %c0_0] : memref<1024x6xf32, #tpu.memory_space<vmem>>, vector<1024x6xf32>
    %1 = arith.truncf %0 : vector<1024x6xf32> to vector<1024x6xbf16>
    %c0_1 = arith.constant 0 : index
    %c0_2 = arith.constant 0 : index
    %2 = vector.load %arg2[%c0_1, %c0_2] : memref<6x256xbf16, #tpu.memory_space<vmem>>, vector<6x256xbf16>
    %cst = arith.constant dense<0.000000e+00> : vector<1024x256xf32>
    %3 = tpu.matmul %1, %2, %cst {dimension_numbers = #tpu.dot_dimension_numbers<[1], [0], [0], [1], [0, 0, 1, 1], [], []>} : vector<1024x6xbf16>, vector<6x256xbf16>, vector<1024x256xf32> -> vector<1024x256xf32>
    %4 = arith.truncf %3 : vector<1024x256xf32> to vector<1024x256xbf16>
    %c0_3 = arith.constant 0 : index
    %c0_4 = arith.constant 0 : index
    %5 = vector.load %arg3[%c0_3, %c0_4] : memref<1x256xbf16, #tpu.memory_space<vmem>>, vector<1x256xbf16>
    %6 = vector.broadcast %5 : vector<1x256xbf16> to vector<1024x256xbf16>
    %7 = arith.addf %4, %6 : vector<1024x256xbf16>
    %cst_5 = arith.constant 0.000000e+00 : bf16
    %8 = vector.broadcast %cst_5 : bf16 to vector<1024x256xbf16>
    %9 = arith.maximumf %7, %8 : vector<1024x256xbf16>
    %c0_6 = arith.constant 0 : index
    %c0_7 = arith.constant 0 : index
    %c0_8 = arith.constant 0 : index
    %10 = vector.load %arg4[%c0_6, %c0_7, %c0_8] : memref<7x256x256xbf16, #tpu.memory_space<vmem>>, vector<1x256x256xbf16>
    %11 = vector.shape_cast %10 : vector<1x256x256xbf16> to vector<256x256xbf16>
    %cst_9 = arith.constant dense<0.000000e+00> : vector<1024x256xf32>
    %12 = tpu.matmul %9, %11, %cst_9 {dimension_numbers = #tpu.dot_dimension_numbers<[1], [0], [0], [1], [0, 0, 1, 1], [], []>} : vector<1024x256xbf16>, vector<256x256xbf16>, vector<1024x256xf32> -> vector<1024x256xf32>
    %13 = arith.truncf %12 : vector<1024x256xf32> to vector<1024x256xbf16>
    %c0_10 = arith.constant 0 : index
    %c0_11 = arith.constant 0 : index
    %c0_12 = arith.constant 0 : index
    %14 = vector.load %arg5[%c0_10, %c0_11, %c0_12] : memref<7x1x256xbf16, #tpu.memory_space<vmem>>, vector<1x1x256xbf16>
    %15 = vector.shape_cast %14 : vector<1x1x256xbf16> to vector<1x256xbf16>
    %16 = vector.broadcast %15 : vector<1x256xbf16> to vector<1024x256xbf16>
    %17 = arith.addf %13, %16 : vector<1024x256xbf16>
    %cst_13 = arith.constant 0.000000e+00 : bf16
    %18 = vector.broadcast %cst_13 : bf16 to vector<1024x256xbf16>
    %19 = arith.maximumf %17, %18 : vector<1024x256xbf16>
    %c1 = arith.constant 1 : index
    %c0_14 = arith.constant 0 : index
    %c0_15 = arith.constant 0 : index
    %20 = vector.load %arg4[%c1, %c0_14, %c0_15] : memref<7x256x256xbf16, #tpu.memory_space<vmem>>, vector<1x256x256xbf16>
    %21 = vector.shape_cast %20 : vector<1x256x256xbf16> to vector<256x256xbf16>
    %cst_16 = arith.constant dense<0.000000e+00> : vector<1024x256xf32>
    %22 = tpu.matmul %19, %21, %cst_16 {dimension_numbers = #tpu.dot_dimension_numbers<[1], [0], [0], [1], [0, 0, 1, 1], [], []>} : vector<1024x256xbf16>, vector<256x256xbf16>, vector<1024x256xf32> -> vector<1024x256xf32>
    %23 = arith.truncf %22 : vector<1024x256xf32> to vector<1024x256xbf16>
    %c1_17 = arith.constant 1 : index
    %c0_18 = arith.constant 0 : index
    %c0_19 = arith.constant 0 : index
    %24 = vector.load %arg5[%c1_17, %c0_18, %c0_19] : memref<7x1x256xbf16, #tpu.memory_space<vmem>>, vector<1x1x256xbf16>
    %25 = vector.shape_cast %24 : vector<1x1x256xbf16> to vector<1x256xbf16>
    %26 = vector.broadcast %25 : vector<1x256xbf16> to vector<1024x256xbf16>
    %27 = arith.addf %23, %26 : vector<1024x256xbf16>
    %cst_20 = arith.constant 0.000000e+00 : bf16
    %28 = vector.broadcast %cst_20 : bf16 to vector<1024x256xbf16>
    %29 = arith.maximumf %27, %28 : vector<1024x256xbf16>
    %c2 = arith.constant 2 : index
    %c0_21 = arith.constant 0 : index
    %c0_22 = arith.constant 0 : index
    %30 = vector.load %arg4[%c2, %c0_21, %c0_22] : memref<7x256x256xbf16, #tpu.memory_space<vmem>>, vector<1x256x256xbf16>
    %31 = vector.shape_cast %30 : vector<1x256x256xbf16> to vector<256x256xbf16>
    %cst_23 = arith.constant dense<0.000000e+00> : vector<1024x256xf32>
    %32 = tpu.matmul %29, %31, %cst_23 {dimension_numbers = #tpu.dot_dimension_numbers<[1], [0], [0], [1], [0, 0, 1, 1], [], []>} : vector<1024x256xbf16>, vector<256x256xbf16>, vector<1024x256xf32> -> vector<1024x256xf32>
    %33 = arith.truncf %32 : vector<1024x256xf32> to vector<1024x256xbf16>
    %c2_24 = arith.constant 2 : index
    %c0_25 = arith.constant 0 : index
    %c0_26 = arith.constant 0 : index
    %34 = vector.load %arg5[%c2_24, %c0_25, %c0_26] : memref<7x1x256xbf16, #tpu.memory_space<vmem>>, vector<1x1x256xbf16>
    %35 = vector.shape_cast %34 : vector<1x1x256xbf16> to vector<1x256xbf16>
    %36 = vector.broadcast %35 : vector<1x256xbf16> to vector<1024x256xbf16>
    %37 = arith.addf %33, %36 : vector<1024x256xbf16>
    %cst_27 = arith.constant 0.000000e+00 : bf16
    %38 = vector.broadcast %cst_27 : bf16 to vector<1024x256xbf16>
    %39 = arith.maximumf %37, %38 : vector<1024x256xbf16>
    %c3 = arith.constant 3 : index
    %c0_28 = arith.constant 0 : index
    %c0_29 = arith.constant 0 : index
    %40 = vector.load %arg4[%c3, %c0_28, %c0_29] : memref<7x256x256xbf16, #tpu.memory_space<vmem>>, vector<1x256x256xbf16>
    %41 = vector.shape_cast %40 : vector<1x256x256xbf16> to vector<256x256xbf16>
    %cst_30 = arith.constant dense<0.000000e+00> : vector<1024x256xf32>
    %42 = tpu.matmul %39, %41, %cst_30 {dimension_numbers = #tpu.dot_dimension_numbers<[1], [0], [0], [1], [0, 0, 1, 1], [], []>} : vector<1024x256xbf16>, vector<256x256xbf16>, vector<1024x256xf32> -> vector<1024x256xf32>
    %43 = arith.truncf %42 : vector<1024x256xf32> to vector<1024x256xbf16>
    %c3_31 = arith.constant 3 : index
    %c0_32 = arith.constant 0 : index
    %c0_33 = arith.constant 0 : index
    %44 = vector.load %arg5[%c3_31, %c0_32, %c0_33] : memref<7x1x256xbf16, #tpu.memory_space<vmem>>, vector<1x1x256xbf16>
    %45 = vector.shape_cast %44 : vector<1x1x256xbf16> to vector<1x256xbf16>
    %46 = vector.broadcast %45 : vector<1x256xbf16> to vector<1024x256xbf16>
    %47 = arith.addf %43, %46 : vector<1024x256xbf16>
    %cst_34 = arith.constant 0.000000e+00 : bf16
    %48 = vector.broadcast %cst_34 : bf16 to vector<1024x256xbf16>
    %49 = arith.maximumf %47, %48 : vector<1024x256xbf16>
    %c4 = arith.constant 4 : index
    %c0_35 = arith.constant 0 : index
    %c0_36 = arith.constant 0 : index
    %50 = vector.load %arg4[%c4, %c0_35, %c0_36] : memref<7x256x256xbf16, #tpu.memory_space<vmem>>, vector<1x256x256xbf16>
    %51 = vector.shape_cast %50 : vector<1x256x256xbf16> to vector<256x256xbf16>
    %cst_37 = arith.constant dense<0.000000e+00> : vector<1024x256xf32>
    %52 = tpu.matmul %49, %51, %cst_37 {dimension_numbers = #tpu.dot_dimension_numbers<[1], [0], [0], [1], [0, 0, 1, 1], [], []>} : vector<1024x256xbf16>, vector<256x256xbf16>, vector<1024x256xf32> -> vector<1024x256xf32>
    %53 = arith.truncf %52 : vector<1024x256xf32> to vector<1024x256xbf16>
    %c4_38 = arith.constant 4 : index
    %c0_39 = arith.constant 0 : index
    %c0_40 = arith.constant 0 : index
    %54 = vector.load %arg5[%c4_38, %c0_39, %c0_40] : memref<7x1x256xbf16, #tpu.memory_space<vmem>>, vector<1x1x256xbf16>
    %55 = vector.shape_cast %54 : vector<1x1x256xbf16> to vector<1x256xbf16>
    %56 = vector.broadcast %55 : vector<1x256xbf16> to vector<1024x256xbf16>
    %57 = arith.addf %53, %56 : vector<1024x256xbf16>
    %cst_41 = arith.constant 0.000000e+00 : bf16
    %58 = vector.broadcast %cst_41 : bf16 to vector<1024x256xbf16>
    %59 = arith.maximumf %57, %58 : vector<1024x256xbf16>
    %c5 = arith.constant 5 : index
    %c0_42 = arith.constant 0 : index
    %c0_43 = arith.constant 0 : index
    %60 = vector.load %arg4[%c5, %c0_42, %c0_43] : memref<7x256x256xbf16, #tpu.memory_space<vmem>>, vector<1x256x256xbf16>
    %61 = vector.shape_cast %60 : vector<1x256x256xbf16> to vector<256x256xbf16>
    %cst_44 = arith.constant dense<0.000000e+00> : vector<1024x256xf32>
    %62 = tpu.matmul %59, %61, %cst_44 {dimension_numbers = #tpu.dot_dimension_numbers<[1], [0], [0], [1], [0, 0, 1, 1], [], []>} : vector<1024x256xbf16>, vector<256x256xbf16>, vector<1024x256xf32> -> vector<1024x256xf32>
    %63 = arith.truncf %62 : vector<1024x256xf32> to vector<1024x256xbf16>
    %c5_45 = arith.constant 5 : index
    %c0_46 = arith.constant 0 : index
    %c0_47 = arith.constant 0 : index
    %64 = vector.load %arg5[%c5_45, %c0_46, %c0_47] : memref<7x1x256xbf16, #tpu.memory_space<vmem>>, vector<1x1x256xbf16>
    %65 = vector.shape_cast %64 : vector<1x1x256xbf16> to vector<1x256xbf16>
    %66 = vector.broadcast %65 : vector<1x256xbf16> to vector<1024x256xbf16>
    %67 = arith.addf %63, %66 : vector<1024x256xbf16>
    %cst_48 = arith.constant 0.000000e+00 : bf16
    %68 = vector.broadcast %cst_48 : bf16 to vector<1024x256xbf16>
    %69 = arith.maximumf %67, %68 : vector<1024x256xbf16>
    %c6 = arith.constant 6 : index
    %c0_49 = arith.constant 0 : index
    %c0_50 = arith.constant 0 : index
    %70 = vector.load %arg4[%c6, %c0_49, %c0_50] : memref<7x256x256xbf16, #tpu.memory_space<vmem>>, vector<1x256x256xbf16>
    %71 = vector.shape_cast %70 : vector<1x256x256xbf16> to vector<256x256xbf16>
    %cst_51 = arith.constant dense<0.000000e+00> : vector<1024x256xf32>
    %72 = tpu.matmul %69, %71, %cst_51 {dimension_numbers = #tpu.dot_dimension_numbers<[1], [0], [0], [1], [0, 0, 1, 1], [], []>} : vector<1024x256xbf16>, vector<256x256xbf16>, vector<1024x256xf32> -> vector<1024x256xf32>
    %73 = arith.truncf %72 : vector<1024x256xf32> to vector<1024x256xbf16>
    %c6_52 = arith.constant 6 : index
    %c0_53 = arith.constant 0 : index
    %c0_54 = arith.constant 0 : index
    %74 = vector.load %arg5[%c6_52, %c0_53, %c0_54] : memref<7x1x256xbf16, #tpu.memory_space<vmem>>, vector<1x1x256xbf16>
    %75 = vector.shape_cast %74 : vector<1x1x256xbf16> to vector<1x256xbf16>
    %76 = vector.broadcast %75 : vector<1x256xbf16> to vector<1024x256xbf16>
    %77 = arith.addf %73, %76 : vector<1024x256xbf16>
    %cst_55 = arith.constant 0.000000e+00 : bf16
    %78 = vector.broadcast %cst_55 : bf16 to vector<1024x256xbf16>
    %79 = arith.maximumf %77, %78 : vector<1024x256xbf16>
    %c0_56 = arith.constant 0 : index
    %c0_57 = arith.constant 0 : index
    %80 = vector.load %arg6[%c0_56, %c0_57] : memref<256x128xbf16, #tpu.memory_space<vmem>>, vector<256x128xbf16>
    %cst_58 = arith.constant dense<0.000000e+00> : vector<1024x128xf32>
    %81 = tpu.matmul %79, %80, %cst_58 {dimension_numbers = #tpu.dot_dimension_numbers<[1], [0], [0], [1], [0, 0, 1, 1], [], []>} : vector<1024x256xbf16>, vector<256x128xbf16>, vector<1024x128xf32> -> vector<1024x128xf32>
    %82 = vector.extract_strided_slice %81 {offsets = [0, 0], sizes = [1024, 1], strides = [1, 1]} : vector<1024x128xf32> to vector<1024x1xf32>
    %c0_59 = arith.constant 0 : index
    %c0_60 = arith.constant 0 : index
    %83 = vector.load %arg7[%c0_59, %c0_60] : memref<1x1xf32, #tpu.memory_space<vmem>>, vector<1x1xf32>
    %84 = vector.broadcast %83 : vector<1x1xf32> to vector<1024x1xf32>
    %85 = arith.addf %82, %84 : vector<1024x1xf32>
    %c0_61 = arith.constant 0 : index
    %c0_62 = arith.constant 0 : index
    %86 = vector.load %arg8[%c0_61, %c0_62] : memref<1024x1xf32, #tpu.memory_space<vmem>>, vector<1024x1xf32>
    tpu.vector_store %arg8[%c0_61, %c0_62], %85 {strides = array<i32>} : memref<1024x1xf32, #tpu.memory_space<vmem>>, vector<1024x1xf32>,
    return
  }
  func.func @transform_0(%arg0: i32) -> (i32, i32) {
    %c0_i32 = arith.constant 0 : i32
    %c0_i32_0 = arith.constant 0 : i32
    return %arg0, %c0_i32 : i32, i32
  }
  func.func @transform_1(%arg0: i32) -> (i32, i32) {
    %c0_i32 = arith.constant 0 : i32
    %c0_i32_0 = arith.constant 0 : i32
    %c0_i32_1 = arith.constant 0 : i32
    return %c0_i32, %c0_i32_0 : i32, i32
  }
  func.func @transform_2(%arg0: i32) -> (i32, i32) {
    %c0_i32 = arith.constant 0 : i32
    %c0_i32_0 = arith.constant 0 : i32
    %c0_i32_1 = arith.constant 0 : i32
    return %c0_i32, %c0_i32_0 : i32, i32
  }
  func.func @transform_3(%arg0: i32) -> (i32, i32, i32) {
    %c0_i32 = arith.constant 0 : i32
    %c0_i32_0 = arith.constant 0 : i32
    %c0_i32_1 = arith.constant 0 : i32
    %c0_i32_2 = arith.constant 0 : i32
    return %c0_i32, %c0_i32_0, %c0_i32_1 : i32, i32, i32
  }
  func.func @transform_4(%arg0: i32) -> (i32, i32, i32) {
    %c0_i32 = arith.constant 0 : i32
    %c0_i32_0 = arith.constant 0 : i32
    %c0_i32_1 = arith.constant 0 : i32
    %c0_i32_2 = arith.constant 0 : i32
    return %c0_i32, %c0_i32_0, %c0_i32_1 : i32, i32, i32
  }
  func.func @transform_5(%arg0: i32) -> (i32, i32) {
    %c0_i32 = arith.constant 0 : i32
    %c0_i32_0 = arith.constant 0 : i32
    %c0_i32_1 = arith.constant 0 : i32
    return %c0_i32, %c0_i32_0 : i32, i32
  }
  func.func @transform_6(%arg0: i32) -> (i32, i32) {
    %c0_i32 = arith.constant 0 : i32
    %c0_i32_0 = arith.constant 0 : i32
    %c0_i32_1 = arith.constant 0 : i32
    return %c0_i32, %c0_i32_0 : i32, i32
  }
  func.func @transform_7(%arg0: i32) -> (i32, i32) {
    %c0_i32 = arith.constant 0 : i32
    %c0_i32_0 = arith.constant 0 : i32
    return %arg0, %c0_i32 : i32, i32
  }
}

</mosaic_0001>

<llo_original>
// kernel: tpu_custom_call.1
$region0: #{tpu_custom_call.1}
  #allocation0 [shape = 'u32[]', space=smem, size = 0x4, offset = 0x4, fixed_abs, tag = 'smem constant byte address 0x4 - core index']
  #allocation1 [shape = 'u32[144,128]{1,0:T(1,128)}', space=vmem, size = 0x12000, scoped, tag = 'internal scratch']
  #allocation2 [shape = 'f32[1,1]{1,0:T(1,128)S(1)}', space=vmem, size = 0x200, scoped, tag = 'scoped memory for tpu_custom_call.1']
  %s0 = inlined_call_operand.vmem [shape: f32[1024,6], index: 0, kind: input, shape index: {}]
  %s1 = inlined_call_operand.vmem [shape: bf16[6,256], index: 1, kind: input, shape index: {}]
  %s2 = inlined_call_operand.vmem [shape: bf16[1,256], index: 2, kind: input, shape index: {}]
  %s3 = inlined_call_operand.hbm [shape: bf16[7,256,256], index: 3, kind: input, shape index: {}]
  %s4 = inlined_call_operand.vmem [shape: bf16[7,1,256], index: 4, kind: input, shape index: {}]
  %s5 = inlined_call_operand.vmem [shape: bf16[256,128], index: 5, kind: input, shape index: {}]
  %s6 = inlined_call_operand.<no memory space> [shape: f32[1,1], index: 6, kind: input, shape index: {}]
  %s7 = inlined_call_operand.vmem [shape: f32[1024,1], index: 7, kind: output, shape index: {}]
  %s8 = sld [smem:[#allocation0]]
  $region42: #{tpu_custom_call.1} parent=0
    _
  %s10 = ssub.s32 1, %s8
  %s11 = scalar_select 0, %s10, %s8
  %v12 = vstv %s6
  %13 = vst [vmem:[#allocation2] sm:$0x1] %v12
  $region1: #{tpu_custom_call.1} parent=0
    #allocation3 [shape = 'u8[917504]{0}', space=vmem, size = 0xe0000, scoped, tag = 'input window, operand 3, single buffered']
    #allocation4 [shape = 's32[1]{0}', space=sflag, size = 0x4, scoped, tag = 'scoped memory for tpu_custom_call.1']
    %14 = vsyncpa [#allocation4], 0
    // Predicated region
    $region2: #{tpu_custom_call.1} parent=1 // pred_check
      _
    $region3: #{tpu_custom_call.1} parent=1 // pred_check_branch
      %16 = sbr.rel (0) target = $region5
    $region4: #{tpu_custom_call.1} parent=1 // pred_region
      _
    $region5: #{tpu_custom_call.1} parent=1 // pred_fallthru
      _
    // Predicated region
    $region6: #{tpu_custom_call.1} parent=1 // pred_check
      _
    $region7: #{tpu_custom_call.1} parent=1 // pred_check_branch
      %18 = sbr.rel (0) target = $region9
    $region8: #{tpu_custom_call.1} parent=1 // pred_region
      _
    $region9: #{tpu_custom_call.1} parent=1 // pred_fallthru
      _
    // Predicated region
    $region10: #{tpu_custom_call.1} parent=1 // pred_check
      _
    $region11: #{tpu_custom_call.1} parent=1 // pred_check_branch
      %20 = sbr.rel (0) target = $region13
    $region12: #{tpu_custom_call.1} parent=1 // pred_region
      _
    $region13: #{tpu_custom_call.1} parent=1 // pred_fallthru
      _
    // Predicated region
    $region14: #{tpu_custom_call.1} parent=1 // pred_check
      _
    $region15: #{tpu_custom_call.1} parent=1 // pred_check_branch
      %22 = sbr.rel (0) target = $region17
    $region16: #{tpu_custom_call.1} parent=1 // pred_region
      %s24 = ssub.s32 28672, 28672
      %25 = vsyncadd [#allocation4], %s24
      %s26 = sshll.u32 [#allocation3], 4
      %s27 = int_to_ptr.vmem [resolvable:$true] %s26
      %32 = dma.hbm_to_vmem [thread:$0]  %s3, 28672, %s27, [#allocation4], 128, 128, 8
    $region17: #{tpu_custom_call.1} parent=1 // pred_fallthru
      _
    // Predicated region
    $region18: #{tpu_custom_call.1} parent=1 // pred_check
      _
    $region19: #{tpu_custom_call.1} parent=1 // pred_check_branch
      %34 = sbr.rel (0) target = $region21
    $region20: #{tpu_custom_call.1} parent=1 // pred_region
      _
    $region21: #{tpu_custom_call.1} parent=1 // pred_fallthru
      _
    // Predicated region
    $region22: #{tpu_custom_call.1} parent=1 // pred_check
      _
    $region23: #{tpu_custom_call.1} parent=1 // pred_check_branch
      %36 = sbr.rel (0) target = $region25
    $region24: #{tpu_custom_call.1} parent=1 // pred_region
      _
    $region25: #{tpu_custom_call.1} parent=1 // pred_fallthru
      _
    // Predicated region
    $region26: #{tpu_custom_call.1} parent=1 // pred_check
      _
    $region27: #{tpu_custom_call.1} parent=1 // pred_check_branch
      %38 = sbr.rel (0) target = $region29
    $region28: #{tpu_custom_call.1} parent=1 // pred_region
      _
    $region29: #{tpu_custom_call.1} parent=1 // pred_fallthru
      _
    // Predicated region
    $region30: #{tpu_custom_call.1} parent=1 // pred_check
      _
    $region31: #{tpu_custom_call.1} parent=1 // pred_check_branch
      %40 = sbr.rel (0) target = $region33
    $region32: #{tpu_custom_call.1} parent=1 // pred_region
      %41 = dma.done [#allocation4], 28672
    $region33: #{tpu_custom_call.1} parent=1 // pred_fallthru
      _
    %v43 = vld [vmem:[%s0] sm:$0xff]
    %v44 = vld [vmem:[%s0 + $0x8] sm:$0xff]
    %v45 = vld [vmem:[%s0 + $0x10] sm:$0xff]
    %v46 = vld [vmem:[%s0 + $0x18] sm:$0xff]
    %v47 = vld [vmem:[%s0 + $0x20] sm:$0xff]
    %v48 = vld [vmem:[%s0 + $0x28] sm:$0xff]
    %v49 = vld [vmem:[%s0 + $0x30] sm:$0xff]
    %v50 = vld [vmem:[%s0 + $0x38] sm:$0xff]
    %v51 = vld [vmem:[%s0 + $0x40] sm:$0xff]
    %v52 = vld [vmem:[%s0 + $0x48] sm:$0xff]
    %v53 = vld [vmem:[%s0 + $0x50] sm:$0xff]
    %v54 = vld [vmem:[%s0 + $0x58] sm:$0xff]
    %v55 = vld [vmem:[%s0 + $0x60] sm:$0xff]
    %v56 = vld [vmem:[%s0 + $0x68] sm:$0xff]
    %v57 = vld [vmem:[%s0 + $0x70] sm:$0xff]
    %v58 = vld [vmem:[%s0 + $0x78] sm:$0xff]
    %v59 = vld [vmem:[%s0 + $0x80] sm:$0xff]
    %v60 = vld [vmem:[%s0 + $0x88] sm:$0xff]
    %v61 = vld [vmem:[%s0 + $0x90] sm:$0xff]
    %v62 = vld [vmem:[%s0 + $0x98] sm:$0xff]
    %v63 = vld [vmem:[%s0 + $0xa0] sm:$0xff]
    %v64 = vld [vmem:[%s0 + $0xa8] sm:$0xff]
    %v65 = vld [vmem:[%s0 + $0xb0] sm:$0xff]
    %v66 = vld [vmem:[%s0 + $0xb8] sm:$0xff]
    %v67 = vld [vmem:[%s0 + $0xc0] sm:$0xff]
    %v68 = vld [vmem:[%s0 + $0xc8] sm:$0xff]
    %v69 = vld [vmem:[%s0 + $0xd0] sm:$0xff]
    %v70 = vld [vmem:[%s0 + $0xd8] sm:$0xff]
    %v71 = vld [vmem:[%s0 + $0xe0] sm:$0xff]
    %v72 = vld [vmem:[%s0 + $0xe8] sm:$0xff]
    %v73 = vld [vmem:[%s0 + $0xf0] sm:$0xff]
    %v74 = vld [vmem:[%s0 + $0xf8] sm:$0xff]
    %v75 = vld [vmem:[%s0 + $0x100] sm:$0xff]
    %v76 = vld [vmem:[%s0 + $0x108] sm:$0xff]
    %v77 = vld [vmem:[%s0 + $0x110] sm:$0xff]
    %v78 = vld [vmem:[%s0 + $0x118] sm:$0xff]
    %v79 = vld [vmem:[%s0 + $0x120] sm:$0xff]
    %v80 = vld [vmem:[%s0 + $0x128] sm:$0xff]
    %v81 = vld [vmem:[%s0 + $0x130] sm:$0xff]
    %v82 = vld [vmem:[%s0 + $0x138] sm:$0xff]
    %v83 = vld [vmem:[%s0 + $0x140] sm:$0xff]
    %v84 = vld [vmem:[%s0 + $0x148] sm:$0xff]
    %v85 = vld [vmem:[%s0 + $0x150] sm:$0xff]
    %v86 = vld [vmem:[%s0 + $0x158] sm:$0xff]
    %v87 = vld [vmem:[%s0 + $0x160] sm:$0xff]
    %v88 = vld [vmem:[%s0 + $0x168] sm:$0xff]
    %v89 = vld [vmem:[%s0 + $0x170] sm:$0xff]
    %v90 = vld [vmem:[%s0 + $0x178] sm:$0xff]
    %v91 = vld [vmem:[%s0 + $0x180] sm:$0xff]
    %v92 = vld [vmem:[%s0 + $0x188] sm:$0xff]
    %v93 = vld [vmem:[%s0 + $0x190] sm:$0xff]
    %v94 = vld [vmem:[%s0 + $0x198] sm:$0xff]
    %v95 = vld [vmem:[%s0 + $0x1a0] sm:$0xff]
    %v96 = vld [vmem:[%s0 + $0x1a8] sm:$0xff]
    %v97 = vld [vmem:[%s0 + $0x1b0] sm:$0xff]
    %v98 = vld [vmem:[%s0 + $0x1b8] sm:$0xff]
    %v99 = vld [vmem:[%s0 + $0x1c0] sm:$0xff]
    %v100 = vld [vmem:[%s0 + $0x1c8] sm:$0xff]
    %v101 = vld [vmem:[%s0 + $0x1d0] sm:$0xff]
    %v102 = vld [vmem:[%s0 + $0x1d8] sm:$0xff]
    %v103 = vld [vmem:[%s0 + $0x1e0] sm:$0xff]
    %v104 = vld [vmem:[%s0 + $0x1e8] sm:$0xff]
    %v105 = vld [vmem:[%s0 + $0x1f0] sm:$0xff]
    %v106 = vld [vmem:[%s0 + $0x1f8] sm:$0xff]
    %v107 = vld [vmem:[%s0 + $0x200] sm:$0xff]
    %v108 = vld [vmem:[%s0 + $0x208] sm:$0xff]
    %v109 = vld [vmem:[%s0 + $0x210] sm:$0xff]
    %v110 = vld [vmem:[%s0 + $0x218] sm:$0xff]
    %v111 = vld [vmem:[%s0 + $0x220] sm:$0xff]
    %v112 = vld [vmem:[%s0 + $0x228] sm:$0xff]
    %v113 = vld [vmem:[%s0 + $0x230] sm:$0xff]
    %v114 = vld [vmem:[%s0 + $0x238] sm:$0xff]
    %v115 = vld [vmem:[%s0 + $0x240] sm:$0xff]
    %v116 = vld [vmem:[%s0 + $0x248] sm:$0xff]
    %v117 = vld [vmem:[%s0 + $0x250] sm:$0xff]
    %v118 = vld [vmem:[%s0 + $0x258] sm:$0xff]
    %v119 = vld [vmem:[%s0 + $0x260] sm:$0xff]
    %v120 = vld [vmem:[%s0 + $0x268] sm:$0xff]
    %v121 = vld [vmem:[%s0 + $0x270] sm:$0xff]
    %v122 = vld [vmem:[%s0 + $0x278] sm:$0xff]
    %v123 = vld [vmem:[%s0 + $0x280] sm:$0xff]
    %v124 = vld [vmem:[%s0 + $0x288] sm:$0xff]
    %v125 = vld [vmem:[%s0 + $0x290] sm:$0xff]
    %v126 = vld [vmem:[%s0 + $0x298] sm:$0xff]
    %v127 = vld [vmem:[%s0 + $0x2a0] sm:$0xff]
    %v128 = vld [vmem:[%s0 + $0x2a8] sm:$0xff]
    %v129 = vld [vmem:[%s0 + $0x2b0] sm:$0xff]
    %v130 = vld [vmem:[%s0 + $0x2b8] sm:$0xff]
    %v131 = vld [vmem:[%s0 + $0x2c0] sm:$0xff]
    %v132 = vld [vmem:[%s0 + $0x2c8] sm:$0xff]
    %v133 = vld [vmem:[%s0 + $0x2d0] sm:$0xff]
    %v134 = vld [vmem:[%s0 + $0x2d8] sm:$0xff]
    %v135 = vld [vmem:[%s0 + $0x2e0] sm:$0xff]
    %v136 = vld [vmem:[%s0 + $0x2e8] sm:$0xff]
    %v137 = vld [vmem:[%s0 + $0x2f0] sm:$0xff]
    %v138 = vld [vmem:[%s0 + $0x2f8] sm:$0xff]
    %v139 = vld [vmem:[%s0 + $0x300] sm:$0xff]
    %v140 = vld [vmem:[%s0 + $0x308] sm:$0xff]
    %v141 = vld [vmem:[%s0 + $0x310] sm:$0xff]
    %v142 = vld [vmem:[%s0 + $0x318] sm:$0xff]
    %v143 = vld [vmem:[%s0 + $0x320] sm:$0xff]
    %v144 = vld [vmem:[%s0 + $0x328] sm:$0xff]
    %v145 = vld [vmem:[%s0 + $0x330] sm:$0xff]
    %v146 = vld [vmem:[%s0 + $0x338] sm:$0xff]
    %v147 = vld [vmem:[%s0 + $0x340] sm:$0xff]
    %v148 = vld [vmem:[%s0 + $0x348] sm:$0xff]
    %v149 = vld [vmem:[%s0 + $0x350] sm:$0xff]
    %v150 = vld [vmem:[%s0 + $0x358] sm:$0xff]
    %v151 = vld [vmem:[%s0 + $0x360] sm:$0xff]
    %v152 = vld [vmem:[%s0 + $0x368] sm:$0xff]
    %v153 = vld [vmem:[%s0 + $0x370] sm:$0xff]
    %v154 = vld [vmem:[%s0 + $0x378] sm:$0xff]
    %v155 = vld [vmem:[%s0 + $0x380] sm:$0xff]
    %v156 = vld [vmem:[%s0 + $0x388] sm:$0xff]
    %v157 = vld [vmem:[%s0 + $0x390] sm:$0xff]
    %v158 = vld [vmem:[%s0 + $0x398] sm:$0xff]
    %v159 = vld [vmem:[%s0 + $0x3a0] sm:$0xff]
    %v160 = vld [vmem:[%s0 + $0x3a8] sm:$0xff]
    %v161 = vld [vmem:[%s0 + $0x3b0] sm:$0xff]
    %v162 = vld [vmem:[%s0 + $0x3b8] sm:$0xff]
    %v163 = vld [vmem:[%s0 + $0x3c0] sm:$0xff]
    %v164 = vld [vmem:[%s0 + $0x3c8] sm:$0xff]
    %v165 = vld [vmem:[%s0 + $0x3d0] sm:$0xff]
    %v166 = vld [vmem:[%s0 + $0x3d8] sm:$0xff]
    %v167 = vld [vmem:[%s0 + $0x3e0] sm:$0xff]
    %v168 = vld [vmem:[%s0 + $0x3e8] sm:$0xff]
    %v169 = vld [vmem:[%s0 + $0x3f0] sm:$0xff]
    %v170 = vld [vmem:[%s0 + $0x3f8] sm:$0xff]
    %v171 = vpack.c.bf16 %v44, %v43
    %v172 = vpack.c.bf16 %v46, %v45
    %v173 = vpack.c.bf16 %v48, %v47
    %v174 = vpack.c.bf16 %v50, %v49
    %v175 = vpack.c.bf16 %v52, %v51
    %v176 = vpack.c.bf16 %v54, %v53
    %v177 = vpack.c.bf16 %v56, %v55
    %v178 = vpack.c.bf16 %v58, %v57
    %v179 = vpack.c.bf16 %v60, %v59
    %v180 = vpack.c.bf16 %v62, %v61
    %v181 = vpack.c.bf16 %v64, %v63
    %v182 = vpack.c.bf16 %v66, %v65
    %v183 = vpack.c.bf16 %v68, %v67
    %v184 = vpack.c.bf16 %v70, %v69
    %v185 = vpack.c.bf16 %v72, %v71
    %v186 = vpack.c.bf16 %v74, %v73
    %v187 = vpack.c.bf16 %v76, %v75
    %v188 = vpack.c.bf16 %v78, %v77
    %v189 = vpack.c.bf16 %v80, %v79
    %v190 = vpack.c.bf16 %v82, %v81
    %v191 = vpack.c.bf16 %v84, %v83
    %v192 = vpack.c.bf16 %v86, %v85
    %v193 = vpack.c.bf16 %v88, %v87
    %v194 = vpack.c.bf16 %v90, %v89
    %v195 = vpack.c.bf16 %v92, %v91
    %v196 = vpack.c.bf16 %v94, %v93
    %v197 = vpack.c.bf16 %v96, %v95
    %v198 = vpack.c.bf16 %v98, %v97
    %v199 = vpack.c.bf16 %v100, %v99
    %v200 = vpack.c.bf16 %v102, %v101
    %v201 = vpack.c.bf16 %v104, %v103
    %v202 = vpack.c.bf16 %v106, %v105
    %v203 = vpack.c.bf16 %v108, %v107
    %v204 = vpack.c.bf16 %v110, %v109
    %v205 = vpack.c.bf16 %v112, %v111
    %v206 = vpack.c.bf16 %v114, %v113
    %v207 = vpack.c.bf16 %v116, %v115
    %v208 = vpack.c.bf16 %v118, %v117
    %v209 = vpack.c.bf16 %v120, %v119
    %v210 = vpack.c.bf16 %v122, %v121
    %v211 = vpack.c.bf16 %v124, %v123
    %v212 = vpack.c.bf16 %v126, %v125
    %v213 = vpack.c.bf16 %v128, %v127
    %v214 = vpack.c.bf16 %v130, %v129
    %v215 = vpack.c.bf16 %v132, %v131
    %v216 = vpack.c.bf16 %v134, %v133
    %v217 = vpack.c.bf16 %v136, %v135
    %v218 = vpack.c.bf16 %v138, %v137
    %v219 = vpack.c.bf16 %v140, %v139
    %v220 = vpack.c.bf16 %v142, %v141
    %v221 = vpack.c.bf16 %v144, %v143
    %v222 = vpack.c.bf16 %v146, %v145
    %v223 = vpack.c.bf16 %v148, %v147
    %v224 = vpack.c.bf16 %v150, %v149
    %v225 = vpack.c.bf16 %v152, %v151
    %v226 = vpack.c.bf16 %v154, %v153
    %v227 = vpack.c.bf16 %v156, %v155
    %v228 = vpack.c.bf16 %v158, %v157
    %v229 = vpack.c.bf16 %v160, %v159
    %v230 = vpack.c.bf16 %v162, %v161
    %v231 = vpack.c.bf16 %v164, %v163
    %v232 = vpack.c.bf16 %v166, %v165
    %v233 = vpack.c.bf16 %v168, %v167
    %v234 = vpack.c.bf16 %v170, %v169
    %v235 = vld [vmem:[%s1] sm:$0x77]
    %v237 = vunpack.c.l.b16 %v235
    %v238 = vunpack.c.h.b16 %v235
    %v239 = vpack.c.b16 %v237, %v237
    %v240 = vpack.c.b16 %v238, %v238
    %vm241 = vcmask 48128
    %v243 = vsel %vm241, %v171, 0
    %v246 = vsel %vm241, %v172, 0
    %v249 = vsel %vm241, %v173, 0
    %v252 = vsel %vm241, %v174, 0
    %v255 = vsel %vm241, %v175, 0
    %v258 = vsel %vm241, %v176, 0
    %v261 = vsel %vm241, %v177, 0
    %v264 = vsel %vm241, %v178, 0
    %v267 = vsel %vm241, %v179, 0
    %v270 = vsel %vm241, %v180, 0
    %v273 = vsel %vm241, %v181, 0
    %v276 = vsel %vm241, %v182, 0
    %v279 = vsel %vm241, %v183, 0
    %v282 = vsel %vm241, %v184, 0
    %v285 = vsel %vm241, %v185, 0
    %v288 = vsel %vm241, %v186, 0
    %v291 = vsel %vm241, %v187, 0
    %v294 = vsel %vm241, %v188, 0
    %v297 = vsel %vm241, %v189, 0
    %v300 = vsel %vm241, %v190, 0
    %v303 = vsel %vm241, %v191, 0
    %v306 = vsel %vm241, %v192, 0
    %v309 = vsel %vm241, %v193, 0
    %v312 = vsel %vm241, %v194, 0
    %v315 = vsel %vm241, %v195, 0
    %v318 = vsel %vm241, %v196, 0
    %v321 = vsel %vm241, %v197, 0
    %v324 = vsel %vm241, %v198, 0
    %v327 = vsel %vm241, %v199, 0
    %v330 = vsel %vm241, %v200, 0
    %v333 = vsel %vm241, %v201, 0
    %v336 = vsel %vm241, %v202, 0
    %v339 = vsel %vm241, %v203, 0
    %v342 = vsel %vm241, %v204, 0
    %v345 = vsel %vm241, %v205, 0
    %v348 = vsel %vm241, %v206, 0
    %v351 = vsel %vm241, %v207, 0
    %v354 = vsel %vm241, %v208, 0
    %v357 = vsel %vm241, %v209, 0
    %v360 = vsel %vm241, %v210, 0
    %v363 = vsel %vm241, %v211, 0
    %v366 = vsel %vm241, %v212, 0
    %v369 = vsel %vm241, %v213, 0
    %v372 = vsel %vm241, %v214, 0
    %v375 = vsel %vm241, %v215, 0
    %v378 = vsel %vm241, %v216, 0
    %v381 = vsel %vm241, %v217, 0
    %v384 = vsel %vm241, %v218, 0
    %v387 = vsel %vm241, %v219, 0
    %v390 = vsel %vm241, %v220, 0
    %v393 = vsel %vm241, %v221, 0
    %v396 = vsel %vm241, %v222, 0
    %v399 = vsel %vm241, %v223, 0
    %v402 = vsel %vm241, %v224, 0
    %v405 = vsel %vm241, %v225, 0
    %v408 = vsel %vm241, %v226, 0
    %v411 = vsel %vm241, %v227, 0
    %v414 = vsel %vm241, %v228, 0
    %v417 = vsel %vm241, %v229, 0
    %v420 = vsel %vm241, %v230, 0
    %v423 = vsel %vm241, %v231, 0
    %v426 = vsel %vm241, %v232, 0
    %v429 = vsel %vm241, %v233, 0
    %v432 = vsel %vm241, %v234, 0
    %vm434 = vcmask 1042432
    %v436 = vsel %vm434, %v239, 0
    %v439 = vsel %vm434, %v240, 0
    %441 = vmatprep.subr.bf16.mxu0 %v439
    %442 = vmatpush1.bf16.msra.mxu0 %v436
    %443 = vmatprep.subr.bf16.mxu0 0
    %444 = vmatpush1.bf16.msra.mxu0 0
    %445 = vmatprep.subr.bf16.mxu0 0
    %446 = vmatpush1.bf16.msra.mxu0 0
    %447 = vmatprep.subr.bf16.mxu0 0
    %448 = vmatpush1.bf16.msra.mxu0 0
    %449 = vmatprep.subr.bf16.mxu0 0
    %450 = vmatpush1.bf16.msra.mxu0 0
    %451 = vmatprep.subr.bf16.mxu0 0
    %452 = vmatpush1.bf16.msra.mxu0 0
    %453 = vmatprep.subr.bf16.mxu0 0
    %454 = vmatpush1.bf16.msra.mxu0 0
    %455 = vmatprep.subr.bf16.mxu0 0
    %456 = vmatpush1.bf16.msra.mxu0 0
    %457 = vmatprep.subr.bf16.mxu0 0
    %458 = vmatpush1.bf16.msra.mxu0 0
    %459 = vmatprep.subr.bf16.mxu0 0
    %460 = vmatpush1.bf16.msra.mxu0 0
    %461 = vmatprep.subr.bf16.mxu0 0
    %462 = vmatpush1.bf16.msra.mxu0 0
    %463 = vmatprep.subr.bf16.mxu0 0
    %464 = vmatpush1.bf16.msra.mxu0 0
    %465 = vmatprep.subr.bf16.mxu0 0
    %466 = vmatpush1.bf16.msra.mxu0 0
    %467 = vmatprep.subr.bf16.mxu0 0
    %468 = vmatpush1.bf16.msra.mxu0 0
    %469 = vmatprep.subr.bf16.mxu0 0
    %470 = vmatpush1.bf16.msra.mxu0 0
    %471 = vmatprep.subr.bf16.mxu0 0
    %472 = vmatpush1.bf16.msra.mxu0 0
    %473 = vmatprep.mubr.bf16.mxu0 0
    %474 = vmatmul.mubr.bf16.gmra.mrb[0].mxu0 %v243
    %v475 = vpop.f32.mrb[0].mxu0
    %v476 = vadd.f32 0.0, %v475
    %v477 = vpop.f32.mrb[0].mxu0
    %v478 = vadd.f32 0.0, %v477
    %v479 = vpop.f32.mrb[0].mxu0
    %v480 = vadd.f32 0.0, %v479
    %v481 = vpop.f32.mrb[0].mxu0
    %v482 = vadd.f32 0.0, %v481
    %483 = vmatprep.mubr.bf16.mxu0 0
    %484 = vmatmul.mubr.bf16.gmra.mrb[0].mxu0 %v246
    %v485 = vpop.f32.mrb[0].mxu0
    %v486 = vadd.f32 0.0, %v485
    %v487 = vpop.f32.mrb[0].mxu0
    %v488 = vadd.f32 0.0, %v487
    %v489 = vpop.f32.mrb[0].mxu0
    %v490 = vadd.f32 0.0, %v489
    %v491 = vpop.f32.mrb[0].mxu0
    %v492 = vadd.f32 0.0, %v491
    %493 = vmatprep.mubr.bf16.mxu0 0
    %494 = vmatmul.mubr.bf16.gmra.mrb[0].mxu0 %v249
    %v495 = vpop.f32.mrb[0].mxu0
    %v496 = vadd.f32 0.0, %v495
    %v497 = vpop.f32.mrb[0].mxu0
    %v498 = vadd.f32 0.0, %v497
    %v499 = vpop.f32.mrb[0].mxu0
    %v500 = vadd.f32 0.0, %v499
    %v501 = vpop.f32.mrb[0].mxu0
    %v502 = vadd.f32 0.0, %v501
    %503 = vmatprep.mubr.bf16.mxu0 0
    %504 = vmatmul.mubr.bf16.gmra.mrb[0].mxu0 %v252
    %v505 = vpop.f32.mrb[0].mxu0
    %v506 = vadd.f32 0.0, %v505
    %v507 = vpop.f32.mrb[0].mxu0
    %v508 = vadd.f32 0.0, %v507
    %v509 = vpop.f32.mrb[0].mxu0
    %v510 = vadd.f32 0.0, %v509
    %v511 = vpop.f32.mrb[0].mxu0
    %v512 = vadd.f32 0.0, %v511
    %513 = vmatprep.mubr.bf16.mxu0 0
    %514 = vmatmul.mubr.bf16.gmra.mrb[0].mxu0 %v255
    %v515 = vpop.f32.mrb[0].mxu0
    %v516 = vadd.f32 0.0, %v515
    %v517 = vpop.f32.mrb[0].mxu0
    %v518 = vadd.f32 0.0, %v517
    %v519 = vpop.f32.mrb[0].mxu0
    %v520 = vadd.f32 0.0, %v519
    %v521 = vpop.f32.mrb[0].mxu0
    %v522 = vadd.f32 0.0, %v521
    %523 = vmatprep.mubr.bf16.mxu0 0
    %524 = vmatmul.mubr.bf16.gmra.mrb[0].mxu0 %v258
    %v525 = vpop.f32.mrb[0].mxu0
    %v526 = vadd.f32 0.0, %v525
    %v527 = vpop.f32.mrb[0].mxu0
    %v528 = vadd.f32 0.0, %v527
    %v529 = vpop.f32.mrb[0].mxu0
    %v530 = vadd.f32 0.0, %v529
    %v531 = vpop.f32.mrb[0].mxu0
    %v532 = vadd.f32 0.0, %v531
    %533 = vmatprep.mubr.bf16.mxu0 0
    %534 = vmatmul.mubr.bf16.gmra.mrb[0].mxu0 %v261
    %v535 = vpop.f32.mrb[0].mxu0
    %v536 = vadd.f32 0.0, %v535
    %v537 = vpop.f32.mrb[0].mxu0
    %v538 = vadd.f32 0.0, %v537
    %v539 = vpop.f32.mrb[0].mxu0
    %v540 = vadd.f32 0.0, %v539
    %v541 = vpop.f32.mrb[0].mxu0
    %v542 = vadd.f32 0.0, %v541
    %543 = vmatprep.mubr.bf16.mxu0 0
    %544 = vmatmul.mubr.bf16.gmra.mrb[0].mxu0 %v264
    %v545 = vpop.f32.mrb[0].mxu0
    %v546 = vadd.f32 0.0, %v545
    %v547 = vpop.f32.mrb[0].mxu0
    %v548 = vadd.f32 0.0, %v547
    %v549 = vpop.f32.mrb[0].mxu0
    %v550 = vadd.f32 0.0, %v549
    %v551 = vpop.f32.mrb[0].mxu0
    %v552 = vadd.f32 0.0, %v551
    %553 = vmatprep.mubr.bf16.mxu0 0
    %554 = vmatmul.mubr.bf16.gmra.mrb[0].mxu0 %v267
    %v555 = vpop.f32.mrb[0].mxu0
    %v556 = vadd.f32 0.0, %v555
    %v557 = vpop.f32.mrb[0].mxu0
    %v558 = vadd.f32 0.0, %v557
    %v559 = vpop.f32.mrb[0].mxu0
    %v560 = vadd.f32 0.0, %v559
    %v561 = vpop.f32.mrb[0].mxu0
    %v562 = vadd.f32 0.0, %v561
    %563 = vmatprep.mubr.bf16.mxu0 0
    %564 = vmatmul.mubr.bf16.gmra.mrb[0].mxu0 %v270
    %v565 = vpop.f32.mrb[0].mxu0
    %v566 = vadd.f32 0.0, %v565
    %v567 = vpop.f32.mrb[0].mxu0
    %v568 = vadd.f32 0.0, %v567
    %v569 = vpop.f32.mrb[0].mxu0
    %v570 = vadd.f32 0.0, %v569
    %v571 = vpop.f32.mrb[0].mxu0
    %v572 = vadd.f32 0.0, %v571
    %573 = vmatprep.mubr.bf16.mxu0 0
    %574 = vmatmul.mubr.bf16.gmra.mrb[0].mxu0 %v273
    %v575 = vpop.f32.mrb[0].mxu0
    %v576 = vadd.f32 0.0, %v575
    %v577 = vpop.f32.mrb[0].mxu0
    %v578 = vadd.f32 0.0, %v577
    %v579 = vpop.f32.mrb[0].mxu0
    %v580 = vadd.f32 0.0, %v579
    %v581 = vpop.f32.mrb[0].mxu0
    %v582 = vadd.f32 0.0, %v581
    %583 = vmatprep.mubr.bf16.mxu0 0
    %584 = vmatmul.mubr.bf16.gmra.mrb[0].mxu0 %v276
    %v585 = vpop.f32.mrb[0].mxu0
    %v586 = vadd.f32 0.0, %v585
    %v587 = vpop.f32.mrb[0].mxu0
    %v588 = vadd.f32 0.0, %v587
    %v589 = vpop.f32.mrb[0].mxu0
    %v590 = vadd.f32 0.0, %v589
    %v591 = vpop.f32.mrb[0].mxu0
    %v592 = vadd.f32 0.0, %v591
    %593 = vmatprep.mubr.bf16.mxu0 0
    %594 = vmatmul.mubr.bf16.gmra.mrb[0].mxu0 %v279
    %v595 = vpop.f32.mrb[0].mxu0
    %v596 = vadd.f32 0.0, %v595
    %v597 = vpop.f32.mrb[0].mxu0
    %v598 = vadd.f32 0.0, %v597
    %v599 = vpop.f32.mrb[0].mxu0
    %v600 = vadd.f32 0.0, %v599
    %v601 = vpop.f32.mrb[0].mxu0
    %v602 = vadd.f32 0.0, %v601
    %603 = vmatprep.mubr.bf16.mxu0 0
    %604 = vmatmul.mubr.bf16.gmra.mrb[0].mxu0 %v282
    %v605 = vpop.f32.mrb[0].mxu0
    %v606 = vadd.f32 0.0, %v605
    %v607 = vpop.f32.mrb[0].mxu0
    %v608 = vadd.f32 0.0, %v607
    %v609 = vpop.f32.mrb[0].mxu0
    %v610 = vadd.f32 0.0, %v609
    %v611 = vpop.f32.mrb[0].mxu0
    %v612 = vadd.f32 0.0, %v611
    %613 = vmatprep.mubr.bf16.mxu0 0
    %614 = vmatmul.mubr.bf16.gmra.mrb[0].mxu0 %v285
    %v615 = vpop.f32.mrb[0].mxu0
    %v616 = vadd.f32 0.0, %v615
    %v617 = vpop.f32.mrb[0].mxu0
    %v618 = vadd.f32 0.0, %v617
    %v619 = vpop.f32.mrb[0].mxu0
    %v620 = vadd.f32 0.0, %v619
    %v621 = vpop.f32.mrb[0].mxu0
    %v622 = vadd.f32 0.0, %v621
    %623 = vmatprep.mubr.bf16.mxu0 0
    %624 = vmatmul.mubr.bf16.gmra.mrb[0].mxu0 %v288
    %v625 = vpop.f32.mrb[0].mxu0
    %v626 = vadd.f32 0.0, %v625
    %v627 = vpop.f32.mrb[0].mxu0
    %v628 = vadd.f32 0.0, %v627
    %v629 = vpop.f32.mrb[0].mxu0
    %v630 = vadd.f32 0.0, %v629
    %v631 = vpop.f32.mrb[0].mxu0
    %v632 = vadd.f32 0.0, %v631
    %633 = vmatprep.mubr.bf16.mxu0 0
    %634 = vmatmul.mubr.bf16.gmra.mrb[0].mxu0 %v291
    %v635 = vpop.f32.mrb[0].mxu0
    %v636 = vadd.f32 0.0, %v635
    %v637 = vpop.f32.mrb[0].mxu0
    %v638 = vadd.f32 0.0, %v637
    %v639 = vpop.f32.mrb[0].mxu0
    %v640 = vadd.f32 0.0, %v639
    %v641 = vpop.f32.mrb[0].mxu0
    %v642 = vadd.f32 0.0, %v641
    %643 = vmatprep.mubr.bf16.mxu0 0
    %644 = vmatmul.mubr.bf16.gmra.mrb[0].mxu0 %v294
    %v645 = vpop.f32.mrb[0].mxu0
    %v646 = vadd.f32 0.0, %v645
    %v647 = vpop.f32.mrb[0].mxu0
    %v648 = vadd.f32 0.0, %v647
    %v649 = vpop.f32.mrb[0].mxu0
    %v650 = vadd.f32 0.0, %v649
    %v651 = vpop.f32.mrb[0].mxu0
    %v652 = vadd.f32 0.0, %v651
    %653 = vmatprep.mubr.bf16.mxu0 0
    %654 = vmatmul.mubr.bf16.gmra.mrb[0].mxu0 %v297
    %v655 = vpop.f32.mrb[0].mxu0
    %v656 = vadd.f32 0.0, %v655
    %v657 = vpop.f32.mrb[0].mxu0
    %v658 = vadd.f32 0.0, %v657
    %v659 = vpop.f32.mrb[0].mxu0
    %v660 = vadd.f32 0.0, %v659
    %v661 = vpop.f32.mrb[0].mxu0
    %v662 = vadd.f32 0.0, %v661
    %663 = vmatprep.mubr.bf16.mxu0 0
    %664 = vmatmul.mubr.bf16.gmra.mrb[0].mxu0 %v300
    %v665 = vpop.f32.mrb[0].mxu0
    %v666 = vadd.f32 0.0, %v665
    %v667 = vpop.f32.mrb[0].mxu0
    %v668 = vadd.f32 0.0, %v667
    %v669 = vpop.f32.mrb[0].mxu0
    %v670 = vadd.f32 0.0, %v669
    %v671 = vpop.f32.mrb[0].mxu0
    %v672 = vadd.f32 0.0, %v671
    %673 = vmatprep.mubr.bf16.mxu0 0
    %674 = vmatmul.mubr.bf16.gmra.mrb[0].mxu0 %v303
    %v675 = vpop.f32.mrb[0].mxu0
    %v676 = vadd.f32 0.0, %v675
    %v677 = vpop.f32.mrb[0].mxu0
    %v678 = vadd.f32 0.0, %v677
    %v679 = vpop.f32.mrb[0].mxu0
    %v680 = vadd.f32 0.0, %v679
    %v681 = vpop.f32.mrb[0].mxu0
    %v682 = vadd.f32 0.0, %v681
    %683 = vmatprep.mubr.bf16.mxu0 0
    %684 = vmatmul.mubr.bf16.gmra.mrb[0].mxu0 %v306
    %v685 = vpop.f32.mrb[0].mxu0
    %v686 = vadd.f32 0.0, %v685
    %v687 = vpop.f32.mrb[0].mxu0
    %v688 = vadd.f32 0.0, %v687
    %v689 = vpop.f32.mrb[0].mxu0
    %v690 = vadd.f32 0.0, %v689
    %v691 = vpop.f32.mrb[0].mxu0
    %v692 = vadd.f32 0.0, %v691
    %693 = vmatprep.mubr.bf16.mxu0 0
    %694 = vmatmul.mubr.bf16.gmra.mrb[0].mxu0 %v309
    %v695 = vpop.f32.mrb[0].mxu0
    %v696 = vadd.f32 0.0, %v695
    %v697 = vpop.f32.mrb[0].mxu0
    %v698 = vadd.f32 0.0, %v697
    %v699 = vpop.f32.mrb[0].mxu0
    %v700 = vadd.f32 0.0, %v699
    %v701 = vpop.f32.mrb[0].mxu0
    %v702 = vadd.f32 0.0, %v701
    %703 = vmatprep.mubr.bf16.mxu0 0
    %704 = vmatmul.mubr.bf16.gmra.mrb[0].mxu0 %v312
    %v705 = vpop.f32.mrb[0].mxu0
    %v706 = vadd.f32 0.0, %v705
    %v707 = vpop.f32.mrb[0].mxu0
    %v708 = vadd.f32 0.0, %v707
    %v709 = vpop.f32.mrb[0].mxu0
    %v710 = vadd.f32 0.0, %v709
    %v711 = vpop.f32.mrb[0].mxu0
    %v712 = vadd.f32 0.0, %v711
    %713 = vmatprep.mubr.bf16.mxu0 0
    %714 = vmatmul.mubr.bf16.gmra.mrb[0].mxu0 %v315
    %v715 = vpop.f32.mrb[0].mxu0
    %v716 = vadd.f32 0.0, %v715
    %v717 = vpop.f32.mrb[0].mxu0
    %v718 = vadd.f32 0.0, %v717
    %v719 = vpop.f32.mrb[0].mxu0
    %v720 = vadd.f32 0.0, %v719
    %v721 = vpop.f32.mrb[0].mxu0
    %v722 = vadd.f32 0.0, %v721
    %723 = vmatprep.mubr.bf16.mxu0 0
    %724 = vmatmul.mubr.bf16.gmra.mrb[0].mxu0 %v318
    %v725 = vpop.f32.mrb[0].mxu0
    %v726 = vadd.f32 0.0, %v725
    %v727 = vpop.f32.mrb[0].mxu0
    %v728 = vadd.f32 0.0, %v727
    %v729 = vpop.f32.mrb[0].mxu0
    %v730 = vadd.f32 0.0, %v729
    %v731 = vpop.f32.mrb[0].mxu0
    %v732 = vadd.f32 0.0, %v731
    %733 = vmatprep.mubr.bf16.mxu0 0
    %734 = vmatmul.mubr.bf16.gmra.mrb[0].mxu0 %v321
    %v735 = vpop.f32.mrb[0].mxu0
    %v736 = vadd.f32 0.0, %v735
    %v737 = vpop.f32.mrb[0].mxu0
    %v738 = vadd.f32 0.0, %v737
    %v739 = vpop.f32.mrb[0].mxu0
    %v740 = vadd.f32 0.0, %v739
    %v741 = vpop.f32.mrb[0].mxu0
    %v742 = vadd.f32 0.0, %v741
    %743 = vmatprep.mubr.bf16.mxu0 0
    %744 = vmatmul.mubr.bf16.gmra.mrb[0].mxu0 %v324
    %v745 = vpop.f32.mrb[0].mxu0
    %v746 = vadd.f32 0.0, %v745
    %v747 = vpop.f32.mrb[0].mxu0
    %v748 = vadd.f32 0.0, %v747
    %v749 = vpop.f32.mrb[0].mxu0
    %v750 = vadd.f32 0.0, %v749
    %v751 = vpop.f32.mrb[0].mxu0
    %v752 = vadd.f32 0.0, %v751
    %753 = vmatprep.mubr.bf16.mxu0 0
    %754 = vmatmul.mubr.bf16.gmra.mrb[0].mxu0 %v327
    %v755 = vpop.f32.mrb[0].mxu0
    %v756 = vadd.f32 0.0, %v755
    %v757 = vpop.f32.mrb[0].mxu0
    %v758 = vadd.f32 0.0, %v757
    %v759 = vpop.f32.mrb[0].mxu0
    %v760 = vadd.f32 0.0, %v759
    %v761 = vpop.f32.mrb[0].mxu0
    %v762 = vadd.f32 0.0, %v761
    %763 = vmatprep.mubr.bf16.mxu0 0
    %764 = vmatmul.mubr.bf16.gmra.mrb[0].mxu0 %v330
    %v765 = vpop.f32.mrb[0].mxu0
    %v766 = vadd.f32 0.0, %v765
    %v767 = vpop.f32.mrb[0].mxu0
    %v768 = vadd.f32 0.0, %v767
    %v769 = vpop.f32.mrb[0].mxu0
    %v770 = vadd.f32 0.0, %v769
    %v771 = vpop.f32.mrb[0].mxu0
    %v772 = vadd.f32 0.0, %v771
    %773 = vmatprep.mubr.bf16.mxu0 0
    %774 = vmatmul.mubr.bf16.gmra.mrb[0].mxu0 %v333
    %v775 = vpop.f32.mrb[0].mxu0
    %v776 = vadd.f32 0.0, %v775
    %v777 = vpop.f32.mrb[0].mxu0
    %v778 = vadd.f32 0.0, %v777
    %v779 = vpop.f32.mrb[0].mxu0
    %v780 = vadd.f32 0.0, %v779
    %v781 = vpop.f32.mrb[0].mxu0
    %v782 = vadd.f32 0.0, %v781
    %783 = vmatprep.mubr.bf16.mxu0 0
    %784 = vmatmul.mubr.bf16.gmra.mrb[0].mxu0 %v336
    %v785 = vpop.f32.mrb[0].mxu0
    %v786 = vadd.f32 0.0, %v785
    %v787 = vpop.f32.mrb[0].mxu0
    %v788 = vadd.f32 0.0, %v787
    %v789 = vpop.f32.mrb[0].mxu0
    %v790 = vadd.f32 0.0, %v789
    %v791 = vpop.f32.mrb[0].mxu0
    %v792 = vadd.f32 0.0, %v791
    %793 = vmatprep.mubr.bf16.mxu0 0
    %794 = vmatmul.mubr.bf16.gmra.mrb[0].mxu0 %v339
    %v795 = vpop.f32.mrb[0].mxu0
    %v796 = vadd.f32 0.0, %v795
    %v797 = vpop.f32.mrb[0].mxu0
    %v798 = vadd.f32 0.0, %v797
    %v799 = vpop.f32.mrb[0].mxu0
    %v800 = vadd.f32 0.0, %v799
    %v801 = vpop.f32.mrb[0].mxu0
    %v802 = vadd.f32 0.0, %v801
    %803 = vmatprep.mubr.bf16.mxu0 0
    %804 = vmatmul.mubr.bf16.gmra.mrb[0].mxu0 %v342
    %v805 = vpop.f32.mrb[0].mxu0
    %v806 = vadd.f32 0.0, %v805
    %v807 = vpop.f32.mrb[0].mxu0
    %v808 = vadd.f32 0.0, %v807
    %v809 = vpop.f32.mrb[0].mxu0
    %v810 = vadd.f32 0.0, %v809
    %v811 = vpop.f32.mrb[0].mxu0
    %v812 = vadd.f32 0.0, %v811
    %813 = vmatprep.mubr.bf16.mxu0 0
    %814 = vmatmul.mubr.bf16.gmra.mrb[0].mxu0 %v345
    %v815 = vpop.f32.mrb[0].mxu0
    %v816 = vadd.f32 0.0, %v815
    %v817 = vpop.f32.mrb[0].mxu0
    %v818 = vadd.f32 0.0, %v817
    %v819 = vpop.f32.mrb[0].mxu0
    %v820 = vadd.f32 0.0, %v819
    %v821 = vpop.f32.mrb[0].mxu0
    %v822 = vadd.f32 0.0, %v821
    %823 = vmatprep.mubr.bf16.mxu0 0
    %824 = vmatmul.mubr.bf16.gmra.mrb[0].mxu0 %v348
    %v825 = vpop.f32.mrb[0].mxu0
    %v826 = vadd.f32 0.0, %v825
    %v827 = vpop.f32.mrb[0].mxu0
    %v828 = vadd.f32 0.0, %v827
    %v829 = vpop.f32.mrb[0].mxu0
    %v830 = vadd.f32 0.0, %v829
    %v831 = vpop.f32.mrb[0].mxu0
    %v832 = vadd.f32 0.0, %v831
    %833 = vmatprep.mubr.bf16.mxu0 0
    %834 = vmatmul.mubr.bf16.gmra.mrb[0].mxu0 %v351
    %v835 = vpop.f32.mrb[0].mxu0
    %v836 = vadd.f32 0.0, %v835
    %v837 = vpop.f32.mrb[0].mxu0
    %v838 = vadd.f32 0.0, %v837
    %v839 = vpop.f32.mrb[0].mxu0
    %v840 = vadd.f32 0.0, %v839
    %v841 = vpop.f32.mrb[0].mxu0
    %v842 = vadd.f32 0.0, %v841
    %843 = vmatprep.mubr.bf16.mxu0 0
    %844 = vmatmul.mubr.bf16.gmra.mrb[0].mxu0 %v354
    %v845 = vpop.f32.mrb[0].mxu0
    %v846 = vadd.f32 0.0, %v845
    %v847 = vpop.f32.mrb[0].mxu0
    %v848 = vadd.f32 0.0, %v847
    %v849 = vpop.f32.mrb[0].mxu0
    %v850 = vadd.f32 0.0, %v849
    %v851 = vpop.f32.mrb[0].mxu0
    %v852 = vadd.f32 0.0, %v851
    %853 = vmatprep.mubr.bf16.mxu0 0
    %854 = vmatmul.mubr.bf16.gmra.mrb[0].mxu0 %v357
    %v855 = vpop.f32.mrb[0].mxu0
    %v856 = vadd.f32 0.0, %v855
    %v857 = vpop.f32.mrb[0].mxu0
    %v858 = vadd.f32 0.0, %v857
    %v859 = vpop.f32.mrb[0].mxu0
    %v860 = vadd.f32 0.0, %v859
    %v861 = vpop.f32.mrb[0].mxu0
    %v862 = vadd.f32 0.0, %v861
    %863 = vmatprep.mubr.bf16.mxu0 0
    %864 = vmatmul.mubr.bf16.gmra.mrb[0].mxu0 %v360
    %v865 = vpop.f32.mrb[0].mxu0
    %v866 = vadd.f32 0.0, %v865
    %v867 = vpop.f32.mrb[0].mxu0
    %v868 = vadd.f32 0.0, %v867
    %v869 = vpop.f32.mrb[0].mxu0
    %v870 = vadd.f32 0.0, %v869
    %v871 = vpop.f32.mrb[0].mxu0
    %v872 = vadd.f32 0.0, %v871
    %873 = vmatprep.mubr.bf16.mxu0 0
    %874 = vmatmul.mubr.bf16.gmra.mrb[0].mxu0 %v363
    %v875 = vpop.f32.mrb[0].mxu0
    %v876 = vadd.f32 0.0, %v875
    %v877 = vpop.f32.mrb[0].mxu0
    %v878 = vadd.f32 0.0, %v877
    %v879 = vpop.f32.mrb[0].mxu0
    %v880 = vadd.f32 0.0, %v879
    %v881 = vpop.f32.mrb[0].mxu0
    %v882 = vadd.f32 0.0, %v881
    %883 = vmatprep.mubr.bf16.mxu0 0
    %884 = vmatmul.mubr.bf16.gmra.mrb[0].mxu0 %v366
    %v885 = vpop.f32.mrb[0].mxu0
    %v886 = vadd.f32 0.0, %v885
    %v887 = vpop.f32.mrb[0].mxu0
    %v888 = vadd.f32 0.0, %v887
    %v889 = vpop.f32.mrb[0].mxu0
    %v890 = vadd.f32 0.0, %v889
    %v891 = vpop.f32.mrb[0].mxu0
    %v892 = vadd.f32 0.0, %v891
    %893 = vmatprep.mubr.bf16.mxu0 0
    %894 = vmatmul.mubr.bf16.gmra.mrb[0].mxu0 %v369
    %v895 = vpop.f32.mrb[0].mxu0
    %v896 = vadd.f32 0.0, %v895
    %v897 = vpop.f32.mrb[0].mxu0
    %v898 = vadd.f32 0.0, %v897
    %v899 = vpop.f32.mrb[0].mxu0
    %v900 = vadd.f32 0.0, %v899
    %v901 = vpop.f32.mrb[0].mxu0
    %v902 = vadd.f32 0.0, %v901
    %903 = vmatprep.mubr.bf16.mxu0 0
    %904 = vmatmul.mubr.bf16.gmra.mrb[0].mxu0 %v372
    %v905 = vpop.f32.mrb[0].mxu0
    %v906 = vadd.f32 0.0, %v905
    %v907 = vpop.f32.mrb[0].mxu0
    %v908 = vadd.f32 0.0, %v907
    %v909 = vpop.f32.mrb[0].mxu0
    %v910 = vadd.f32 0.0, %v909
    %v911 = vpop.f32.mrb[0].mxu0
    %v912 = vadd.f32 0.0, %v911
    %913 = vmatprep.mubr.bf16.mxu0 0
    %914 = vmatmul.mubr.bf16.gmra.mrb[0].mxu0 %v375
    %v915 = vpop.f32.mrb[0].mxu0
    %v916 = vadd.f32 0.0, %v915
    %v917 = vpop.f32.mrb[0].mxu0
    %v918 = vadd.f32 0.0, %v917
    %v919 = vpop.f32.mrb[0].mxu0
    %v920 = vadd.f32 0.0, %v919
    %v921 = vpop.f32.mrb[0].mxu0
    %v922 = vadd.f32 0.0, %v921
    %923 = vmatprep.mubr.bf16.mxu0 0
    %924 = vmatmul.mubr.bf16.gmra.mrb[0].mxu0 %v378
    %v925 = vpop.f32.mrb[0].mxu0
    %v926 = vadd.f32 0.0, %v925
    %v927 = vpop.f32.mrb[0].mxu0
    %v928 = vadd.f32 0.0, %v927
    %v929 = vpop.f32.mrb[0].mxu0
    %v930 = vadd.f32 0.0, %v929
    %v931 = vpop.f32.mrb[0].mxu0
    %v932 = vadd.f32 0.0, %v931
    %933 = vmatprep.mubr.bf16.mxu0 0
    %934 = vmatmul.mubr.bf16.gmra.mrb[0].mxu0 %v381
    %v935 = vpop.f32.mrb[0].mxu0
    %v936 = vadd.f32 0.0, %v935
    %v937 = vpop.f32.mrb[0].mxu0
    %v938 = vadd.f32 0.0, %v937
    %v939 = vpop.f32.mrb[0].mxu0
    %v940 = vadd.f32 0.0, %v939
    %v941 = vpop.f32.mrb[0].mxu0
    %v942 = vadd.f32 0.0, %v941
    %943 = vmatprep.mubr.bf16.mxu0 0
    %944 = vmatmul.mubr.bf16.gmra.mrb[0].mxu0 %v384
    %v945 = vpop.f32.mrb[0].mxu0
    %v946 = vadd.f32 0.0, %v945
    %v947 = vpop.f32.mrb[0].mxu0
    %v948 = vadd.f32 0.0, %v947
    %v949 = vpop.f32.mrb[0].mxu0
    %v950 = vadd.f32 0.0, %v949
    %v951 = vpop.f32.mrb[0].mxu0
    %v952 = vadd.f32 0.0, %v951
    %953 = vmatprep.mubr.bf16.mxu0 0
    %954 = vmatmul.mubr.bf16.gmra.mrb[0].mxu0 %v387
    %v955 = vpop.f32.mrb[0].mxu0
    %v956 = vadd.f32 0.0, %v955
    %v957 = vpop.f32.mrb[0].mxu0
    %v958 = vadd.f32 0.0, %v957
    %v959 = vpop.f32.mrb[0].mxu0
    %v960 = vadd.f32 0.0, %v959
    %v961 = vpop.f32.mrb[0].mxu0
    %v962 = vadd.f32 0.0, %v961
    %963 = vmatprep.mubr.bf16.mxu0 0
    %964 = vmatmul.mubr.bf16.gmra.mrb[0].mxu0 %v390
    %v965 = vpop.f32.mrb[0].mxu0
    %v966 = vadd.f32 0.0, %v965
    %v967 = vpop.f32.mrb[0].mxu0
    %v968 = vadd.f32 0.0, %v967
    %v969 = vpop.f32.mrb[0].mxu0
    %v970 = vadd.f32 0.0, %v969
    %v971 = vpop.f32.mrb[0].mxu0
    %v972 = vadd.f32 0.0, %v971
    %973 = vmatprep.mubr.bf16.mxu0 0
    %974 = vmatmul.mubr.bf16.gmra.mrb[0].mxu0 %v393
    %v975 = vpop.f32.mrb[0].mxu0
    %v976 = vadd.f32 0.0, %v975
    %v977 = vpop.f32.mrb[0].mxu0
    %v978 = vadd.f32 0.0, %v977
    %v979 = vpop.f32.mrb[0].mxu0
    %v980 = vadd.f32 0.0, %v979
    %v981 = vpop.f32.mrb[0].mxu0
    %v982 = vadd.f32 0.0, %v981
    %983 = vmatprep.mubr.bf16.mxu0 0
    %984 = vmatmul.mubr.bf16.gmra.mrb[0].mxu0 %v396
    %v985 = vpop.f32.mrb[0].mxu0
    %v986 = vadd.f32 0.0, %v985
    %v987 = vpop.f32.mrb[0].mxu0
    %v988 = vadd.f32 0.0, %v987
    %v989 = vpop.f32.mrb[0].mxu0
    %v990 = vadd.f32 0.0, %v989
    %v991 = vpop.f32.mrb[0].mxu0
    %v992 = vadd.f32 0.0, %v991
    %993 = vmatprep.mubr.bf16.mxu0 0
    %994 = vmatmul.mubr.bf16.gmra.mrb[0].mxu0 %v399
    %v995 = vpop.f32.mrb[0].mxu0
    %v996 = vadd.f32 0.0, %v995
    %v997 = vpop.f32.mrb[0].mxu0
    %v998 = vadd.f32 0.0, %v997
    %v999 = vpop.f32.mrb[0].mxu0
    %v1000 = vadd.f32 0.0, %v999
    %v1001 = vpop.f32.mrb[0].mxu0
    %v1002 = vadd.f32 0.0, %v1001
    %1003 = vmatprep.mubr.bf16.mxu0 0
    %1004 = vmatmul.mubr.bf16.gmra.mrb[0].mxu0 %v402
    %v1005 = vpop.f32.mrb[0].mxu0
    %v1006 = vadd.f32 0.0, %v1005
    %v1007 = vpop.f32.mrb[0].mxu0
    %v1008 = vadd.f32 0.0, %v1007
    %v1009 = vpop.f32.mrb[0].mxu0
    %v1010 = vadd.f32 0.0, %v1009
    %v1011 = vpop.f32.mrb[0].mxu0
    %v1012 = vadd.f32 0.0, %v1011
    %1013 = vmatprep.mubr.bf16.mxu0 0
    %1014 = vmatmul.mubr.bf16.gmra.mrb[0].mxu0 %v405
    %v1015 = vpop.f32.mrb[0].mxu0
    %v1016 = vadd.f32 0.0, %v1015
    %v1017 = vpop.f32.mrb[0].mxu0
    %v1018 = vadd.f32 0.0, %v1017
    %v1019 = vpop.f32.mrb[0].mxu0
    %v1020 = vadd.f32 0.0, %v1019
    %v1021 = vpop.f32.mrb[0].mxu0
    %v1022 = vadd.f32 0.0, %v1021
    %1023 = vmatprep.mubr.bf16.mxu0 0
    %1024 = vmatmul.mubr.bf16.gmra.mrb[0].mxu0 %v408
    %v1025 = vpop.f32.mrb[0].mxu0
    %v1026 = vadd.f32 0.0, %v1025
    %v1027 = vpop.f32.mrb[0].mxu0
    %v1028 = vadd.f32 0.0, %v1027
    %v1029 = vpop.f32.mrb[0].mxu0
    %v1030 = vadd.f32 0.0, %v1029
    %v1031 = vpop.f32.mrb[0].mxu0
    %v1032 = vadd.f32 0.0, %v1031
    %1033 = vmatprep.mubr.bf16.mxu0 0
    %1034 = vmatmul.mubr.bf16.gmra.mrb[0].mxu0 %v411
    %v1035 = vpop.f32.mrb[0].mxu0
    %v1036 = vadd.f32 0.0, %v1035
    %v1037 = vpop.f32.mrb[0].mxu0
    %v1038 = vadd.f32 0.0, %v1037
    %v1039 = vpop.f32.mrb[0].mxu0
    %v1040 = vadd.f32 0.0, %v1039
    %v1041 = vpop.f32.mrb[0].mxu0
    %v1042 = vadd.f32 0.0, %v1041
    %1043 = vmatprep.mubr.bf16.mxu0 0
    %1044 = vmatmul.mubr.bf16.gmra.mrb[0].mxu0 %v414
    %v1045 = vpop.f32.mrb[0].mxu0
    %v1046 = vadd.f32 0.0, %v1045
    %v1047 = vpop.f32.mrb[0].mxu0
    %v1048 = vadd.f32 0.0, %v1047
    %v1049 = vpop.f32.mrb[0].mxu0
    %v1050 = vadd.f32 0.0, %v1049
    %v1051 = vpop.f32.mrb[0].mxu0
    %v1052 = vadd.f32 0.0, %v1051
    %1053 = vmatprep.mubr.bf16.mxu0 0
    %1054 = vmatmul.mubr.bf16.gmra.mrb[0].mxu0 %v417
    %v1055 = vpop.f32.mrb[0].mxu0
    %v1056 = vadd.f32 0.0, %v1055
    %v1057 = vpop.f32.mrb[0].mxu0
    %v1058 = vadd.f32 0.0, %v1057
    %v1059 = vpop.f32.mrb[0].mxu0
    %v1060 = vadd.f32 0.0, %v1059
    %v1061 = vpop.f32.mrb[0].mxu0
    %v1062 = vadd.f32 0.0, %v1061
    %1063 = vmatprep.mubr.bf16.mxu0 0
    %1064 = vmatmul.mubr.bf16.gmra.mrb[0].mxu0 %v420
    %v1065 = vpop.f32.mrb[0].mxu0
    %v1066 = vadd.f32 0.0, %v1065
    %v1067 = vpop.f32.mrb[0].mxu0
    %v1068 = vadd.f32 0.0, %v1067
    %v1069 = vpop.f32.mrb[0].mxu0
    %v1070 = vadd.f32 0.0, %v1069
    %v1071 = vpop.f32.mrb[0].mxu0
    %v1072 = vadd.f32 0.0, %v1071
    %1073 = vmatprep.mubr.bf16.mxu0 0
    %1074 = vmatmul.mubr.bf16.gmra.mrb[0].mxu0 %v423
    %v1075 = vpop.f32.mrb[0].mxu0
    %v1076 = vadd.f32 0.0, %v1075
    %v1077 = vpop.f32.mrb[0].mxu0
    %v1078 = vadd.f32 0.0, %v1077
    %v1079 = vpop.f32.mrb[0].mxu0
    %v1080 = vadd.f32 0.0, %v1079
    %v1081 = vpop.f32.mrb[0].mxu0
    %v1082 = vadd.f32 0.0, %v1081
    %1083 = vmatprep.mubr.bf16.mxu0 0
    %1084 = vmatmul.mubr.bf16.gmra.mrb[0].mxu0 %v426
    %v1085 = vpop.f32.mrb[0].mxu0
    %v1086 = vadd.f32 0.0, %v1085
    %v1087 = vpop.f32.mrb[0].mxu0
    %v1088 = vadd.f32 0.0, %v1087
    %v1089 = vpop.f32.mrb[0].mxu0
    %v1090 = vadd.f32 0.0, %v1089
    %v1091 = vpop.f32.mrb[0].mxu0
    %v1092 = vadd.f32 0.0, %v1091
    %1093 = vmatprep.mubr.bf16.mxu0 0
    %1094 = vmatmul.mubr.bf16.gmra.mrb[0].mxu0 %v429
    %v1095 = vpop.f32.mrb[0].mxu0
    %v1096 = vadd.f32 0.0, %v1095
    %v1097 = vpop.f32.mrb[0].mxu0
    %v1098 = vadd.f32 0.0, %v1097
    %v1099 = vpop.f32.mrb[0].mxu0
    %v1100 = vadd.f32 0.0, %v1099
    %v1101 = vpop.f32.mrb[0].mxu0
    %v1102 = vadd.f32 0.0, %v1101
    %1103 = vmatprep.mubr.bf16.mxu0 0
    %1104 = vmatmul.mubr.bf16.gmra.mrb[0].mxu0 %v432
    %v1105 = vpop.f32.mrb[0].mxu0
    %v1106 = vadd.f32 0.0, %v1105
    %v1107 = vpop.f32.mrb[0].mxu0
    %v1108 = vadd.f32 0.0, %v1107
    %v1109 = vpop.f32.mrb[0].mxu0
    %v1110 = vadd.f32 0.0, %v1109
    %v1111 = vpop.f32.mrb[0].mxu0
    %v1112 = vadd.f32 0.0, %v1111
    %1113 = vdwg.mxu0
    %v1114 = vpack.c.bf16 %v480, %v476
    %v1115 = vpack.c.bf16 %v482, %v478
    %v1116 = vpack.c.bf16 %v490, %v486
    %v1117 = vpack.c.bf16 %v492, %v488
    %v1118 = vpack.c.bf16 %v500, %v496
    %v1119 = vpack.c.bf16 %v502, %v498
    %v1120 = vpack.c.bf16 %v510, %v506
    %v1121 = vpack.c.bf16 %v512, %v508
    %v1122 = vpack.c.bf16 %v520, %v516
    %v1123 = vpack.c.bf16 %v522, %v518
    %v1124 = vpack.c.bf16 %v530, %v526
    %v1125 = vpack.c.bf16 %v532, %v528
    %v1126 = vpack.c.bf16 %v540, %v536
    %v1127 = vpack.c.bf16 %v542, %v538
    %v1128 = vpack.c.bf16 %v550, %v546
    %v1129 = vpack.c.bf16 %v552, %v548
    %v1130 = vpack.c.bf16 %v560, %v556
    %v1131 = vpack.c.bf16 %v562, %v558
    %v1132 = vpack.c.bf16 %v570, %v566
    %v1133 = vpack.c.bf16 %v572, %v568
    %v1134 = vpack.c.bf16 %v580, %v576
    %v1135 = vpack.c.bf16 %v582, %v578
    %v1136 = vpack.c.bf16 %v590, %v586
    %v1137 = vpack.c.bf16 %v592, %v588
    %v1138 = vpack.c.bf16 %v600, %v596
    %v1139 = vpack.c.bf16 %v602, %v598
    %v1140 = vpack.c.bf16 %v610, %v606
    %v1141 = vpack.c.bf16 %v612, %v608
    %v1142 = vpack.c.bf16 %v620, %v616
    %v1143 = vpack.c.bf16 %v622, %v618
    %v1144 = vpack.c.bf16 %v630, %v626
    %v1145 = vpack.c.bf16 %v632, %v628
    %v1146 = vpack.c.bf16 %v640, %v636
    %v1147 = vpack.c.bf16 %v642, %v638
    %v1148 = vpack.c.bf16 %v650, %v646
    %v1149 = vpack.c.bf16 %v652, %v648
    %v1150 = vpack.c.bf16 %v660, %v656
    %v1151 = vpack.c.bf16 %v662, %v658
    %v1152 = vpack.c.bf16 %v670, %v666
    %v1153 = vpack.c.bf16 %v672, %v668
    %v1154 = vpack.c.bf16 %v680, %v676
    %v1155 = vpack.c.bf16 %v682, %v678
    %v1156 = vpack.c.bf16 %v690, %v686
    %v1157 = vpack.c.bf16 %v692, %v688
    %v1158 = vpack.c.bf16 %v700, %v696
    %v1159 = vpack.c.bf16 %v702, %v698
    %v1160 = vpack.c.bf16 %v710, %v706
    %v1161 = vpack.c.bf16 %v712, %v708
    %v1162 = vpack.c.bf16 %v720, %v716
    %v1163 = vpack.c.bf16 %v722, %v718
    %v1164 = vpack.c.bf16 %v730, %v726
    %v1165 = vpack.c.bf16 %v732, %v728
    %v1166 = vpack.c.bf16 %v740, %v736
    %v1167 = vpack.c.bf16 %v742, %v738
    %v1168 = vpack.c.bf16 %v750, %v746
    %v1169 = vpack.c.bf16 %v752, %v748
    %v1170 = vpack.c.bf16 %v760, %v756
    %v1171 = vpack.c.bf16 %v762, %v758
    %v1172 = vpack.c.bf16 %v770, %v766
    %v1173 = vpack.c.bf16 %v772, %v768
    %v1174 = vpack.c.bf16 %v780, %v776
    %v1175 = vpack.c.bf16 %v782, %v778
    %v1176 = vpack.c.bf16 %v790, %v786
    %v1177 = vpack.c.bf16 %v792, %v788
    %v1178 = vpack.c.bf16 %v800, %v796
    %v1179 = vpack.c.bf16 %v802, %v798
    %v1180 = vpack.c.bf16 %v810, %v806
    %v1181 = vpack.c.bf16 %v812, %v808
    %v1182 = vpack.c.bf16 %v820, %v816
    %v1183 = vpack.c.bf16 %v822, %v818
    %v1184 = vpack.c.bf16 %v830, %v826
    %v1185 = vpack.c.bf16 %v832, %v828
    %v1186 = vpack.c.bf16 %v840, %v836
    %v1187 = vpack.c.bf16 %v842, %v838
    %v1188 = vpack.c.bf16 %v850, %v846
    %v1189 = vpack.c.bf16 %v852, %v848
    %v1190 = vpack.c.bf16 %v860, %v856
    %v1191 = vpack.c.bf16 %v862, %v858
    %v1192 = vpack.c.bf16 %v870, %v866
    %v1193 = vpack.c.bf16 %v872, %v868
    %v1194 = vpack.c.bf16 %v880, %v876
    %v1195 = vpack.c.bf16 %v882, %v878
    %v1196 = vpack.c.bf16 %v890, %v886
    %v1197 = vpack.c.bf16 %v892, %v888
    %v1198 = vpack.c.bf16 %v900, %v896
    %v1199 = vpack.c.bf16 %v902, %v898
    %v1200 = vpack.c.bf16 %v910, %v906
    %v1201 = vpack.c.bf16 %v912, %v908
    %v1202 = vpack.c.bf16 %v920, %v916
    %v1203 = vpack.c.bf16 %v922, %v918
    %v1204 = vpack.c.bf16 %v930, %v926
    %v1205 = vpack.c.bf16 %v932, %v928
    %v1206 = vpack.c.bf16 %v940, %v936
    %v1207 = vpack.c.bf16 %v942, %v938
    %v1208 = vpack.c.bf16 %v950, %v946
    %v1209 = vpack.c.bf16 %v952, %v948
    %v1210 = vpack.c.bf16 %v960, %v956
    %v1211 = vpack.c.bf16 %v962, %v958
    %v1212 = vpack.c.bf16 %v970, %v966
    %v1213 = vpack.c.bf16 %v972, %v968
    %v1214 = vpack.c.bf16 %v980, %v976
    %v1215 = vpack.c.bf16 %v982, %v978
    %v1216 = vpack.c.bf16 %v990, %v986
    %v1217 = vpack.c.bf16 %v992, %v988
    %v1218 = vpack.c.bf16 %v1000, %v996
    %v1219 = vpack.c.bf16 %v1002, %v998
    %v1220 = vpack.c.bf16 %v1010, %v1006
    %v1221 = vpack.c.bf16 %v1012, %v1008
    %v1222 = vpack.c.bf16 %v1020, %v1016
    %v1223 = vpack.c.bf16 %v1022, %v1018
    %v1224 = vpack.c.bf16 %v1030, %v1026
    %v1225 = vpack.c.bf16 %v1032, %v1028
    %v1226 = vpack.c.bf16 %v1040, %v1036
    %v1227 = vpack.c.bf16 %v1042, %v1038
    %v1228 = vpack.c.bf16 %v1050, %v1046
    %v1229 = vpack.c.bf16 %v1052, %v1048
    %v1230 = vpack.c.bf16 %v1060, %v1056
    %v1231 = vpack.c.bf16 %v1062, %v1058
    %v1232 = vpack.c.bf16 %v1070, %v1066
    %v1233 = vpack.c.bf16 %v1072, %v1068
    %v1234 = vpack.c.bf16 %v1080, %v1076
    %v1235 = vpack.c.bf16 %v1082, %v1078
    %v1236 = vpack.c.bf16 %v1090, %v1086
    %v1237 = vpack.c.bf16 %v1092, %v1088
    %v1238 = vpack.c.bf16 %v1100, %v1096
    %v1239 = vpack.c.bf16 %v1102, %v1098
    %v1240 = vpack.c.bf16 %v1110, %v1106
    %v1241 = vpack.c.bf16 %v1112, %v1108
    %v1242 = vld [vmem:[%s2] sm:$0x3]
    %v1245 = vunpack.c.l.s4 1966171168
    %v1246 = vunpack.c.0.s8 %v1245
    %v1247 = vlaneseq
    %v1248 = vshrl.u32 %v1247, 7
    %v1249 = vsub.s32 %v1246, %v1248
    %v1250 = vrot.slane %v1242, %v1249
    %v1251 = vcombine.high %v1250, %v1250
    %v1253 = vunpack.c.l.s4 1966171168
    %v1254 = vunpack.c.0.s8 %v1253
    %v1255 = vlaneseq
    %v1256 = vshrl.u32 %v1255, 7
    %v1257 = vsub.s32 %v1254, %v1256
    %v1258 = vrot.slane %v1250, %v1257
    %v1260 = vunpack.c.l.s4 1966171168
    %v1261 = vunpack.c.0.s8 %v1260
    %v1262 = vlaneseq
    %v1263 = vshrl.u32 %v1262, 7
    %v1264 = vsub.s32 %v1261, %v1263
    %v1265 = vrot.slane %v1251, %v1264
    %v1267 = vpack.i.b16 %v1258, %v1258
    %v1269 = vlaneseq
    %v1270 = vshrl.u32 %v1269, 7
    %v1271 = vsub.s32 0, %v1270
    %v1272 = vrot.slane %v1267, %v1271
    %v1274 = vpack.i.b16 %v1265, %v1265
    %v1276 = vlaneseq
    %v1277 = vshrl.u32 %v1276, 7
    %v1278 = vsub.s32 0, %v1277
    %v1279 = vrot.slane %v1274, %v1278
    %v1280 = vadd.bf16 %v1114, %v1272
    %v1281 = vadd.bf16 %v1115, %v1279
    %v1282 = vadd.bf16 %v1116, %v1272
    %v1283 = vadd.bf16 %v1117, %v1279
    %v1284 = vadd.bf16 %v1118, %v1272
    %v1285 = vadd.bf16 %v1119, %v1279
    %v1286 = vadd.bf16 %v1120, %v1272
    %v1287 = vadd.bf16 %v1121, %v1279
    %v1288 = vadd.bf16 %v1122, %v1272
    %v1289 = vadd.bf16 %v1123, %v1279
    %v1290 = vadd.bf16 %v1124, %v1272
    %v1291 = vadd.bf16 %v1125, %v1279
    %v1292 = vadd.bf16 %v1126, %v1272
    %v1293 = vadd.bf16 %v1127, %v1279
    %v1294 = vadd.bf16 %v1128, %v1272
    %v1295 = vadd.bf16 %v1129, %v1279
    %v1296 = vadd.bf16 %v1130, %v1272
    %v1297 = vadd.bf16 %v1131, %v1279
    %v1298 = vadd.bf16 %v1132, %v1272
    %v1299 = vadd.bf16 %v1133, %v1279
    %v1300 = vadd.bf16 %v1134, %v1272
    %v1301 = vadd.bf16 %v1135, %v1279
    %v1302 = vadd.bf16 %v1136, %v1272
    %v1303 = vadd.bf16 %v1137, %v1279
    %v1304 = vadd.bf16 %v1138, %v1272
    %v1305 = vadd.bf16 %v1139, %v1279
    %v1306 = vadd.bf16 %v1140, %v1272
    %v1307 = vadd.bf16 %v1141, %v1279
    %v1308 = vadd.bf16 %v1142, %v1272
    %v1309 = vadd.bf16 %v1143, %v1279
    %v1310 = vadd.bf16 %v1144, %v1272
    %v1311 = vadd.bf16 %v1145, %v1279
    %v1312 = vadd.bf16 %v1146, %v1272
    %v1313 = vadd.bf16 %v1147, %v1279
    %v1314 = vadd.bf16 %v1148, %v1272
    %v1315 = vadd.bf16 %v1149, %v1279
    %v1316 = vadd.bf16 %v1150, %v1272
    %v1317 = vadd.bf16 %v1151, %v1279
    %v1318 = vadd.bf16 %v1152, %v1272
    %v1319 = vadd.bf16 %v1153, %v1279
    %v1320 = vadd.bf16 %v1154, %v1272
    %v1321 = vadd.bf16 %v1155, %v1279
    %v1322 = vadd.bf16 %v1156, %v1272
    %v1323 = vadd.bf16 %v1157, %v1279
    %v1324 = vadd.bf16 %v1158, %v1272
    %v1325 = vadd.bf16 %v1159, %v1279
    %v1326 = vadd.bf16 %v1160, %v1272
    %v1327 = vadd.bf16 %v1161, %v1279
    %v1328 = vadd.bf16 %v1162, %v1272
    %v1329 = vadd.bf16 %v1163, %v1279
    %v1330 = vadd.bf16 %v1164, %v1272
    %v1331 = vadd.bf16 %v1165, %v1279
    %v1332 = vadd.bf16 %v1166, %v1272
    %v1333 = vadd.bf16 %v1167, %v1279
    %v1334 = vadd.bf16 %v1168, %v1272
    %v1335 = vadd.bf16 %v1169, %v1279
    %v1336 = vadd.bf16 %v1170, %v1272
    %v1337 = vadd.bf16 %v1171, %v1279
    %v1338 = vadd.bf16 %v1172, %v1272
    %v1339 = vadd.bf16 %v1173, %v1279
    %v1340 = vadd.bf16 %v1174, %v1272
    %v1341 = vadd.bf16 %v1175, %v1279
    %v1342 = vadd.bf16 %v1176, %v1272
    %v1343 = vadd.bf16 %v1177, %v1279
    %v1344 = vadd.bf16 %v1178, %v1272
    %v1345 = vadd.bf16 %v1179, %v1279
    %v1346 = vadd.bf16 %v1180, %v1272
    %v1347 = vadd.bf16 %v1181, %v1279
    %v1348 = vadd.bf16 %v1182, %v1272
    %v1349 = vadd.bf16 %v1183, %v1279
    %v1350 = vadd.bf16 %v1184, %v1272
    %v1351 = vadd.bf16 %v1185, %v1279
    %v1352 = vadd.bf16 %v1186, %v1272
    %v1353 = vadd.bf16 %v1187, %v1279
    %v1354 = vadd.bf16 %v1188, %v1272
    %v1355 = vadd.bf16 %v1189, %v1279
    %v1356 = vadd.bf16 %v1190, %v1272
    %v1357 = vadd.bf16 %v1191, %v1279
    %v1358 = vadd.bf16 %v1192, %v1272
    %v1359 = vadd.bf16 %v1193, %v1279
    %v1360 = vadd.bf16 %v1194, %v1272
    %v1361 = vadd.bf16 %v1195, %v1279
    %v1362 = vadd.bf16 %v1196, %v1272
    %v1363 = vadd.bf16 %v1197, %v1279
    %v1364 = vadd.bf16 %v1198, %v1272
    %v1365 = vadd.bf16 %v1199, %v1279
    %v1366 = vadd.bf16 %v1200, %v1272
    %v1367 = vadd.bf16 %v1201, %v1279
    %v1368 = vadd.bf16 %v1202, %v1272
    %v1369 = vadd.bf16 %v1203, %v1279
    %v1370 = vadd.bf16 %v1204, %v1272
    %v1371 = vadd.bf16 %v1205, %v1279
    %v1372 = vadd.bf16 %v1206, %v1272
    %v1373 = vadd.bf16 %v1207, %v1279
    %v1374 = vadd.bf16 %v1208, %v1272
    %v1375 = vadd.bf16 %v1209, %v1279
    %v1376 = vadd.bf16 %v1210, %v1272
    %v1377 = vadd.bf16 %v1211, %v1279
    %v1378 = vadd.bf16 %v1212, %v1272
    %v1379 = vadd.bf16 %v1213, %v1279
    %v1380 = vadd.bf16 %v1214, %v1272
    %v1381 = vadd.bf16 %v1215, %v1279
    %v1382 = vadd.bf16 %v1216, %v1272
    %v1383 = vadd.bf16 %v1217, %v1279
    %v1384 = vadd.bf16 %v1218, %v1272
    %v1385 = vadd.bf16 %v1219, %v1279
    %v1386 = vadd.bf16 %v1220, %v1272
    %v1387 = vadd.bf16 %v1221, %v1279
    %v1388 = vadd.bf16 %v1222, %v1272
    %v1389 = vadd.bf16 %v1223, %v1279
    %v1390 = vadd.bf16 %v1224, %v1272
    %v1391 = vadd.bf16 %v1225, %v1279
    %v1392 = vadd.bf16 %v1226, %v1272
    %v1393 = vadd.bf16 %v1227, %v1279
    %v1394 = vadd.bf16 %v1228, %v1272
    %v1395 = vadd.bf16 %v1229, %v1279
    %v1396 = vadd.bf16 %v1230, %v1272
    %v1397 = vadd.bf16 %v1231, %v1279
    %v1398 = vadd.bf16 %v1232, %v1272
    %v1399 = vadd.bf16 %v1233, %v1279
    %v1400 = vadd.bf16 %v1234, %v1272
    %v1401 = vadd.bf16 %v1235, %v1279
    %v1402 = vadd.bf16 %v1236, %v1272
    %v1403 = vadd.bf16 %v1237, %v1279
    %v1404 = vadd.bf16 %v1238, %v1272
    %v1405 = vadd.bf16 %v1239, %v1279
    %v1406 = vadd.bf16 %v1240, %v1272
    %v1407 = vadd.bf16 %v1241, %v1279
    %v1408 = vmax.bf16 %v1280, 0
    %v1409 = vmax.bf16 %v1281, 0
    %v1410 = vmax.bf16 %v1282, 0
    %v1411 = vmax.bf16 %v1283, 0
    %v1412 = vmax.bf16 %v1284, 0
    %v1413 = vmax.bf16 %v1285, 0
    %v1414 = vmax.bf16 %v1286, 0
    %v1415 = vmax.bf16 %v1287, 0
    %v1416 = vmax.bf16 %v1288, 0
    %v1417 = vmax.bf16 %v1289, 0
    %v1418 = vmax.bf16 %v1290, 0
    %v1419 = vmax.bf16 %v1291, 0
    %v1420 = vmax.bf16 %v1292, 0
    %v1421 = vmax.bf16 %v1293, 0
    %v1422 = vmax.bf16 %v1294, 0
    %v1423 = vmax.bf16 %v1295, 0
    %v1424 = vmax.bf16 %v1296, 0
    %v1425 = vmax.bf16 %v1297, 0
    %v1426 = vmax.bf16 %v1298, 0
    %v1427 = vmax.bf16 %v1299, 0
    %v1428 = vmax.bf16 %v1300, 0
    %v1429 = vmax.bf16 %v1301, 0
    %v1430 = vmax.bf16 %v1302, 0
    %v1431 = vmax.bf16 %v1303, 0
    %v1432 = vmax.bf16 %v1304, 0
    %v1433 = vmax.bf16 %v1305, 0
    %v1434 = vmax.bf16 %v1306, 0
    %v1435 = vmax.bf16 %v1307, 0
    %v1436 = vmax.bf16 %v1308, 0
    %v1437 = vmax.bf16 %v1309, 0
    %v1438 = vmax.bf16 %v1310, 0
    %v1439 = vmax.bf16 %v1311, 0
    %v1440 = vmax.bf16 %v1312, 0
    %v1441 = vmax.bf16 %v1313, 0
    %v1442 = vmax.bf16 %v1314, 0
    %v1443 = vmax.bf16 %v1315, 0
    %v1444 = vmax.bf16 %v1316, 0
    %v1445 = vmax.bf16 %v1317, 0
    %v1446 = vmax.bf16 %v1318, 0
    %v1447 = vmax.bf16 %v1319, 0
    %v1448 = vmax.bf16 %v1320, 0
    %v1449 = vmax.bf16 %v1321, 0
    %v1450 = vmax.bf16 %v1322, 0
    %v1451 = vmax.bf16 %v1323, 0
    %v1452 = vmax.bf16 %v1324, 0
    %v1453 = vmax.bf16 %v1325, 0
    %v1454 = vmax.bf16 %v1326, 0
    %v1455 = vmax.bf16 %v1327, 0
    %v1456 = vmax.bf16 %v1328, 0
    %v1457 = vmax.bf16 %v1329, 0
    %v1458 = vmax.bf16 %v1330, 0
    %v1459 = vmax.bf16 %v1331, 0
    %v1460 = vmax.bf16 %v1332, 0
    %v1461 = vmax.bf16 %v1333, 0
    %v1462 = vmax.bf16 %v1334, 0
    %v1463 = vmax.bf16 %v1335, 0
    %v1464 = vmax.bf16 %v1336, 0
    %v1465 = vmax.bf16 %v1337, 0
    %v1466 = vmax.bf16 %v1338, 0
    %v1467 = vmax.bf16 %v1339, 0
    %v1468 = vmax.bf16 %v1340, 0
    %v1469 = vmax.bf16 %v1341, 0
    %v1470 = vmax.bf16 %v1342, 0
    %v1471 = vmax.bf16 %v1343, 0
    %v1472 = vmax.bf16 %v1344, 0
    %v1473 = vmax.bf16 %v1345, 0
    %v1474 = vmax.bf16 %v1346, 0
    %v1475 = vmax.bf16 %v1347, 0
    %v1476 = vmax.bf16 %v1348, 0
    %v1477 = vmax.bf16 %v1349, 0
    %v1478 = vmax.bf16 %v1350, 0
    %v1479 = vmax.bf16 %v1351, 0
    %v1480 = vmax.bf16 %v1352, 0
    %v1481 = vmax.bf16 %v1353, 0
    %v1482 = vmax.bf16 %v1354, 0
    %v1483 = vmax.bf16 %v1355, 0
    %v1484 = vmax.bf16 %v1356, 0
    %v1485 = vmax.bf16 %v1357, 0
    %v1486 = vmax.bf16 %v1358, 0
    %v1487 = vmax.bf16 %v1359, 0
    %v1488 = vmax.bf16 %v1360, 0
    %v1489 = vmax.bf16 %v1361, 0
    %v1490 = vmax.bf16 %v1362, 0
    %v1491 = vmax.bf16 %v1363, 0
    %v1492 = vmax.bf16 %v1364, 0
    %v1493 = vmax.bf16 %v1365, 0
    %v1494 = vmax.bf16 %v1366, 0
    %v1495 = vmax.bf16 %v1367, 0
    %v1496 = vmax.bf16 %v1368, 0
    %v1497 = vmax.bf16 %v1369, 0
    %v1498 = vmax.bf16 %v1370, 0
    %v1499 = vmax.bf16 %v1371, 0
    %v1500 = vmax.bf16 %v1372, 0
    %v1501 = vmax.bf16 %v1373, 0
    %v1502 = vmax.bf16 %v1374, 0
    %v1503 = vmax.bf16 %v1375, 0
    %v1504 = vmax.bf16 %v1376, 0
    %v1505 = vmax.bf16 %v1377, 0
    %v1506 = vmax.bf16 %v1378, 0
    %v1507 = vmax.bf16 %v1379, 0
    %v1508 = vmax.bf16 %v1380, 0
    %v1509 = vmax.bf16 %v1381, 0
    %v1510 = vmax.bf16 %v1382, 0
    %v1511 = vmax.bf16 %v1383, 0
    %v1512 = vmax.bf16 %v1384, 0
    %v1513 = vmax.bf16 %v1385, 0
    %v1514 = vmax.bf16 %v1386, 0
    %v1515 = vmax.bf16 %v1387, 0
    %v1516 = vmax.bf16 %v1388, 0
    %v1517 = vmax.bf16 %v1389, 0
    %v1518 = vmax.bf16 %v1390, 0
    %v1519 = vmax.bf16 %v1391, 0
    %v1520 = vmax.bf16 %v1392, 0
    %v1521 = vmax.bf16 %v1393, 0
    %v1522 = vmax.bf16 %v1394, 0
    %v1523 = vmax.bf16 %v1395, 0
    %v1524 = vmax.bf16 %v1396, 0
    %v1525 = vmax.bf16 %v1397, 0
    %v1526 = vmax.bf16 %v1398, 0
    %v1527 = vmax.bf16 %v1399, 0
    %v1528 = vmax.bf16 %v1400, 0
    %v1529 = vmax.bf16 %v1401, 0
    %v1530 = vmax.bf16 %v1402, 0
    %v1531 = vmax.bf16 %v1403, 0
    %v1532 = vmax.bf16 %v1404, 0
    %v1533 = vmax.bf16 %v1405, 0
    %v1534 = vmax.bf16 %v1406, 0
    %v1535 = vmax.bf16 %v1407, 0
    %v1536 = vld [vmem:[#allocation3] sm:$0xff]
    %v1537 = vld [vmem:[#allocation3 + $0x8] sm:$0xff]
    %v1538 = vld [vmem:[#allocation3 + $0x10] sm:$0xff]
    %v1539 = vld [vmem:[#allocation3 + $0x18] sm:$0xff]
    %v1540 = vld [vmem:[#allocation3 + $0x20] sm:$0xff]
    %v1541 = vld [vmem:[#allocation3 + $0x28] sm:$0xff]
    %v1542 = vld [vmem:[#allocation3 + $0x30] sm:$0xff]
    %v1543 = vld [vmem:[#allocation3 + $0x38] sm:$0xff]
    %v1544 = vld [vmem:[#allocation3 + $0x40] sm:$0xff]
    %v1545 = vld [vmem:[#allocation3 + $0x48] sm:$0xff]
    %v1546 = vld [vmem:[#allocation3 + $0x50] sm:$0xff]
    %v1547 = vld [vmem:[#allocation3 + $0x58] sm:$0xff]
    %v1548 = vld [vmem:[#allocation3 + $0x60] sm:$0xff]
    %v1549 = vld [vmem:[#allocation3 + $0x68] sm:$0xff]
    %v1550 = vld [vmem:[#allocation3 + $0x70] sm:$0xff]
    %v1551 = vld [vmem:[#allocation3 + $0x78] sm:$0xff]
    %v1552 = vld [vmem:[#allocation3 + $0x80] sm:$0xff]
    %v1553 = vld [vmem:[#allocation3 + $0x88] sm:$0xff]
    %v1554 = vld [vmem:[#allocation3 + $0x90] sm:$0xff]
    %v1555 = vld [vmem:[#allocation3 + $0x98] sm:$0xff]
    %v1556 = vld [vmem:[#allocation3 + $0xa0] sm:$0xff]
    %v1557 = vld [vmem:[#allocation3 + $0xa8] sm:$0xff]
    %v1558 = vld [vmem:[#allocation3 + $0xb0] sm:$0xff]
    %v1559 = vld [vmem:[#allocation3 + $0xb8] sm:$0xff]
    %v1560 = vld [vmem:[#allocation3 + $0xc0] sm:$0xff]
    %v1561 = vld [vmem:[#allocation3 + $0xc8] sm:$0xff]
    %v1562 = vld [vmem:[#allocation3 + $0xd0] sm:$0xff]
    %v1563 = vld [vmem:[#allocation3 + $0xd8] sm:$0xff]
    %v1564 = vld [vmem:[#allocation3 + $0xe0] sm:$0xff]
    %v1565 = vld [vmem:[#allocation3 + $0xe8] sm:$0xff]
    %v1566 = vld [vmem:[#allocation3 + $0xf0] sm:$0xff]
    %v1567 = vld [vmem:[#allocation3 + $0xf8] sm:$0xff]
    %v1600 = vunpack.c.l.b16 %v1536
    %v1601 = vunpack.c.h.b16 %v1536
    %v1602 = vunpack.c.l.b16 %v1537
    %v1603 = vunpack.c.h.b16 %v1537
    %v1604 = vunpack.c.l.b16 %v1538
    %v1605 = vunpack.c.h.b16 %v1538
    %v1606 = vunpack.c.l.b16 %v1539
    %v1607 = vunpack.c.h.b16 %v1539
    %v1608 = vunpack.c.l.b16 %v1540
    %v1609 = vunpack.c.h.b16 %v1540
    %v1610 = vunpack.c.l.b16 %v1541
    %v1611 = vunpack.c.h.b16 %v1541
    %v1612 = vunpack.c.l.b16 %v1542
    %v1613 = vunpack.c.h.b16 %v1542
    %v1614 = vunpack.c.l.b16 %v1543
    %v1615 = vunpack.c.h.b16 %v1543
    %v1616 = vunpack.c.l.b16 %v1544
    %v1617 = vunpack.c.h.b16 %v1544
    %v1618 = vunpack.c.l.b16 %v1545
    %v1619 = vunpack.c.h.b16 %v1545
    %v1620 = vunpack.c.l.b16 %v1546
    %v1621 = vunpack.c.h.b16 %v1546
    %v1622 = vunpack.c.l.b16 %v1547
    %v1623 = vunpack.c.h.b16 %v1547
    %v1624 = vunpack.c.l.b16 %v1548
    %v1625 = vunpack.c.h.b16 %v1548
    %v1626 = vunpack.c.l.b16 %v1549
    %v1627 = vunpack.c.h.b16 %v1549
    %v1628 = vunpack.c.l.b16 %v1550
    %v1629 = vunpack.c.h.b16 %v1550
    %v1630 = vunpack.c.l.b16 %v1551
    %v1631 = vunpack.c.h.b16 %v1551
    %v1632 = vunpack.c.l.b16 %v1552
    %v1633 = vunpack.c.h.b16 %v1552
    %v1634 = vunpack.c.l.b16 %v1553
    %v1635 = vunpack.c.h.b16 %v1553
    %v1636 = vunpack.c.l.b16 %v1554
    %v1637 = vunpack.c.h.b16 %v1554
    %v1638 = vunpack.c.l.b16 %v1555
    %v1639 = vunpack.c.h.b16 %v1555
    %v1640 = vunpack.c.l.b16 %v1556
    %v1641 = vunpack.c.h.b16 %v1556
    %v1642 = vunpack.c.l.b16 %v1557
    %v1643 = vunpack.c.h.b16 %v1557
    %v1644 = vunpack.c.l.b16 %v1558
    %v1645 = vunpack.c.h.b16 %v1558
    %v1646 = vunpack.c.l.b16 %v1559
    %v1647 = vunpack.c.h.b16 %v1559
    %v1648 = vunpack.c.l.b16 %v1560
    %v1649 = vunpack.c.h.b16 %v1560
    %v1650 = vunpack.c.l.b16 %v1561
    %v1651 = vunpack.c.h.b16 %v1561
    %v1652 = vunpack.c.l.b16 %v1562
    %v1653 = vunpack.c.h.b16 %v1562
    %v1654 = vunpack.c.l.b16 %v1563
    %v1655 = vunpack.c.h.b16 %v1563
    %v1656 = vunpack.c.l.b16 %v1564
    %v1657 = vunpack.c.h.b16 %v1564
    %v1658 = vunpack.c.l.b16 %v1565
    %v1659 = vunpack.c.h.b16 %v1565
    %v1660 = vunpack.c.l.b16 %v1566
    %v1661 = vunpack.c.h.b16 %v1566
    %v1662 = vunpack.c.l.b16 %v1567
    %v1663 = vunpack.c.h.b16 %v1567
    %v1664 = vpack.c.b16 %v1602, %v1600
    %v1665 = vpack.c.b16 %v1603, %v1601
    %v1666 = vpack.c.b16 %v1606, %v1604
    %v1667 = vpack.c.b16 %v1607, %v1605
    %v1668 = vpack.c.b16 %v1610, %v1608
    %v1669 = vpack.c.b16 %v1611, %v1609
    %v1670 = vpack.c.b16 %v1614, %v1612
    %v1671 = vpack.c.b16 %v1615, %v1613
    %v1672 = vpack.c.b16 %v1618, %v1616
    %v1673 = vpack.c.b16 %v1619, %v1617
    %v1674 = vpack.c.b16 %v1622, %v1620
    %v1675 = vpack.c.b16 %v1623, %v1621
    %v1676 = vpack.c.b16 %v1626, %v1624
    %v1677 = vpack.c.b16 %v1627, %v1625
    %v1678 = vpack.c.b16 %v1630, %v1628
    %v1679 = vpack.c.b16 %v1631, %v1629
    %v1680 = vpack.c.b16 %v1634, %v1632
    %v1681 = vpack.c.b16 %v1635, %v1633
    %v1682 = vpack.c.b16 %v1638, %v1636
    %v1683 = vpack.c.b16 %v1639, %v1637
    %v1684 = vpack.c.b16 %v1642, %v1640
    %v1685 = vpack.c.b16 %v1643, %v1641
    %v1686 = vpack.c.b16 %v1646, %v1644
    %v1687 = vpack.c.b16 %v1647, %v1645
    %v1688 = vpack.c.b16 %v1650, %v1648
    %v1689 = vpack.c.b16 %v1651, %v1649
    %v1690 = vpack.c.b16 %v1654, %v1652
    %v1691 = vpack.c.b16 %v1655, %v1653
    %v1692 = vpack.c.b16 %v1658, %v1656
    %v1693 = vpack.c.b16 %v1659, %v1657
    %v1694 = vpack.c.b16 %v1662, %v1660
    %v1695 = vpack.c.b16 %v1663, %v1661
    %1728 = vmatprep.subr.bf16.mxu0 %v1665
    %1729 = vmatpush1.bf16.msra.mxu0 %v1664
    %1730 = vmatprep.subr.bf16.mxu0 %v1667
    %1731 = vmatpush1.bf16.msra.mxu0 %v1666
    %1732 = vmatprep.subr.bf16.mxu0 %v1669
    %1733 = vmatpush1.bf16.msra.mxu0 %v1668
    %1734 = vmatprep.subr.bf16.mxu0 %v1671
    %1735 = vmatpush1.bf16.msra.mxu0 %v1670
    %1736 = vmatprep.subr.bf16.mxu0 %v1673
    %1737 = vmatpush1.bf16.msra.mxu0 %v1672
    %1738 = vmatprep.subr.bf16.mxu0 %v1675
    %1739 = vmatpush1.bf16.msra.mxu0 %v1674
    %1740 = vmatprep.subr.bf16.mxu0 %v1677
    %1741 = vmatpush1.bf16.msra.mxu0 %v1676
    %1742 = vmatprep.subr.bf16.mxu0 %v1679
    %1743 = vmatpush1.bf16.msra.mxu0 %v1678
    %1744 = vmatprep.subr.bf16.mxu0 %v1681
    %1745 = vmatpush1.bf16.msra.mxu0 %v1680
    %1746 = vmatprep.subr.bf16.mxu0 %v1683
    %1747 = vmatpush1.bf16.msra.mxu0 %v1682
    %1748 = vmatprep.subr.bf16.mxu0 %v1685
    %1749 = vmatpush1.bf16.msra.mxu0 %v1684
    %1750 = vmatprep.subr.bf16.mxu0 %v1687
    %1751 = vmatpush1.bf16.msra.mxu0 %v1686
    %1752 = vmatprep.subr.bf16.mxu0 %v1689
    %1753 = vmatpush1.bf16.msra.mxu0 %v1688
    %1754 = vmatprep.subr.bf16.mxu0 %v1691
    %1755 = vmatpush1.bf16.msra.mxu0 %v1690
    %1756 = vmatprep.subr.bf16.mxu0 %v1693
    %1757 = vmatpush1.bf16.msra.mxu0 %v1692
    %1758 = vmatprep.subr.bf16.mxu0 %v1695
    %1759 = vmatpush1.bf16.msra.mxu0 %v1694
    %1760 = vmatprep.mubr.bf16.mxu0 %v1409
    %1761 = vmatmul.mubr.bf16.gmra.mrb[0].mxu0 %v1408
    %v1762 = vpop.f32.mrb[0].mxu0
    %v1763 = vadd.f32 0.0, %v1762
    %v1764 = vpop.f32.mrb[0].mxu0
    %v1765 = vadd.f32 0.0, %v1764
    %v1766 = vpop.f32.mrb[0].mxu0
    %v1767 = vadd.f32 0.0, %v1766
    %v1768 = vpop.f32.mrb[0].mxu0
    %v1769 = vadd.f32 0.0, %v1768
    %1770 = vmatprep.mubr.bf16.mxu0 %v1411
    %1771 = vmatmul.mubr.bf16.gmra.mrb[0].mxu0 %v1410
    %v1772 = vpop.f32.mrb[0].mxu0
    %v1773 = vadd.f32 0.0, %v1772
    %v1774 = vpop.f32.mrb[0].mxu0
    %v1775 = vadd.f32 0.0, %v1774
    %v1776 = vpop.f32.mrb[0].mxu0
    %v1777 = vadd.f32 0.0, %v1776
    %v1778 = vpop.f32.mrb[0].mxu0
    %v1779 = vadd.f32 0.0, %v1778
    %1780 = vmatprep.mubr.bf16.mxu0 %v1413
    %1781 = vmatmul.mubr.bf16.gmra.mrb[0].mxu0 %v1412
    %v1782 = vpop.f32.mrb[0].mxu0
    %v1783 = vadd.f32 0.0, %v1782
    %v1784 = vpop.f32.mrb[0].mxu0
    %v1785 = vadd.f32 0.0, %v1784
    %v1786 = vpop.f32.mrb[0].mxu0
    %v1787 = vadd.f32 0.0, %v1786
    %v1788 = vpop.f32.mrb[0].mxu0
    %v1789 = vadd.f32 0.0, %v1788
    %1790 = vmatprep.mubr.bf16.mxu0 %v1415
    %1791 = vmatmul.mubr.bf16.gmra.mrb[0].mxu0 %v1414
    %v1792 = vpop.f32.mrb[0].mxu0
    %v1793 = vadd.f32 0.0, %v1792
    %v1794 = vpop.f32.mrb[0].mxu0
    %v1795 = vadd.f32 0.0, %v1794
    %v1796 = vpop.f32.mrb[0].mxu0
    %v1797 = vadd.f32 0.0, %v1796
    %v1798 = vpop.f32.mrb[0].mxu0
    %v1799 = vadd.f32 0.0, %v1798
    %1800 = vmatprep.mubr.bf16.mxu0 %v1417
    %1801 = vmatmul.mubr.bf16.gmra.mrb[0].mxu0 %v1416
    %v1802 = vpop.f32.mrb[0].mxu0
    %v1803 = vadd.f32 0.0, %v1802
    %v1804 = vpop.f32.mrb[0].mxu0
    %v1805 = vadd.f32 0.0, %v1804
    %v1806 = vpop.f32.mrb[0].mxu0
    %v1807 = vadd.f32 0.0, %v1806
    %v1808 = vpop.f32.mrb[0].mxu0
    %v1809 = vadd.f32 0.0, %v1808
    %1810 = vmatprep.mubr.bf16.mxu0 %v1419
    %1811 = vmatmul.mubr.bf16.gmra.mrb[0].mxu0 %v1418
    %v1812 = vpop.f32.mrb[0].mxu0
    %v1813 = vadd.f32 0.0, %v1812
    %v1814 = vpop.f32.mrb[0].mxu0
    %v1815 = vadd.f32 0.0, %v1814
    %v1816 = vpop.f32.mrb[0].mxu0
    %v1817 = vadd.f32 0.0, %v1816
    %v1818 = vpop.f32.mrb[0].mxu0
    %v1819 = vadd.f32 0.0, %v1818
    %1820 = vmatprep.mubr.bf16.mxu0 %v1421
    %1821 = vmatmul.mubr.bf16.gmra.mrb[0].mxu0 %v1420
    %v1822 = vpop.f32.mrb[0].mxu0
    %v1823 = vadd.f32 0.0, %v1822
    %v1824 = vpop.f32.mrb[0].mxu0
    %v1825 = vadd.f32 0.0, %v1824
    %v1826 = vpop.f32.mrb[0].mxu0
    %v1827 = vadd.f32 0.0, %v1826
    %v1828 = vpop.f32.mrb[0].mxu0
    %v1829 = vadd.f32 0.0, %v1828
    %1830 = vmatprep.mubr.bf16.mxu0 %v1423
    %1831 = vmatmul.mubr.bf16.gmra.mrb[0].mxu0 %v1422
    %v1832 = vpop.f32.mrb[0].mxu0
    %v1833 = vadd.f32 0.0, %v1832
    %v1834 = vpop.f32.mrb[0].mxu0
    %v1835 = vadd.f32 0.0, %v1834
    %v1836 = vpop.f32.mrb[0].mxu0
    %v1837 = vadd.f32 0.0, %v1836
    %v1838 = vpop.f32.mrb[0].mxu0
    %v1839 = vadd.f32 0.0, %v1838
    %1840 = vmatprep.mubr.bf16.mxu0 %v1425
    %1841 = vmatmul.mubr.bf16.gmra.mrb[0].mxu0 %v1424
    %v1842 = vpop.f32.mrb[0].mxu0
    %v1843 = vadd.f32 0.0, %v1842
    %v1844 = vpop.f32.mrb[0].mxu0
    %v1845 = vadd.f32 0.0, %v1844
    %v1846 = vpop.f32.mrb[0].mxu0
    %v1847 = vadd.f32 0.0, %v1846
    %v1848 = vpop.f32.mrb[0].mxu0
    %v1849 = vadd.f32 0.0, %v1848
    %1850 = vmatprep.mubr.bf16.mxu0 %v1427
    %1851 = vmatmul.mubr.bf16.gmra.mrb[0].mxu0 %v1426
    %v1852 = vpop.f32.mrb[0].mxu0
    %v1853 = vadd.f32 0.0, %v1852
    %v1854 = vpop.f32.mrb[0].mxu0
    %v1855 = vadd.f32 0.0, %v1854
    %v1856 = vpop.f32.mrb[0].mxu0
    %v1857 = vadd.f32 0.0, %v1856
    %v1858 = vpop.f32.mrb[0].mxu0
    %v1859 = vadd.f32 0.0, %v1858
    %1860 = vmatprep.mubr.bf16.mxu0 %v1429
    %1861 = vmatmul.mubr.bf16.gmra.mrb[0].mxu0 %v1428
    %v1862 = vpop.f32.mrb[0].mxu0
    %v1863 = vadd.f32 0.0, %v1862
    %v1864 = vpop.f32.mrb[0].mxu0
    %v1865 = vadd.f32 0.0, %v1864
    %v1866 = vpop.f32.mrb[0].mxu0
    %v1867 = vadd.f32 0.0, %v1866
    %v1868 = vpop.f32.mrb[0].mxu0
    %v1869 = vadd.f32 0.0, %v1868
    %1870 = vmatprep.mubr.bf16.mxu0 %v1431
    %1871 = vmatmul.mubr.bf16.gmra.mrb[0].mxu0 %v1430
    %v1872 = vpop.f32.mrb[0].mxu0
    %v1873 = vadd.f32 0.0, %v1872
    %v1874 = vpop.f32.mrb[0].mxu0
    %v1875 = vadd.f32 0.0, %v1874
    %v1876 = vpop.f32.mrb[0].mxu0
    %v1877 = vadd.f32 0.0, %v1876
    %v1878 = vpop.f32.mrb[0].mxu0
    %v1879 = vadd.f32 0.0, %v1878
    %1880 = vmatprep.mubr.bf16.mxu0 %v1433
    %1881 = vmatmul.mubr.bf16.gmra.mrb[0].mxu0 %v1432
    %v1882 = vpop.f32.mrb[0].mxu0
    %v1883 = vadd.f32 0.0, %v1882
    %v1884 = vpop.f32.mrb[0].mxu0
    %v1885 = vadd.f32 0.0, %v1884
    %v1886 = vpop.f32.mrb[0].mxu0
    %v1887 = vadd.f32 0.0, %v1886
    %v1888 = vpop.f32.mrb[0].mxu0
    %v1889 = vadd.f32 0.0, %v1888
    %1890 = vmatprep.mubr.bf16.mxu0 %v1435
    %1891 = vmatmul.mubr.bf16.gmra.mrb[0].mxu0 %v1434
    %v1892 = vpop.f32.mrb[0].mxu0
    %v1893 = vadd.f32 0.0, %v1892
    %v1894 = vpop.f32.mrb[0].mxu0
    %v1895 = vadd.f32 0.0, %v1894
    %v1896 = vpop.f32.mrb[0].mxu0
    %v1897 = vadd.f32 0.0, %v1896
    %v1898 = vpop.f32.mrb[0].mxu0
    %v1899 = vadd.f32 0.0, %v1898
    %1900 = vmatprep.mubr.bf16.mxu0 %v1437
    %1901 = vmatmul.mubr.bf16.gmra.mrb[0].mxu0 %v1436
    %v1902 = vpop.f32.mrb[0].mxu0
    %v1903 = vadd.f32 0.0, %v1902
    %v1904 = vpop.f32.mrb[0].mxu0
    %v1905 = vadd.f32 0.0, %v1904
    %v1906 = vpop.f32.mrb[0].mxu0
    %v1907 = vadd.f32 0.0, %v1906
    %v1908 = vpop.f32.mrb[0].mxu0
    %v1909 = vadd.f32 0.0, %v1908
    %1910 = vmatprep.mubr.bf16.mxu0 %v1439
    %1911 = vmatmul.mubr.bf16.gmra.mrb[0].mxu0 %v1438
    %v1912 = vpop.f32.mrb[0].mxu0
    %v1913 = vadd.f32 0.0, %v1912
    %v1914 = vpop.f32.mrb[0].mxu0
    %v1915 = vadd.f32 0.0, %v1914
    %v1916 = vpop.f32.mrb[0].mxu0
    %v1917 = vadd.f32 0.0, %v1916
    %v1918 = vpop.f32.mrb[0].mxu0
    %v1919 = vadd.f32 0.0, %v1918
    %1920 = vmatprep.mubr.bf16.mxu0 %v1441
    %1921 = vmatmul.mubr.bf16.gmra.mrb[0].mxu0 %v1440
    %v1922 = vpop.f32.mrb[0].mxu0
    %v1923 = vadd.f32 0.0, %v1922
    %v1924 = vpop.f32.mrb[0].mxu0
    %v1925 = vadd.f32 0.0, %v1924
    %v1926 = vpop.f32.mrb[0].mxu0
    %v1927 = vadd.f32 0.0, %v1926
    %v1928 = vpop.f32.mrb[0].mxu0
    %v1929 = vadd.f32 0.0, %v1928
    %1930 = vmatprep.mubr.bf16.mxu0 %v1443
    %1931 = vmatmul.mubr.bf16.gmra.mrb[0].mxu0 %v1442
    %v1932 = vpop.f32.mrb[0].mxu0
    %v1933 = vadd.f32 0.0, %v1932
    %v1934 = vpop.f32.mrb[0].mxu0
    %v1935 = vadd.f32 0.0, %v1934
    %v1936 = vpop.f32.mrb[0].mxu0
    %v1937 = vadd.f32 0.0, %v1936
    %v1938 = vpop.f32.mrb[0].mxu0
    %v1939 = vadd.f32 0.0, %v1938
    %1940 = vmatprep.mubr.bf16.mxu0 %v1445
    %1941 = vmatmul.mubr.bf16.gmra.mrb[0].mxu0 %v1444
    %v1942 = vpop.f32.mrb[0].mxu0
    %v1943 = vadd.f32 0.0, %v1942
    %v1944 = vpop.f32.mrb[0].mxu0
    %v1945 = vadd.f32 0.0, %v1944
    %v1946 = vpop.f32.mrb[0].mxu0
    %v1947 = vadd.f32 0.0, %v1946
    %v1948 = vpop.f32.mrb[0].mxu0
    %v1949 = vadd.f32 0.0, %v1948
    %1950 = vmatprep.mubr.bf16.mxu0 %v1447
    %1951 = vmatmul.mubr.bf16.gmra.mrb[0].mxu0 %v1446
    %v1952 = vpop.f32.mrb[0].mxu0
    %v1953 = vadd.f32 0.0, %v1952
    %v1954 = vpop.f32.mrb[0].mxu0
    %v1955 = vadd.f32 0.0, %v1954
    %v1956 = vpop.f32.mrb[0].mxu0
    %v1957 = vadd.f32 0.0, %v1956
    %v1958 = vpop.f32.mrb[0].mxu0
    %v1959 = vadd.f32 0.0, %v1958
    %1960 = vmatprep.mubr.bf16.mxu0 %v1449
    %1961 = vmatmul.mubr.bf16.gmra.mrb[0].mxu0 %v1448
    %v1962 = vpop.f32.mrb[0].mxu0
    %v1963 = vadd.f32 0.0, %v1962
    %v1964 = vpop.f32.mrb[0].mxu0
    %v1965 = vadd.f32 0.0, %v1964
    %v1966 = vpop.f32.mrb[0].mxu0
    %v1967 = vadd.f32 0.0, %v1966
    %v1968 = vpop.f32.mrb[0].mxu0
    %v1969 = vadd.f32 0.0, %v1968
    %1970 = vmatprep.mubr.bf16.mxu0 %v1451
    %1971 = vmatmul.mubr.bf16.gmra.mrb[0].mxu0 %v1450
    %v1972 = vpop.f32.mrb[0].mxu0
    %v1973 = vadd.f32 0.0, %v1972
    %v1974 = vpop.f32.mrb[0].mxu0
    %v1975 = vadd.f32 0.0, %v1974
    %v1976 = vpop.f32.mrb[0].mxu0
    %v1977 = vadd.f32 0.0, %v1976
    %v1978 = vpop.f32.mrb[0].mxu0
    %v1979 = vadd.f32 0.0, %v1978
    %1980 = vmatprep.mubr.bf16.mxu0 %v1453
    %1981 = vmatmul.mubr.bf16.gmra.mrb[0].mxu0 %v1452
    %v1982 = vpop.f32.mrb[0].mxu0
    %v1983 = vadd.f32 0.0, %v1982
    %v1984 = vpop.f32.mrb[0].mxu0
    %v1985 = vadd.f32 0.0, %v1984
    %v1986 = vpop.f32.mrb[0].mxu0
    %v1987 = vadd.f32 0.0, %v1986
    %v1988 = vpop.f32.mrb[0].mxu0
    %v1989 = vadd.f32 0.0, %v1988
    %1990 = vmatprep.mubr.bf16.mxu0 %v1455
    %1991 = vmatmul.mubr.bf16.gmra.mrb[0].mxu0 %v1454
    %v1992 = vpop.f32.mrb[0].mxu0
    %v1993 = vadd.f32 0.0, %v1992
    %v1994 = vpop.f32.mrb[0].mxu0
    %v1995 = vadd.f32 0.0, %v1994
    %v1996 = vpop.f32.mrb[0].mxu0
    %v1997 = vadd.f32 0.0, %v1996
    %v1998 = vpop.f32.mrb[0].mxu0
    %v1999 = vadd.f32 0.0, %v1998
    %2000 = vmatprep.mubr.bf16.mxu0 %v1457
    %2001 = vmatmul.mubr.bf16.gmra.mrb[0].mxu0 %v1456
    %v2002 = vpop.f32.mrb[0].mxu0
    %v2003 = vadd.f32 0.0, %v2002
    %v2004 = vpop.f32.mrb[0].mxu0
    %v2005 = vadd.f32 0.0, %v2004
    %v2006 = vpop.f32.mrb[0].mxu0
    %v2007 = vadd.f32 0.0, %v2006
    %v2008 = vpop.f32.mrb[0].mxu0
    %v2009 = vadd.f32 0.0, %v2008
    %2010 = vmatprep.mubr.bf16.mxu0 %v1459
    %2011 = vmatmul.mubr.bf16.gmra.mrb[0].mxu0 %v1458
    %v2012 = vpop.f32.mrb[0].mxu0
    %v2013 = vadd.f32 0.0, %v2012
    %v2014 = vpop.f32.mrb[0].mxu0
    %v2015 = vadd.f32 0.0, %v2014
    %v2016 = vpop.f32.mrb[0].mxu0
    %v2017 = vadd.f32 0.0, %v2016
    %v2018 = vpop.f32.mrb[0].mxu0
    %v2019 = vadd.f32 0.0, %v2018
    %2020 = vmatprep.mubr.bf16.mxu0 %v1461
    %2021 = vmatmul.mubr.bf16.gmra.mrb[0].mxu0 %v1460
    %v2022 = vpop.f32.mrb[0].mxu0
    %v2023 = vadd.f32 0.0, %v2022
    %v2024 = vpop.f32.mrb[0].mxu0
    %v2025 = vadd.f32 0.0, %v2024
    %v2026 = vpop.f32.mrb[0].mxu0
    %v2027 = vadd.f32 0.0, %v2026
    %v2028 = vpop.f32.mrb[0].mxu0
    %v2029 = vadd.f32 0.0, %v2028
    %2030 = vmatprep.mubr.bf16.mxu0 %v1463
    %2031 = vmatmul.mubr.bf16.gmra.mrb[0].mxu0 %v1462
    %v2032 = vpop.f32.mrb[0].mxu0
    %v2033 = vadd.f32 0.0, %v2032
    %v2034 = vpop.f32.mrb[0].mxu0
    %v2035 = vadd.f32 0.0, %v2034
    %v2036 = vpop.f32.mrb[0].mxu0
    %v2037 = vadd.f32 0.0, %v2036
    %v2038 = vpop.f32.mrb[0].mxu0
    %v2039 = vadd.f32 0.0, %v2038
    %2040 = vmatprep.mubr.bf16.mxu0 %v1465
    %2041 = vmatmul.mubr.bf16.gmra.mrb[0].mxu0 %v1464
    %v2042 = vpop.f32.mrb[0].mxu0
    %v2043 = vadd.f32 0.0, %v2042
    %v2044 = vpop.f32.mrb[0].mxu0
    %v2045 = vadd.f32 0.0, %v2044
    %v2046 = vpop.f32.mrb[0].mxu0
    %v2047 = vadd.f32 0.0, %v2046
    %v2048 = vpop.f32.mrb[0].mxu0
    %v2049 = vadd.f32 0.0, %v2048
    %2050 = vmatprep.mubr.bf16.mxu0 %v1467
    %2051 = vmatmul.mubr.bf16.gmra.mrb[0].mxu0 %v1466
    %v2052 = vpop.f32.mrb[0].mxu0
    %v2053 = vadd.f32 0.0, %v2052
    %v2054 = vpop.f32.mrb[0].mxu0
    %v2055 = vadd.f32 0.0, %v2054
    %v2056 = vpop.f32.mrb[0].mxu0
    %v2057 = vadd.f32 0.0, %v2056
    %v2058 = vpop.f32.mrb[0].mxu0
    %v2059 = vadd.f32 0.0, %v2058
    %2060 = vmatprep.mubr.bf16.mxu0 %v1469
    %2061 = vmatmul.mubr.bf16.gmra.mrb[0].mxu0 %v1468
    %v2062 = vpop.f32.mrb[0].mxu0
    %v2063 = vadd.f32 0.0, %v2062
    %v2064 = vpop.f32.mrb[0].mxu0
    %v2065 = vadd.f32 0.0, %v2064
    %v2066 = vpop.f32.mrb[0].mxu0
    %v2067 = vadd.f32 0.0, %v2066
    %v2068 = vpop.f32.mrb[0].mxu0
    %v2069 = vadd.f32 0.0, %v2068
    %2070 = vmatprep.mubr.bf16.mxu0 %v1471
    %2071 = vmatmul.mubr.bf16.gmra.mrb[0].mxu0 %v1470
    %v2072 = vpop.f32.mrb[0].mxu0
    %v2073 = vadd.f32 0.0, %v2072
    %v2074 = vpop.f32.mrb[0].mxu0
    %v2075 = vadd.f32 0.0, %v2074
    %v2076 = vpop.f32.mrb[0].mxu0
    %v2077 = vadd.f32 0.0, %v2076
    %v2078 = vpop.f32.mrb[0].mxu0
    %v2079 = vadd.f32 0.0, %v2078
    %2080 = vmatprep.mubr.bf16.mxu0 %v1473
    %2081 = vmatmul.mubr.bf16.gmra.mrb[0].mxu0 %v1472
    %v2082 = vpop.f32.mrb[0].mxu0
    %v2083 = vadd.f32 0.0, %v2082
    %v2084 = vpop.f32.mrb[0].mxu0
    %v2085 = vadd.f32 0.0, %v2084
    %v2086 = vpop.f32.mrb[0].mxu0
    %v2087 = vadd.f32 0.0, %v2086
    %v2088 = vpop.f32.mrb[0].mxu0
    %v2089 = vadd.f32 0.0, %v2088
    %2090 = vmatprep.mubr.bf16.mxu0 %v1475
    %2091 = vmatmul.mubr.bf16.gmra.mrb[0].mxu0 %v1474
    %v2092 = vpop.f32.mrb[0].mxu0
    %v2093 = vadd.f32 0.0, %v2092
    %v2094 = vpop.f32.mrb[0].mxu0
    %v2095 = vadd.f32 0.0, %v2094
    %v2096 = vpop.f32.mrb[0].mxu0
    %v2097 = vadd.f32 0.0, %v2096
    %v2098 = vpop.f32.mrb[0].mxu0
    %v2099 = vadd.f32 0.0, %v2098
    %2100 = vmatprep.mubr.bf16.mxu0 %v1477
    %2101 = vmatmul.mubr.bf16.gmra.mrb[0].mxu0 %v1476
    %v2102 = vpop.f32.mrb[0].mxu0
    %v2103 = vadd.f32 0.0, %v2102
    %v2104 = vpop.f32.mrb[0].mxu0
    %v2105 = vadd.f32 0.0, %v2104
    %v2106 = vpop.f32.mrb[0].mxu0
    %v2107 = vadd.f32 0.0, %v2106
    %v2108 = vpop.f32.mrb[0].mxu0
    %v2109 = vadd.f32 0.0, %v2108
    %2110 = vmatprep.mubr.bf16.mxu0 %v1479
    %2111 = vmatmul.mubr.bf16.gmra.mrb[0].mxu0 %v1478
    %v2112 = vpop.f32.mrb[0].mxu0
    %v2113 = vadd.f32 0.0, %v2112
    %v2114 = vpop.f32.mrb[0].mxu0
    %v2115 = vadd.f32 0.0, %v2114
    %v2116 = vpop.f32.mrb[0].mxu0
    %v2117 = vadd.f32 0.0, %v2116
    %v2118 = vpop.f32.mrb[0].mxu0
    %v2119 = vadd.f32 0.0, %v2118
    %2120 = vmatprep.mubr.bf16.mxu0 %v1481
    %2121 = vmatmul.mubr.bf16.gmra.mrb[0].mxu0 %v1480
    %v2122 = vpop.f32.mrb[0].mxu0
    %v2123 = vadd.f32 0.0, %v2122
    %v2124 = vpop.f32.mrb[0].mxu0
    %v2125 = vadd.f32 0.0, %v2124
    %v2126 = vpop.f32.mrb[0].mxu0
    %v2127 = vadd.f32 0.0, %v2126
    %v2128 = vpop.f32.mrb[0].mxu0
    %v2129 = vadd.f32 0.0, %v2128
    %2130 = vmatprep.mubr.bf16.mxu0 %v1483
    %2131 = vmatmul.mubr.bf16.gmra.mrb[0].mxu0 %v1482
    %v2132 = vpop.f32.mrb[0].mxu0
    %v2133 = vadd.f32 0.0, %v2132
    %v2134 = vpop.f32.mrb[0].mxu0
    %v2135 = vadd.f32 0.0, %v2134
    %v2136 = vpop.f32.mrb[0].mxu0
    %v2137 = vadd.f32 0.0, %v2136
    %v2138 = vpop.f32.mrb[0].mxu0
    %v2139 = vadd.f32 0.0, %v2138
    %2140 = vmatprep.mubr.bf16.mxu0 %v1485
    %2141 = vmatmul.mubr.bf16.gmra.mrb[0].mxu0 %v1484
    %v2142 = vpop.f32.mrb[0].mxu0
    %v2143 = vadd.f32 0.0, %v2142
    %v2144 = vpop.f32.mrb[0].mxu0
    %v2145 = vadd.f32 0.0, %v2144
    %v2146 = vpop.f32.mrb[0].mxu0
    %v2147 = vadd.f32 0.0, %v2146
    %v2148 = vpop.f32.mrb[0].mxu0
    %v2149 = vadd.f32 0.0, %v2148
    %2150 = vmatprep.mubr.bf16.mxu0 %v1487
    %2151 = vmatmul.mubr.bf16.gmra.mrb[0].mxu0 %v1486
    %v2152 = vpop.f32.mrb[0].mxu0
    %v2153 = vadd.f32 0.0, %v2152
    %v2154 = vpop.f32.mrb[0].mxu0
    %v2155 = vadd.f32 0.0, %v2154
    %v2156 = vpop.f32.mrb[0].mxu0
    %v2157 = vadd.f32 0.0, %v2156
    %v2158 = vpop.f32.mrb[0].mxu0
    %v2159 = vadd.f32 0.0, %v2158
    %2160 = vmatprep.mubr.bf16.mxu0 %v1489
    %2161 = vmatmul.mubr.bf16.gmra.mrb[0].mxu0 %v1488
    %v2162 = vpop.f32.mrb[0].mxu0
    %v2163 = vadd.f32 0.0, %v2162
    %v2164 = vpop.f32.mrb[0].mxu0
    %v2165 = vadd.f32 0.0, %v2164
    %v2166 = vpop.f32.mrb[0].mxu0
    %v2167 = vadd.f32 0.0, %v2166
    %v2168 = vpop.f32.mrb[0].mxu0
    %v2169 = vadd.f32 0.0, %v2168
    %2170 = vmatprep.mubr.bf16.mxu0 %v1491
    %2171 = vmatmul.mubr.bf16.gmra.mrb[0].mxu0 %v1490
    %v2172 = vpop.f32.mrb[0].mxu0
    %v2173 = vadd.f32 0.0, %v2172
    %v2174 = vpop.f32.mrb[0].mxu0
    %v2175 = vadd.f32 0.0, %v2174
    %v2176 = vpop.f32.mrb[0].mxu0
    %v2177 = vadd.f32 0.0, %v2176
    %v2178 = vpop.f32.mrb[0].mxu0
    %v2179 = vadd.f32 0.0, %v2178
    %2180 = vmatprep.mubr.bf16.mxu0 %v1493
    %2181 = vmatmul.mubr.bf16.gmra.mrb[0].mxu0 %v1492
    %v2182 = vpop.f32.mrb[0].mxu0
    %v2183 = vadd.f32 0.0, %v2182
    %v2184 = vpop.f32.mrb[0].mxu0
    %v2185 = vadd.f32 0.0, %v2184
    %v2186 = vpop.f32.mrb[0].mxu0
    %v2187 = vadd.f32 0.0, %v2186
    %v2188 = vpop.f32.mrb[0].mxu0
    %v2189 = vadd.f32 0.0, %v2188
    %2190 = vmatprep.mubr.bf16.mxu0 %v1495
    %2191 = vmatmul.mubr.bf16.gmra.mrb[0].mxu0 %v1494
    %v2192 = vpop.f32.mrb[0].mxu0
    %v2193 = vadd.f32 0.0, %v2192
    %v2194 = vpop.f32.mrb[0].mxu0
    %v2195 = vadd.f32 0.0, %v2194
    %v2196 = vpop.f32.mrb[0].mxu0
    %v2197 = vadd.f32 0.0, %v2196
    %v2198 = vpop.f32.mrb[0].mxu0
    %v2199 = vadd.f32 0.0, %v2198
    %2200 = vmatprep.mubr.bf16.mxu0 %v1497
    %2201 = vmatmul.mubr.bf16.gmra.mrb[0].mxu0 %v1496
    %v2202 = vpop.f32.mrb[0].mxu0
    %v2203 = vadd.f32 0.0, %v2202
    %v2204 = vpop.f32.mrb[0].mxu0
    %v2205 = vadd.f32 0.0, %v2204
    %v2206 = vpop.f32.mrb[0].mxu0
    %v2207 = vadd.f32 0.0, %v2206
    %v2208 = vpop.f32.mrb[0].mxu0
    %v2209 = vadd.f32 0.0, %v2208
    %2210 = vmatprep.mubr.bf16.mxu0 %v1499
    %2211 = vmatmul.mubr.bf16.gmra.mrb[0].mxu0 %v1498
    %v2212 = vpop.f32.mrb[0].mxu0
    %v2213 = vadd.f32 0.0, %v2212
    %v2214 = vpop.f32.mrb[0].mxu0
    %v2215 = vadd.f32 0.0, %v2214
    %v2216 = vpop.f32.mrb[0].mxu0
    %v2217 = vadd.f32 0.0, %v2216
    %v2218 = vpop.f32.mrb[0].mxu0
    %v2219 = vadd.f32 0.0, %v2218
    %2220 = vmatprep.mubr.bf16.mxu0 %v1501
    %2221 = vmatmul.mubr.bf16.gmra.mrb[0].mxu0 %v1500
    %v2222 = vpop.f32.mrb[0].mxu0
    %v2223 = vadd.f32 0.0, %v2222
    %v2224 = vpop.f32.mrb[0].mxu0
    %v2225 = vadd.f32 0.0, %v2224
    %v2226 = vpop.f32.mrb[0].mxu0
    %v2227 = vadd.f32 0.0, %v2226
    %v2228 = vpop.f32.mrb[0].mxu0
    %v2229 = vadd.f32 0.0, %v2228
    %2230 = vmatprep.mubr.bf16.mxu0 %v1503
    %2231 = vmatmul.mubr.bf16.gmra.mrb[0].mxu0 %v1502
    %v2232 = vpop.f32.mrb[0].mxu0
    %v2233 = vadd.f32 0.0, %v2232
    %v2234 = vpop.f32.mrb[0].mxu0
    %v2235 = vadd.f32 0.0, %v2234
    %v2236 = vpop.f32.mrb[0].mxu0
    %v2237 = vadd.f32 0.0, %v2236
    %v2238 = vpop.f32.mrb[0].mxu0
    %v2239 = vadd.f32 0.0, %v2238
    %2240 = vmatprep.mubr.bf16.mxu0 %v1505
    %2241 = vmatmul.mubr.bf16.gmra.mrb[0].mxu0 %v1504
    %v2242 = vpop.f32.mrb[0].mxu0
    %v2243 = vadd.f32 0.0, %v2242
    %v2244 = vpop.f32.mrb[0].mxu0
    %v2245 = vadd.f32 0.0, %v2244
    %v2246 = vpop.f32.mrb[0].mxu0
    %v2247 = vadd.f32 0.0, %v2246
    %v2248 = vpop.f32.mrb[0].mxu0
    %v2249 = vadd.f32 0.0, %v2248
    %2250 = vmatprep.mubr.bf16.mxu0 %v1507
    %2251 = vmatmul.mubr.bf16.gmra.mrb[0].mxu0 %v1506
    %v2252 = vpop.f32.mrb[0].mxu0
    %v2253 = vadd.f32 0.0, %v2252
    %v2254 = vpop.f32.mrb[0].mxu0
    %v2255 = vadd.f32 0.0, %v2254
    %v2256 = vpop.f32.mrb[0].mxu0
    %v2257 = vadd.f32 0.0, %v2256
    %v2258 = vpop.f32.mrb[0].mxu0
    %v2259 = vadd.f32 0.0, %v2258
    %2260 = vmatprep.mubr.bf16.mxu0 %v1509
    %2261 = vmatmul.mubr.bf16.gmra.mrb[0].mxu0 %v1508
    %v2262 = vpop.f32.mrb[0].mxu0
    %v2263 = vadd.f32 0.0, %v2262
    %v2264 = vpop.f32.mrb[0].mxu0
    %v2265 = vadd.f32 0.0, %v2264
    %v2266 = vpop.f32.mrb[0].mxu0
    %v2267 = vadd.f32 0.0, %v2266
    %v2268 = vpop.f32.mrb[0].mxu0
    %v2269 = vadd.f32 0.0, %v2268
    %2270 = vmatprep.mubr.bf16.mxu0 %v1511
    %2271 = vmatmul.mubr.bf16.gmra.mrb[0].mxu0 %v1510
    %v2272 = vpop.f32.mrb[0].mxu0
    %v2273 = vadd.f32 0.0, %v2272
    %v2274 = vpop.f32.mrb[0].mxu0
    %v2275 = vadd.f32 0.0, %v2274
    %v2276 = vpop.f32.mrb[0].mxu0
    %v2277 = vadd.f32 0.0, %v2276
    %v2278 = vpop.f32.mrb[0].mxu0
    %v2279 = vadd.f32 0.0, %v2278
    %2280 = vmatprep.mubr.bf16.mxu0 %v1513
    %2281 = vmatmul.mubr.bf16.gmra.mrb[0].mxu0 %v1512
    %v2282 = vpop.f32.mrb[0].mxu0
    %v2283 = vadd.f32 0.0, %v2282
    %v2284 = vpop.f32.mrb[0].mxu0
    %v2285 = vadd.f32 0.0, %v2284
    %v2286 = vpop.f32.mrb[0].mxu0
    %v2287 = vadd.f32 0.0, %v2286
    %v2288 = vpop.f32.mrb[0].mxu0
    %v2289 = vadd.f32 0.0, %v2288
    %2290 = vmatprep.mubr.bf16.mxu0 %v1515
    %2291 = vmatmul.mubr.bf16.gmra.mrb[0].mxu0 %v1514
    %v2292 = vpop.f32.mrb[0].mxu0
    %v2293 = vadd.f32 0.0, %v2292
    %v2294 = vpop.f32.mrb[0].mxu0
    %v2295 = vadd.f32 0.0, %v2294
    %v2296 = vpop.f32.mrb[0].mxu0
    %v2297 = vadd.f32 0.0, %v2296
    %v2298 = vpop.f32.mrb[0].mxu0
    %v2299 = vadd.f32 0.0, %v2298
    %2300 = vmatprep.mubr.bf16.mxu0 %v1517
    %2301 = vmatmul.mubr.bf16.gmra.mrb[0].mxu0 %v1516
    %v2302 = vpop.f32.mrb[0].mxu0
    %v2303 = vadd.f32 0.0, %v2302
    %v2304 = vpop.f32.mrb[0].mxu0
    %v2305 = vadd.f32 0.0, %v2304
    %v2306 = vpop.f32.mrb[0].mxu0
    %v2307 = vadd.f32 0.0, %v2306
    %v2308 = vpop.f32.mrb[0].mxu0
    %v2309 = vadd.f32 0.0, %v2308
    %2310 = vmatprep.mubr.bf16.mxu0 %v1519
    %2311 = vmatmul.mubr.bf16.gmra.mrb[0].mxu0 %v1518
    %v2312 = vpop.f32.mrb[0].mxu0
    %v2313 = vadd.f32 0.0, %v2312
    %v2314 = vpop.f32.mrb[0].mxu0
    %v2315 = vadd.f32 0.0, %v2314
    %v2316 = vpop.f32.mrb[0].mxu0
    %v2317 = vadd.f32 0.0, %v2316
    %v2318 = vpop.f32.mrb[0].mxu0
    %v2319 = vadd.f32 0.0, %v2318
    %2320 = vmatprep.mubr.bf16.mxu0 %v1521
    %2321 = vmatmul.mubr.bf16.gmra.mrb[0].mxu0 %v1520
    %v2322 = vpop.f32.mrb[0].mxu0
    %v2323 = vadd.f32 0.0, %v2322
    %v2324 = vpop.f32.mrb[0].mxu0
    %v2325 = vadd.f32 0.0, %v2324
    %v2326 = vpop.f32.mrb[0].mxu0
    %v2327 = vadd.f32 0.0, %v2326
    %v2328 = vpop.f32.mrb[0].mxu0
    %v2329 = vadd.f32 0.0, %v2328
    %2330 = vmatprep.mubr.bf16.mxu0 %v1523
    %2331 = vmatmul.mubr.bf16.gmra.mrb[0].mxu0 %v1522
    %v2332 = vpop.f32.mrb[0].mxu0
    %v2333 = vadd.f32 0.0, %v2332
    %v2334 = vpop.f32.mrb[0].mxu0
    %v2335 = vadd.f32 0.0, %v2334
    %v2336 = vpop.f32.mrb[0].mxu0
    %v2337 = vadd.f32 0.0, %v2336
    %v2338 = vpop.f32.mrb[0].mxu0
    %v2339 = vadd.f32 0.0, %v2338
    %2340 = vmatprep.mubr.bf16.mxu0 %v1525
    %2341 = vmatmul.mubr.bf16.gmra.mrb[0].mxu0 %v1524
    %v2342 = vpop.f32.mrb[0].mxu0
    %v2343 = vadd.f32 0.0, %v2342
    %v2344 = vpop.f32.mrb[0].mxu0
    %v2345 = vadd.f32 0.0, %v2344
    %v2346 = vpop.f32.mrb[0].mxu0
    %v2347 = vadd.f32 0.0, %v2346
    %v2348 = vpop.f32.mrb[0].mxu0
    %v2349 = vadd.f32 0.0, %v2348
    %2350 = vmatprep.mubr.bf16.mxu0 %v1527
    %2351 = vmatmul.mubr.bf16.gmra.mrb[0].mxu0 %v1526
    %v2352 = vpop.f32.mrb[0].mxu0
    %v2353 = vadd.f32 0.0, %v2352
    %v2354 = vpop.f32.mrb[0].mxu0
    %v2355 = vadd.f32 0.0, %v2354
    %v2356 = vpop.f32.mrb[0].mxu0
    %v2357 = vadd.f32 0.0, %v2356
    %v2358 = vpop.f32.mrb[0].mxu0
    %v2359 = vadd.f32 0.0, %v2358
    %2360 = vmatprep.mubr.bf16.mxu0 %v1529
    %2361 = vmatmul.mubr.bf16.gmra.mrb[0].mxu0 %v1528
    %v2362 = vpop.f32.mrb[0].mxu0
    %v2363 = vadd.f32 0.0, %v2362
    %v2364 = vpop.f32.mrb[0].mxu0
    %v2365 = vadd.f32 0.0, %v2364
    %v2366 = vpop.f32.mrb[0].mxu0
    %v2367 = vadd.f32 0.0, %v2366
    %v2368 = vpop.f32.mrb[0].mxu0
    %v2369 = vadd.f32 0.0, %v2368
    %2370 = vmatprep.mubr.bf16.mxu0 %v1531
    %2371 = vmatmul.mubr.bf16.gmra.mrb[0].mxu0 %v1530
    %v2372 = vpop.f32.mrb[0].mxu0
    %v2373 = vadd.f32 0.0, %v2372
    %v2374 = vpop.f32.mrb[0].mxu0
    %v2375 = vadd.f32 0.0, %v2374
    %v2376 = vpop.f32.mrb[0].mxu0
    %v2377 = vadd.f32 0.0, %v2376
    %v2378 = vpop.f32.mrb[0].mxu0
    %v2379 = vadd.f32 0.0, %v2378
    %2380 = vmatprep.mubr.bf16.mxu0 %v1533
    %2381 = vmatmul.mubr.bf16.gmra.mrb[0].mxu0 %v1532
    %v2382 = vpop.f32.mrb[0].mxu0
    %v2383 = vadd.f32 0.0, %v2382
    %v2384 = vpop.f32.mrb[0].mxu0
    %v2385 = vadd.f32 0.0, %v2384
    %v2386 = vpop.f32.mrb[0].mxu0
    %v2387 = vadd.f32 0.0, %v2386
    %v2388 = vpop.f32.mrb[0].mxu0
    %v2389 = vadd.f32 0.0, %v2388
    %2390 = vmatprep.mubr.bf16.mxu0 %v1535
    %2391 = vmatmul.mubr.bf16.gmra.mrb[0].mxu0 %v1534
    %v2392 = vpop.f32.mrb[0].mxu0
    %v2393 = vadd.f32 0.0, %v2392
    %v2394 = vpop.f32.mrb[0].mxu0
    %v2395 = vadd.f32 0.0, %v2394
    %v2396 = vpop.f32.mrb[0].mxu0
    %v2397 = vadd.f32 0.0, %v2396
    %v2398 = vpop.f32.mrb[0].mxu0
    %v2399 = vadd.f32 0.0, %v2398
    %2400 = vdwg.mxu0
    %v2401 = vpack.c.bf16 %v1767, %v1763
    %v2402 = vpack.c.bf16 %v1769, %v1765
    %v2403 = vpack.c.bf16 %v1777, %v1773
    %v2404 = vpack.c.bf16 %v1779, %v1775
    %v2405 = vpack.c.bf16 %v1787, %v1783
    %v2406 = vpack.c.bf16 %v1789, %v1785
    %v2407 = vpack.c.bf16 %v1797, %v1793
    %v2408 = vpack.c.bf16 %v1799, %v1795
    %v2409 = vpack.c.bf16 %v1807, %v1803
    %v2410 = vpack.c.bf16 %v1809, %v1805
    %v2411 = vpack.c.bf16 %v1817, %v1813
    %v2412 = vpack.c.bf16 %v1819, %v1815
    %v2413 = vpack.c.bf16 %v1827, %v1823
    %v2414 = vpack.c.bf16 %v1829, %v1825
    %v2415 = vpack.c.bf16 %v1837, %v1833
    %v2416 = vpack.c.bf16 %v1839, %v1835
    %v2417 = vpack.c.bf16 %v1847, %v1843
    %v2418 = vpack.c.bf16 %v1849, %v1845
    %v2419 = vpack.c.bf16 %v1857, %v1853
    %v2420 = vpack.c.bf16 %v1859, %v1855
    %v2421 = vpack.c.bf16 %v1867, %v1863
    %v2422 = vpack.c.bf16 %v1869, %v1865
    %v2423 = vpack.c.bf16 %v1877, %v1873
    %v2424 = vpack.c.bf16 %v1879, %v1875
    %v2425 = vpack.c.bf16 %v1887, %v1883
    %v2426 = vpack.c.bf16 %v1889, %v1885
    %v2427 = vpack.c.bf16 %v1897, %v1893
    %v2428 = vpack.c.bf16 %v1899, %v1895
    %v2429 = vpack.c.bf16 %v1907, %v1903
    %v2430 = vpack.c.bf16 %v1909, %v1905
    %v2431 = vpack.c.bf16 %v1917, %v1913
    %v2432 = vpack.c.bf16 %v1919, %v1915
    %v2433 = vpack.c.bf16 %v1927, %v1923
    %v2434 = vpack.c.bf16 %v1929, %v1925
    %v2435 = vpack.c.bf16 %v1937, %v1933
    %v2436 = vpack.c.bf16 %v1939, %v1935
    %v2437 = vpack.c.bf16 %v1947, %v1943
    %v2438 = vpack.c.bf16 %v1949, %v1945
    %v2439 = vpack.c.bf16 %v1957, %v1953
    %v2440 = vpack.c.bf16 %v1959, %v1955
    %v2441 = vpack.c.bf16 %v1967, %v1963
    %v2442 = vpack.c.bf16 %v1969, %v1965
    %v2443 = vpack.c.bf16 %v1977, %v1973
    %v2444 = vpack.c.bf16 %v1979, %v1975
    %v2445 = vpack.c.bf16 %v1987, %v1983
    %v2446 = vpack.c.bf16 %v1989, %v1985
    %v2447 = vpack.c.bf16 %v1997, %v1993
    %v2448 = vpack.c.bf16 %v1999, %v1995
    %v2449 = vpack.c.bf16 %v2007, %v2003
    %v2450 = vpack.c.bf16 %v2009, %v2005
    %v2451 = vpack.c.bf16 %v2017, %v2013
    %v2452 = vpack.c.bf16 %v2019, %v2015
    %v2453 = vpack.c.bf16 %v2027, %v2023
    %v2454 = vpack.c.bf16 %v2029, %v2025
    %v2455 = vpack.c.bf16 %v2037, %v2033
    %v2456 = vpack.c.bf16 %v2039, %v2035
    %v2457 = vpack.c.bf16 %v2047, %v2043
    %v2458 = vpack.c.bf16 %v2049, %v2045
    %v2459 = vpack.c.bf16 %v2057, %v2053
    %v2460 = vpack.c.bf16 %v2059, %v2055
    %v2461 = vpack.c.bf16 %v2067, %v2063
    %v2462 = vpack.c.bf16 %v2069, %v2065
    %v2463 = vpack.c.bf16 %v2077, %v2073
    %v2464 = vpack.c.bf16 %v2079, %v2075
    %v2465 = vpack.c.bf16 %v2087, %v2083
    %v2466 = vpack.c.bf16 %v2089, %v2085
    %v2467 = vpack.c.bf16 %v2097, %v2093
    %v2468 = vpack.c.bf16 %v2099, %v2095
    %v2469 = vpack.c.bf16 %v2107, %v2103
    %v2470 = vpack.c.bf16 %v2109, %v2105
    %v2471 = vpack.c.bf16 %v2117, %v2113
    %v2472 = vpack.c.bf16 %v2119, %v2115
    %v2473 = vpack.c.bf16 %v2127, %v2123
    %v2474 = vpack.c.bf16 %v2129, %v2125
    %v2475 = vpack.c.bf16 %v2137, %v2133
    %v2476 = vpack.c.bf16 %v2139, %v2135
    %v2477 = vpack.c.bf16 %v2147, %v2143
    %v2478 = vpack.c.bf16 %v2149, %v2145
    %v2479 = vpack.c.bf16 %v2157, %v2153
    %v2480 = vpack.c.bf16 %v2159, %v2155
    %v2481 = vpack.c.bf16 %v2167, %v2163
    %v2482 = vpack.c.bf16 %v2169, %v2165
    %v2483 = vpack.c.bf16 %v2177, %v2173
    %v2484 = vpack.c.bf16 %v2179, %v2175
    %v2485 = vpack.c.bf16 %v2187, %v2183
    %v2486 = vpack.c.bf16 %v2189, %v2185
    %v2487 = vpack.c.bf16 %v2197, %v2193
    %v2488 = vpack.c.bf16 %v2199, %v2195
    %v2489 = vpack.c.bf16 %v2207, %v2203
    %v2490 = vpack.c.bf16 %v2209, %v2205
    %v2491 = vpack.c.bf16 %v2217, %v2213
    %v2492 = vpack.c.bf16 %v2219, %v2215
    %v2493 = vpack.c.bf16 %v2227, %v2223
    %v2494 = vpack.c.bf16 %v2229, %v2225
    %v2495 = vpack.c.bf16 %v2237, %v2233
    %v2496 = vpack.c.bf16 %v2239, %v2235
    %v2497 = vpack.c.bf16 %v2247, %v2243
    %v2498 = vpack.c.bf16 %v2249, %v2245
    %v2499 = vpack.c.bf16 %v2257, %v2253
    %v2500 = vpack.c.bf16 %v2259, %v2255
    %v2501 = vpack.c.bf16 %v2267, %v2263
    %v2502 = vpack.c.bf16 %v2269, %v2265
    %v2503 = vpack.c.bf16 %v2277, %v2273
    %v2504 = vpack.c.bf16 %v2279, %v2275
    %v2505 = vpack.c.bf16 %v2287, %v2283
    %v2506 = vpack.c.bf16 %v2289, %v2285
    %v2507 = vpack.c.bf16 %v2297, %v2293
    %v2508 = vpack.c.bf16 %v2299, %v2295
    %v2509 = vpack.c.bf16 %v2307, %v2303
    %v2510 = vpack.c.bf16 %v2309, %v2305
    %v2511 = vpack.c.bf16 %v2317, %v2313
    %v2512 = vpack.c.bf16 %v2319, %v2315
    %v2513 = vpack.c.bf16 %v2327, %v2323
    %v2514 = vpack.c.bf16 %v2329, %v2325
    %v2515 = vpack.c.bf16 %v2337, %v2333
    %v2516 = vpack.c.bf16 %v2339, %v2335
    %v2517 = vpack.c.bf16 %v2347, %v2343
    %v2518 = vpack.c.bf16 %v2349, %v2345
    %v2519 = vpack.c.bf16 %v2357, %v2353
    %v2520 = vpack.c.bf16 %v2359, %v2355
    %v2521 = vpack.c.bf16 %v2367, %v2363
    %v2522 = vpack.c.bf16 %v2369, %v2365
    %v2523 = vpack.c.bf16 %v2377, %v2373
    %v2524 = vpack.c.bf16 %v2379, %v2375
    %v2525 = vpack.c.bf16 %v2387, %v2383
    %v2526 = vpack.c.bf16 %v2389, %v2385
    %v2527 = vpack.c.bf16 %v2397, %v2393
    %v2528 = vpack.c.bf16 %v2399, %v2395
    %v2529 = vld [vmem:[%s4] sm:$0x3]
    %v2532 = vunpack.c.l.s4 1966171168
    %v2533 = vunpack.c.0.s8 %v2532
    %v2534 = vlaneseq
    %v2535 = vshrl.u32 %v2534, 7
    %v2536 = vsub.s32 %v2533, %v2535
    %v2537 = vrot.slane %v2529, %v2536
    %v2538 = vcombine.high %v2537, %v2537
    %v2540 = vunpack.c.l.s4 1966171168
    %v2541 = vunpack.c.0.s8 %v2540
    %v2542 = vlaneseq
    %v2543 = vshrl.u32 %v2542, 7
    %v2544 = vsub.s32 %v2541, %v2543
    %v2545 = vrot.slane %v2537, %v2544
    %v2547 = vunpack.c.l.s4 1966171168
    %v2548 = vunpack.c.0.s8 %v2547
    %v2549 = vlaneseq
    %v2550 = vshrl.u32 %v2549, 7
    %v2551 = vsub.s32 %v2548, %v2550
    %v2552 = vrot.slane %v2538, %v2551
    %v2554 = vpack.i.b16 %v2545, %v2545
    %v2556 = vlaneseq
    %v2557 = vshrl.u32 %v2556, 7
    %v2558 = vsub.s32 0, %v2557
    %v2559 = vrot.slane %v2554, %v2558
    %v2561 = vpack.i.b16 %v2552, %v2552
    %v2563 = vlaneseq
    %v2564 = vshrl.u32 %v2563, 7
    %v2565 = vsub.s32 0, %v2564
    %v2566 = vrot.slane %v2561, %v2565
    %v2567 = vadd.bf16 %v2401, %v2559
    %v2568 = vadd.bf16 %v2402, %v2566
    %v2569 = vadd.bf16 %v2403, %v2559
    %v2570 = vadd.bf16 %v2404, %v2566
    %v2571 = vadd.bf16 %v2405, %v2559
    %v2572 = vadd.bf16 %v2406, %v2566
    %v2573 = vadd.bf16 %v2407, %v2559
    %v2574 = vadd.bf16 %v2408, %v2566
    %v2575 = vadd.bf16 %v2409, %v2559
    %v2576 = vadd.bf16 %v2410, %v2566
    %v2577 = vadd.bf16 %v2411, %v2559
    %v2578 = vadd.bf16 %v2412, %v2566
    %v2579 = vadd.bf16 %v2413, %v2559
    %v2580 = vadd.bf16 %v2414, %v2566
    %v2581 = vadd.bf16 %v2415, %v2559
    %v2582 = vadd.bf16 %v2416, %v2566
    %v2583 = vadd.bf16 %v2417, %v2559
    %v2584 = vadd.bf16 %v2418, %v2566
    %v2585 = vadd.bf16 %v2419, %v2559
    %v2586 = vadd.bf16 %v2420, %v2566
    %v2587 = vadd.bf16 %v2421, %v2559
    %v2588 = vadd.bf16 %v2422, %v2566
    %v2589 = vadd.bf16 %v2423, %v2559
    %v2590 = vadd.bf16 %v2424, %v2566
    %v2591 = vadd.bf16 %v2425, %v2559
    %v2592 = vadd.bf16 %v2426, %v2566
    %v2593 = vadd.bf16 %v2427, %v2559
    %v2594 = vadd.bf16 %v2428, %v2566
    %v2595 = vadd.bf16 %v2429, %v2559
    %v2596 = vadd.bf16 %v2430, %v2566
    %v2597 = vadd.bf16 %v2431, %v2559
    %v2598 = vadd.bf16 %v2432, %v2566
    %v2599 = vadd.bf16 %v2433, %v2559
    %v2600 = vadd.bf16 %v2434, %v2566
    %v2601 = vadd.bf16 %v2435, %v2559
    %v2602 = vadd.bf16 %v2436, %v2566
    %v2603 = vadd.bf16 %v2437, %v2559
    %v2604 = vadd.bf16 %v2438, %v2566
    %v2605 = vadd.bf16 %v2439, %v2559
    %v2606 = vadd.bf16 %v2440, %v2566
    %v2607 = vadd.bf16 %v2441, %v2559
    %v2608 = vadd.bf16 %v2442, %v2566
    %v2609 = vadd.bf16 %v2443, %v2559
    %v2610 = vadd.bf16 %v2444, %v2566
    %v2611 = vadd.bf16 %v2445, %v2559
    %v2612 = vadd.bf16 %v2446, %v2566
    %v2613 = vadd.bf16 %v2447, %v2559
    %v2614 = vadd.bf16 %v2448, %v2566
    %v2615 = vadd.bf16 %v2449, %v2559
    %v2616 = vadd.bf16 %v2450, %v2566
    %v2617 = vadd.bf16 %v2451, %v2559
    %v2618 = vadd.bf16 %v2452, %v2566
    %v2619 = vadd.bf16 %v2453, %v2559
    %v2620 = vadd.bf16 %v2454, %v2566
    %v2621 = vadd.bf16 %v2455, %v2559
    %v2622 = vadd.bf16 %v2456, %v2566
    %v2623 = vadd.bf16 %v2457, %v2559
    %v2624 = vadd.bf16 %v2458, %v2566
    %v2625 = vadd.bf16 %v2459, %v2559
    %v2626 = vadd.bf16 %v2460, %v2566
    %v2627 = vadd.bf16 %v2461, %v2559
    %v2628 = vadd.bf16 %v2462, %v2566
    %v2629 = vadd.bf16 %v2463, %v2559
    %v2630 = vadd.bf16 %v2464, %v2566
    %v2631 = vadd.bf16 %v2465, %v2559
    %v2632 = vadd.bf16 %v2466, %v2566
    %v2633 = vadd.bf16 %v2467, %v2559
    %v2634 = vadd.bf16 %v2468, %v2566
    %v2635 = vadd.bf16 %v2469, %v2559
    %v2636 = vadd.bf16 %v2470, %v2566
    %v2637 = vadd.bf16 %v2471, %v2559
    %v2638 = vadd.bf16 %v2472, %v2566
    %v2639 = vadd.bf16 %v2473, %v2559
    %v2640 = vadd.bf16 %v2474, %v2566
    %v2641 = vadd.bf16 %v2475, %v2559
    %v2642 = vadd.bf16 %v2476, %v2566
    %v2643 = vadd.bf16 %v2477, %v2559
    %v2644 = vadd.bf16 %v2478, %v2566
    %v2645 = vadd.bf16 %v2479, %v2559
    %v2646 = vadd.bf16 %v2480, %v2566
    %v2647 = vadd.bf16 %v2481, %v2559
    %v2648 = vadd.bf16 %v2482, %v2566
    %v2649 = vadd.bf16 %v2483, %v2559
    %v2650 = vadd.bf16 %v2484, %v2566
    %v2651 = vadd.bf16 %v2485, %v2559
    %v2652 = vadd.bf16 %v2486, %v2566
    %v2653 = vadd.bf16 %v2487, %v2559
    %v2654 = vadd.bf16 %v2488, %v2566
    %v2655 = vadd.bf16 %v2489, %v2559
    %v2656 = vadd.bf16 %v2490, %v2566
    %v2657 = vadd.bf16 %v2491, %v2559
    %v2658 = vadd.bf16 %v2492, %v2566
    %v2659 = vadd.bf16 %v2493, %v2559
    %v2660 = vadd.bf16 %v2494, %v2566
    %v2661 = vadd.bf16 %v2495, %v2559
    %v2662 = vadd.bf16 %v2496, %v2566
    %v2663 = vadd.bf16 %v2497, %v2559
    %v2664 = vadd.bf16 %v2498, %v2566
    %v2665 = vadd.bf16 %v2499, %v2559
    %v2666 = vadd.bf16 %v2500, %v2566
    %v2667 = vadd.bf16 %v2501, %v2559
    %v2668 = vadd.bf16 %v2502, %v2566
    %v2669 = vadd.bf16 %v2503, %v2559
    %v2670 = vadd.bf16 %v2504, %v2566
    %v2671 = vadd.bf16 %v2505, %v2559
    %v2672 = vadd.bf16 %v2506, %v2566
    %v2673 = vadd.bf16 %v2507, %v2559
    %v2674 = vadd.bf16 %v2508, %v2566
    %v2675 = vadd.bf16 %v2509, %v2559
    %v2676 = vadd.bf16 %v2510, %v2566
    %v2677 = vadd.bf16 %v2511, %v2559
    %v2678 = vadd.bf16 %v2512, %v2566
    %v2679 = vadd.bf16 %v2513, %v2559
    %v2680 = vadd.bf16 %v2514, %v2566
    %v2681 = vadd.bf16 %v2515, %v2559
    %v2682 = vadd.bf16 %v2516, %v2566
    %v2683 = vadd.bf16 %v2517, %v2559
    %v2684 = vadd.bf16 %v2518, %v2566
    %v2685 = vadd.bf16 %v2519, %v2559
    %v2686 = vadd.bf16 %v2520, %v2566
    %v2687 = vadd.bf16 %v2521, %v2559
    %v2688 = vadd.bf16 %v2522, %v2566
    %v2689 = vadd.bf16 %v2523, %v2559
    %v2690 = vadd.bf16 %v2524, %v2566
    %v2691 = vadd.bf16 %v2525, %v2559
    %v2692 = vadd.bf16 %v2526, %v2566
    %v2693 = vadd.bf16 %v2527, %v2559
    %v2694 = vadd.bf16 %v2528, %v2566
    %v2695 = vmax.bf16 %v2567, 0
    %v2696 = vmax.bf16 %v2568, 0
    %v2697 = vmax.bf16 %v2569, 0
    %v2698 = vmax.bf16 %v2570, 0
    %v2699 = vmax.bf16 %v2571, 0
    %v2700 = vmax.bf16 %v2572, 0
    %v2701 = vmax.bf16 %v2573, 0
    %v2702 = vmax.bf16 %v2574, 0
    %v2703 = vmax.bf16 %v2575, 0
    %v2704 = vmax.bf16 %v2576, 0
    %v2705 = vmax.bf16 %v2577, 0
    %v2706 = vmax.bf16 %v2578, 0
    %v2707 = vmax.bf16 %v2579, 0
    %v2708 = vmax.bf16 %v2580, 0
    %v2709 = vmax.bf16 %v2581, 0
    %v2710 = vmax.bf16 %v2582, 0
    %v2711 = vmax.bf16 %v2583, 0
    %v2712 = vmax.bf16 %v2584, 0
    %v2713 = vmax.bf16 %v2585, 0
    %v2714 = vmax.bf16 %v2586, 0
    %v2715 = vmax.bf16 %v2587, 0
    %v2716 = vmax.bf16 %v2588, 0
    %v2717 = vmax.bf16 %v2589, 0
    %v2718 = vmax.bf16 %v2590, 0
    %v2719 = vmax.bf16 %v2591, 0
    %v2720 = vmax.bf16 %v2592, 0
    %v2721 = vmax.bf16 %v2593, 0
    %v2722 = vmax.bf16 %v2594, 0
    %v2723 = vmax.bf16 %v2595, 0
    %v2724 = vmax.bf16 %v2596, 0
    %v2725 = vmax.bf16 %v2597, 0
    %v2726 = vmax.bf16 %v2598, 0
    %v2727 = vmax.bf16 %v2599, 0
    %v2728 = vmax.bf16 %v2600, 0
    %v2729 = vmax.bf16 %v2601, 0
    %v2730 = vmax.bf16 %v2602, 0
    %v2731 = vmax.bf16 %v2603, 0
    %v2732 = vmax.bf16 %v2604, 0
    %v2733 = vmax.bf16 %v2605, 0
    %v2734 = vmax.bf16 %v2606, 0
    %v2735 = vmax.bf16 %v2607, 0
    %v2736 = vmax.bf16 %v2608, 0
    %v2737 = vmax.bf16 %v2609, 0
    %v2738 = vmax.bf16 %v2610, 0
    %v2739 = vmax.bf16 %v2611, 0
    %v2740 = vmax.bf16 %v2612, 0
    %v2741 = vmax.bf16 %v2613, 0
    %v2742 = vmax.bf16 %v2614, 0
    %v2743 = vmax.bf16 %v2615, 0
    %v2744 = vmax.bf16 %v2616, 0
    %v2745 = vmax.bf16 %v2617, 0
    %v2746 = vmax.bf16 %v2618, 0
    %v2747 = vmax.bf16 %v2619, 0
    %v2748 = vmax.bf16 %v2620, 0
    %v2749 = vmax.bf16 %v2621, 0
    %v2750 = vmax.bf16 %v2622, 0
    %v2751 = vmax.bf16 %v2623, 0
    %v2752 = vmax.bf16 %v2624, 0
    %v2753 = vmax.bf16 %v2625, 0
    %v2754 = vmax.bf16 %v2626, 0
    %v2755 = vmax.bf16 %v2627, 0
    %v2756 = vmax.bf16 %v2628, 0
    %v2757 = vmax.bf16 %v2629, 0
    %v2758 = vmax.bf16 %v2630, 0
    %v2759 = vmax.bf16 %v2631, 0
    %v2760 = vmax.bf16 %v2632, 0
    %v2761 = vmax.bf16 %v2633, 0
    %v2762 = vmax.bf16 %v2634, 0
    %v2763 = vmax.bf16 %v2635, 0
    %v2764 = vmax.bf16 %v2636, 0
    %v2765 = vmax.bf16 %v2637, 0
    %v2766 = vmax.bf16 %v2638, 0
    %v2767 = vmax.bf16 %v2639, 0
    %v2768 = vmax.bf16 %v2640, 0
    %v2769 = vmax.bf16 %v2641, 0
    %v2770 = vmax.bf16 %v2642, 0
    %v2771 = vmax.bf16 %v2643, 0
    %v2772 = vmax.bf16 %v2644, 0
    %v2773 = vmax.bf16 %v2645, 0
    %v2774 = vmax.bf16 %v2646, 0
    %v2775 = vmax.bf16 %v2647, 0
    %v2776 = vmax.bf16 %v2648, 0
    %v2777 = vmax.bf16 %v2649, 0
    %v2778 = vmax.bf16 %v2650, 0
    %v2779 = vmax.bf16 %v2651, 0
    %v2780 = vmax.bf16 %v2652, 0
    %v2781 = vmax.bf16 %v2653, 0
    %v2782 = vmax.bf16 %v2654, 0
    %v2783 = vmax.bf16 %v2655, 0
    %v2784 = vmax.bf16 %v2656, 0
    %v2785 = vmax.bf16 %v2657, 0
    %v2786 = vmax.bf16 %v2658, 0
    %v2787 = vmax.bf16 %v2659, 0
    %v2788 = vmax.bf16 %v2660, 0
    %v2789 = vmax.bf16 %v2661, 0
    %v2790 = vmax.bf16 %v2662, 0
    %v2791 = vmax.bf16 %v2663, 0
    %v2792 = vmax.bf16 %v2664, 0
    %v2793 = vmax.bf16 %v2665, 0
    %v2794 = vmax.bf16 %v2666, 0
    %v2795 = vmax.bf16 %v2667, 0
    %v2796 = vmax.bf16 %v2668, 0
    %v2797 = vmax.bf16 %v2669, 0
    %v2798 = vmax.bf16 %v2670, 0
    %v2799 = vmax.bf16 %v2671, 0
    %v2800 = vmax.bf16 %v2672, 0
    %v2801 = vmax.bf16 %v2673, 0
    %v2802 = vmax.bf16 %v2674, 0
    %v2803 = vmax.bf16 %v2675, 0
    %v2804 = vmax.bf16 %v2676, 0
    %v2805 = vmax.bf16 %v2677, 0
    %v2806 = vmax.bf16 %v2678, 0
    %v2807 = vmax.bf16 %v2679, 0
    %v2808 = vmax.bf16 %v2680, 0
    %v2809 = vmax.bf16 %v2681, 0
    %v2810 = vmax.bf16 %v2682, 0
    %v2811 = vmax.bf16 %v2683, 0
    %v2812 = vmax.bf16 %v2684, 0
    %v2813 = vmax.bf16 %v2685, 0
    %v2814 = vmax.bf16 %v2686, 0
    %v2815 = vmax.bf16 %v2687, 0
    %v2816 = vmax.bf16 %v2688, 0
    %v2817 = vmax.bf16 %v2689, 0
    %v2818 = vmax.bf16 %v2690, 0
    %v2819 = vmax.bf16 %v2691, 0
    %v2820 = vmax.bf16 %v2692, 0
    %v2821 = vmax.bf16 %v2693, 0
    %v2822 = vmax.bf16 %v2694, 0
    %s2823 = scalar_lea.vmem [#allocation3], 256
    %v2824 = vld [vmem:[%s2823] sm:$0xff]
    %v2825 = vld [vmem:[%s2823 + $0x8] sm:$0xff]
    %v2826 = vld [vmem:[%s2823 + $0x10] sm:$0xff]
    %v2827 = vld [vmem:[%s2823 + $0x18] sm:$0xff]
    %v2828 = vld [vmem:[%s2823 + $0x20] sm:$0xff]
    %v2829 = vld [vmem:[%s2823 + $0x28] sm:$0xff]
    %v2830 = vld [vmem:[%s2823 + $0x30] sm:$0xff]
    %v2831 = vld [vmem:[%s2823 + $0x38] sm:$0xff]
    %v2832 = vld [vmem:[%s2823 + $0x40] sm:$0xff]
    %v2833 = vld [vmem:[%s2823 + $0x48] sm:$0xff]
    %v2834 = vld [vmem:[%s2823 + $0x50] sm:$0xff]
    %v2835 = vld [vmem:[%s2823 + $0x58] sm:$0xff]
    %v2836 = vld [vmem:[%s2823 + $0x60] sm:$0xff]
    %v2837 = vld [vmem:[%s2823 + $0x68] sm:$0xff]
    %v2838 = vld [vmem:[%s2823 + $0x70] sm:$0xff]
    %v2839 = vld [vmem:[%s2823 + $0x78] sm:$0xff]
    %v2840 = vld [vmem:[%s2823 + $0x80] sm:$0xff]
    %v2841 = vld [vmem:[%s2823 + $0x88] sm:$0xff]
    %v2842 = vld [vmem:[%s2823 + $0x90] sm:$0xff]
    %v2843 = vld [vmem:[%s2823 + $0x98] sm:$0xff]
    %v2844 = vld [vmem:[%s2823 + $0xa0] sm:$0xff]
    %v2845 = vld [vmem:[%s2823 + $0xa8] sm:$0xff]
    %v2846 = vld [vmem:[%s2823 + $0xb0] sm:$0xff]
    %v2847 = vld [vmem:[%s2823 + $0xb8] sm:$0xff]
    %v2848 = vld [vmem:[%s2823 + $0xc0] sm:$0xff]
    %v2849 = vld [vmem:[%s2823 + $0xc8] sm:$0xff]
    %v2850 = vld [vmem:[%s2823 + $0xd0] sm:$0xff]
    %v2851 = vld [vmem:[%s2823 + $0xd8] sm:$0xff]
    %v2852 = vld [vmem:[%s2823 + $0xe0] sm:$0xff]
    %v2853 = vld [vmem:[%s2823 + $0xe8] sm:$0xff]
    %v2854 = vld [vmem:[%s2823 + $0xf0] sm:$0xff]
    %v2855 = vld [vmem:[%s2823 + $0xf8] sm:$0xff]
    %v2888 = vunpack.c.l.b16 %v2824
    %v2889 = vunpack.c.h.b16 %v2824
    %v2890 = vunpack.c.l.b16 %v2825
    %v2891 = vunpack.c.h.b16 %v2825
    %v2892 = vunpack.c.l.b16 %v2826
    %v2893 = vunpack.c.h.b16 %v2826
    %v2894 = vunpack.c.l.b16 %v2827
    %v2895 = vunpack.c.h.b16 %v2827
    %v2896 = vunpack.c.l.b16 %v2828
    %v2897 = vunpack.c.h.b16 %v2828
    %v2898 = vunpack.c.l.b16 %v2829
    %v2899 = vunpack.c.h.b16 %v2829
    %v2900 = vunpack.c.l.b16 %v2830
    %v2901 = vunpack.c.h.b16 %v2830
    %v2902 = vunpack.c.l.b16 %v2831
    %v2903 = vunpack.c.h.b16 %v2831
    %v2904 = vunpack.c.l.b16 %v2832
    %v2905 = vunpack.c.h.b16 %v2832
    %v2906 = vunpack.c.l.b16 %v2833
    %v2907 = vunpack.c.h.b16 %v2833
    %v2908 = vunpack.c.l.b16 %v2834
    %v2909 = vunpack.c.h.b16 %v2834
    %v2910 = vunpack.c.l.b16 %v2835
    %v2911 = vunpack.c.h.b16 %v2835
    %v2912 = vunpack.c.l.b16 %v2836
    %v2913 = vunpack.c.h.b16 %v2836
    %v2914 = vunpack.c.l.b16 %v2837
    %v2915 = vunpack.c.h.b16 %v2837
    %v2916 = vunpack.c.l.b16 %v2838
    %v2917 = vunpack.c.h.b16 %v2838
    %v2918 = vunpack.c.l.b16 %v2839
    %v2919 = vunpack.c.h.b16 %v2839
    %v2920 = vunpack.c.l.b16 %v2840
    %v2921 = vunpack.c.h.b16 %v2840
    %v2922 = vunpack.c.l.b16 %v2841
    %v2923 = vunpack.c.h.b16 %v2841
    %v2924 = vunpack.c.l.b16 %v2842
    %v2925 = vunpack.c.h.b16 %v2842
    %v2926 = vunpack.c.l.b16 %v2843
    %v2927 = vunpack.c.h.b16 %v2843
    %v2928 = vunpack.c.l.b16 %v2844
    %v2929 = vunpack.c.h.b16 %v2844
    %v2930 = vunpack.c.l.b16 %v2845
    %v2931 = vunpack.c.h.b16 %v2845
    %v2932 = vunpack.c.l.b16 %v2846
    %v2933 = vunpack.c.h.b16 %v2846
    %v2934 = vunpack.c.l.b16 %v2847
    %v2935 = vunpack.c.h.b16 %v2847
    %v2936 = vunpack.c.l.b16 %v2848
    %v2937 = vunpack.c.h.b16 %v2848
    %v2938 = vunpack.c.l.b16 %v2849
    %v2939 = vunpack.c.h.b16 %v2849
    %v2940 = vunpack.c.l.b16 %v2850
    %v2941 = vunpack.c.h.b16 %v2850
    %v2942 = vunpack.c.l.b16 %v2851
    %v2943 = vunpack.c.h.b16 %v2851
    %v2944 = vunpack.c.l.b16 %v2852
    %v2945 = vunpack.c.h.b16 %v2852
    %v2946 = vunpack.c.l.b16 %v2853
    %v2947 = vunpack.c.h.b16 %v2853
    %v2948 = vunpack.c.l.b16 %v2854
    %v2949 = vunpack.c.h.b16 %v2854
    %v2950 = vunpack.c.l.b16 %v2855
    %v2951 = vunpack.c.h.b16 %v2855
    %v2952 = vpack.c.b16 %v2890, %v2888
    %v2953 = vpack.c.b16 %v2891, %v2889
    %v2954 = vpack.c.b16 %v2894, %v2892
    %v2955 = vpack.c.b16 %v2895, %v2893
    %v2956 = vpack.c.b16 %v2898, %v2896
    %v2957 = vpack.c.b16 %v2899, %v2897
    %v2958 = vpack.c.b16 %v2902, %v2900
    %v2959 = vpack.c.b16 %v2903, %v2901
    %v2960 = vpack.c.b16 %v2906, %v2904
    %v2961 = vpack.c.b16 %v2907, %v2905
    %v2962 = vpack.c.b16 %v2910, %v2908
    %v2963 = vpack.c.b16 %v2911, %v2909
    %v2964 = vpack.c.b16 %v2914, %v2912
    %v2965 = vpack.c.b16 %v2915, %v2913
    %v2966 = vpack.c.b16 %v2918, %v2916
    %v2967 = vpack.c.b16 %v2919, %v2917
    %v2968 = vpack.c.b16 %v2922, %v2920
    %v2969 = vpack.c.b16 %v2923, %v2921
    %v2970 = vpack.c.b16 %v2926, %v2924
    %v2971 = vpack.c.b16 %v2927, %v2925
    %v2972 = vpack.c.b16 %v2930, %v2928
    %v2973 = vpack.c.b16 %v2931, %v2929
    %v2974 = vpack.c.b16 %v2934, %v2932
    %v2975 = vpack.c.b16 %v2935, %v2933
    %v2976 = vpack.c.b16 %v2938, %v2936
    %v2977 = vpack.c.b16 %v2939, %v2937
    %v2978 = vpack.c.b16 %v2942, %v2940
    %v2979 = vpack.c.b16 %v2943, %v2941
    %v2980 = vpack.c.b16 %v2946, %v2944
    %v2981 = vpack.c.b16 %v2947, %v2945
    %v2982 = vpack.c.b16 %v2950, %v2948
    %v2983 = vpack.c.b16 %v2951, %v2949
    %3016 = vmatprep.subr.bf16.mxu0 %v2953
    %3017 = vmatpush1.bf16.msra.mxu0 %v2952
    %3018 = vmatprep.subr.bf16.mxu0 %v2955
    %3019 = vmatpush1.bf16.msra.mxu0 %v2954
    %3020 = vmatprep.subr.bf16.mxu0 %v2957
    %3021 = vmatpush1.bf16.msra.mxu0 %v2956
    %3022 = vmatprep.subr.bf16.mxu0 %v2959
    %3023 = vmatpush1.bf16.msra.mxu0 %v2958
    %3024 = vmatprep.subr.bf16.mxu0 %v2961
    %3025 = vmatpush1.bf16.msra.mxu0 %v2960
    %3026 = vmatprep.subr.bf16.mxu0 %v2963
    %3027 = vmatpush1.bf16.msra.mxu0 %v2962
    %3028 = vmatprep.subr.bf16.mxu0 %v2965
    %3029 = vmatpush1.bf16.msra.mxu0 %v2964
    %3030 = vmatprep.subr.bf16.mxu0 %v2967
    %3031 = vmatpush1.bf16.msra.mxu0 %v2966
    %3032 = vmatprep.subr.bf16.mxu0 %v2969
    %3033 = vmatpush1.bf16.msra.mxu0 %v2968
    %3034 = vmatprep.subr.bf16.mxu0 %v2971
    %3035 = vmatpush1.bf16.msra.mxu0 %v2970
    %3036 = vmatprep.subr.bf16.mxu0 %v2973
    %3037 = vmatpush1.bf16.msra.mxu0 %v2972
    %3038 = vmatprep.subr.bf16.mxu0 %v2975
    %3039 = vmatpush1.bf16.msra.mxu0 %v2974
    %3040 = vmatprep.subr.bf16.mxu0 %v2977
    %3041 = vmatpush1.bf16.msra.mxu0 %v2976
    %3042 = vmatprep.subr.bf16.mxu0 %v2979
    %3043 = vmatpush1.bf16.msra.mxu0 %v2978
    %3044 = vmatprep.subr.bf16.mxu0 %v2981
    %3045 = vmatpush1.bf16.msra.mxu0 %v2980
    %3046 = vmatprep.subr.bf16.mxu0 %v2983
    %3047 = vmatpush1.bf16.msra.mxu0 %v2982
    %3048 = vmatprep.mubr.bf16.mxu0 %v2696
    %3049 = vmatmul.mubr.bf16.gmra.mrb[0].mxu0 %v2695
    %v3050 = vpop.f32.mrb[0].mxu0
    %v3051 = vadd.f32 0.0, %v3050
    %v3052 = vpop.f32.mrb[0].mxu0
    %v3053 = vadd.f32 0.0, %v3052
    %v3054 = vpop.f32.mrb[0].mxu0
    %v3055 = vadd.f32 0.0, %v3054
    %v3056 = vpop.f32.mrb[0].mxu0
    %v3057 = vadd.f32 0.0, %v3056
    %3058 = vmatprep.mubr.bf16.mxu0 %v2698
    %3059 = vmatmul.mubr.bf16.gmra.mrb[0].mxu0 %v2697
    %v3060 = vpop.f32.mrb[0].mxu0
    %v3061 = vadd.f32 0.0, %v3060
    %v3062 = vpop.f32.mrb[0].mxu0
    %v3063 = vadd.f32 0.0, %v3062
    %v3064 = vpop.f32.mrb[0].mxu0
    %v3065 = vadd.f32 0.0, %v3064
    %v3066 = vpop.f32.mrb[0].mxu0
    %v3067 = vadd.f32 0.0, %v3066
    %3068 = vmatprep.mubr.bf16.mxu0 %v2700
    %3069 = vmatmul.mubr.bf16.gmra.mrb[0].mxu0 %v2699
    %v3070 = vpop.f32.mrb[0].mxu0
    %v3071 = vadd.f32 0.0, %v3070
    %v3072 = vpop.f32.mrb[0].mxu0
    %v3073 = vadd.f32 0.0, %v3072
    %v3074 = vpop.f32.mrb[0].mxu0
    %v3075 = vadd.f32 0.0, %v3074
    %v3076 = vpop.f32.mrb[0].mxu0
    %v3077 = vadd.f32 0.0, %v3076
    %3078 = vmatprep.mubr.bf16.mxu0 %v2702
    %3079 = vmatmul.mubr.bf16.gmra.mrb[0].mxu0 %v2701
    %v3080 = vpop.f32.mrb[0].mxu0
    %v3081 = vadd.f32 0.0, %v3080
    %v3082 = vpop.f32.mrb[0].mxu0
    %v3083 = vadd.f32 0.0, %v3082
    %v3084 = vpop.f32.mrb[0].mxu0
    %v3085 = vadd.f32 0.0, %v3084
    %v3086 = vpop.f32.mrb[0].mxu0
    %v3087 = vadd.f32 0.0, %v3086
    %3088 = vmatprep.mubr.bf16.mxu0 %v2704
    %3089 = vmatmul.mubr.bf16.gmra.mrb[0].mxu0 %v2703
    %v3090 = vpop.f32.mrb[0].mxu0
    %v3091 = vadd.f32 0.0, %v3090
    %v3092 = vpop.f32.mrb[0].mxu0
    %v3093 = vadd.f32 0.0, %v3092
    %v3094 = vpop.f32.mrb[0].mxu0
    %v3095 = vadd.f32 0.0, %v3094
    %v3096 = vpop.f32.mrb[0].mxu0
    %v3097 = vadd.f32 0.0, %v3096
    %3098 = vmatprep.mubr.bf16.mxu0 %v2706
    %3099 = vmatmul.mubr.bf16.gmra.mrb[0].mxu0 %v2705
    %v3100 = vpop.f32.mrb[0].mxu0
    %v3101 = vadd.f32 0.0, %v3100
    %v3102 = vpop.f32.mrb[0].mxu0
    %v3103 = vadd.f32 0.0, %v3102
    %v3104 = vpop.f32.mrb[0].mxu0
    %v3105 = vadd.f32 0.0, %v3104
    %v3106 = vpop.f32.mrb[0].mxu0
    %v3107 = vadd.f32 0.0, %v3106
    %3108 = vmatprep.mubr.bf16.mxu0 %v2708
    %3109 = vmatmul.mubr.bf16.gmra.mrb[0].mxu0 %v2707
    %v3110 = vpop.f32.mrb[0].mxu0
    %v3111 = vadd.f32 0.0, %v3110
    %v3112 = vpop.f32.mrb[0].mxu0
    %v3113 = vadd.f32 0.0, %v3112
    %v3114 = vpop.f32.mrb[0].mxu0
    %v3115 = vadd.f32 0.0, %v3114
    %v3116 = vpop.f32.mrb[0].mxu0
    %v3117 = vadd.f32 0.0, %v3116
    %3118 = vmatprep.mubr.bf16.mxu0 %v2710
    %3119 = vmatmul.mubr.bf16.gmra.mrb[0].mxu0 %v2709
    %v3120 = vpop.f32.mrb[0].mxu0
    %v3121 = vadd.f32 0.0, %v3120
    %v3122 = vpop.f32.mrb[0].mxu0
    %v3123 = vadd.f32 0.0, %v3122
    %v3124 = vpop.f32.mrb[0].mxu0
    %v3125 = vadd.f32 0.0, %v3124
    %v3126 = vpop.f32.mrb[0].mxu0
    %v3127 = vadd.f32 0.0, %v3126
    %3128 = vmatprep.mubr.bf16.mxu0 %v2712
    %3129 = vmatmul.mubr.bf16.gmra.mrb[0].mxu0 %v2711
    %v3130 = vpop.f32.mrb[0].mxu0
    %v3131 = vadd.f32 0.0, %v3130
    %v3132 = vpop.f32.mrb[0].mxu0
    %v3133 = vadd.f32 0.0, %v3132
    %v3134 = vpop.f32.mrb[0].mxu0
    %v3135 = vadd.f32 0.0, %v3134
    %v3136 = vpop.f32.mrb[0].mxu0
    %v3137 = vadd.f32 0.0, %v3136
    %3138 = vmatprep.mubr.bf16.mxu0 %v2714
    %3139 = vmatmul.mubr.bf16.gmra.mrb[0].mxu0 %v2713
    %v3140 = vpop.f32.mrb[0].mxu0
    %v3141 = vadd.f32 0.0, %v3140
    %v3142 = vpop.f32.mrb[0].mxu0
    %v3143 = vadd.f32 0.0, %v3142
    %v3144 = vpop.f32.mrb[0].mxu0
    %v3145 = vadd.f32 0.0, %v3144
    %v3146 = vpop.f32.mrb[0].mxu0
    %v3147 = vadd.f32 0.0, %v3146
    %3148 = vmatprep.mubr.bf16.mxu0 %v2716
    %3149 = vmatmul.mubr.bf16.gmra.mrb[0].mxu0 %v2715
    %v3150 = vpop.f32.mrb[0].mxu0
    %v3151 = vadd.f32 0.0, %v3150
    %v3152 = vpop.f32.mrb[0].mxu0
    %v3153 = vadd.f32 0.0, %v3152
    %v3154 = vpop.f32.mrb[0].mxu0
    %v3155 = vadd.f32 0.0, %v3154
    %v3156 = vpop.f32.mrb[0].mxu0
    %v3157 = vadd.f32 0.0, %v3156
    %3158 = vmatprep.mubr.bf16.mxu0 %v2718
    %3159 = vmatmul.mubr.bf16.gmra.mrb[0].mxu0 %v2717
    %v3160 = vpop.f32.mrb[0].mxu0
    %v3161 = vadd.f32 0.0, %v3160
    %v3162 = vpop.f32.mrb[0].mxu0
    %v3163 = vadd.f32 0.0, %v3162
    %v3164 = vpop.f32.mrb[0].mxu0
    %v3165 = vadd.f32 0.0, %v3164
    %v3166 = vpop.f32.mrb[0].mxu0
    %v3167 = vadd.f32 0.0, %v3166
    %3168 = vmatprep.mubr.bf16.mxu0 %v2720
    %3169 = vmatmul.mubr.bf16.gmra.mrb[0].mxu0 %v2719
    %v3170 = vpop.f32.mrb[0].mxu0
    %v3171 = vadd.f32 0.0, %v3170
    %v3172 = vpop.f32.mrb[0].mxu0
    %v3173 = vadd.f32 0.0, %v3172
    %v3174 = vpop.f32.mrb[0].mxu0
    %v3175 = vadd.f32 0.0, %v3174
    %v3176 = vpop.f32.mrb[0].mxu0
    %v3177 = vadd.f32 0.0, %v3176
    %3178 = vmatprep.mubr.bf16.mxu0 %v2722
    %3179 = vmatmul.mubr.bf16.gmra.mrb[0].mxu0 %v2721
    %v3180 = vpop.f32.mrb[0].mxu0
    %v3181 = vadd.f32 0.0, %v3180
    %v3182 = vpop.f32.mrb[0].mxu0
    %v3183 = vadd.f32 0.0, %v3182
    %v3184 = vpop.f32.mrb[0].mxu0
    %v3185 = vadd.f32 0.0, %v3184
    %v3186 = vpop.f32.mrb[0].mxu0
    %v3187 = vadd.f32 0.0, %v3186
    %3188 = vmatprep.mubr.bf16.mxu0 %v2724
    %3189 = vmatmul.mubr.bf16.gmra.mrb[0].mxu0 %v2723
    %v3190 = vpop.f32.mrb[0].mxu0
    %v3191 = vadd.f32 0.0, %v3190
    %v3192 = vpop.f32.mrb[0].mxu0
    %v3193 = vadd.f32 0.0, %v3192
    %v3194 = vpop.f32.mrb[0].mxu0
    %v3195 = vadd.f32 0.0, %v3194
    %v3196 = vpop.f32.mrb[0].mxu0
    %v3197 = vadd.f32 0.0, %v3196
    %3198 = vmatprep.mubr.bf16.mxu0 %v2726
    %3199 = vmatmul.mubr.bf16.gmra.mrb[0].mxu0 %v2725
    %v3200 = vpop.f32.mrb[0].mxu0
    %v3201 = vadd.f32 0.0, %v3200
    %v3202 = vpop.f32.mrb[0].mxu0
    %v3203 = vadd.f32 0.0, %v3202
    %v3204 = vpop.f32.mrb[0].mxu0
    %v3205 = vadd.f32 0.0, %v3204
    %v3206 = vpop.f32.mrb[0].mxu0
    %v3207 = vadd.f32 0.0, %v3206
    %3208 = vmatprep.mubr.bf16.mxu0 %v2728
    %3209 = vmatmul.mubr.bf16.gmra.mrb[0].mxu0 %v2727
    %v3210 = vpop.f32.mrb[0].mxu0
    %v3211 = vadd.f32 0.0, %v3210
    %v3212 = vpop.f32.mrb[0].mxu0
    %v3213 = vadd.f32 0.0, %v3212
    %v3214 = vpop.f32.mrb[0].mxu0
    %v3215 = vadd.f32 0.0, %v3214
    %v3216 = vpop.f32.mrb[0].mxu0
    %v3217 = vadd.f32 0.0, %v3216
    %3218 = vmatprep.mubr.bf16.mxu0 %v2730
    %3219 = vmatmul.mubr.bf16.gmra.mrb[0].mxu0 %v2729
    %v3220 = vpop.f32.mrb[0].mxu0
    %v3221 = vadd.f32 0.0, %v3220
    %v3222 = vpop.f32.mrb[0].mxu0
    %v3223 = vadd.f32 0.0, %v3222
    %v3224 = vpop.f32.mrb[0].mxu0
    %v3225 = vadd.f32 0.0, %v3224
    %v3226 = vpop.f32.mrb[0].mxu0
    %v3227 = vadd.f32 0.0, %v3226
    %3228 = vmatprep.mubr.bf16.mxu0 %v2732
    %3229 = vmatmul.mubr.bf16.gmra.mrb[0].mxu0 %v2731
    %v3230 = vpop.f32.mrb[0].mxu0
    %v3231 = vadd.f32 0.0, %v3230
    %v3232 = vpop.f32.mrb[0].mxu0
    %v3233 = vadd.f32 0.0, %v3232
    %v3234 = vpop.f32.mrb[0].mxu0
    %v3235 = vadd.f32 0.0, %v3234
    %v3236 = vpop.f32.mrb[0].mxu0
    %v3237 = vadd.f32 0.0, %v3236
    %3238 = vmatprep.mubr.bf16.mxu0 %v2734
    %3239 = vmatmul.mubr.bf16.gmra.mrb[0].mxu0 %v2733
    %v3240 = vpop.f32.mrb[0].mxu0
    %v3241 = vadd.f32 0.0, %v3240
    %v3242 = vpop.f32.mrb[0].mxu0
    %v3243 = vadd.f32 0.0, %v3242
    %v3244 = vpop.f32.mrb[0].mxu0
    %v3245 = vadd.f32 0.0, %v3244
    %v3246 = vpop.f32.mrb[0].mxu0
    %v3247 = vadd.f32 0.0, %v3246
    %3248 = vmatprep.mubr.bf16.mxu0 %v2736
    %3249 = vmatmul.mubr.bf16.gmra.mrb[0].mxu0 %v2735
    %v3250 = vpop.f32.mrb[0].mxu0
    %v3251 = vadd.f32 0.0, %v3250
    %v3252 = vpop.f32.mrb[0].mxu0
    %v3253 = vadd.f32 0.0, %v3252
    %v3254 = vpop.f32.mrb[0].mxu0
    %v3255 = vadd.f32 0.0, %v3254
    %v3256 = vpop.f32.mrb[0].mxu0
    %v3257 = vadd.f32 0.0, %v3256
    %3258 = vmatprep.mubr.bf16.mxu0 %v2738
    %3259 = vmatmul.mubr.bf16.gmra.mrb[0].mxu0 %v2737
    %v3260 = vpop.f32.mrb[0].mxu0
    %v3261 = vadd.f32 0.0, %v3260
    %v3262 = vpop.f32.mrb[0].mxu0
    %v3263 = vadd.f32 0.0, %v3262
    %v3264 = vpop.f32.mrb[0].mxu0
    %v3265 = vadd.f32 0.0, %v3264
    %v3266 = vpop.f32.mrb[0].mxu0
    %v3267 = vadd.f32 0.0, %v3266
    %3268 = vmatprep.mubr.bf16.mxu0 %v2740
    %3269 = vmatmul.mubr.bf16.gmra.mrb[0].mxu0 %v2739
    %v3270 = vpop.f32.mrb[0].mxu0
    %v3271 = vadd.f32 0.0, %v3270
    %v3272 = vpop.f32.mrb[0].mxu0
    %v3273 = vadd.f32 0.0, %v3272
    %v3274 = vpop.f32.mrb[0].mxu0
    %v3275 = vadd.f32 0.0, %v3274
    %v3276 = vpop.f32.mrb[0].mxu0
    %v3277 = vadd.f32 0.0, %v3276
    %3278 = vmatprep.mubr.bf16.mxu0 %v2742
    %3279 = vmatmul.mubr.bf16.gmra.mrb[0].mxu0 %v2741
    %v3280 = vpop.f32.mrb[0].mxu0
    %v3281 = vadd.f32 0.0, %v3280
    %v3282 = vpop.f32.mrb[0].mxu0
    %v3283 = vadd.f32 0.0, %v3282
    %v3284 = vpop.f32.mrb[0].mxu0
    %v3285 = vadd.f32 0.0, %v3284
    %v3286 = vpop.f32.mrb[0].mxu0
    %v3287 = vadd.f32 0.0, %v3286
    %3288 = vmatprep.mubr.bf16.mxu0 %v2744
    %3289 = vmatmul.mubr.bf16.gmra.mrb[0].mxu0 %v2743
    %v3290 = vpop.f32.mrb[0].mxu0
    %v3291 = vadd.f32 0.0, %v3290
    %v3292 = vpop.f32.mrb[0].mxu0
    %v3293 = vadd.f32 0.0, %v3292
    %v3294 = vpop.f32.mrb[0].mxu0
    %v3295 = vadd.f32 0.0, %v3294
    %v3296 = vpop.f32.mrb[0].mxu0
    %v3297 = vadd.f32 0.0, %v3296
    %3298 = vmatprep.mubr.bf16.mxu0 %v2746
    %3299 = vmatmul.mubr.bf16.gmra.mrb[0].mxu0 %v2745
    %v3300 = vpop.f32.mrb[0].mxu0
    %v3301 = vadd.f32 0.0, %v3300
    %v3302 = vpop.f32.mrb[0].mxu0
    %v3303 = vadd.f32 0.0, %v3302
    %v3304 = vpop.f32.mrb[0].mxu0
    %v3305 = vadd.f32 0.0, %v3304
    %v3306 = vpop.f32.mrb[0].mxu0
    %v3307 = vadd.f32 0.0, %v3306
    %3308 = vmatprep.mubr.bf16.mxu0 %v2748
    %3309 = vmatmul.mubr.bf16.gmra.mrb[0].mxu0 %v2747
    %v3310 = vpop.f32.mrb[0].mxu0
    %v3311 = vadd.f32 0.0, %v3310
    %v3312 = vpop.f32.mrb[0].mxu0
    %v3313 = vadd.f32 0.0, %v3312
    %v3314 = vpop.f32.mrb[0].mxu0
    %v3315 = vadd.f32 0.0, %v3314
    %v3316 = vpop.f32.mrb[0].mxu0
    %v3317 = vadd.f32 0.0, %v3316
    %3318 = vmatprep.mubr.bf16.mxu0 %v2750
    %3319 = vmatmul.mubr.bf16.gmra.mrb[0].mxu0 %v2749
    %v3320 = vpop.f32.mrb[0].mxu0
    %v3321 = vadd.f32 0.0, %v3320
    %v3322 = vpop.f32.mrb[0].mxu0
    %v3323 = vadd.f32 0.0, %v3322
    %v3324 = vpop.f32.mrb[0].mxu0
    %v3325 = vadd.f32 0.0, %v3324
    %v3326 = vpop.f32.mrb[0].mxu0
    %v3327 = vadd.f32 0.0, %v3326
    %3328 = vmatprep.mubr.bf16.mxu0 %v2752
    %3329 = vmatmul.mubr.bf16.gmra.mrb[0].mxu0 %v2751
    %v3330 = vpop.f32.mrb[0].mxu0
    %v3331 = vadd.f32 0.0, %v3330
    %v3332 = vpop.f32.mrb[0].mxu0
    %v3333 = vadd.f32 0.0, %v3332
    %v3334 = vpop.f32.mrb[0].mxu0
    %v3335 = vadd.f32 0.0, %v3334
    %v3336 = vpop.f32.mrb[0].mxu0
    %v3337 = vadd.f32 0.0, %v3336
    %3338 = vmatprep.mubr.bf16.mxu0 %v2754
    %3339 = vmatmul.mubr.bf16.gmra.mrb[0].mxu0 %v2753
    %v3340 = vpop.f32.mrb[0].mxu0
    %v3341 = vadd.f32 0.0, %v3340
    %v3342 = vpop.f32.mrb[0].mxu0
    %v3343 = vadd.f32 0.0, %v3342
    %v3344 = vpop.f32.mrb[0].mxu0
    %v3345 = vadd.f32 0.0, %v3344
    %v3346 = vpop.f32.mrb[0].mxu0
    %v3347 = vadd.f32 0.0, %v3346
    %3348 = vmatprep.mubr.bf16.mxu0 %v2756
    %3349 = vmatmul.mubr.bf16.gmra.mrb[0].mxu0 %v2755
    %v3350 = vpop.f32.mrb[0].mxu0
    %v3351 = vadd.f32 0.0, %v3350
    %v3352 = vpop.f32.mrb[0].mxu0
    %v3353 = vadd.f32 0.0, %v3352
    %v3354 = vpop.f32.mrb[0].mxu0
    %v3355 = vadd.f32 0.0, %v3354
    %v3356 = vpop.f32.mrb[0].mxu0
    %v3357 = vadd.f32 0.0, %v3356
    %3358 = vmatprep.mubr.bf16.mxu0 %v2758
    %3359 = vmatmul.mubr.bf16.gmra.mrb[0].mxu0 %v2757
    %v3360 = vpop.f32.mrb[0].mxu0
    %v3361 = vadd.f32 0.0, %v3360
    %v3362 = vpop.f32.mrb[0].mxu0
    %v3363 = vadd.f32 0.0, %v3362
    %v3364 = vpop.f32.mrb[0].mxu0
    %v3365 = vadd.f32 0.0, %v3364
    %v3366 = vpop.f32.mrb[0].mxu0
    %v3367 = vadd.f32 0.0, %v3366
    %3368 = vmatprep.mubr.bf16.mxu0 %v2760
    %3369 = vmatmul.mubr.bf16.gmra.mrb[0].mxu0 %v2759
    %v3370 = vpop.f32.mrb[0].mxu0
    %v3371 = vadd.f32 0.0, %v3370
    %v3372 = vpop.f32.mrb[0].mxu0
    %v3373 = vadd.f32 0.0, %v3372
    %v3374 = vpop.f32.mrb[0].mxu0
    %v3375 = vadd.f32 0.0, %v3374
    %v3376 = vpop.f32.mrb[0].mxu0
    %v3377 = vadd.f32 0.0, %v3376
    %3378 = vmatprep.mubr.bf16.mxu0 %v2762
    %3379 = vmatmul.mubr.bf16.gmra.mrb[0].mxu0 %v2761
    %v3380 = vpop.f32.mrb[0].mxu0
    %v3381 = vadd.f32 0.0, %v3380
    %v3382 = vpop.f32.mrb[0].mxu0
    %v3383 = vadd.f32 0.0, %v3382
    %v3384 = vpop.f32.mrb[0].mxu0
    %v3385 = vadd.f32 0.0, %v3384
    %v3386 = vpop.f32.mrb[0].mxu0
    %v3387 = vadd.f32 0.0, %v3386
    %3388 = vmatprep.mubr.bf16.mxu0 %v2764
    %3389 = vmatmul.mubr.bf16.gmra.mrb[0].mxu0 %v2763
    %v3390 = vpop.f32.mrb[0].mxu0
    %v3391 = vadd.f32 0.0, %v3390
    %v3392 = vpop.f32.mrb[0].mxu0
    %v3393 = vadd.f32 0.0, %v3392
    %v3394 = vpop.f32.mrb[0].mxu0
    %v3395 = vadd.f32 0.0, %v3394
    %v3396 = vpop.f32.mrb[0].mxu0
    %v3397 = vadd.f32 0.0, %v3396
    %3398 = vmatprep.mubr.bf16.mxu0 %v2766
    %3399 = vmatmul.mubr.bf16.gmra.mrb[0].mxu0 %v2765
    %v3400 = vpop.f32.mrb[0].mxu0
    %v3401 = vadd.f32 0.0, %v3400
    %v3402 = vpop.f32.mrb[0].mxu0
    %v3403 = vadd.f32 0.0, %v3402
    %v3404 = vpop.f32.mrb[0].mxu0
    %v3405 = vadd.f32 0.0, %v3404
    %v3406 = vpop.f32.mrb[0].mxu0
    %v3407 = vadd.f32 0.0, %v3406
    %3408 = vmatprep.mubr.bf16.mxu0 %v2768
    %3409 = vmatmul.mubr.bf16.gmra.mrb[0].mxu0 %v2767
    %v3410 = vpop.f32.mrb[0].mxu0
    %v3411 = vadd.f32 0.0, %v3410
    %v3412 = vpop.f32.mrb[0].mxu0
    %v3413 = vadd.f32 0.0, %v3412
    %v3414 = vpop.f32.mrb[0].mxu0
    %v3415 = vadd.f32 0.0, %v3414
    %v3416 = vpop.f32.mrb[0].mxu0
    %v3417 = vadd.f32 0.0, %v3416
    %3418 = vmatprep.mubr.bf16.mxu0 %v2770
    %3419 = vmatmul.mubr.bf16.gmra.mrb[0].mxu0 %v2769
    %v3420 = vpop.f32.mrb[0].mxu0
    %v3421 = vadd.f32 0.0, %v3420
    %v3422 = vpop.f32.mrb[0].mxu0
    %v3423 = vadd.f32 0.0, %v3422
    %v3424 = vpop.f32.mrb[0].mxu0
    %v3425 = vadd.f32 0.0, %v3424
    %v3426 = vpop.f32.mrb[0].mxu0
    %v3427 = vadd.f32 0.0, %v3426
    %3428 = vmatprep.mubr.bf16.mxu0 %v2772
    %3429 = vmatmul.mubr.bf16.gmra.mrb[0].mxu0 %v2771
    %v3430 = vpop.f32.mrb[0].mxu0
    %v3431 = vadd.f32 0.0, %v3430
    %v3432 = vpop.f32.mrb[0].mxu0
    %v3433 = vadd.f32 0.0, %v3432
    %v3434 = vpop.f32.mrb[0].mxu0
    %v3435 = vadd.f32 0.0, %v3434
    %v3436 = vpop.f32.mrb[0].mxu0
    %v3437 = vadd.f32 0.0, %v3436
    %3438 = vmatprep.mubr.bf16.mxu0 %v2774
    %3439 = vmatmul.mubr.bf16.gmra.mrb[0].mxu0 %v2773
    %v3440 = vpop.f32.mrb[0].mxu0
    %v3441 = vadd.f32 0.0, %v3440
    %v3442 = vpop.f32.mrb[0].mxu0
    %v3443 = vadd.f32 0.0, %v3442
    %v3444 = vpop.f32.mrb[0].mxu0
    %v3445 = vadd.f32 0.0, %v3444
    %v3446 = vpop.f32.mrb[0].mxu0
    %v3447 = vadd.f32 0.0, %v3446
    %3448 = vmatprep.mubr.bf16.mxu0 %v2776
    %3449 = vmatmul.mubr.bf16.gmra.mrb[0].mxu0 %v2775
    %v3450 = vpop.f32.mrb[0].mxu0
    %v3451 = vadd.f32 0.0, %v3450
    %v3452 = vpop.f32.mrb[0].mxu0
    %v3453 = vadd.f32 0.0, %v3452
    %v3454 = vpop.f32.mrb[0].mxu0
    %v3455 = vadd.f32 0.0, %v3454
    %v3456 = vpop.f32.mrb[0].mxu0
    %v3457 = vadd.f32 0.0, %v3456
    %3458 = vmatprep.mubr.bf16.mxu0 %v2778
    %3459 = vmatmul.mubr.bf16.gmra.mrb[0].mxu0 %v2777
    %v3460 = vpop.f32.mrb[0].mxu0
    %v3461 = vadd.f32 0.0, %v3460
    %v3462 = vpop.f32.mrb[0].mxu0
    %v3463 = vadd.f32 0.0, %v3462
    %v3464 = vpop.f32.mrb[0].mxu0
    %v3465 = vadd.f32 0.0, %v3464
    %v3466 = vpop.f32.mrb[0].mxu0
    %v3467 = vadd.f32 0.0, %v3466
    %3468 = vmatprep.mubr.bf16.mxu0 %v2780
    %3469 = vmatmul.mubr.bf16.gmra.mrb[0].mxu0 %v2779
    %v3470 = vpop.f32.mrb[0].mxu0
    %v3471 = vadd.f32 0.0, %v3470
    %v3472 = vpop.f32.mrb[0].mxu0
    %v3473 = vadd.f32 0.0, %v3472
    %v3474 = vpop.f32.mrb[0].mxu0
    %v3475 = vadd.f32 0.0, %v3474
    %v3476 = vpop.f32.mrb[0].mxu0
    %v3477 = vadd.f32 0.0, %v3476
    %3478 = vmatprep.mubr.bf16.mxu0 %v2782
    %3479 = vmatmul.mubr.bf16.gmra.mrb[0].mxu0 %v2781
    %v3480 = vpop.f32.mrb[0].mxu0
    %v3481 = vadd.f32 0.0, %v3480
    %v3482 = vpop.f32.mrb[0].mxu0
    %v3483 = vadd.f32 0.0, %v3482
    %v3484 = vpop.f32.mrb[0].mxu0
    %v3485 = vadd.f32 0.0, %v3484
    %v3486 = vpop.f32.mrb[0].mxu0
    %v3487 = vadd.f32 0.0, %v3486
    %3488 = vmatprep.mubr.bf16.mxu0 %v2784
    %3489 = vmatmul.mubr.bf16.gmra.mrb[0].mxu0 %v2783
    %v3490 = vpop.f32.mrb[0].mxu0
    %v3491 = vadd.f32 0.0, %v3490
    %v3492 = vpop.f32.mrb[0].mxu0
    %v3493 = vadd.f32 0.0, %v3492
    %v3494 = vpop.f32.mrb[0].mxu0
    %v3495 = vadd.f32 0.0, %v3494
    %v3496 = vpop.f32.mrb[0].mxu0
    %v3497 = vadd.f32 0.0, %v3496
    %3498 = vmatprep.mubr.bf16.mxu0 %v2786
    %3499 = vmatmul.mubr.bf16.gmra.mrb[0].mxu0 %v2785
    %v3500 = vpop.f32.mrb[0].mxu0
    %v3501 = vadd.f32 0.0, %v3500
    %v3502 = vpop.f32.mrb[0].mxu0
    %v3503 = vadd.f32 0.0, %v3502
    %v3504 = vpop.f32.mrb[0].mxu0
    %v3505 = vadd.f32 0.0, %v3504
    %v3506 = vpop.f32.mrb[0].mxu0
    %v3507 = vadd.f32 0.0, %v3506
    %3508 = vmatprep.mubr.bf16.mxu0 %v2788
    %3509 = vmatmul.mubr.bf16.gmra.mrb[0].mxu0 %v2787
    %v3510 = vpop.f32.mrb[0].mxu0
    %v3511 = vadd.f32 0.0, %v3510
    %v3512 = vpop.f32.mrb[0].mxu0
    %v3513 = vadd.f32 0.0, %v3512
    %v3514 = vpop.f32.mrb[0].mxu0
    %v3515 = vadd.f32 0.0, %v3514
    %v3516 = vpop.f32.mrb[0].mxu0
    %v3517 = vadd.f32 0.0, %v3516
    %3518 = vmatprep.mubr.bf16.mxu0 %v2790
    %3519 = vmatmul.mubr.bf16.gmra.mrb[0].mxu0 %v2789
    %v3520 = vpop.f32.mrb[0].mxu0
    %v3521 = vadd.f32 0.0, %v3520
    %v3522 = vpop.f32.mrb[0].mxu0
    %v3523 = vadd.f32 0.0, %v3522
    %v3524 = vpop.f32.mrb[0].mxu0
    %v3525 = vadd.f32 0.0, %v3524
    %v3526 = vpop.f32.mrb[0].mxu0
    %v3527 = vadd.f32 0.0, %v3526
    %3528 = vmatprep.mubr.bf16.mxu0 %v2792
    %3529 = vmatmul.mubr.bf16.gmra.mrb[0].mxu0 %v2791
    %v3530 = vpop.f32.mrb[0].mxu0
    %v3531 = vadd.f32 0.0, %v3530
    %v3532 = vpop.f32.mrb[0].mxu0
    %v3533 = vadd.f32 0.0, %v3532
    %v3534 = vpop.f32.mrb[0].mxu0
    %v3535 = vadd.f32 0.0, %v3534
    %v3536 = vpop.f32.mrb[0].mxu0
    %v3537 = vadd.f32 0.0, %v3536
    %3538 = vmatprep.mubr.bf16.mxu0 %v2794
    %3539 = vmatmul.mubr.bf16.gmra.mrb[0].mxu0 %v2793
    %v3540 = vpop.f32.mrb[0].mxu0
    %v3541 = vadd.f32 0.0, %v3540
    %v3542 = vpop.f32.mrb[0].mxu0
    %v3543 = vadd.f32 0.0, %v3542
    %v3544 = vpop.f32.mrb[0].mxu0
    %v3545 = vadd.f32 0.0, %v3544
    %v3546 = vpop.f32.mrb[0].mxu0
    %v3547 = vadd.f32 0.0, %v3546
    %3548 = vmatprep.mubr.bf16.mxu0 %v2796
    %3549 = vmatmul.mubr.bf16.gmra.mrb[0].mxu0 %v2795
    %v3550 = vpop.f32.mrb[0].mxu0
    %v3551 = vadd.f32 0.0, %v3550
    %v3552 = vpop.f32.mrb[0].mxu0
    %v3553 = vadd.f32 0.0, %v3552
    %v3554 = vpop.f32.mrb[0].mxu0
    %v3555 = vadd.f32 0.0, %v3554
    %v3556 = vpop.f32.mrb[0].mxu0
    %v3557 = vadd.f32 0.0, %v3556
    %3558 = vmatprep.mubr.bf16.mxu0 %v2798
    %3559 = vmatmul.mubr.bf16.gmra.mrb[0].mxu0 %v2797
    %v3560 = vpop.f32.mrb[0].mxu0
    %v3561 = vadd.f32 0.0, %v3560
    %v3562 = vpop.f32.mrb[0].mxu0
    %v3563 = vadd.f32 0.0, %v3562
    %v3564 = vpop.f32.mrb[0].mxu0
    %v3565 = vadd.f32 0.0, %v3564
    %v3566 = vpop.f32.mrb[0].mxu0
    %v3567 = vadd.f32 0.0, %v3566
    %3568 = vmatprep.mubr.bf16.mxu0 %v2800
    %3569 = vmatmul.mubr.bf16.gmra.mrb[0].mxu0 %v2799
    %v3570 = vpop.f32.mrb[0].mxu0
    %v3571 = vadd.f32 0.0, %v3570
    %v3572 = vpop.f32.mrb[0].mxu0
    %v3573 = vadd.f32 0.0, %v3572
    %v3574 = vpop.f32.mrb[0].mxu0
    %v3575 = vadd.f32 0.0, %v3574
    %v3576 = vpop.f32.mrb[0].mxu0
    %v3577 = vadd.f32 0.0, %v3576
    %3578 = vmatprep.mubr.bf16.mxu0 %v2802
    %3579 = vmatmul.mubr.bf16.gmra.mrb[0].mxu0 %v2801
    %v3580 = vpop.f32.mrb[0].mxu0
    %v3581 = vadd.f32 0.0, %v3580
    %v3582 = vpop.f32.mrb[0].mxu0
    %v3583 = vadd.f32 0.0, %v3582
    %v3584 = vpop.f32.mrb[0].mxu0
    %v3585 = vadd.f32 0.0, %v3584
    %v3586 = vpop.f32.mrb[0].mxu0
    %v3587 = vadd.f32 0.0, %v3586
    %3588 = vmatprep.mubr.bf16.mxu0 %v2804
    %3589 = vmatmul.mubr.bf16.gmra.mrb[0].mxu0 %v2803
    %v3590 = vpop.f32.mrb[0].mxu0
    %v3591 = vadd.f32 0.0, %v3590
    %v3592 = vpop.f32.mrb[0].mxu0
    %v3593 = vadd.f32 0.0, %v3592
    %v3594 = vpop.f32.mrb[0].mxu0
    %v3595 = vadd.f32 0.0, %v3594
    %v3596 = vpop.f32.mrb[0].mxu0
    %v3597 = vadd.f32 0.0, %v3596
    %3598 = vmatprep.mubr.bf16.mxu0 %v2806
    %3599 = vmatmul.mubr.bf16.gmra.mrb[0].mxu0 %v2805
    %v3600 = vpop.f32.mrb[0].mxu0
    %v3601 = vadd.f32 0.0, %v3600
    %v3602 = vpop.f32.mrb[0].mxu0
    %v3603 = vadd.f32 0.0, %v3602
    %v3604 = vpop.f32.mrb[0].mxu0
    %v3605 = vadd.f32 0.0, %v3604
    %v3606 = vpop.f32.mrb[0].mxu0
    %v3607 = vadd.f32 0.0, %v3606
    %3608 = vmatprep.mubr.bf16.mxu0 %v2808
    %3609 = vmatmul.mubr.bf16.gmra.mrb[0].mxu0 %v2807
    %v3610 = vpop.f32.mrb[0].mxu0
    %v3611 = vadd.f32 0.0, %v3610
    %v3612 = vpop.f32.mrb[0].mxu0
    %v3613 = vadd.f32 0.0, %v3612
    %v3614 = vpop.f32.mrb[0].mxu0
    %v3615 = vadd.f32 0.0, %v3614
    %v3616 = vpop.f32.mrb[0].mxu0
    %v3617 = vadd.f32 0.0, %v3616
    %3618 = vmatprep.mubr.bf16.mxu0 %v2810
    %3619 = vmatmul.mubr.bf16.gmra.mrb[0].mxu0 %v2809
    %v3620 = vpop.f32.mrb[0].mxu0
    %v3621 = vadd.f32 0.0, %v3620
    %v3622 = vpop.f32.mrb[0].mxu0
    %v3623 = vadd.f32 0.0, %v3622
    %v3624 = vpop.f32.mrb[0].mxu0
    %v3625 = vadd.f32 0.0, %v3624
    %v3626 = vpop.f32.mrb[0].mxu0
    %v3627 = vadd.f32 0.0, %v3626
    %3628 = vmatprep.mubr.bf16.mxu0 %v2812
    %3629 = vmatmul.mubr.bf16.gmra.mrb[0].mxu0 %v2811
    %v3630 = vpop.f32.mrb[0].mxu0
    %v3631 = vadd.f32 0.0, %v3630
    %v3632 = vpop.f32.mrb[0].mxu0
    %v3633 = vadd.f32 0.0, %v3632
    %v3634 = vpop.f32.mrb[0].mxu0
    %v3635 = vadd.f32 0.0, %v3634
    %v3636 = vpop.f32.mrb[0].mxu0
    %v3637 = vadd.f32 0.0, %v3636
    %3638 = vmatprep.mubr.bf16.mxu0 %v2814
    %3639 = vmatmul.mubr.bf16.gmra.mrb[0].mxu0 %v2813
    %v3640 = vpop.f32.mrb[0].mxu0
    %v3641 = vadd.f32 0.0, %v3640
    %v3642 = vpop.f32.mrb[0].mxu0
    %v3643 = vadd.f32 0.0, %v3642
    %v3644 = vpop.f32.mrb[0].mxu0
    %v3645 = vadd.f32 0.0, %v3644
    %v3646 = vpop.f32.mrb[0].mxu0
    %v3647 = vadd.f32 0.0, %v3646
    %3648 = vmatprep.mubr.bf16.mxu0 %v2816
    %3649 = vmatmul.mubr.bf16.gmra.mrb[0].mxu0 %v2815
    %v3650 = vpop.f32.mrb[0].mxu0
    %v3651 = vadd.f32 0.0, %v3650
    %v3652 = vpop.f32.mrb[0].mxu0
    %v3653 = vadd.f32 0.0, %v3652
    %v3654 = vpop.f32.mrb[0].mxu0
    %v3655 = vadd.f32 0.0, %v3654
    %v3656 = vpop.f32.mrb[0].mxu0
    %v3657 = vadd.f32 0.0, %v3656
    %3658 = vmatprep.mubr.bf16.mxu0 %v2818
    %3659 = vmatmul.mubr.bf16.gmra.mrb[0].mxu0 %v2817
    %v3660 = vpop.f32.mrb[0].mxu0
    %v3661 = vadd.f32 0.0, %v3660
    %v3662 = vpop.f32.mrb[0].mxu0
    %v3663 = vadd.f32 0.0, %v3662
    %v3664 = vpop.f32.mrb[0].mxu0
    %v3665 = vadd.f32 0.0, %v3664
    %v3666 = vpop.f32.mrb[0].mxu0
    %v3667 = vadd.f32 0.0, %v3666
    %3668 = vmatprep.mubr.bf16.mxu0 %v2820
    %3669 = vmatmul.mubr.bf16.gmra.mrb[0].mxu0 %v2819
    %v3670 = vpop.f32.mrb[0].mxu0
    %v3671 = vadd.f32 0.0, %v3670
    %v3672 = vpop.f32.mrb[0].mxu0
    %v3673 = vadd.f32 0.0, %v3672
    %v3674 = vpop.f32.mrb[0].mxu0
    %v3675 = vadd.f32 0.0, %v3674
    %v3676 = vpop.f32.mrb[0].mxu0
    %v3677 = vadd.f32 0.0, %v3676
    %3678 = vmatprep.mubr.bf16.mxu0 %v2822
    %3679 = vmatmul.mubr.bf16.gmra.mrb[0].mxu0 %v2821
    %v3680 = vpop.f32.mrb[0].mxu0
    %v3681 = vadd.f32 0.0, %v3680
    %v3682 = vpop.f32.mrb[0].mxu0
    %v3683 = vadd.f32 0.0, %v3682
    %v3684 = vpop.f32.mrb[0].mxu0
    %v3685 = vadd.f32 0.0, %v3684
    %v3686 = vpop.f32.mrb[0].mxu0
    %v3687 = vadd.f32 0.0, %v3686
    %3688 = vdwg.mxu0
    %v3689 = vpack.c.bf16 %v3055, %v3051
    %v3690 = vpack.c.bf16 %v3057, %v3053
    %v3691 = vpack.c.bf16 %v3065, %v3061
    %v3692 = vpack.c.bf16 %v3067, %v3063
    %v3693 = vpack.c.bf16 %v3075, %v3071
    %v3694 = vpack.c.bf16 %v3077, %v3073
    %v3695 = vpack.c.bf16 %v3085, %v3081
    %v3696 = vpack.c.bf16 %v3087, %v3083
    %v3697 = vpack.c.bf16 %v3095, %v3091
    %v3698 = vpack.c.bf16 %v3097, %v3093
    %v3699 = vpack.c.bf16 %v3105, %v3101
    %v3700 = vpack.c.bf16 %v3107, %v3103
    %v3701 = vpack.c.bf16 %v3115, %v3111
    %v3702 = vpack.c.bf16 %v3117, %v3113
    %v3703 = vpack.c.bf16 %v3125, %v3121
    %v3704 = vpack.c.bf16 %v3127, %v3123
    %v3705 = vpack.c.bf16 %v3135, %v3131
    %v3706 = vpack.c.bf16 %v3137, %v3133
    %v3707 = vpack.c.bf16 %v3145, %v3141
    %v3708 = vpack.c.bf16 %v3147, %v3143
    %v3709 = vpack.c.bf16 %v3155, %v3151
    %v3710 = vpack.c.bf16 %v3157, %v3153
    %v3711 = vpack.c.bf16 %v3165, %v3161
    %v3712 = vpack.c.bf16 %v3167, %v3163
    %v3713 = vpack.c.bf16 %v3175, %v3171
    %v3714 = vpack.c.bf16 %v3177, %v3173
    %v3715 = vpack.c.bf16 %v3185, %v3181
    %v3716 = vpack.c.bf16 %v3187, %v3183
    %v3717 = vpack.c.bf16 %v3195, %v3191
    %v3718 = vpack.c.bf16 %v3197, %v3193
    %v3719 = vpack.c.bf16 %v3205, %v3201
    %v3720 = vpack.c.bf16 %v3207, %v3203
    %v3721 = vpack.c.bf16 %v3215, %v3211
    %v3722 = vpack.c.bf16 %v3217, %v3213
    %v3723 = vpack.c.bf16 %v3225, %v3221
    %v3724 = vpack.c.bf16 %v3227, %v3223
    %v3725 = vpack.c.bf16 %v3235, %v3231
    %v3726 = vpack.c.bf16 %v3237, %v3233
    %v3727 = vpack.c.bf16 %v3245, %v3241
    %v3728 = vpack.c.bf16 %v3247, %v3243
    %v3729 = vpack.c.bf16 %v3255, %v3251
    %v3730 = vpack.c.bf16 %v3257, %v3253
    %v3731 = vpack.c.bf16 %v3265, %v3261
    %v3732 = vpack.c.bf16 %v3267, %v3263
    %v3733 = vpack.c.bf16 %v3275, %v3271
    %v3734 = vpack.c.bf16 %v3277, %v3273
    %v3735 = vpack.c.bf16 %v3285, %v3281
    %v3736 = vpack.c.bf16 %v3287, %v3283
    %v3737 = vpack.c.bf16 %v3295, %v3291
    %v3738 = vpack.c.bf16 %v3297, %v3293
    %v3739 = vpack.c.bf16 %v3305, %v3301
    %v3740 = vpack.c.bf16 %v3307, %v3303
    %v3741 = vpack.c.bf16 %v3315, %v3311
    %v3742 = vpack.c.bf16 %v3317, %v3313
    %v3743 = vpack.c.bf16 %v3325, %v3321
    %v3744 = vpack.c.bf16 %v3327, %v3323
    %v3745 = vpack.c.bf16 %v3335, %v3331
    %v3746 = vpack.c.bf16 %v3337, %v3333
    %v3747 = vpack.c.bf16 %v3345, %v3341
    %v3748 = vpack.c.bf16 %v3347, %v3343
    %v3749 = vpack.c.bf16 %v3355, %v3351
    %v3750 = vpack.c.bf16 %v3357, %v3353
    %v3751 = vpack.c.bf16 %v3365, %v3361
    %v3752 = vpack.c.bf16 %v3367, %v3363
    %v3753 = vpack.c.bf16 %v3375, %v3371
    %v3754 = vpack.c.bf16 %v3377, %v3373
    %v3755 = vpack.c.bf16 %v3385, %v3381
    %v3756 = vpack.c.bf16 %v3387, %v3383
    %v3757 = vpack.c.bf16 %v3395, %v3391
    %v3758 = vpack.c.bf16 %v3397, %v3393
    %v3759 = vpack.c.bf16 %v3405, %v3401
    %v3760 = vpack.c.bf16 %v3407, %v3403
    %v3761 = vpack.c.bf16 %v3415, %v3411
    %v3762 = vpack.c.bf16 %v3417, %v3413
    %v3763 = vpack.c.bf16 %v3425, %v3421
    %v3764 = vpack.c.bf16 %v3427, %v3423
    %v3765 = vpack.c.bf16 %v3435, %v3431
    %v3766 = vpack.c.bf16 %v3437, %v3433
    %v3767 = vpack.c.bf16 %v3445, %v3441
    %v3768 = vpack.c.bf16 %v3447, %v3443
    %v3769 = vpack.c.bf16 %v3455, %v3451
    %v3770 = vpack.c.bf16 %v3457, %v3453
    %v3771 = vpack.c.bf16 %v3465, %v3461
    %v3772 = vpack.c.bf16 %v3467, %v3463
    %v3773 = vpack.c.bf16 %v3475, %v3471
    %v3774 = vpack.c.bf16 %v3477, %v3473
    %v3775 = vpack.c.bf16 %v3485, %v3481
    %v3776 = vpack.c.bf16 %v3487, %v3483
    %v3777 = vpack.c.bf16 %v3495, %v3491
    %v3778 = vpack.c.bf16 %v3497, %v3493
    %v3779 = vpack.c.bf16 %v3505, %v3501
    %v3780 = vpack.c.bf16 %v3507, %v3503
    %v3781 = vpack.c.bf16 %v3515, %v3511
    %v3782 = vpack.c.bf16 %v3517, %v3513
    %v3783 = vpack.c.bf16 %v3525, %v3521
    %v3784 = vpack.c.bf16 %v3527, %v3523
    %v3785 = vpack.c.bf16 %v3535, %v3531
    %v3786 = vpack.c.bf16 %v3537, %v3533
    %v3787 = vpack.c.bf16 %v3545, %v3541
    %v3788 = vpack.c.bf16 %v3547, %v3543
    %v3789 = vpack.c.bf16 %v3555, %v3551
    %v3790 = vpack.c.bf16 %v3557, %v3553
    %v3791 = vpack.c.bf16 %v3565, %v3561
    %v3792 = vpack.c.bf16 %v3567, %v3563
    %v3793 = vpack.c.bf16 %v3575, %v3571
    %v3794 = vpack.c.bf16 %v3577, %v3573
    %v3795 = vpack.c.bf16 %v3585, %v3581
    %v3796 = vpack.c.bf16 %v3587, %v3583
    %v3797 = vpack.c.bf16 %v3595, %v3591
    %v3798 = vpack.c.bf16 %v3597, %v3593
    %v3799 = vpack.c.bf16 %v3605, %v3601
    %v3800 = vpack.c.bf16 %v3607, %v3603
    %v3801 = vpack.c.bf16 %v3615, %v3611
    %v3802 = vpack.c.bf16 %v3617, %v3613
    %v3803 = vpack.c.bf16 %v3625, %v3621
    %v3804 = vpack.c.bf16 %v3627, %v3623
    %v3805 = vpack.c.bf16 %v3635, %v3631
    %v3806 = vpack.c.bf16 %v3637, %v3633
    %v3807 = vpack.c.bf16 %v3645, %v3641
    %v3808 = vpack.c.bf16 %v3647, %v3643
    %v3809 = vpack.c.bf16 %v3655, %v3651
    %v3810 = vpack.c.bf16 %v3657, %v3653
    %v3811 = vpack.c.bf16 %v3665, %v3661
    %v3812 = vpack.c.bf16 %v3667, %v3663
    %v3813 = vpack.c.bf16 %v3675, %v3671
    %v3814 = vpack.c.bf16 %v3677, %v3673
    %v3815 = vpack.c.bf16 %v3685, %v3681
    %v3816 = vpack.c.bf16 %v3687, %v3683
    %s3817 = scalar_lea.vmem %s4, 2
    %v3818 = vld [vmem:[%s3817] sm:$0x3]
    %v3821 = vunpack.c.l.s4 1966171168
    %v3822 = vunpack.c.0.s8 %v3821
    %v3823 = vlaneseq
    %v3824 = vshrl.u32 %v3823, 7
    %v3825 = vsub.s32 %v3822, %v3824
    %v3826 = vrot.slane %v3818, %v3825
    %v3827 = vcombine.high %v3826, %v3826
    %v3829 = vunpack.c.l.s4 1966171168
    %v3830 = vunpack.c.0.s8 %v3829
    %v3831 = vlaneseq
    %v3832 = vshrl.u32 %v3831, 7
    %v3833 = vsub.s32 %v3830, %v3832
    %v3834 = vrot.slane %v3826, %v3833
    %v3836 = vunpack.c.l.s4 1966171168
    %v3837 = vunpack.c.0.s8 %v3836
    %v3838 = vlaneseq
    %v3839 = vshrl.u32 %v3838, 7
    %v3840 = vsub.s32 %v3837, %v3839
    %v3841 = vrot.slane %v3827, %v3840
    %v3843 = vpack.i.b16 %v3834, %v3834
    %v3845 = vlaneseq
    %v3846 = vshrl.u32 %v3845, 7
    %v3847 = vsub.s32 0, %v3846
    %v3848 = vrot.slane %v3843, %v3847
    %v3850 = vpack.i.b16 %v3841, %v3841
    %v3852 = vlaneseq
    %v3853 = vshrl.u32 %v3852, 7
    %v3854 = vsub.s32 0, %v3853
    %v3855 = vrot.slane %v3850, %v3854
    %v3856 = vadd.bf16 %v3689, %v3848
    %v3857 = vadd.bf16 %v3690, %v3855
    %v3858 = vadd.bf16 %v3691, %v3848
    %v3859 = vadd.bf16 %v3692, %v3855
    %v3860 = vadd.bf16 %v3693, %v3848
    %v3861 = vadd.bf16 %v3694, %v3855
    %v3862 = vadd.bf16 %v3695, %v3848
    %v3863 = vadd.bf16 %v3696, %v3855
    %v3864 = vadd.bf16 %v3697, %v3848
    %v3865 = vadd.bf16 %v3698, %v3855
    %v3866 = vadd.bf16 %v3699, %v3848
    %v3867 = vadd.bf16 %v3700, %v3855
    %v3868 = vadd.bf16 %v3701, %v3848
    %v3869 = vadd.bf16 %v3702, %v3855
    %v3870 = vadd.bf16 %v3703, %v3848
    %v3871 = vadd.bf16 %v3704, %v3855
    %v3872 = vadd.bf16 %v3705, %v3848
    %v3873 = vadd.bf16 %v3706, %v3855
    %v3874 = vadd.bf16 %v3707, %v3848
    %v3875 = vadd.bf16 %v3708, %v3855
    %v3876 = vadd.bf16 %v3709, %v3848
    %v3877 = vadd.bf16 %v3710, %v3855
    %v3878 = vadd.bf16 %v3711, %v3848
    %v3879 = vadd.bf16 %v3712, %v3855
    %v3880 = vadd.bf16 %v3713, %v3848
    %v3881 = vadd.bf16 %v3714, %v3855
    %v3882 = vadd.bf16 %v3715, %v3848
    %v3883 = vadd.bf16 %v3716, %v3855
    %v3884 = vadd.bf16 %v3717, %v3848
    %v3885 = vadd.bf16 %v3718, %v3855
    %v3886 = vadd.bf16 %v3719, %v3848
    %v3887 = vadd.bf16 %v3720, %v3855
    %v3888 = vadd.bf16 %v3721, %v3848
    %v3889 = vadd.bf16 %v3722, %v3855
    %v3890 = vadd.bf16 %v3723, %v3848
    %v3891 = vadd.bf16 %v3724, %v3855
    %v3892 = vadd.bf16 %v3725, %v3848
    %v3893 = vadd.bf16 %v3726, %v3855
    %v3894 = vadd.bf16 %v3727, %v3848
    %v3895 = vadd.bf16 %v3728, %v3855
    %v3896 = vadd.bf16 %v3729, %v3848
    %v3897 = vadd.bf16 %v3730, %v3855
    %v3898 = vadd.bf16 %v3731, %v3848
    %v3899 = vadd.bf16 %v3732, %v3855
    %v3900 = vadd.bf16 %v3733, %v3848
    %v3901 = vadd.bf16 %v3734, %v3855
    %v3902 = vadd.bf16 %v3735, %v3848
    %v3903 = vadd.bf16 %v3736, %v3855
    %v3904 = vadd.bf16 %v3737, %v3848
    %v3905 = vadd.bf16 %v3738, %v3855
    %v3906 = vadd.bf16 %v3739, %v3848
    %v3907 = vadd.bf16 %v3740, %v3855
    %v3908 = vadd.bf16 %v3741, %v3848
    %v3909 = vadd.bf16 %v3742, %v3855
    %v3910 = vadd.bf16 %v3743, %v3848
    %v3911 = vadd.bf16 %v3744, %v3855
    %v3912 = vadd.bf16 %v3745, %v3848
    %v3913 = vadd.bf16 %v3746, %v3855
    %v3914 = vadd.bf16 %v3747, %v3848
    %v3915 = vadd.bf16 %v3748, %v3855
    %v3916 = vadd.bf16 %v3749, %v3848
    %v3917 = vadd.bf16 %v3750, %v3855
    %v3918 = vadd.bf16 %v3751, %v3848
    %v3919 = vadd.bf16 %v3752, %v3855
    %v3920 = vadd.bf16 %v3753, %v3848
    %v3921 = vadd.bf16 %v3754, %v3855
    %v3922 = vadd.bf16 %v3755, %v3848
    %v3923 = vadd.bf16 %v3756, %v3855
    %v3924 = vadd.bf16 %v3757, %v3848
    %v3925 = vadd.bf16 %v3758, %v3855
    %v3926 = vadd.bf16 %v3759, %v3848
    %v3927 = vadd.bf16 %v3760, %v3855
    %v3928 = vadd.bf16 %v3761, %v3848
    %v3929 = vadd.bf16 %v3762, %v3855
    %v3930 = vadd.bf16 %v3763, %v3848
    %v3931 = vadd.bf16 %v3764, %v3855
    %v3932 = vadd.bf16 %v3765, %v3848
    %v3933 = vadd.bf16 %v3766, %v3855
    %v3934 = vadd.bf16 %v3767, %v3848
    %v3935 = vadd.bf16 %v3768, %v3855
    %v3936 = vadd.bf16 %v3769, %v3848
    %v3937 = vadd.bf16 %v3770, %v3855
    %v3938 = vadd.bf16 %v3771, %v3848
    %v3939 = vadd.bf16 %v3772, %v3855
    %v3940 = vadd.bf16 %v3773, %v3848
    %v3941 = vadd.bf16 %v3774, %v3855
    %v3942 = vadd.bf16 %v3775, %v3848
    %v3943 = vadd.bf16 %v3776, %v3855
    %v3944 = vadd.bf16 %v3777, %v3848
    %v3945 = vadd.bf16 %v3778, %v3855
    %v3946 = vadd.bf16 %v3779, %v3848
    %v3947 = vadd.bf16 %v3780, %v3855
    %v3948 = vadd.bf16 %v3781, %v3848
    %v3949 = vadd.bf16 %v3782, %v3855
    %v3950 = vadd.bf16 %v3783, %v3848
    %v3951 = vadd.bf16 %v3784, %v3855
    %v3952 = vadd.bf16 %v3785, %v3848
    %v3953 = vadd.bf16 %v3786, %v3855
    %v3954 = vadd.bf16 %v3787, %v3848
    %v3955 = vadd.bf16 %v3788, %v3855
    %v3956 = vadd.bf16 %v3789, %v3848
    %v3957 = vadd.bf16 %v3790, %v3855
    %v3958 = vadd.bf16 %v3791, %v3848
    %v3959 = vadd.bf16 %v3792, %v3855
    %v3960 = vadd.bf16 %v3793, %v3848
    %v3961 = vadd.bf16 %v3794, %v3855
    %v3962 = vadd.bf16 %v3795, %v3848
    %v3963 = vadd.bf16 %v3796, %v3855
    %v3964 = vadd.bf16 %v3797, %v3848
    %v3965 = vadd.bf16 %v3798, %v3855
    %v3966 = vadd.bf16 %v3799, %v3848
    %v3967 = vadd.bf16 %v3800, %v3855
    %v3968 = vadd.bf16 %v3801, %v3848
    %v3969 = vadd.bf16 %v3802, %v3855
    %v3970 = vadd.bf16 %v3803, %v3848
    %v3971 = vadd.bf16 %v3804, %v3855
    %v3972 = vadd.bf16 %v3805, %v3848
    %v3973 = vadd.bf16 %v3806, %v3855
    %v3974 = vadd.bf16 %v3807, %v3848
    %v3975 = vadd.bf16 %v3808, %v3855
    %v3976 = vadd.bf16 %v3809, %v3848
    %v3977 = vadd.bf16 %v3810, %v3855
    %v3978 = vadd.bf16 %v3811, %v3848
    %v3979 = vadd.bf16 %v3812, %v3855
    %v3980 = vadd.bf16 %v3813, %v3848
    %v3981 = vadd.bf16 %v3814, %v3855
    %v3982 = vadd.bf16 %v3815, %v3848
    %v3983 = vadd.bf16 %v3816, %v3855
    %v3984 = vmax.bf16 %v3856, 0
    %v3985 = vmax.bf16 %v3857, 0
    %v3986 = vmax.bf16 %v3858, 0
    %v3987 = vmax.bf16 %v3859, 0
    %v3988 = vmax.bf16 %v3860, 0
    %v3989 = vmax.bf16 %v3861, 0
    %v3990 = vmax.bf16 %v3862, 0
    %v3991 = vmax.bf16 %v3863, 0
    %v3992 = vmax.bf16 %v3864, 0
    %v3993 = vmax.bf16 %v3865, 0
    %v3994 = vmax.bf16 %v3866, 0
    %v3995 = vmax.bf16 %v3867, 0
    %v3996 = vmax.bf16 %v3868, 0
    %v3997 = vmax.bf16 %v3869, 0
    %v3998 = vmax.bf16 %v3870, 0
    %v3999 = vmax.bf16 %v3871, 0
    %v4000 = vmax.bf16 %v3872, 0
    %v4001 = vmax.bf16 %v3873, 0
    %v4002 = vmax.bf16 %v3874, 0
    %v4003 = vmax.bf16 %v3875, 0
    %v4004 = vmax.bf16 %v3876, 0
    %v4005 = vmax.bf16 %v3877, 0
    %v4006 = vmax.bf16 %v3878, 0
    %v4007 = vmax.bf16 %v3879, 0
    %v4008 = vmax.bf16 %v3880, 0
    %v4009 = vmax.bf16 %v3881, 0
    %v4010 = vmax.bf16 %v3882, 0
    %v4011 = vmax.bf16 %v3883, 0
    %v4012 = vmax.bf16 %v3884, 0
    %v4013 = vmax.bf16 %v3885, 0
    %v4014 = vmax.bf16 %v3886, 0
    %v4015 = vmax.bf16 %v3887, 0
    %v4016 = vmax.bf16 %v3888, 0
    %v4017 = vmax.bf16 %v3889, 0
    %v4018 = vmax.bf16 %v3890, 0
    %v4019 = vmax.bf16 %v3891, 0
    %v4020 = vmax.bf16 %v3892, 0
    %v4021 = vmax.bf16 %v3893, 0
    %v4022 = vmax.bf16 %v3894, 0
    %v4023 = vmax.bf16 %v3895, 0
    %v4024 = vmax.bf16 %v3896, 0
    %v4025 = vmax.bf16 %v3897, 0
    %v4026 = vmax.bf16 %v3898, 0
    %v4027 = vmax.bf16 %v3899, 0
    %v4028 = vmax.bf16 %v3900, 0
    %v4029 = vmax.bf16 %v3901, 0
    %v4030 = vmax.bf16 %v3902, 0
    %v4031 = vmax.bf16 %v3903, 0
    %v4032 = vmax.bf16 %v3904, 0
    %v4033 = vmax.bf16 %v3905, 0
    %v4034 = vmax.bf16 %v3906, 0
    %v4035 = vmax.bf16 %v3907, 0
    %v4036 = vmax.bf16 %v3908, 0
    %v4037 = vmax.bf16 %v3909, 0
    %v4038 = vmax.bf16 %v3910, 0
    %v4039 = vmax.bf16 %v3911, 0
    %v4040 = vmax.bf16 %v3912, 0
    %v4041 = vmax.bf16 %v3913, 0
    %v4042 = vmax.bf16 %v3914, 0
    %v4043 = vmax.bf16 %v3915, 0
    %v4044 = vmax.bf16 %v3916, 0
    %v4045 = vmax.bf16 %v3917, 0
    %v4046 = vmax.bf16 %v3918, 0
    %v4047 = vmax.bf16 %v3919, 0
    %v4048 = vmax.bf16 %v3920, 0
    %v4049 = vmax.bf16 %v3921, 0
    %v4050 = vmax.bf16 %v3922, 0
    %v4051 = vmax.bf16 %v3923, 0
    %v4052 = vmax.bf16 %v3924, 0
    %v4053 = vmax.bf16 %v3925, 0
    %v4054 = vmax.bf16 %v3926, 0
    %v4055 = vmax.bf16 %v3927, 0
    %v4056 = vmax.bf16 %v3928, 0
    %v4057 = vmax.bf16 %v3929, 0
    %v4058 = vmax.bf16 %v3930, 0
    %v4059 = vmax.bf16 %v3931, 0
    %v4060 = vmax.bf16 %v3932, 0
    %v4061 = vmax.bf16 %v3933, 0
    %v4062 = vmax.bf16 %v3934, 0
    %v4063 = vmax.bf16 %v3935, 0
    %v4064 = vmax.bf16 %v3936, 0
    %v4065 = vmax.bf16 %v3937, 0
    %v4066 = vmax.bf16 %v3938, 0
    %v4067 = vmax.bf16 %v3939, 0
    %v4068 = vmax.bf16 %v3940, 0
    %v4069 = vmax.bf16 %v3941, 0
    %v4070 = vmax.bf16 %v3942, 0
    %v4071 = vmax.bf16 %v3943, 0
    %v4072 = vmax.bf16 %v3944, 0
    %v4073 = vmax.bf16 %v3945, 0
    %v4074 = vmax.bf16 %v3946, 0
    %v4075 = vmax.bf16 %v3947, 0
    %v4076 = vmax.bf16 %v3948, 0
    %v4077 = vmax.bf16 %v3949, 0
    %v4078 = vmax.bf16 %v3950, 0
    %v4079 = vmax.bf16 %v3951, 0
    %v4080 = vmax.bf16 %v3952, 0
    %v4081 = vmax.bf16 %v3953, 0
    %v4082 = vmax.bf16 %v3954, 0
    %v4083 = vmax.bf16 %v3955, 0
    %v4084 = vmax.bf16 %v3956, 0
    %v4085 = vmax.bf16 %v3957, 0
    %v4086 = vmax.bf16 %v3958, 0
    %v4087 = vmax.bf16 %v3959, 0
    %v4088 = vmax.bf16 %v3960, 0
    %v4089 = vmax.bf16 %v3961, 0
    %v4090 = vmax.bf16 %v3962, 0
    %v4091 = vmax.bf16 %v3963, 0
    %v4092 = vmax.bf16 %v3964, 0
    %v4093 = vmax.bf16 %v3965, 0
    %v4094 = vmax.bf16 %v3966, 0
    %v4095 = vmax.bf16 %v3967, 0
    %v4096 = vmax.bf16 %v3968, 0
    %v4097 = vmax.bf16 %v3969, 0
    %v4098 = vmax.bf16 %v3970, 0
    %v4099 = vmax.bf16 %v3971, 0
    %v4100 = vmax.bf16 %v3972, 0
    %v4101 = vmax.bf16 %v3973, 0
    %v4102 = vmax.bf16 %v3974, 0
    %v4103 = vmax.bf16 %v3975, 0
    %v4104 = vmax.bf16 %v3976, 0
    %v4105 = vmax.bf16 %v3977, 0
    %v4106 = vmax.bf16 %v3978, 0
    %v4107 = vmax.bf16 %v3979, 0
    %v4108 = vmax.bf16 %v3980, 0
    %v4109 = vmax.bf16 %v3981, 0
    %v4110 = vmax.bf16 %v3982, 0
    %v4111 = vmax.bf16 %v3983, 0
    %s4112 = scalar_lea.vmem [#allocation3], 512
    %v4113 = vld [vmem:[%s4112] sm:$0xff]
    %v4114 = vld [vmem:[%s4112 + $0x8] sm:$0xff]
    %v4115 = vld [vmem:[%s4112 + $0x10] sm:$0xff]
    %v4116 = vld [vmem:[%s4112 + $0x18] sm:$0xff]
    %v4117 = vld [vmem:[%s4112 + $0x20] sm:$0xff]
    %v4118 = vld [vmem:[%s4112 + $0x28] sm:$0xff]
    %v4119 = vld [vmem:[%s4112 + $0x30] sm:$0xff]
    %v4120 = vld [vmem:[%s4112 + $0x38] sm:$0xff]
    %v4121 = vld [vmem:[%s4112 + $0x40] sm:$0xff]
    %v4122 = vld [vmem:[%s4112 + $0x48] sm:$0xff]
    %v4123 = vld [vmem:[%s4112 + $0x50] sm:$0xff]
    %v4124 = vld [vmem:[%s4112 + $0x58] sm:$0xff]
    %v4125 = vld [vmem:[%s4112 + $0x60] sm:$0xff]
    %v4126 = vld [vmem:[%s4112 + $0x68] sm:$0xff]
    %v4127 = vld [vmem:[%s4112 + $0x70] sm:$0xff]
    %v4128 = vld [vmem:[%s4112 + $0x78] sm:$0xff]
    %v4129 = vld [vmem:[%s4112 + $0x80] sm:$0xff]
    %v4130 = vld [vmem:[%s4112 + $0x88] sm:$0xff]
    %v4131 = vld [vmem:[%s4112 + $0x90] sm:$0xff]
    %v4132 = vld [vmem:[%s4112 + $0x98] sm:$0xff]
    %v4133 = vld [vmem:[%s4112 + $0xa0] sm:$0xff]
    %v4134 = vld [vmem:[%s4112 + $0xa8] sm:$0xff]
    %v4135 = vld [vmem:[%s4112 + $0xb0] sm:$0xff]
    %v4136 = vld [vmem:[%s4112 + $0xb8] sm:$0xff]
    %v4137 = vld [vmem:[%s4112 + $0xc0] sm:$0xff]
    %v4138 = vld [vmem:[%s4112 + $0xc8] sm:$0xff]
    %v4139 = vld [vmem:[%s4112 + $0xd0] sm:$0xff]
    %v4140 = vld [vmem:[%s4112 + $0xd8] sm:$0xff]
    %v4141 = vld [vmem:[%s4112 + $0xe0] sm:$0xff]
    %v4142 = vld [vmem:[%s4112 + $0xe8] sm:$0xff]
    %v4143 = vld [vmem:[%s4112 + $0xf0] sm:$0xff]
    %v4144 = vld [vmem:[%s4112 + $0xf8] sm:$0xff]
    %v4177 = vunpack.c.l.b16 %v4113
    %v4178 = vunpack.c.h.b16 %v4113
    %v4179 = vunpack.c.l.b16 %v4114
    %v4180 = vunpack.c.h.b16 %v4114
    %v4181 = vunpack.c.l.b16 %v4115
    %v4182 = vunpack.c.h.b16 %v4115
    %v4183 = vunpack.c.l.b16 %v4116
    %v4184 = vunpack.c.h.b16 %v4116
    %v4185 = vunpack.c.l.b16 %v4117
    %v4186 = vunpack.c.h.b16 %v4117
    %v4187 = vunpack.c.l.b16 %v4118
    %v4188 = vunpack.c.h.b16 %v4118
    %v4189 = vunpack.c.l.b16 %v4119
    %v4190 = vunpack.c.h.b16 %v4119
    %v4191 = vunpack.c.l.b16 %v4120
    %v4192 = vunpack.c.h.b16 %v4120
    %v4193 = vunpack.c.l.b16 %v4121
    %v4194 = vunpack.c.h.b16 %v4121
    %v4195 = vunpack.c.l.b16 %v4122
    %v4196 = vunpack.c.h.b16 %v4122
    %v4197 = vunpack.c.l.b16 %v4123
    %v4198 = vunpack.c.h.b16 %v4123
    %v4199 = vunpack.c.l.b16 %v4124
    %v4200 = vunpack.c.h.b16 %v4124
    %v4201 = vunpack.c.l.b16 %v4125
    %v4202 = vunpack.c.h.b16 %v4125
    %v4203 = vunpack.c.l.b16 %v4126
    %v4204 = vunpack.c.h.b16 %v4126
    %v4205 = vunpack.c.l.b16 %v4127
    %v4206 = vunpack.c.h.b16 %v4127
    %v4207 = vunpack.c.l.b16 %v4128
    %v4208 = vunpack.c.h.b16 %v4128
    %v4209 = vunpack.c.l.b16 %v4129
    %v4210 = vunpack.c.h.b16 %v4129
    %v4211 = vunpack.c.l.b16 %v4130
    %v4212 = vunpack.c.h.b16 %v4130
    %v4213 = vunpack.c.l.b16 %v4131
    %v4214 = vunpack.c.h.b16 %v4131
    %v4215 = vunpack.c.l.b16 %v4132
    %v4216 = vunpack.c.h.b16 %v4132
    %v4217 = vunpack.c.l.b16 %v4133
    %v4218 = vunpack.c.h.b16 %v4133
    %v4219 = vunpack.c.l.b16 %v4134
    %v4220 = vunpack.c.h.b16 %v4134
    %v4221 = vunpack.c.l.b16 %v4135
    %v4222 = vunpack.c.h.b16 %v4135
    %v4223 = vunpack.c.l.b16 %v4136
    %v4224 = vunpack.c.h.b16 %v4136
    %v4225 = vunpack.c.l.b16 %v4137
    %v4226 = vunpack.c.h.b16 %v4137
    %v4227 = vunpack.c.l.b16 %v4138
    %v4228 = vunpack.c.h.b16 %v4138
    %v4229 = vunpack.c.l.b16 %v4139
    %v4230 = vunpack.c.h.b16 %v4139
    %v4231 = vunpack.c.l.b16 %v4140
    %v4232 = vunpack.c.h.b16 %v4140
    %v4233 = vunpack.c.l.b16 %v4141
    %v4234 = vunpack.c.h.b16 %v4141
    %v4235 = vunpack.c.l.b16 %v4142
    %v4236 = vunpack.c.h.b16 %v4142
    %v4237 = vunpack.c.l.b16 %v4143
    %v4238 = vunpack.c.h.b16 %v4143
    %v4239 = vunpack.c.l.b16 %v4144
    %v4240 = vunpack.c.h.b16 %v4144
    %v4241 = vpack.c.b16 %v4179, %v4177
    %v4242 = vpack.c.b16 %v4180, %v4178
    %v4243 = vpack.c.b16 %v4183, %v4181
    %v4244 = vpack.c.b16 %v4184, %v4182
    %v4245 = vpack.c.b16 %v4187, %v4185
    %v4246 = vpack.c.b16 %v4188, %v4186
    %v4247 = vpack.c.b16 %v4191, %v4189
    %v4248 = vpack.c.b16 %v4192, %v4190
    %v4249 = vpack.c.b16 %v4195, %v4193
    %v4250 = vpack.c.b16 %v4196, %v4194
    %v4251 = vpack.c.b16 %v4199, %v4197
    %v4252 = vpack.c.b16 %v4200, %v4198
    %v4253 = vpack.c.b16 %v4203, %v4201
    %v4254 = vpack.c.b16 %v4204, %v4202
    %v4255 = vpack.c.b16 %v4207, %v4205
    %v4256 = vpack.c.b16 %v4208, %v4206
    %v4257 = vpack.c.b16 %v4211, %v4209
    %v4258 = vpack.c.b16 %v4212, %v4210
    %v4259 = vpack.c.b16 %v4215, %v4213
    %v4260 = vpack.c.b16 %v4216, %v4214
    %v4261 = vpack.c.b16 %v4219, %v4217
    %v4262 = vpack.c.b16 %v4220, %v4218
    %v4263 = vpack.c.b16 %v4223, %v4221
    %v4264 = vpack.c.b16 %v4224, %v4222
    %v4265 = vpack.c.b16 %v4227, %v4225
    %v4266 = vpack.c.b16 %v4228, %v4226
    %v4267 = vpack.c.b16 %v4231, %v4229
    %v4268 = vpack.c.b16 %v4232, %v4230
    %v4269 = vpack.c.b16 %v4235, %v4233
    %v4270 = vpack.c.b16 %v4236, %v4234
    %v4271 = vpack.c.b16 %v4239, %v4237
    %v4272 = vpack.c.b16 %v4240, %v4238
    %4305 = vmatprep.subr.bf16.mxu0 %v4242
    %4306 = vmatpush1.bf16.msra.mxu0 %v4241
    %4307 = vmatprep.subr.bf16.mxu0 %v4244
    %4308 = vmatpush1.bf16.msra.mxu0 %v4243
    %4309 = vmatprep.subr.bf16.mxu0 %v4246
    %4310 = vmatpush1.bf16.msra.mxu0 %v4245
    %4311 = vmatprep.subr.bf16.mxu0 %v4248
    %4312 = vmatpush1.bf16.msra.mxu0 %v4247
    %4313 = vmatprep.subr.bf16.mxu0 %v4250
    %4314 = vmatpush1.bf16.msra.mxu0 %v4249
    %4315 = vmatprep.subr.bf16.mxu0 %v4252
    %4316 = vmatpush1.bf16.msra.mxu0 %v4251
    %4317 = vmatprep.subr.bf16.mxu0 %v4254
    %4318 = vmatpush1.bf16.msra.mxu0 %v4253
    %4319 = vmatprep.subr.bf16.mxu0 %v4256
    %4320 = vmatpush1.bf16.msra.mxu0 %v4255
    %4321 = vmatprep.subr.bf16.mxu0 %v4258
    %4322 = vmatpush1.bf16.msra.mxu0 %v4257
    %4323 = vmatprep.subr.bf16.mxu0 %v4260
    %4324 = vmatpush1.bf16.msra.mxu0 %v4259
    %4325 = vmatprep.subr.bf16.mxu0 %v4262
    %4326 = vmatpush1.bf16.msra.mxu0 %v4261
    %4327 = vmatprep.subr.bf16.mxu0 %v4264
    %4328 = vmatpush1.bf16.msra.mxu0 %v4263
    %4329 = vmatprep.subr.bf16.mxu0 %v4266
    %4330 = vmatpush1.bf16.msra.mxu0 %v4265
    %4331 = vmatprep.subr.bf16.mxu0 %v4268
    %4332 = vmatpush1.bf16.msra.mxu0 %v4267
    %4333 = vmatprep.subr.bf16.mxu0 %v4270
    %4334 = vmatpush1.bf16.msra.mxu0 %v4269
    %4335 = vmatprep.subr.bf16.mxu0 %v4272
    %4336 = vmatpush1.bf16.msra.mxu0 %v4271
    %4337 = vmatprep.mubr.bf16.mxu0 %v3985
    %4338 = vmatmul.mubr.bf16.gmra.mrb[0].mxu0 %v3984
    %v4339 = vpop.f32.mrb[0].mxu0
    %v4340 = vadd.f32 0.0, %v4339
    %v4341 = vpop.f32.mrb[0].mxu0
    %v4342 = vadd.f32 0.0, %v4341
    %v4343 = vpop.f32.mrb[0].mxu0
    %v4344 = vadd.f32 0.0, %v4343
    %v4345 = vpop.f32.mrb[0].mxu0
    %v4346 = vadd.f32 0.0, %v4345
    %4347 = vmatprep.mubr.bf16.mxu0 %v3987
    %4348 = vmatmul.mubr.bf16.gmra.mrb[0].mxu0 %v3986
    %v4349 = vpop.f32.mrb[0].mxu0
    %v4350 = vadd.f32 0.0, %v4349
    %v4351 = vpop.f32.mrb[0].mxu0
    %v4352 = vadd.f32 0.0, %v4351
    %v4353 = vpop.f32.mrb[0].mxu0
    %v4354 = vadd.f32 0.0, %v4353
    %v4355 = vpop.f32.mrb[0].mxu0
    %v4356 = vadd.f32 0.0, %v4355
    %4357 = vmatprep.mubr.bf16.mxu0 %v3989
    %4358 = vmatmul.mubr.bf16.gmra.mrb[0].mxu0 %v3988
    %v4359 = vpop.f32.mrb[0].mxu0
    %v4360 = vadd.f32 0.0, %v4359
    %v4361 = vpop.f32.mrb[0].mxu0
    %v4362 = vadd.f32 0.0, %v4361
    %v4363 = vpop.f32.mrb[0].mxu0
    %v4364 = vadd.f32 0.0, %v4363
    %v4365 = vpop.f32.mrb[0].mxu0
    %v4366 = vadd.f32 0.0, %v4365
    %4367 = vmatprep.mubr.bf16.mxu0 %v3991
    %4368 = vmatmul.mubr.bf16.gmra.mrb[0].mxu0 %v3990
    %v4369 = vpop.f32.mrb[0].mxu0
    %v4370 = vadd.f32 0.0, %v4369
    %v4371 = vpop.f32.mrb[0].mxu0
    %v4372 = vadd.f32 0.0, %v4371
    %v4373 = vpop.f32.mrb[0].mxu0
    %v4374 = vadd.f32 0.0, %v4373
    %v4375 = vpop.f32.mrb[0].mxu0
    %v4376 = vadd.f32 0.0, %v4375
    %4377 = vmatprep.mubr.bf16.mxu0 %v3993
    %4378 = vmatmul.mubr.bf16.gmra.mrb[0].mxu0 %v3992
    %v4379 = vpop.f32.mrb[0].mxu0
    %v4380 = vadd.f32 0.0, %v4379
    %v4381 = vpop.f32.mrb[0].mxu0
    %v4382 = vadd.f32 0.0, %v4381
    %v4383 = vpop.f32.mrb[0].mxu0
    %v4384 = vadd.f32 0.0, %v4383
    %v4385 = vpop.f32.mrb[0].mxu0
    %v4386 = vadd.f32 0.0, %v4385
    %4387 = vmatprep.mubr.bf16.mxu0 %v3995
    %4388 = vmatmul.mubr.bf16.gmra.mrb[0].mxu0 %v3994
    %v4389 = vpop.f32.mrb[0].mxu0
    %v4390 = vadd.f32 0.0, %v4389
    %v4391 = vpop.f32.mrb[0].mxu0
    %v4392 = vadd.f32 0.0, %v4391
    %v4393 = vpop.f32.mrb[0].mxu0
    %v4394 = vadd.f32 0.0, %v4393
    %v4395 = vpop.f32.mrb[0].mxu0
    %v4396 = vadd.f32 0.0, %v4395
    %4397 = vmatprep.mubr.bf16.mxu0 %v3997
    %4398 = vmatmul.mubr.bf16.gmra.mrb[0].mxu0 %v3996
    %v4399 = vpop.f32.mrb[0].mxu0
    %v4400 = vadd.f32 0.0, %v4399
    %v4401 = vpop.f32.mrb[0].mxu0
    %v4402 = vadd.f32 0.0, %v4401
    %v4403 = vpop.f32.mrb[0].mxu0
    %v4404 = vadd.f32 0.0, %v4403
    %v4405 = vpop.f32.mrb[0].mxu0
    %v4406 = vadd.f32 0.0, %v4405
    %4407 = vmatprep.mubr.bf16.mxu0 %v3999
    %4408 = vmatmul.mubr.bf16.gmra.mrb[0].mxu0 %v3998
    %v4409 = vpop.f32.mrb[0].mxu0
    %v4410 = vadd.f32 0.0, %v4409
    %v4411 = vpop.f32.mrb[0].mxu0
    %v4412 = vadd.f32 0.0, %v4411
    %v4413 = vpop.f32.mrb[0].mxu0
    %v4414 = vadd.f32 0.0, %v4413
    %v4415 = vpop.f32.mrb[0].mxu0
    %v4416 = vadd.f32 0.0, %v4415
    %4417 = vmatprep.mubr.bf16.mxu0 %v4001
    %4418 = vmatmul.mubr.bf16.gmra.mrb[0].mxu0 %v4000
    %v4419 = vpop.f32.mrb[0].mxu0
    %v4420 = vadd.f32 0.0, %v4419
    %v4421 = vpop.f32.mrb[0].mxu0
    %v4422 = vadd.f32 0.0, %v4421
    %v4423 = vpop.f32.mrb[0].mxu0
    %v4424 = vadd.f32 0.0, %v4423
    %v4425 = vpop.f32.mrb[0].mxu0
    %v4426 = vadd.f32 0.0, %v4425
    %4427 = vmatprep.mubr.bf16.mxu0 %v4003
    %4428 = vmatmul.mubr.bf16.gmra.mrb[0].mxu0 %v4002
    %v4429 = vpop.f32.mrb[0].mxu0
    %v4430 = vadd.f32 0.0, %v4429
    %v4431 = vpop.f32.mrb[0].mxu0
    %v4432 = vadd.f32 0.0, %v4431
    %v4433 = vpop.f32.mrb[0].mxu0
    %v4434 = vadd.f32 0.0, %v4433
    %v4435 = vpop.f32.mrb[0].mxu0
    %v4436 = vadd.f32 0.0, %v4435
    %4437 = vmatprep.mubr.bf16.mxu0 %v4005
    %4438 = vmatmul.mubr.bf16.gmra.mrb[0].mxu0 %v4004
    %v4439 = vpop.f32.mrb[0].mxu0
    %v4440 = vadd.f32 0.0, %v4439
    %v4441 = vpop.f32.mrb[0].mxu0
    %v4442 = vadd.f32 0.0, %v4441
    %v4443 = vpop.f32.mrb[0].mxu0
    %v4444 = vadd.f32 0.0, %v4443
    %v4445 = vpop.f32.mrb[0].mxu0
    %v4446 = vadd.f32 0.0, %v4445
    %4447 = vmatprep.mubr.bf16.mxu0 %v4007
    %4448 = vmatmul.mubr.bf16.gmra.mrb[0].mxu0 %v4006
    %v4449 = vpop.f32.mrb[0].mxu0
    %v4450 = vadd.f32 0.0, %v4449
    %v4451 = vpop.f32.mrb[0].mxu0
    %v4452 = vadd.f32 0.0, %v4451
    %v4453 = vpop.f32.mrb[0].mxu0
    %v4454 = vadd.f32 0.0, %v4453
    %v4455 = vpop.f32.mrb[0].mxu0
    %v4456 = vadd.f32 0.0, %v4455
    %4457 = vmatprep.mubr.bf16.mxu0 %v4009
    %4458 = vmatmul.mubr.bf16.gmra.mrb[0].mxu0 %v4008
    %v4459 = vpop.f32.mrb[0].mxu0
    %v4460 = vadd.f32 0.0, %v4459
    %v4461 = vpop.f32.mrb[0].mxu0
    %v4462 = vadd.f32 0.0, %v4461
    %v4463 = vpop.f32.mrb[0].mxu0
    %v4464 = vadd.f32 0.0, %v4463
    %v4465 = vpop.f32.mrb[0].mxu0
    %v4466 = vadd.f32 0.0, %v4465
    %4467 = vmatprep.mubr.bf16.mxu0 %v4011
    %4468 = vmatmul.mubr.bf16.gmra.mrb[0].mxu0 %v4010
    %v4469 = vpop.f32.mrb[0].mxu0
    %v4470 = vadd.f32 0.0, %v4469
    %v4471 = vpop.f32.mrb[0].mxu0
    %v4472 = vadd.f32 0.0, %v4471
    %v4473 = vpop.f32.mrb[0].mxu0
    %v4474 = vadd.f32 0.0, %v4473
    %v4475 = vpop.f32.mrb[0].mxu0
    %v4476 = vadd.f32 0.0, %v4475
    %4477 = vmatprep.mubr.bf16.mxu0 %v4013
    %4478 = vmatmul.mubr.bf16.gmra.mrb[0].mxu0 %v4012
    %v4479 = vpop.f32.mrb[0].mxu0
    %v4480 = vadd.f32 0.0, %v4479
    %v4481 = vpop.f32.mrb[0].mxu0
    %v4482 = vadd.f32 0.0, %v4481
    %v4483 = vpop.f32.mrb[0].mxu0
    %v4484 = vadd.f32 0.0, %v4483
    %v4485 = vpop.f32.mrb[0].mxu0
    %v4486 = vadd.f32 0.0, %v4485
    %4487 = vmatprep.mubr.bf16.mxu0 %v4015
    %4488 = vmatmul.mubr.bf16.gmra.mrb[0].mxu0 %v4014
    %v4489 = vpop.f32.mrb[0].mxu0
    %v4490 = vadd.f32 0.0, %v4489
    %v4491 = vpop.f32.mrb[0].mxu0
    %v4492 = vadd.f32 0.0, %v4491
    %v4493 = vpop.f32.mrb[0].mxu0
    %v4494 = vadd.f32 0.0, %v4493
    %v4495 = vpop.f32.mrb[0].mxu0
    %v4496 = vadd.f32 0.0, %v4495
    %4497 = vmatprep.mubr.bf16.mxu0 %v4017
    %4498 = vmatmul.mubr.bf16.gmra.mrb[0].mxu0 %v4016
    %v4499 = vpop.f32.mrb[0].mxu0
    %v4500 = vadd.f32 0.0, %v4499
    %v4501 = vpop.f32.mrb[0].mxu0
    %v4502 = vadd.f32 0.0, %v4501
    %v4503 = vpop.f32.mrb[0].mxu0
    %v4504 = vadd.f32 0.0, %v4503
    %v4505 = vpop.f32.mrb[0].mxu0
    %v4506 = vadd.f32 0.0, %v4505
    %4507 = vmatprep.mubr.bf16.mxu0 %v4019
    %4508 = vmatmul.mubr.bf16.gmra.mrb[0].mxu0 %v4018
    %v4509 = vpop.f32.mrb[0].mxu0
    %v4510 = vadd.f32 0.0, %v4509
    %v4511 = vpop.f32.mrb[0].mxu0
    %v4512 = vadd.f32 0.0, %v4511
    %v4513 = vpop.f32.mrb[0].mxu0
    %v4514 = vadd.f32 0.0, %v4513
    %v4515 = vpop.f32.mrb[0].mxu0
    %v4516 = vadd.f32 0.0, %v4515
    %4517 = vmatprep.mubr.bf16.mxu0 %v4021
    %4518 = vmatmul.mubr.bf16.gmra.mrb[0].mxu0 %v4020
    %v4519 = vpop.f32.mrb[0].mxu0
    %v4520 = vadd.f32 0.0, %v4519
    %v4521 = vpop.f32.mrb[0].mxu0
    %v4522 = vadd.f32 0.0, %v4521
    %v4523 = vpop.f32.mrb[0].mxu0
    %v4524 = vadd.f32 0.0, %v4523
    %v4525 = vpop.f32.mrb[0].mxu0
    %v4526 = vadd.f32 0.0, %v4525
    %4527 = vmatprep.mubr.bf16.mxu0 %v4023
    %4528 = vmatmul.mubr.bf16.gmra.mrb[0].mxu0 %v4022
    %v4529 = vpop.f32.mrb[0].mxu0
    %v4530 = vadd.f32 0.0, %v4529
    %v4531 = vpop.f32.mrb[0].mxu0
    %v4532 = vadd.f32 0.0, %v4531
    %v4533 = vpop.f32.mrb[0].mxu0
    %v4534 = vadd.f32 0.0, %v4533
    %v4535 = vpop.f32.mrb[0].mxu0
    %v4536 = vadd.f32 0.0, %v4535
    %4537 = vmatprep.mubr.bf16.mxu0 %v4025
    %4538 = vmatmul.mubr.bf16.gmra.mrb[0].mxu0 %v4024
    %v4539 = vpop.f32.mrb[0].mxu0
    %v4540 = vadd.f32 0.0, %v4539
    %v4541 = vpop.f32.mrb[0].mxu0
    %v4542 = vadd.f32 0.0, %v4541
    %v4543 = vpop.f32.mrb[0].mxu0
    %v4544 = vadd.f32 0.0, %v4543
    %v4545 = vpop.f32.mrb[0].mxu0
    %v4546 = vadd.f32 0.0, %v4545
    %4547 = vmatprep.mubr.bf16.mxu0 %v4027
    %4548 = vmatmul.mubr.bf16.gmra.mrb[0].mxu0 %v4026
    %v4549 = vpop.f32.mrb[0].mxu0
    %v4550 = vadd.f32 0.0, %v4549
    %v4551 = vpop.f32.mrb[0].mxu0
    %v4552 = vadd.f32 0.0, %v4551
    %v4553 = vpop.f32.mrb[0].mxu0
    %v4554 = vadd.f32 0.0, %v4553
    %v4555 = vpop.f32.mrb[0].mxu0
    %v4556 = vadd.f32 0.0, %v4555
    %4557 = vmatprep.mubr.bf16.mxu0 %v4029
    %4558 = vmatmul.mubr.bf16.gmra.mrb[0].mxu0 %v4028
    %v4559 = vpop.f32.mrb[0].mxu0
    %v4560 = vadd.f32 0.0, %v4559
    %v4561 = vpop.f32.mrb[0].mxu0
    %v4562 = vadd.f32 0.0, %v4561
    %v4563 = vpop.f32.mrb[0].mxu0
    %v4564 = vadd.f32 0.0, %v4563
    %v4565 = vpop.f32.mrb[0].mxu0
    %v4566 = vadd.f32 0.0, %v4565
    %4567 = vmatprep.mubr.bf16.mxu0 %v4031
    %4568 = vmatmul.mubr.bf16.gmra.mrb[0].mxu0 %v4030
    %v4569 = vpop.f32.mrb[0].mxu0
    %v4570 = vadd.f32 0.0, %v4569
    %v4571 = vpop.f32.mrb[0].mxu0
    %v4572 = vadd.f32 0.0, %v4571
    %v4573 = vpop.f32.mrb[0].mxu0
    %v4574 = vadd.f32 0.0, %v4573
    %v4575 = vpop.f32.mrb[0].mxu0
    %v4576 = vadd.f32 0.0, %v4575
    %4577 = vmatprep.mubr.bf16.mxu0 %v4033
    %4578 = vmatmul.mubr.bf16.gmra.mrb[0].mxu0 %v4032
    %v4579 = vpop.f32.mrb[0].mxu0
    %v4580 = vadd.f32 0.0, %v4579
    %v4581 = vpop.f32.mrb[0].mxu0
    %v4582 = vadd.f32 0.0, %v4581
    %v4583 = vpop.f32.mrb[0].mxu0
    %v4584 = vadd.f32 0.0, %v4583
    %v4585 = vpop.f32.mrb[0].mxu0
    %v4586 = vadd.f32 0.0, %v4585
    %4587 = vmatprep.mubr.bf16.mxu0 %v4035
    %4588 = vmatmul.mubr.bf16.gmra.mrb[0].mxu0 %v4034
    %v4589 = vpop.f32.mrb[0].mxu0
    %v4590 = vadd.f32 0.0, %v4589
    %v4591 = vpop.f32.mrb[0].mxu0
    %v4592 = vadd.f32 0.0, %v4591
    %v4593 = vpop.f32.mrb[0].mxu0
    %v4594 = vadd.f32 0.0, %v4593
    %v4595 = vpop.f32.mrb[0].mxu0
    %v4596 = vadd.f32 0.0, %v4595
    %4597 = vmatprep.mubr.bf16.mxu0 %v4037
    %4598 = vmatmul.mubr.bf16.gmra.mrb[0].mxu0 %v4036
    %v4599 = vpop.f32.mrb[0].mxu0
    %v4600 = vadd.f32 0.0, %v4599
    %v4601 = vpop.f32.mrb[0].mxu0
    %v4602 = vadd.f32 0.0, %v4601
    %v4603 = vpop.f32.mrb[0].mxu0
    %v4604 = vadd.f32 0.0, %v4603
    %v4605 = vpop.f32.mrb[0].mxu0
    %v4606 = vadd.f32 0.0, %v4605
    %4607 = vmatprep.mubr.bf16.mxu0 %v4039
    %4608 = vmatmul.mubr.bf16.gmra.mrb[0].mxu0 %v4038
    %v4609 = vpop.f32.mrb[0].mxu0
    %v4610 = vadd.f32 0.0, %v4609
    %v4611 = vpop.f32.mrb[0].mxu0
    %v4612 = vadd.f32 0.0, %v4611
    %v4613 = vpop.f32.mrb[0].mxu0
    %v4614 = vadd.f32 0.0, %v4613
    %v4615 = vpop.f32.mrb[0].mxu0
    %v4616 = vadd.f32 0.0, %v4615
    %4617 = vmatprep.mubr.bf16.mxu0 %v4041
    %4618 = vmatmul.mubr.bf16.gmra.mrb[0].mxu0 %v4040
    %v4619 = vpop.f32.mrb[0].mxu0
    %v4620 = vadd.f32 0.0, %v4619
    %v4621 = vpop.f32.mrb[0].mxu0
    %v4622 = vadd.f32 0.0, %v4621
    %v4623 = vpop.f32.mrb[0].mxu0
    %v4624 = vadd.f32 0.0, %v4623
    %v4625 = vpop.f32.mrb[0].mxu0
    %v4626 = vadd.f32 0.0, %v4625
    %4627 = vmatprep.mubr.bf16.mxu0 %v4043
    %4628 = vmatmul.mubr.bf16.gmra.mrb[0].mxu0 %v4042
    %v4629 = vpop.f32.mrb[0].mxu0
    %v4630 = vadd.f32 0.0, %v4629
    %v4631 = vpop.f32.mrb[0].mxu0
    %v4632 = vadd.f32 0.0, %v4631
    %v4633 = vpop.f32.mrb[0].mxu0
    %v4634 = vadd.f32 0.0, %v4633
    %v4635 = vpop.f32.mrb[0].mxu0
    %v4636 = vadd.f32 0.0, %v4635
    %4637 = vmatprep.mubr.bf16.mxu0 %v4045
    %4638 = vmatmul.mubr.bf16.gmra.mrb[0].mxu0 %v4044
    %v4639 = vpop.f32.mrb[0].mxu0
    %v4640 = vadd.f32 0.0, %v4639
    %v4641 = vpop.f32.mrb[0].mxu0
    %v4642 = vadd.f32 0.0, %v4641
    %v4643 = vpop.f32.mrb[0].mxu0
    %v4644 = vadd.f32 0.0, %v4643
    %v4645 = vpop.f32.mrb[0].mxu0
    %v4646 = vadd.f32 0.0, %v4645
    %4647 = vmatprep.mubr.bf16.mxu0 %v4047
    %4648 = vmatmul.mubr.bf16.gmra.mrb[0].mxu0 %v4046
    %v4649 = vpop.f32.mrb[0].mxu0
    %v4650 = vadd.f32 0.0, %v4649
    %v4651 = vpop.f32.mrb[0].mxu0
    %v4652 = vadd.f32 0.0, %v4651
    %v4653 = vpop.f32.mrb[0].mxu0
    %v4654 = vadd.f32 0.0, %v4653
    %v4655 = vpop.f32.mrb[0].mxu0
    %v4656 = vadd.f32 0.0, %v4655
    %4657 = vmatprep.mubr.bf16.mxu0 %v4049
    %4658 = vmatmul.mubr.bf16.gmra.mrb[0].mxu0 %v4048
    %v4659 = vpop.f32.mrb[0].mxu0
    %v4660 = vadd.f32 0.0, %v4659
    %v4661 = vpop.f32.mrb[0].mxu0
    %v4662 = vadd.f32 0.0, %v4661
    %v4663 = vpop.f32.mrb[0].mxu0
    %v4664 = vadd.f32 0.0, %v4663
    %v4665 = vpop.f32.mrb[0].mxu0
    %v4666 = vadd.f32 0.0, %v4665
    %4667 = vmatprep.mubr.bf16.mxu0 %v4051
    %4668 = vmatmul.mubr.bf16.gmra.mrb[0].mxu0 %v4050
    %v4669 = vpop.f32.mrb[0].mxu0
    %v4670 = vadd.f32 0.0, %v4669
    %v4671 = vpop.f32.mrb[0].mxu0
    %v4672 = vadd.f32 0.0, %v4671
    %v4673 = vpop.f32.mrb[0].mxu0
    %v4674 = vadd.f32 0.0, %v4673
    %v4675 = vpop.f32.mrb[0].mxu0
    %v4676 = vadd.f32 0.0, %v4675
    %4677 = vmatprep.mubr.bf16.mxu0 %v4053
    %4678 = vmatmul.mubr.bf16.gmra.mrb[0].mxu0 %v4052
    %v4679 = vpop.f32.mrb[0].mxu0
    %v4680 = vadd.f32 0.0, %v4679
    %v4681 = vpop.f32.mrb[0].mxu0
    %v4682 = vadd.f32 0.0, %v4681
    %v4683 = vpop.f32.mrb[0].mxu0
    %v4684 = vadd.f32 0.0, %v4683
    %v4685 = vpop.f32.mrb[0].mxu0
    %v4686 = vadd.f32 0.0, %v4685
    %4687 = vmatprep.mubr.bf16.mxu0 %v4055
    %4688 = vmatmul.mubr.bf16.gmra.mrb[0].mxu0 %v4054
    %v4689 = vpop.f32.mrb[0].mxu0
    %v4690 = vadd.f32 0.0, %v4689
    %v4691 = vpop.f32.mrb[0].mxu0
    %v4692 = vadd.f32 0.0, %v4691
    %v4693 = vpop.f32.mrb[0].mxu0
    %v4694 = vadd.f32 0.0, %v4693
    %v4695 = vpop.f32.mrb[0].mxu0
    %v4696 = vadd.f32 0.0, %v4695
    %4697 = vmatprep.mubr.bf16.mxu0 %v4057
    %4698 = vmatmul.mubr.bf16.gmra.mrb[0].mxu0 %v4056
    %v4699 = vpop.f32.mrb[0].mxu0
    %v4700 = vadd.f32 0.0, %v4699
    %v4701 = vpop.f32.mrb[0].mxu0
    %v4702 = vadd.f32 0.0, %v4701
    %v4703 = vpop.f32.mrb[0].mxu0
    %v4704 = vadd.f32 0.0, %v4703
    %v4705 = vpop.f32.mrb[0].mxu0
    %v4706 = vadd.f32 0.0, %v4705
    %4707 = vmatprep.mubr.bf16.mxu0 %v4059
    %4708 = vmatmul.mubr.bf16.gmra.mrb[0].mxu0 %v4058
    %v4709 = vpop.f32.mrb[0].mxu0
    %v4710 = vadd.f32 0.0, %v4709
    %v4711 = vpop.f32.mrb[0].mxu0
    %v4712 = vadd.f32 0.0, %v4711
    %v4713 = vpop.f32.mrb[0].mxu0
    %v4714 = vadd.f32 0.0, %v4713
    %v4715 = vpop.f32.mrb[0].mxu0
    %v4716 = vadd.f32 0.0, %v4715
    %4717 = vmatprep.mubr.bf16.mxu0 %v4061
    %4718 = vmatmul.mubr.bf16.gmra.mrb[0].mxu0 %v4060
    %v4719 = vpop.f32.mrb[0].mxu0
    %v4720 = vadd.f32 0.0, %v4719
    %v4721 = vpop.f32.mrb[0].mxu0
    %v4722 = vadd.f32 0.0, %v4721
    %v4723 = vpop.f32.mrb[0].mxu0
    %v4724 = vadd.f32 0.0, %v4723
    %v4725 = vpop.f32.mrb[0].mxu0
    %v4726 = vadd.f32 0.0, %v4725
    %4727 = vmatprep.mubr.bf16.mxu0 %v4063
    %4728 = vmatmul.mubr.bf16.gmra.mrb[0].mxu0 %v4062
    %v4729 = vpop.f32.mrb[0].mxu0
    %v4730 = vadd.f32 0.0, %v4729
    %v4731 = vpop.f32.mrb[0].mxu0
    %v4732 = vadd.f32 0.0, %v4731
    %v4733 = vpop.f32.mrb[0].mxu0
    %v4734 = vadd.f32 0.0, %v4733
    %v4735 = vpop.f32.mrb[0].mxu0
    %v4736 = vadd.f32 0.0, %v4735
    %4737 = vmatprep.mubr.bf16.mxu0 %v4065
    %4738 = vmatmul.mubr.bf16.gmra.mrb[0].mxu0 %v4064
    %v4739 = vpop.f32.mrb[0].mxu0
    %v4740 = vadd.f32 0.0, %v4739
    %v4741 = vpop.f32.mrb[0].mxu0
    %v4742 = vadd.f32 0.0, %v4741
    %v4743 = vpop.f32.mrb[0].mxu0
    %v4744 = vadd.f32 0.0, %v4743
    %v4745 = vpop.f32.mrb[0].mxu0
    %v4746 = vadd.f32 0.0, %v4745
    %4747 = vmatprep.mubr.bf16.mxu0 %v4067
    %4748 = vmatmul.mubr.bf16.gmra.mrb[0].mxu0 %v4066
    %v4749 = vpop.f32.mrb[0].mxu0
    %v4750 = vadd.f32 0.0, %v4749
    %v4751 = vpop.f32.mrb[0].mxu0
    %v4752 = vadd.f32 0.0, %v4751
    %v4753 = vpop.f32.mrb[0].mxu0
    %v4754 = vadd.f32 0.0, %v4753
    %v4755 = vpop.f32.mrb[0].mxu0
    %v4756 = vadd.f32 0.0, %v4755
    %4757 = vmatprep.mubr.bf16.mxu0 %v4069
    %4758 = vmatmul.mubr.bf16.gmra.mrb[0].mxu0 %v4068
    %v4759 = vpop.f32.mrb[0].mxu0
    %v4760 = vadd.f32 0.0, %v4759
    %v4761 = vpop.f32.mrb[0].mxu0
    %v4762 = vadd.f32 0.0, %v4761
    %v4763 = vpop.f32.mrb[0].mxu0
    %v4764 = vadd.f32 0.0, %v4763
    %v4765 = vpop.f32.mrb[0].mxu0
    %v4766 = vadd.f32 0.0, %v4765
    %4767 = vmatprep.mubr.bf16.mxu0 %v4071
    %4768 = vmatmul.mubr.bf16.gmra.mrb[0].mxu0 %v4070
    %v4769 = vpop.f32.mrb[0].mxu0
    %v4770 = vadd.f32 0.0, %v4769
    %v4771 = vpop.f32.mrb[0].mxu0
    %v4772 = vadd.f32 0.0, %v4771
    %v4773 = vpop.f32.mrb[0].mxu0
    %v4774 = vadd.f32 0.0, %v4773
    %v4775 = vpop.f32.mrb[0].mxu0
    %v4776 = vadd.f32 0.0, %v4775
    %4777 = vmatprep.mubr.bf16.mxu0 %v4073
    %4778 = vmatmul.mubr.bf16.gmra.mrb[0].mxu0 %v4072
    %v4779 = vpop.f32.mrb[0].mxu0
    %v4780 = vadd.f32 0.0, %v4779
    %v4781 = vpop.f32.mrb[0].mxu0
    %v4782 = vadd.f32 0.0, %v4781
    %v4783 = vpop.f32.mrb[0].mxu0
    %v4784 = vadd.f32 0.0, %v4783
    %v4785 = vpop.f32.mrb[0].mxu0
    %v4786 = vadd.f32 0.0, %v4785
    %4787 = vmatprep.mubr.bf16.mxu0 %v4075
    %4788 = vmatmul.mubr.bf16.gmra.mrb[0].mxu0 %v4074
    %v4789 = vpop.f32.mrb[0].mxu0
    %v4790 = vadd.f32 0.0, %v4789
    %v4791 = vpop.f32.mrb[0].mxu0
    %v4792 = vadd.f32 0.0, %v4791
    %v4793 = vpop.f32.mrb[0].mxu0
    %v4794 = vadd.f32 0.0, %v4793
    %v4795 = vpop.f32.mrb[0].mxu0
    %v4796 = vadd.f32 0.0, %v4795
    %4797 = vmatprep.mubr.bf16.mxu0 %v4077
    %4798 = vmatmul.mubr.bf16.gmra.mrb[0].mxu0 %v4076
    %v4799 = vpop.f32.mrb[0].mxu0
    %v4800 = vadd.f32 0.0, %v4799
    %v4801 = vpop.f32.mrb[0].mxu0
    %v4802 = vadd.f32 0.0, %v4801
    %v4803 = vpop.f32.mrb[0].mxu0
    %v4804 = vadd.f32 0.0, %v4803
    %v4805 = vpop.f32.mrb[0].mxu0
    %v4806 = vadd.f32 0.0, %v4805
    %4807 = vmatprep.mubr.bf16.mxu0 %v4079
    %4808 = vmatmul.mubr.bf16.gmra.mrb[0].mxu0 %v4078
    %v4809 = vpop.f32.mrb[0].mxu0
    %v4810 = vadd.f32 0.0, %v4809
    %v4811 = vpop.f32.mrb[0].mxu0
    %v4812 = vadd.f32 0.0, %v4811
    %v4813 = vpop.f32.mrb[0].mxu0
    %v4814 = vadd.f32 0.0, %v4813
    %v4815 = vpop.f32.mrb[0].mxu0
    %v4816 = vadd.f32 0.0, %v4815
    %4817 = vmatprep.mubr.bf16.mxu0 %v4081
    %4818 = vmatmul.mubr.bf16.gmra.mrb[0].mxu0 %v4080
    %v4819 = vpop.f32.mrb[0].mxu0
    %v4820 = vadd.f32 0.0, %v4819
    %v4821 = vpop.f32.mrb[0].mxu0
    %v4822 = vadd.f32 0.0, %v4821
    %v4823 = vpop.f32.mrb[0].mxu0
    %v4824 = vadd.f32 0.0, %v4823
    %v4825 = vpop.f32.mrb[0].mxu0
    %v4826 = vadd.f32 0.0, %v4825
    %4827 = vmatprep.mubr.bf16.mxu0 %v4083
    %4828 = vmatmul.mubr.bf16.gmra.mrb[0].mxu0 %v4082
    %v4829 = vpop.f32.mrb[0].mxu0
    %v4830 = vadd.f32 0.0, %v4829
    %v4831 = vpop.f32.mrb[0].mxu0
    %v4832 = vadd.f32 0.0, %v4831
    %v4833 = vpop.f32.mrb[0].mxu0
    %v4834 = vadd.f32 0.0, %v4833
    %v4835 = vpop.f32.mrb[0].mxu0
    %v4836 = vadd.f32 0.0, %v4835
    %4837 = vmatprep.mubr.bf16.mxu0 %v4085
    %4838 = vmatmul.mubr.bf16.gmra.mrb[0].mxu0 %v4084
    %v4839 = vpop.f32.mrb[0].mxu0
    %v4840 = vadd.f32 0.0, %v4839
    %v4841 = vpop.f32.mrb[0].mxu0
    %v4842 = vadd.f32 0.0, %v4841
    %v4843 = vpop.f32.mrb[0].mxu0
    %v4844 = vadd.f32 0.0, %v4843
    %v4845 = vpop.f32.mrb[0].mxu0
    %v4846 = vadd.f32 0.0, %v4845
    %4847 = vmatprep.mubr.bf16.mxu0 %v4087
    %4848 = vmatmul.mubr.bf16.gmra.mrb[0].mxu0 %v4086
    %v4849 = vpop.f32.mrb[0].mxu0
    %v4850 = vadd.f32 0.0, %v4849
    %v4851 = vpop.f32.mrb[0].mxu0
    %v4852 = vadd.f32 0.0, %v4851
    %v4853 = vpop.f32.mrb[0].mxu0
    %v4854 = vadd.f32 0.0, %v4853
    %v4855 = vpop.f32.mrb[0].mxu0
    %v4856 = vadd.f32 0.0, %v4855
    %4857 = vmatprep.mubr.bf16.mxu0 %v4089
    %4858 = vmatmul.mubr.bf16.gmra.mrb[0].mxu0 %v4088
    %v4859 = vpop.f32.mrb[0].mxu0
    %v4860 = vadd.f32 0.0, %v4859
    %v4861 = vpop.f32.mrb[0].mxu0
    %v4862 = vadd.f32 0.0, %v4861
    %v4863 = vpop.f32.mrb[0].mxu0
    %v4864 = vadd.f32 0.0, %v4863
    %v4865 = vpop.f32.mrb[0].mxu0
    %v4866 = vadd.f32 0.0, %v4865
    %4867 = vmatprep.mubr.bf16.mxu0 %v4091
    %4868 = vmatmul.mubr.bf16.gmra.mrb[0].mxu0 %v4090
    %v4869 = vpop.f32.mrb[0].mxu0
    %v4870 = vadd.f32 0.0, %v4869
    %v4871 = vpop.f32.mrb[0].mxu0
    %v4872 = vadd.f32 0.0, %v4871
    %v4873 = vpop.f32.mrb[0].mxu0
    %v4874 = vadd.f32 0.0, %v4873
    %v4875 = vpop.f32.mrb[0].mxu0
    %v4876 = vadd.f32 0.0, %v4875
    %4877 = vmatprep.mubr.bf16.mxu0 %v4093
    %4878 = vmatmul.mubr.bf16.gmra.mrb[0].mxu0 %v4092
    %v4879 = vpop.f32.mrb[0].mxu0
    %v4880 = vadd.f32 0.0, %v4879
    %v4881 = vpop.f32.mrb[0].mxu0
    %v4882 = vadd.f32 0.0, %v4881
    %v4883 = vpop.f32.mrb[0].mxu0
    %v4884 = vadd.f32 0.0, %v4883
    %v4885 = vpop.f32.mrb[0].mxu0
    %v4886 = vadd.f32 0.0, %v4885
    %4887 = vmatprep.mubr.bf16.mxu0 %v4095
    %4888 = vmatmul.mubr.bf16.gmra.mrb[0].mxu0 %v4094
    %v4889 = vpop.f32.mrb[0].mxu0
    %v4890 = vadd.f32 0.0, %v4889
    %v4891 = vpop.f32.mrb[0].mxu0
    %v4892 = vadd.f32 0.0, %v4891
    %v4893 = vpop.f32.mrb[0].mxu0
    %v4894 = vadd.f32 0.0, %v4893
    %v4895 = vpop.f32.mrb[0].mxu0
    %v4896 = vadd.f32 0.0, %v4895
    %4897 = vmatprep.mubr.bf16.mxu0 %v4097
    %4898 = vmatmul.mubr.bf16.gmra.mrb[0].mxu0 %v4096
    %v4899 = vpop.f32.mrb[0].mxu0
    %v4900 = vadd.f32 0.0, %v4899
    %v4901 = vpop.f32.mrb[0].mxu0
    %v4902 = vadd.f32 0.0, %v4901
    %v4903 = vpop.f32.mrb[0].mxu0
    %v4904 = vadd.f32 0.0, %v4903
    %v4905 = vpop.f32.mrb[0].mxu0
    %v4906 = vadd.f32 0.0, %v4905
    %4907 = vmatprep.mubr.bf16.mxu0 %v4099
    %4908 = vmatmul.mubr.bf16.gmra.mrb[0].mxu0 %v4098
    %v4909 = vpop.f32.mrb[0].mxu0
    %v4910 = vadd.f32 0.0, %v4909
    %v4911 = vpop.f32.mrb[0].mxu0
    %v4912 = vadd.f32 0.0, %v4911
    %v4913 = vpop.f32.mrb[0].mxu0
    %v4914 = vadd.f32 0.0, %v4913
    %v4915 = vpop.f32.mrb[0].mxu0
    %v4916 = vadd.f32 0.0, %v4915
    %4917 = vmatprep.mubr.bf16.mxu0 %v4101
    %4918 = vmatmul.mubr.bf16.gmra.mrb[0].mxu0 %v4100
    %v4919 = vpop.f32.mrb[0].mxu0
    %v4920 = vadd.f32 0.0, %v4919
    %v4921 = vpop.f32.mrb[0].mxu0
    %v4922 = vadd.f32 0.0, %v4921
    %v4923 = vpop.f32.mrb[0].mxu0
    %v4924 = vadd.f32 0.0, %v4923
    %v4925 = vpop.f32.mrb[0].mxu0
    %v4926 = vadd.f32 0.0, %v4925
    %4927 = vmatprep.mubr.bf16.mxu0 %v4103
    %4928 = vmatmul.mubr.bf16.gmra.mrb[0].mxu0 %v4102
    %v4929 = vpop.f32.mrb[0].mxu0
    %v4930 = vadd.f32 0.0, %v4929
    %v4931 = vpop.f32.mrb[0].mxu0
    %v4932 = vadd.f32 0.0, %v4931
    %v4933 = vpop.f32.mrb[0].mxu0
    %v4934 = vadd.f32 0.0, %v4933
    %v4935 = vpop.f32.mrb[0].mxu0
    %v4936 = vadd.f32 0.0, %v4935
    %4937 = vmatprep.mubr.bf16.mxu0 %v4105
    %4938 = vmatmul.mubr.bf16.gmra.mrb[0].mxu0 %v4104
    %v4939 = vpop.f32.mrb[0].mxu0
    %v4940 = vadd.f32 0.0, %v4939
    %v4941 = vpop.f32.mrb[0].mxu0
    %v4942 = vadd.f32 0.0, %v4941
    %v4943 = vpop.f32.mrb[0].mxu0
    %v4944 = vadd.f32 0.0, %v4943
    %v4945 = vpop.f32.mrb[0].mxu0
    %v4946 = vadd.f32 0.0, %v4945
    %4947 = vmatprep.mubr.bf16.mxu0 %v4107
    %4948 = vmatmul.mubr.bf16.gmra.mrb[0].mxu0 %v4106
    %v4949 = vpop.f32.mrb[0].mxu0
    %v4950 = vadd.f32 0.0, %v4949
    %v4951 = vpop.f32.mrb[0].mxu0
    %v4952 = vadd.f32 0.0, %v4951
    %v4953 = vpop.f32.mrb[0].mxu0
    %v4954 = vadd.f32 0.0, %v4953
    %v4955 = vpop.f32.mrb[0].mxu0
    %v4956 = vadd.f32 0.0, %v4955
    %4957 = vmatprep.mubr.bf16.mxu0 %v4109
    %4958 = vmatmul.mubr.bf16.gmra.mrb[0].mxu0 %v4108
    %v4959 = vpop.f32.mrb[0].mxu0
    %v4960 = vadd.f32 0.0, %v4959
    %v4961 = vpop.f32.mrb[0].mxu0
    %v4962 = vadd.f32 0.0, %v4961
    %v4963 = vpop.f32.mrb[0].mxu0
    %v4964 = vadd.f32 0.0, %v4963
    %v4965 = vpop.f32.mrb[0].mxu0
    %v4966 = vadd.f32 0.0, %v4965
    %4967 = vmatprep.mubr.bf16.mxu0 %v4111
    %4968 = vmatmul.mubr.bf16.gmra.mrb[0].mxu0 %v4110
    %v4969 = vpop.f32.mrb[0].mxu0
    %v4970 = vadd.f32 0.0, %v4969
    %v4971 = vpop.f32.mrb[0].mxu0
    %v4972 = vadd.f32 0.0, %v4971
    %v4973 = vpop.f32.mrb[0].mxu0
    %v4974 = vadd.f32 0.0, %v4973
    %v4975 = vpop.f32.mrb[0].mxu0
    %v4976 = vadd.f32 0.0, %v4975
    %4977 = vdwg.mxu0
    %v4978 = vpack.c.bf16 %v4344, %v4340
    %v4979 = vpack.c.bf16 %v4346, %v4342
    %v4980 = vpack.c.bf16 %v4354, %v4350
    %v4981 = vpack.c.bf16 %v4356, %v4352
    %v4982 = vpack.c.bf16 %v4364, %v4360
    %v4983 = vpack.c.bf16 %v4366, %v4362
    %v4984 = vpack.c.bf16 %v4374, %v4370
    %v4985 = vpack.c.bf16 %v4376, %v4372
    %v4986 = vpack.c.bf16 %v4384, %v4380
    %v4987 = vpack.c.bf16 %v4386, %v4382
    %v4988 = vpack.c.bf16 %v4394, %v4390
    %v4989 = vpack.c.bf16 %v4396, %v4392
    %v4990 = vpack.c.bf16 %v4404, %v4400
    %v4991 = vpack.c.bf16 %v4406, %v4402
    %v4992 = vpack.c.bf16 %v4414, %v4410
    %v4993 = vpack.c.bf16 %v4416, %v4412
    %v4994 = vpack.c.bf16 %v4424, %v4420
    %v4995 = vpack.c.bf16 %v4426, %v4422
    %v4996 = vpack.c.bf16 %v4434, %v4430
    %v4997 = vpack.c.bf16 %v4436, %v4432
    %v4998 = vpack.c.bf16 %v4444, %v4440
    %v4999 = vpack.c.bf16 %v4446, %v4442
    %v5000 = vpack.c.bf16 %v4454, %v4450
    %v5001 = vpack.c.bf16 %v4456, %v4452
    %v5002 = vpack.c.bf16 %v4464, %v4460
    %v5003 = vpack.c.bf16 %v4466, %v4462
    %v5004 = vpack.c.bf16 %v4474, %v4470
    %v5005 = vpack.c.bf16 %v4476, %v4472
    %v5006 = vpack.c.bf16 %v4484, %v4480
    %v5007 = vpack.c.bf16 %v4486, %v4482
    %v5008 = vpack.c.bf16 %v4494, %v4490
    %v5009 = vpack.c.bf16 %v4496, %v4492
    %v5010 = vpack.c.bf16 %v4504, %v4500
    %v5011 = vpack.c.bf16 %v4506, %v4502
    %v5012 = vpack.c.bf16 %v4514, %v4510
    %v5013 = vpack.c.bf16 %v4516, %v4512
    %v5014 = vpack.c.bf16 %v4524, %v4520
    %v5015 = vpack.c.bf16 %v4526, %v4522
    %v5016 = vpack.c.bf16 %v4534, %v4530
    %v5017 = vpack.c.bf16 %v4536, %v4532
    %v5018 = vpack.c.bf16 %v4544, %v4540
    %v5019 = vpack.c.bf16 %v4546, %v4542
    %v5020 = vpack.c.bf16 %v4554, %v4550
    %v5021 = vpack.c.bf16 %v4556, %v4552
    %v5022 = vpack.c.bf16 %v4564, %v4560
    %v5023 = vpack.c.bf16 %v4566, %v4562
    %v5024 = vpack.c.bf16 %v4574, %v4570
    %v5025 = vpack.c.bf16 %v4576, %v4572
    %v5026 = vpack.c.bf16 %v4584, %v4580
    %v5027 = vpack.c.bf16 %v4586, %v4582
    %v5028 = vpack.c.bf16 %v4594, %v4590
    %v5029 = vpack.c.bf16 %v4596, %v4592
    %v5030 = vpack.c.bf16 %v4604, %v4600
    %v5031 = vpack.c.bf16 %v4606, %v4602
    %v5032 = vpack.c.bf16 %v4614, %v4610
    %v5033 = vpack.c.bf16 %v4616, %v4612
    %v5034 = vpack.c.bf16 %v4624, %v4620
    %v5035 = vpack.c.bf16 %v4626, %v4622
    %v5036 = vpack.c.bf16 %v4634, %v4630
    %v5037 = vpack.c.bf16 %v4636, %v4632
    %v5038 = vpack.c.bf16 %v4644, %v4640
    %v5039 = vpack.c.bf16 %v4646, %v4642
    %v5040 = vpack.c.bf16 %v4654, %v4650
    %v5041 = vpack.c.bf16 %v4656, %v4652
    %v5042 = vpack.c.bf16 %v4664, %v4660
    %v5043 = vpack.c.bf16 %v4666, %v4662
    %v5044 = vpack.c.bf16 %v4674, %v4670
    %v5045 = vpack.c.bf16 %v4676, %v4672
    %v5046 = vpack.c.bf16 %v4684, %v4680
    %v5047 = vpack.c.bf16 %v4686, %v4682
    %v5048 = vpack.c.bf16 %v4694, %v4690
    %v5049 = vpack.c.bf16 %v4696, %v4692
    %v5050 = vpack.c.bf16 %v4704, %v4700
    %v5051 = vpack.c.bf16 %v4706, %v4702
    %v5052 = vpack.c.bf16 %v4714, %v4710
    %v5053 = vpack.c.bf16 %v4716, %v4712
    %v5054 = vpack.c.bf16 %v4724, %v4720
    %v5055 = vpack.c.bf16 %v4726, %v4722
    %v5056 = vpack.c.bf16 %v4734, %v4730
    %v5057 = vpack.c.bf16 %v4736, %v4732
    %v5058 = vpack.c.bf16 %v4744, %v4740
    %v5059 = vpack.c.bf16 %v4746, %v4742
    %v5060 = vpack.c.bf16 %v4754, %v4750
    %v5061 = vpack.c.bf16 %v4756, %v4752
    %v5062 = vpack.c.bf16 %v4764, %v4760
    %v5063 = vpack.c.bf16 %v4766, %v4762
    %v5064 = vpack.c.bf16 %v4774, %v4770
    %v5065 = vpack.c.bf16 %v4776, %v4772
    %v5066 = vpack.c.bf16 %v4784, %v4780
    %v5067 = vpack.c.bf16 %v4786, %v4782
    %v5068 = vpack.c.bf16 %v4794, %v4790
    %v5069 = vpack.c.bf16 %v4796, %v4792
    %v5070 = vpack.c.bf16 %v4804, %v4800
    %v5071 = vpack.c.bf16 %v4806, %v4802
    %v5072 = vpack.c.bf16 %v4814, %v4810
    %v5073 = vpack.c.bf16 %v4816, %v4812
    %v5074 = vpack.c.bf16 %v4824, %v4820
    %v5075 = vpack.c.bf16 %v4826, %v4822
    %v5076 = vpack.c.bf16 %v4834, %v4830
    %v5077 = vpack.c.bf16 %v4836, %v4832
    %v5078 = vpack.c.bf16 %v4844, %v4840
    %v5079 = vpack.c.bf16 %v4846, %v4842
    %v5080 = vpack.c.bf16 %v4854, %v4850
    %v5081 = vpack.c.bf16 %v4856, %v4852
    %v5082 = vpack.c.bf16 %v4864, %v4860
    %v5083 = vpack.c.bf16 %v4866, %v4862
    %v5084 = vpack.c.bf16 %v4874, %v4870
    %v5085 = vpack.c.bf16 %v4876, %v4872
    %v5086 = vpack.c.bf16 %v4884, %v4880
    %v5087 = vpack.c.bf16 %v4886, %v4882
    %v5088 = vpack.c.bf16 %v4894, %v4890
    %v5089 = vpack.c.bf16 %v4896, %v4892
    %v5090 = vpack.c.bf16 %v4904, %v4900
    %v5091 = vpack.c.bf16 %v4906, %v4902
    %v5092 = vpack.c.bf16 %v4914, %v4910
    %v5093 = vpack.c.bf16 %v4916, %v4912
    %v5094 = vpack.c.bf16 %v4924, %v4920
    %v5095 = vpack.c.bf16 %v4926, %v4922
    %v5096 = vpack.c.bf16 %v4934, %v4930
    %v5097 = vpack.c.bf16 %v4936, %v4932
    %v5098 = vpack.c.bf16 %v4944, %v4940
    %v5099 = vpack.c.bf16 %v4946, %v4942
    %v5100 = vpack.c.bf16 %v4954, %v4950
    %v5101 = vpack.c.bf16 %v4956, %v4952
    %v5102 = vpack.c.bf16 %v4964, %v4960
    %v5103 = vpack.c.bf16 %v4966, %v4962
    %v5104 = vpack.c.bf16 %v4974, %v4970
    %v5105 = vpack.c.bf16 %v4976, %v4972
    %s5106 = scalar_lea.vmem %s4, 4
    %v5107 = vld [vmem:[%s5106] sm:$0x3]
    %v5110 = vunpack.c.l.s4 1966171168
    %v5111 = vunpack.c.0.s8 %v5110
    %v5112 = vlaneseq
    %v5113 = vshrl.u32 %v5112, 7
    %v5114 = vsub.s32 %v5111, %v5113
    %v5115 = vrot.slane %v5107, %v5114
    %v5116 = vcombine.high %v5115, %v5115
    %v5118 = vunpack.c.l.s4 1966171168
    %v5119 = vunpack.c.0.s8 %v5118
    %v5120 = vlaneseq
    %v5121 = vshrl.u32 %v5120, 7
    %v5122 = vsub.s32 %v5119, %v5121
    %v5123 = vrot.slane %v5115, %v5122
    %v5125 = vunpack.c.l.s4 1966171168
    %v5126 = vunpack.c.0.s8 %v5125
    %v5127 = vlaneseq
    %v5128 = vshrl.u32 %v5127, 7
    %v5129 = vsub.s32 %v5126, %v5128
    %v5130 = vrot.slane %v5116, %v5129
    %v5132 = vpack.i.b16 %v5123, %v5123
    %v5134 = vlaneseq
    %v5135 = vshrl.u32 %v5134, 7
    %v5136 = vsub.s32 0, %v5135
    %v5137 = vrot.slane %v5132, %v5136
    %v5139 = vpack.i.b16 %v5130, %v5130
    %v5141 = vlaneseq
    %v5142 = vshrl.u32 %v5141, 7
    %v5143 = vsub.s32 0, %v5142
    %v5144 = vrot.slane %v5139, %v5143
    %v5145 = vadd.bf16 %v4978, %v5137
    %v5146 = vadd.bf16 %v4979, %v5144
    %v5147 = vadd.bf16 %v4980, %v5137
    %v5148 = vadd.bf16 %v4981, %v5144
    %v5149 = vadd.bf16 %v4982, %v5137
    %v5150 = vadd.bf16 %v4983, %v5144
    %v5151 = vadd.bf16 %v4984, %v5137
    %v5152 = vadd.bf16 %v4985, %v5144
    %v5153 = vadd.bf16 %v4986, %v5137
    %v5154 = vadd.bf16 %v4987, %v5144
    %v5155 = vadd.bf16 %v4988, %v5137
    %v5156 = vadd.bf16 %v4989, %v5144
    %v5157 = vadd.bf16 %v4990, %v5137
    %v5158 = vadd.bf16 %v4991, %v5144
    %v5159 = vadd.bf16 %v4992, %v5137
    %v5160 = vadd.bf16 %v4993, %v5144
    %v5161 = vadd.bf16 %v4994, %v5137
    %v5162 = vadd.bf16 %v4995, %v5144
    %v5163 = vadd.bf16 %v4996, %v5137
    %v5164 = vadd.bf16 %v4997, %v5144
    %v5165 = vadd.bf16 %v4998, %v5137
    %v5166 = vadd.bf16 %v4999, %v5144
    %v5167 = vadd.bf16 %v5000, %v5137
    %v5168 = vadd.bf16 %v5001, %v5144
    %v5169 = vadd.bf16 %v5002, %v5137
    %v5170 = vadd.bf16 %v5003, %v5144
    %v5171 = vadd.bf16 %v5004, %v5137
    %v5172 = vadd.bf16 %v5005, %v5144
    %v5173 = vadd.bf16 %v5006, %v5137
    %v5174 = vadd.bf16 %v5007, %v5144
    %v5175 = vadd.bf16 %v5008, %v5137
    %v5176 = vadd.bf16 %v5009, %v5144
    %v5177 = vadd.bf16 %v5010, %v5137
    %v5178 = vadd.bf16 %v5011, %v5144
    %v5179 = vadd.bf16 %v5012, %v5137
    %v5180 = vadd.bf16 %v5013, %v5144
    %v5181 = vadd.bf16 %v5014, %v5137
    %v5182 = vadd.bf16 %v5015, %v5144
    %v5183 = vadd.bf16 %v5016, %v5137
    %v5184 = vadd.bf16 %v5017, %v5144
    %v5185 = vadd.bf16 %v5018, %v5137
    %v5186 = vadd.bf16 %v5019, %v5144
    %v5187 = vadd.bf16 %v5020, %v5137
    %v5188 = vadd.bf16 %v5021, %v5144
    %v5189 = vadd.bf16 %v5022, %v5137
    %v5190 = vadd.bf16 %v5023, %v5144
    %v5191 = vadd.bf16 %v5024, %v5137
    %v5192 = vadd.bf16 %v5025, %v5144
    %v5193 = vadd.bf16 %v5026, %v5137
    %v5194 = vadd.bf16 %v5027, %v5144
    %v5195 = vadd.bf16 %v5028, %v5137
    %v5196 = vadd.bf16 %v5029, %v5144
    %v5197 = vadd.bf16 %v5030, %v5137
    %v5198 = vadd.bf16 %v5031, %v5144
    %v5199 = vadd.bf16 %v5032, %v5137
    %v5200 = vadd.bf16 %v5033, %v5144
    %v5201 = vadd.bf16 %v5034, %v5137
    %v5202 = vadd.bf16 %v5035, %v5144
    %v5203 = vadd.bf16 %v5036, %v5137
    %v5204 = vadd.bf16 %v5037, %v5144
    %v5205 = vadd.bf16 %v5038, %v5137
    %v5206 = vadd.bf16 %v5039, %v5144
    %v5207 = vadd.bf16 %v5040, %v5137
    %v5208 = vadd.bf16 %v5041, %v5144
    %v5209 = vadd.bf16 %v5042, %v5137
    %v5210 = vadd.bf16 %v5043, %v5144
    %v5211 = vadd.bf16 %v5044, %v5137
    %v5212 = vadd.bf16 %v5045, %v5144
    %v5213 = vadd.bf16 %v5046, %v5137
    %v5214 = vadd.bf16 %v5047, %v5144
    %v5215 = vadd.bf16 %v5048, %v5137
    %v5216 = vadd.bf16 %v5049, %v5144
    %v5217 = vadd.bf16 %v5050, %v5137
    %v5218 = vadd.bf16 %v5051, %v5144
    %v5219 = vadd.bf16 %v5052, %v5137
    %v5220 = vadd.bf16 %v5053, %v5144
    %v5221 = vadd.bf16 %v5054, %v5137
    %v5222 = vadd.bf16 %v5055, %v5144
    %v5223 = vadd.bf16 %v5056, %v5137
    %v5224 = vadd.bf16 %v5057, %v5144
    %v5225 = vadd.bf16 %v5058, %v5137
    %v5226 = vadd.bf16 %v5059, %v5144
    %v5227 = vadd.bf16 %v5060, %v5137
    %v5228 = vadd.bf16 %v5061, %v5144
    %v5229 = vadd.bf16 %v5062, %v5137
    %v5230 = vadd.bf16 %v5063, %v5144
    %v5231 = vadd.bf16 %v5064, %v5137
    %v5232 = vadd.bf16 %v5065, %v5144
    %v5233 = vadd.bf16 %v5066, %v5137
    %v5234 = vadd.bf16 %v5067, %v5144
    %v5235 = vadd.bf16 %v5068, %v5137
    %v5236 = vadd.bf16 %v5069, %v5144
    %v5237 = vadd.bf16 %v5070, %v5137
    %v5238 = vadd.bf16 %v5071, %v5144
    %v5239 = vadd.bf16 %v5072, %v5137
    %v5240 = vadd.bf16 %v5073, %v5144
    %v5241 = vadd.bf16 %v5074, %v5137
    %v5242 = vadd.bf16 %v5075, %v5144
    %v5243 = vadd.bf16 %v5076, %v5137
    %v5244 = vadd.bf16 %v5077, %v5144
    %v5245 = vadd.bf16 %v5078, %v5137
    %v5246 = vadd.bf16 %v5079, %v5144
    %v5247 = vadd.bf16 %v5080, %v5137
    %v5248 = vadd.bf16 %v5081, %v5144
    %v5249 = vadd.bf16 %v5082, %v5137
    %v5250 = vadd.bf16 %v5083, %v5144
    %v5251 = vadd.bf16 %v5084, %v5137
    %v5252 = vadd.bf16 %v5085, %v5144
    %v5253 = vadd.bf16 %v5086, %v5137
    %v5254 = vadd.bf16 %v5087, %v5144
    %v5255 = vadd.bf16 %v5088, %v5137
    %v5256 = vadd.bf16 %v5089, %v5144
    %v5257 = vadd.bf16 %v5090, %v5137
    %v5258 = vadd.bf16 %v5091, %v5144
    %v5259 = vadd.bf16 %v5092, %v5137
    %v5260 = vadd.bf16 %v5093, %v5144
    %v5261 = vadd.bf16 %v5094, %v5137
    %v5262 = vadd.bf16 %v5095, %v5144
    %v5263 = vadd.bf16 %v5096, %v5137
    %v5264 = vadd.bf16 %v5097, %v5144
    %v5265 = vadd.bf16 %v5098, %v5137
    %v5266 = vadd.bf16 %v5099, %v5144
    %v5267 = vadd.bf16 %v5100, %v5137
    %v5268 = vadd.bf16 %v5101, %v5144
    %v5269 = vadd.bf16 %v5102, %v5137
    %v5270 = vadd.bf16 %v5103, %v5144
    %v5271 = vadd.bf16 %v5104, %v5137
    %v5272 = vadd.bf16 %v5105, %v5144
    %v5273 = vmax.bf16 %v5145, 0
    %v5274 = vmax.bf16 %v5146, 0
    %v5275 = vmax.bf16 %v5147, 0
    %v5276 = vmax.bf16 %v5148, 0
    %v5277 = vmax.bf16 %v5149, 0
    %v5278 = vmax.bf16 %v5150, 0
    %v5279 = vmax.bf16 %v5151, 0
    %v5280 = vmax.bf16 %v5152, 0
    %v5281 = vmax.bf16 %v5153, 0
    %v5282 = vmax.bf16 %v5154, 0
    %v5283 = vmax.bf16 %v5155, 0
    %v5284 = vmax.bf16 %v5156, 0
    %v5285 = vmax.bf16 %v5157, 0
    %v5286 = vmax.bf16 %v5158, 0
    %v5287 = vmax.bf16 %v5159, 0
    %v5288 = vmax.bf16 %v5160, 0
    %v5289 = vmax.bf16 %v5161, 0
    %v5290 = vmax.bf16 %v5162, 0
    %v5291 = vmax.bf16 %v5163, 0
    %v5292 = vmax.bf16 %v5164, 0
    %v5293 = vmax.bf16 %v5165, 0
    %v5294 = vmax.bf16 %v5166, 0
    %v5295 = vmax.bf16 %v5167, 0
    %v5296 = vmax.bf16 %v5168, 0
    %v5297 = vmax.bf16 %v5169, 0
    %v5298 = vmax.bf16 %v5170, 0
    %v5299 = vmax.bf16 %v5171, 0
    %v5300 = vmax.bf16 %v5172, 0
    %v5301 = vmax.bf16 %v5173, 0
    %v5302 = vmax.bf16 %v5174, 0
    %v5303 = vmax.bf16 %v5175, 0
    %v5304 = vmax.bf16 %v5176, 0
    %v5305 = vmax.bf16 %v5177, 0
    %v5306 = vmax.bf16 %v5178, 0
    %v5307 = vmax.bf16 %v5179, 0
    %v5308 = vmax.bf16 %v5180, 0
    %v5309 = vmax.bf16 %v5181, 0
    %v5310 = vmax.bf16 %v5182, 0
    %v5311 = vmax.bf16 %v5183, 0
    %v5312 = vmax.bf16 %v5184, 0
    %v5313 = vmax.bf16 %v5185, 0
    %v5314 = vmax.bf16 %v5186, 0
    %v5315 = vmax.bf16 %v5187, 0
    %v5316 = vmax.bf16 %v5188, 0
    %v5317 = vmax.bf16 %v5189, 0
    %v5318 = vmax.bf16 %v5190, 0
    %v5319 = vmax.bf16 %v5191, 0
    %v5320 = vmax.bf16 %v5192, 0
    %v5321 = vmax.bf16 %v5193, 0
    %v5322 = vmax.bf16 %v5194, 0
    %v5323 = vmax.bf16 %v5195, 0
    %v5324 = vmax.bf16 %v5196, 0
    %v5325 = vmax.bf16 %v5197, 0
    %v5326 = vmax.bf16 %v5198, 0
    %v5327 = vmax.bf16 %v5199, 0
    %v5328 = vmax.bf16 %v5200, 0
    %v5329 = vmax.bf16 %v5201, 0
    %v5330 = vmax.bf16 %v5202, 0
    %v5331 = vmax.bf16 %v5203, 0
    %v5332 = vmax.bf16 %v5204, 0
    %v5333 = vmax.bf16 %v5205, 0
    %v5334 = vmax.bf16 %v5206, 0
    %v5335 = vmax.bf16 %v5207, 0
    %v5336 = vmax.bf16 %v5208, 0
    %v5337 = vmax.bf16 %v5209, 0
    %v5338 = vmax.bf16 %v5210, 0
    %v5339 = vmax.bf16 %v5211, 0
    %v5340 = vmax.bf16 %v5212, 0
    %v5341 = vmax.bf16 %v5213, 0
    %v5342 = vmax.bf16 %v5214, 0
    %v5343 = vmax.bf16 %v5215, 0
    %v5344 = vmax.bf16 %v5216, 0
    %v5345 = vmax.bf16 %v5217, 0
    %v5346 = vmax.bf16 %v5218, 0
    %v5347 = vmax.bf16 %v5219, 0
    %v5348 = vmax.bf16 %v5220, 0
    %v5349 = vmax.bf16 %v5221, 0
    %v5350 = vmax.bf16 %v5222, 0
    %v5351 = vmax.bf16 %v5223, 0
    %v5352 = vmax.bf16 %v5224, 0
    %v5353 = vmax.bf16 %v5225, 0
    %v5354 = vmax.bf16 %v5226, 0
    %v5355 = vmax.bf16 %v5227, 0
    %v5356 = vmax.bf16 %v5228, 0
    %v5357 = vmax.bf16 %v5229, 0
    %v5358 = vmax.bf16 %v5230, 0
    %v5359 = vmax.bf16 %v5231, 0
    %v5360 = vmax.bf16 %v5232, 0
    %v5361 = vmax.bf16 %v5233, 0
    %v5362 = vmax.bf16 %v5234, 0
    %v5363 = vmax.bf16 %v5235, 0
    %v5364 = vmax.bf16 %v5236, 0
    %v5365 = vmax.bf16 %v5237, 0
    %v5366 = vmax.bf16 %v5238, 0
    %v5367 = vmax.bf16 %v5239, 0
    %v5368 = vmax.bf16 %v5240, 0
    %v5369 = vmax.bf16 %v5241, 0
    %v5370 = vmax.bf16 %v5242, 0
    %v5371 = vmax.bf16 %v5243, 0
    %v5372 = vmax.bf16 %v5244, 0
    %v5373 = vmax.bf16 %v5245, 0
    %v5374 = vmax.bf16 %v5246, 0
    %v5375 = vmax.bf16 %v5247, 0
    %v5376 = vmax.bf16 %v5248, 0
    %v5377 = vmax.bf16 %v5249, 0
    %v5378 = vmax.bf16 %v5250, 0
    %v5379 = vmax.bf16 %v5251, 0
    %v5380 = vmax.bf16 %v5252, 0
    %v5381 = vmax.bf16 %v5253, 0
    %v5382 = vmax.bf16 %v5254, 0
    %v5383 = vmax.bf16 %v5255, 0
    %v5384 = vmax.bf16 %v5256, 0
    %v5385 = vmax.bf16 %v5257, 0
    %v5386 = vmax.bf16 %v5258, 0
    %v5387 = vmax.bf16 %v5259, 0
    %v5388 = vmax.bf16 %v5260, 0
    %v5389 = vmax.bf16 %v5261, 0
    %v5390 = vmax.bf16 %v5262, 0
    %v5391 = vmax.bf16 %v5263, 0
    %v5392 = vmax.bf16 %v5264, 0
    %v5393 = vmax.bf16 %v5265, 0
    %v5394 = vmax.bf16 %v5266, 0
    %v5395 = vmax.bf16 %v5267, 0
    %v5396 = vmax.bf16 %v5268, 0
    %v5397 = vmax.bf16 %v5269, 0
    %v5398 = vmax.bf16 %v5270, 0
    %v5399 = vmax.bf16 %v5271, 0
    %v5400 = vmax.bf16 %v5272, 0
    %s5401 = scalar_lea.vmem [#allocation3], 768
    %v5402 = vld [vmem:[%s5401] sm:$0xff]
    %v5403 = vld [vmem:[%s5401 + $0x8] sm:$0xff]
    %v5404 = vld [vmem:[%s5401 + $0x10] sm:$0xff]
    %v5405 = vld [vmem:[%s5401 + $0x18] sm:$0xff]
    %v5406 = vld [vmem:[%s5401 + $0x20] sm:$0xff]
    %v5407 = vld [vmem:[%s5401 + $0x28] sm:$0xff]
    %v5408 = vld [vmem:[%s5401 + $0x30] sm:$0xff]
    %v5409 = vld [vmem:[%s5401 + $0x38] sm:$0xff]
    %v5410 = vld [vmem:[%s5401 + $0x40] sm:$0xff]
    %v5411 = vld [vmem:[%s5401 + $0x48] sm:$0xff]
    %v5412 = vld [vmem:[%s5401 + $0x50] sm:$0xff]
    %v5413 = vld [vmem:[%s5401 + $0x58] sm:$0xff]
    %v5414 = vld [vmem:[%s5401 + $0x60] sm:$0xff]
    %v5415 = vld [vmem:[%s5401 + $0x68] sm:$0xff]
    %v5416 = vld [vmem:[%s5401 + $0x70] sm:$0xff]
    %v5417 = vld [vmem:[%s5401 + $0x78] sm:$0xff]
    %v5418 = vld [vmem:[%s5401 + $0x80] sm:$0xff]
    %v5419 = vld [vmem:[%s5401 + $0x88] sm:$0xff]
    %v5420 = vld [vmem:[%s5401 + $0x90] sm:$0xff]
    %v5421 = vld [vmem:[%s5401 + $0x98] sm:$0xff]
    %v5422 = vld [vmem:[%s5401 + $0xa0] sm:$0xff]
    %v5423 = vld [vmem:[%s5401 + $0xa8] sm:$0xff]
    %v5424 = vld [vmem:[%s5401 + $0xb0] sm:$0xff]
    %v5425 = vld [vmem:[%s5401 + $0xb8] sm:$0xff]
    %v5426 = vld [vmem:[%s5401 + $0xc0] sm:$0xff]
    %v5427 = vld [vmem:[%s5401 + $0xc8] sm:$0xff]
    %v5428 = vld [vmem:[%s5401 + $0xd0] sm:$0xff]
    %v5429 = vld [vmem:[%s5401 + $0xd8] sm:$0xff]
    %v5430 = vld [vmem:[%s5401 + $0xe0] sm:$0xff]
    %v5431 = vld [vmem:[%s5401 + $0xe8] sm:$0xff]
    %v5432 = vld [vmem:[%s5401 + $0xf0] sm:$0xff]
    %v5433 = vld [vmem:[%s5401 + $0xf8] sm:$0xff]
    %v5466 = vunpack.c.l.b16 %v5402
    %v5467 = vunpack.c.h.b16 %v5402
    %v5468 = vunpack.c.l.b16 %v5403
    %v5469 = vunpack.c.h.b16 %v5403
    %v5470 = vunpack.c.l.b16 %v5404
    %v5471 = vunpack.c.h.b16 %v5404
    %v5472 = vunpack.c.l.b16 %v5405
    %v5473 = vunpack.c.h.b16 %v5405
    %v5474 = vunpack.c.l.b16 %v5406
    %v5475 = vunpack.c.h.b16 %v5406
    %v5476 = vunpack.c.l.b16 %v5407
    %v5477 = vunpack.c.h.b16 %v5407
    %v5478 = vunpack.c.l.b16 %v5408
    %v5479 = vunpack.c.h.b16 %v5408
    %v5480 = vunpack.c.l.b16 %v5409
    %v5481 = vunpack.c.h.b16 %v5409
    %v5482 = vunpack.c.l.b16 %v5410
    %v5483 = vunpack.c.h.b16 %v5410
    %v5484 = vunpack.c.l.b16 %v5411
    %v5485 = vunpack.c.h.b16 %v5411
    %v5486 = vunpack.c.l.b16 %v5412
    %v5487 = vunpack.c.h.b16 %v5412
    %v5488 = vunpack.c.l.b16 %v5413
    %v5489 = vunpack.c.h.b16 %v5413
    %v5490 = vunpack.c.l.b16 %v5414
    %v5491 = vunpack.c.h.b16 %v5414
    %v5492 = vunpack.c.l.b16 %v5415
    %v5493 = vunpack.c.h.b16 %v5415
    %v5494 = vunpack.c.l.b16 %v5416
    %v5495 = vunpack.c.h.b16 %v5416
    %v5496 = vunpack.c.l.b16 %v5417
    %v5497 = vunpack.c.h.b16 %v5417
    %v5498 = vunpack.c.l.b16 %v5418
    %v5499 = vunpack.c.h.b16 %v5418
    %v5500 = vunpack.c.l.b16 %v5419
    %v5501 = vunpack.c.h.b16 %v5419
    %v5502 = vunpack.c.l.b16 %v5420
    %v5503 = vunpack.c.h.b16 %v5420
    %v5504 = vunpack.c.l.b16 %v5421
    %v5505 = vunpack.c.h.b16 %v5421
    %v5506 = vunpack.c.l.b16 %v5422
    %v5507 = vunpack.c.h.b16 %v5422
    %v5508 = vunpack.c.l.b16 %v5423
    %v5509 = vunpack.c.h.b16 %v5423
    %v5510 = vunpack.c.l.b16 %v5424
    %v5511 = vunpack.c.h.b16 %v5424
    %v5512 = vunpack.c.l.b16 %v5425
    %v5513 = vunpack.c.h.b16 %v5425
    %v5514 = vunpack.c.l.b16 %v5426
    %v5515 = vunpack.c.h.b16 %v5426
    %v5516 = vunpack.c.l.b16 %v5427
    %v5517 = vunpack.c.h.b16 %v5427
    %v5518 = vunpack.c.l.b16 %v5428
    %v5519 = vunpack.c.h.b16 %v5428
    %v5520 = vunpack.c.l.b16 %v5429
    %v5521 = vunpack.c.h.b16 %v5429
    %v5522 = vunpack.c.l.b16 %v5430
    %v5523 = vunpack.c.h.b16 %v5430
    %v5524 = vunpack.c.l.b16 %v5431
    %v5525 = vunpack.c.h.b16 %v5431
    %v5526 = vunpack.c.l.b16 %v5432
    %v5527 = vunpack.c.h.b16 %v5432
    %v5528 = vunpack.c.l.b16 %v5433
    %v5529 = vunpack.c.h.b16 %v5433
    %v5530 = vpack.c.b16 %v5468, %v5466
    %v5531 = vpack.c.b16 %v5469, %v5467
    %v5532 = vpack.c.b16 %v5472, %v5470
    %v5533 = vpack.c.b16 %v5473, %v5471
    %v5534 = vpack.c.b16 %v5476, %v5474
    %v5535 = vpack.c.b16 %v5477, %v5475
    %v5536 = vpack.c.b16 %v5480, %v5478
    %v5537 = vpack.c.b16 %v5481, %v5479
    %v5538 = vpack.c.b16 %v5484, %v5482
    %v5539 = vpack.c.b16 %v5485, %v5483
    %v5540 = vpack.c.b16 %v5488, %v5486
    %v5541 = vpack.c.b16 %v5489, %v5487
    %v5542 = vpack.c.b16 %v5492, %v5490
    %v5543 = vpack.c.b16 %v5493, %v5491
    %v5544 = vpack.c.b16 %v5496, %v5494
    %v5545 = vpack.c.b16 %v5497, %v5495
    %v5546 = vpack.c.b16 %v5500, %v5498
    %v5547 = vpack.c.b16 %v5501, %v5499
    %v5548 = vpack.c.b16 %v5504, %v5502
    %v5549 = vpack.c.b16 %v5505, %v5503
    %v5550 = vpack.c.b16 %v5508, %v5506
    %v5551 = vpack.c.b16 %v5509, %v5507
    %v5552 = vpack.c.b16 %v5512, %v5510
    %v5553 = vpack.c.b16 %v5513, %v5511
    %v5554 = vpack.c.b16 %v5516, %v5514
    %v5555 = vpack.c.b16 %v5517, %v5515
    %v5556 = vpack.c.b16 %v5520, %v5518
    %v5557 = vpack.c.b16 %v5521, %v5519
    %v5558 = vpack.c.b16 %v5524, %v5522
    %v5559 = vpack.c.b16 %v5525, %v5523
    %v5560 = vpack.c.b16 %v5528, %v5526
    %v5561 = vpack.c.b16 %v5529, %v5527
    %5594 = vmatprep.subr.bf16.mxu0 %v5531
    %5595 = vmatpush1.bf16.msra.mxu0 %v5530
    %5596 = vmatprep.subr.bf16.mxu0 %v5533
    %5597 = vmatpush1.bf16.msra.mxu0 %v5532
    %5598 = vmatprep.subr.bf16.mxu0 %v5535
    %5599 = vmatpush1.bf16.msra.mxu0 %v5534
    %5600 = vmatprep.subr.bf16.mxu0 %v5537
    %5601 = vmatpush1.bf16.msra.mxu0 %v5536
    %5602 = vmatprep.subr.bf16.mxu0 %v5539
    %5603 = vmatpush1.bf16.msra.mxu0 %v5538
    %5604 = vmatprep.subr.bf16.mxu0 %v5541
    %5605 = vmatpush1.bf16.msra.mxu0 %v5540
    %5606 = vmatprep.subr.bf16.mxu0 %v5543
    %5607 = vmatpush1.bf16.msra.mxu0 %v5542
    %5608 = vmatprep.subr.bf16.mxu0 %v5545
    %5609 = vmatpush1.bf16.msra.mxu0 %v5544
    %5610 = vmatprep.subr.bf16.mxu0 %v5547
    %5611 = vmatpush1.bf16.msra.mxu0 %v5546
    %5612 = vmatprep.subr.bf16.mxu0 %v5549
    %5613 = vmatpush1.bf16.msra.mxu0 %v5548
    %5614 = vmatprep.subr.bf16.mxu0 %v5551
    %5615 = vmatpush1.bf16.msra.mxu0 %v5550
    %5616 = vmatprep.subr.bf16.mxu0 %v5553
    %5617 = vmatpush1.bf16.msra.mxu0 %v5552
    %5618 = vmatprep.subr.bf16.mxu0 %v5555
    %5619 = vmatpush1.bf16.msra.mxu0 %v5554
    %5620 = vmatprep.subr.bf16.mxu0 %v5557
    %5621 = vmatpush1.bf16.msra.mxu0 %v5556
    %5622 = vmatprep.subr.bf16.mxu0 %v5559
    %5623 = vmatpush1.bf16.msra.mxu0 %v5558
    %5624 = vmatprep.subr.bf16.mxu0 %v5561
    %5625 = vmatpush1.bf16.msra.mxu0 %v5560
    %5626 = vmatprep.mubr.bf16.mxu0 %v5274
    %5627 = vmatmul.mubr.bf16.gmra.mrb[0].mxu0 %v5273
    %v5628 = vpop.f32.mrb[0].mxu0
    %v5629 = vadd.f32 0.0, %v5628
    %v5630 = vpop.f32.mrb[0].mxu0
    %v5631 = vadd.f32 0.0, %v5630
    %v5632 = vpop.f32.mrb[0].mxu0
    %v5633 = vadd.f32 0.0, %v5632
    %v5634 = vpop.f32.mrb[0].mxu0
    %v5635 = vadd.f32 0.0, %v5634
    %5636 = vmatprep.mubr.bf16.mxu0 %v5276
    %5637 = vmatmul.mubr.bf16.gmra.mrb[0].mxu0 %v5275
    %v5638 = vpop.f32.mrb[0].mxu0
    %v5639 = vadd.f32 0.0, %v5638
    %v5640 = vpop.f32.mrb[0].mxu0
    %v5641 = vadd.f32 0.0, %v5640
    %v5642 = vpop.f32.mrb[0].mxu0
    %v5643 = vadd.f32 0.0, %v5642
    %v5644 = vpop.f32.mrb[0].mxu0
    %v5645 = vadd.f32 0.0, %v5644
    %5646 = vmatprep.mubr.bf16.mxu0 %v5278
    %5647 = vmatmul.mubr.bf16.gmra.mrb[0].mxu0 %v5277
    %v5648 = vpop.f32.mrb[0].mxu0
    %v5649 = vadd.f32 0.0, %v5648
    %v5650 = vpop.f32.mrb[0].mxu0
    %v5651 = vadd.f32 0.0, %v5650
    %v5652 = vpop.f32.mrb[0].mxu0
    %v5653 = vadd.f32 0.0, %v5652
    %v5654 = vpop.f32.mrb[0].mxu0
    %v5655 = vadd.f32 0.0, %v5654
    %5656 = vmatprep.mubr.bf16.mxu0 %v5280
    %5657 = vmatmul.mubr.bf16.gmra.mrb[0].mxu0 %v5279
    %v5658 = vpop.f32.mrb[0].mxu0
    %v5659 = vadd.f32 0.0, %v5658
    %v5660 = vpop.f32.mrb[0].mxu0
    %v5661 = vadd.f32 0.0, %v5660
    %v5662 = vpop.f32.mrb[0].mxu0
    %v5663 = vadd.f32 0.0, %v5662
    %v5664 = vpop.f32.mrb[0].mxu0
    %v5665 = vadd.f32 0.0, %v5664
    %5666 = vmatprep.mubr.bf16.mxu0 %v5282
    %5667 = vmatmul.mubr.bf16.gmra.mrb[0].mxu0 %v5281
    %v5668 = vpop.f32.mrb[0].mxu0
    %v5669 = vadd.f32 0.0, %v5668
    %v5670 = vpop.f32.mrb[0].mxu0
    %v5671 = vadd.f32 0.0, %v5670
    %v5672 = vpop.f32.mrb[0].mxu0
    %v5673 = vadd.f32 0.0, %v5672
    %v5674 = vpop.f32.mrb[0].mxu0
    %v5675 = vadd.f32 0.0, %v5674
    %5676 = vmatprep.mubr.bf16.mxu0 %v5284
    %5677 = vmatmul.mubr.bf16.gmra.mrb[0].mxu0 %v5283
    %v5678 = vpop.f32.mrb[0].mxu0
    %v5679 = vadd.f32 0.0, %v5678
    %v5680 = vpop.f32.mrb[0].mxu0
    %v5681 = vadd.f32 0.0, %v5680
    %v5682 = vpop.f32.mrb[0].mxu0
    %v5683 = vadd.f32 0.0, %v5682
    %v5684 = vpop.f32.mrb[0].mxu0
    %v5685 = vadd.f32 0.0, %v5684
    %5686 = vmatprep.mubr.bf16.mxu0 %v5286
    %5687 = vmatmul.mubr.bf16.gmra.mrb[0].mxu0 %v5285
    %v5688 = vpop.f32.mrb[0].mxu0
    %v5689 = vadd.f32 0.0, %v5688
    %v5690 = vpop.f32.mrb[0].mxu0
    %v5691 = vadd.f32 0.0, %v5690
    %v5692 = vpop.f32.mrb[0].mxu0
    %v5693 = vadd.f32 0.0, %v5692
    %v5694 = vpop.f32.mrb[0].mxu0
    %v5695 = vadd.f32 0.0, %v5694
    %5696 = vmatprep.mubr.bf16.mxu0 %v5288
    %5697 = vmatmul.mubr.bf16.gmra.mrb[0].mxu0 %v5287
    %v5698 = vpop.f32.mrb[0].mxu0
    %v5699 = vadd.f32 0.0, %v5698
    %v5700 = vpop.f32.mrb[0].mxu0
    %v5701 = vadd.f32 0.0, %v5700
    %v5702 = vpop.f32.mrb[0].mxu0
    %v5703 = vadd.f32 0.0, %v5702
    %v5704 = vpop.f32.mrb[0].mxu0
    %v5705 = vadd.f32 0.0, %v5704
    %5706 = vmatprep.mubr.bf16.mxu0 %v5290
    %5707 = vmatmul.mubr.bf16.gmra.mrb[0].mxu0 %v5289
    %v5708 = vpop.f32.mrb[0].mxu0
    %v5709 = vadd.f32 0.0, %v5708
    %v5710 = vpop.f32.mrb[0].mxu0
    %v5711 = vadd.f32 0.0, %v5710
    %v5712 = vpop.f32.mrb[0].mxu0
    %v5713 = vadd.f32 0.0, %v5712
    %v5714 = vpop.f32.mrb[0].mxu0
    %v5715 = vadd.f32 0.0, %v5714
    %5716 = vmatprep.mubr.bf16.mxu0 %v5292
    %5717 = vmatmul.mubr.bf16.gmra.mrb[0].mxu0 %v5291
    %v5718 = vpop.f32.mrb[0].mxu0
    %v5719 = vadd.f32 0.0, %v5718
    %v5720 = vpop.f32.mrb[0].mxu0
    %v5721 = vadd.f32 0.0, %v5720
    %v5722 = vpop.f32.mrb[0].mxu0
    %v5723 = vadd.f32 0.0, %v5722
    %v5724 = vpop.f32.mrb[0].mxu0
    %v5725 = vadd.f32 0.0, %v5724
    %5726 = vmatprep.mubr.bf16.mxu0 %v5294
    %5727 = vmatmul.mubr.bf16.gmra.mrb[0].mxu0 %v5293
    %v5728 = vpop.f32.mrb[0].mxu0
    %v5729 = vadd.f32 0.0, %v5728
    %v5730 = vpop.f32.mrb[0].mxu0
    %v5731 = vadd.f32 0.0, %v5730
    %v5732 = vpop.f32.mrb[0].mxu0
    %v5733 = vadd.f32 0.0, %v5732
    %v5734 = vpop.f32.mrb[0].mxu0
    %v5735 = vadd.f32 0.0, %v5734
    %5736 = vmatprep.mubr.bf16.mxu0 %v5296
    %5737 = vmatmul.mubr.bf16.gmra.mrb[0].mxu0 %v5295
    %v5738 = vpop.f32.mrb[0].mxu0
    %v5739 = vadd.f32 0.0, %v5738
    %v5740 = vpop.f32.mrb[0].mxu0
    %v5741 = vadd.f32 0.0, %v5740
    %v5742 = vpop.f32.mrb[0].mxu0
    %v5743 = vadd.f32 0.0, %v5742
    %v5744 = vpop.f32.mrb[0].mxu0
    %v5745 = vadd.f32 0.0, %v5744
    %5746 = vmatprep.mubr.bf16.mxu0 %v5298
    %5747 = vmatmul.mubr.bf16.gmra.mrb[0].mxu0 %v5297
    %v5748 = vpop.f32.mrb[0].mxu0
    %v5749 = vadd.f32 0.0, %v5748
    %v5750 = vpop.f32.mrb[0].mxu0
    %v5751 = vadd.f32 0.0, %v5750
    %v5752 = vpop.f32.mrb[0].mxu0
    %v5753 = vadd.f32 0.0, %v5752
    %v5754 = vpop.f32.mrb[0].mxu0
    %v5755 = vadd.f32 0.0, %v5754
    %5756 = vmatprep.mubr.bf16.mxu0 %v5300
    %5757 = vmatmul.mubr.bf16.gmra.mrb[0].mxu0 %v5299
    %v5758 = vpop.f32.mrb[0].mxu0
    %v5759 = vadd.f32 0.0, %v5758
    %v5760 = vpop.f32.mrb[0].mxu0
    %v5761 = vadd.f32 0.0, %v5760
    %v5762 = vpop.f32.mrb[0].mxu0
    %v5763 = vadd.f32 0.0, %v5762
    %v5764 = vpop.f32.mrb[0].mxu0
    %v5765 = vadd.f32 0.0, %v5764
    %5766 = vmatprep.mubr.bf16.mxu0 %v5302
    %5767 = vmatmul.mubr.bf16.gmra.mrb[0].mxu0 %v5301
    %v5768 = vpop.f32.mrb[0].mxu0
    %v5769 = vadd.f32 0.0, %v5768
    %v5770 = vpop.f32.mrb[0].mxu0
    %v5771 = vadd.f32 0.0, %v5770
    %v5772 = vpop.f32.mrb[0].mxu0
    %v5773 = vadd.f32 0.0, %v5772
    %v5774 = vpop.f32.mrb[0].mxu0
    %v5775 = vadd.f32 0.0, %v5774
    %5776 = vmatprep.mubr.bf16.mxu0 %v5304
    %5777 = vmatmul.mubr.bf16.gmra.mrb[0].mxu0 %v5303
    %v5778 = vpop.f32.mrb[0].mxu0
    %v5779 = vadd.f32 0.0, %v5778
    %v5780 = vpop.f32.mrb[0].mxu0
    %v5781 = vadd.f32 0.0, %v5780
    %v5782 = vpop.f32.mrb[0].mxu0
    %v5783 = vadd.f32 0.0, %v5782
    %v5784 = vpop.f32.mrb[0].mxu0
    %v5785 = vadd.f32 0.0, %v5784
    %5786 = vmatprep.mubr.bf16.mxu0 %v5306
    %5787 = vmatmul.mubr.bf16.gmra.mrb[0].mxu0 %v5305
    %v5788 = vpop.f32.mrb[0].mxu0
    %v5789 = vadd.f32 0.0, %v5788
    %v5790 = vpop.f32.mrb[0].mxu0
    %v5791 = vadd.f32 0.0, %v5790
    %v5792 = vpop.f32.mrb[0].mxu0
    %v5793 = vadd.f32 0.0, %v5792
    %v5794 = vpop.f32.mrb[0].mxu0
    %v5795 = vadd.f32 0.0, %v5794
    %5796 = vmatprep.mubr.bf16.mxu0 %v5308
    %5797 = vmatmul.mubr.bf16.gmra.mrb[0].mxu0 %v5307
    %v5798 = vpop.f32.mrb[0].mxu0
    %v5799 = vadd.f32 0.0, %v5798
    %v5800 = vpop.f32.mrb[0].mxu0
    %v5801 = vadd.f32 0.0, %v5800
    %v5802 = vpop.f32.mrb[0].mxu0
    %v5803 = vadd.f32 0.0, %v5802
    %v5804 = vpop.f32.mrb[0].mxu0
    %v5805 = vadd.f32 0.0, %v5804
    %5806 = vmatprep.mubr.bf16.mxu0 %v5310
    %5807 = vmatmul.mubr.bf16.gmra.mrb[0].mxu0 %v5309
    %v5808 = vpop.f32.mrb[0].mxu0
    %v5809 = vadd.f32 0.0, %v5808
    %v5810 = vpop.f32.mrb[0].mxu0
    %v5811 = vadd.f32 0.0, %v5810
    %v5812 = vpop.f32.mrb[0].mxu0
    %v5813 = vadd.f32 0.0, %v5812
    %v5814 = vpop.f32.mrb[0].mxu0
    %v5815 = vadd.f32 0.0, %v5814
    %5816 = vmatprep.mubr.bf16.mxu0 %v5312
    %5817 = vmatmul.mubr.bf16.gmra.mrb[0].mxu0 %v5311
    %v5818 = vpop.f32.mrb[0].mxu0
    %v5819 = vadd.f32 0.0, %v5818
    %v5820 = vpop.f32.mrb[0].mxu0
    %v5821 = vadd.f32 0.0, %v5820
    %v5822 = vpop.f32.mrb[0].mxu0
    %v5823 = vadd.f32 0.0, %v5822
    %v5824 = vpop.f32.mrb[0].mxu0
    %v5825 = vadd.f32 0.0, %v5824
    %5826 = vmatprep.mubr.bf16.mxu0 %v5314
    %5827 = vmatmul.mubr.bf16.gmra.mrb[0].mxu0 %v5313
    %v5828 = vpop.f32.mrb[0].mxu0
    %v5829 = vadd.f32 0.0, %v5828
    %v5830 = vpop.f32.mrb[0].mxu0
    %v5831 = vadd.f32 0.0, %v5830
    %v5832 = vpop.f32.mrb[0].mxu0
    %v5833 = vadd.f32 0.0, %v5832
    %v5834 = vpop.f32.mrb[0].mxu0
    %v5835 = vadd.f32 0.0, %v5834
    %5836 = vmatprep.mubr.bf16.mxu0 %v5316
    %5837 = vmatmul.mubr.bf16.gmra.mrb[0].mxu0 %v5315
    %v5838 = vpop.f32.mrb[0].mxu0
    %v5839 = vadd.f32 0.0, %v5838
    %v5840 = vpop.f32.mrb[0].mxu0
    %v5841 = vadd.f32 0.0, %v5840
    %v5842 = vpop.f32.mrb[0].mxu0
    %v5843 = vadd.f32 0.0, %v5842
    %v5844 = vpop.f32.mrb[0].mxu0
    %v5845 = vadd.f32 0.0, %v5844
    %5846 = vmatprep.mubr.bf16.mxu0 %v5318
    %5847 = vmatmul.mubr.bf16.gmra.mrb[0].mxu0 %v5317
    %v5848 = vpop.f32.mrb[0].mxu0
    %v5849 = vadd.f32 0.0, %v5848
    %v5850 = vpop.f32.mrb[0].mxu0
    %v5851 = vadd.f32 0.0, %v5850
    %v5852 = vpop.f32.mrb[0].mxu0
    %v5853 = vadd.f32 0.0, %v5852
    %v5854 = vpop.f32.mrb[0].mxu0
    %v5855 = vadd.f32 0.0, %v5854
    %5856 = vmatprep.mubr.bf16.mxu0 %v5320
    %5857 = vmatmul.mubr.bf16.gmra.mrb[0].mxu0 %v5319
    %v5858 = vpop.f32.mrb[0].mxu0
    %v5859 = vadd.f32 0.0, %v5858
    %v5860 = vpop.f32.mrb[0].mxu0
    %v5861 = vadd.f32 0.0, %v5860
    %v5862 = vpop.f32.mrb[0].mxu0
    %v5863 = vadd.f32 0.0, %v5862
    %v5864 = vpop.f32.mrb[0].mxu0
    %v5865 = vadd.f32 0.0, %v5864
    %5866 = vmatprep.mubr.bf16.mxu0 %v5322
    %5867 = vmatmul.mubr.bf16.gmra.mrb[0].mxu0 %v5321
    %v5868 = vpop.f32.mrb[0].mxu0
    %v5869 = vadd.f32 0.0, %v5868
    %v5870 = vpop.f32.mrb[0].mxu0
    %v5871 = vadd.f32 0.0, %v5870
    %v5872 = vpop.f32.mrb[0].mxu0
    %v5873 = vadd.f32 0.0, %v5872
    %v5874 = vpop.f32.mrb[0].mxu0
    %v5875 = vadd.f32 0.0, %v5874
    %5876 = vmatprep.mubr.bf16.mxu0 %v5324
    %5877 = vmatmul.mubr.bf16.gmra.mrb[0].mxu0 %v5323
    %v5878 = vpop.f32.mrb[0].mxu0
    %v5879 = vadd.f32 0.0, %v5878
    %v5880 = vpop.f32.mrb[0].mxu0
    %v5881 = vadd.f32 0.0, %v5880
    %v5882 = vpop.f32.mrb[0].mxu0
    %v5883 = vadd.f32 0.0, %v5882
    %v5884 = vpop.f32.mrb[0].mxu0
    %v5885 = vadd.f32 0.0, %v5884
    %5886 = vmatprep.mubr.bf16.mxu0 %v5326
    %5887 = vmatmul.mubr.bf16.gmra.mrb[0].mxu0 %v5325
    %v5888 = vpop.f32.mrb[0].mxu0
    %v5889 = vadd.f32 0.0, %v5888
    %v5890 = vpop.f32.mrb[0].mxu0
    %v5891 = vadd.f32 0.0, %v5890
    %v5892 = vpop.f32.mrb[0].mxu0
    %v5893 = vadd.f32 0.0, %v5892
    %v5894 = vpop.f32.mrb[0].mxu0
    %v5895 = vadd.f32 0.0, %v5894
    %5896 = vmatprep.mubr.bf16.mxu0 %v5328
    %5897 = vmatmul.mubr.bf16.gmra.mrb[0].mxu0 %v5327
    %v5898 = vpop.f32.mrb[0].mxu0
    %v5899 = vadd.f32 0.0, %v5898
    %v5900 = vpop.f32.mrb[0].mxu0
    %v5901 = vadd.f32 0.0, %v5900
    %v5902 = vpop.f32.mrb[0].mxu0
    %v5903 = vadd.f32 0.0, %v5902
    %v5904 = vpop.f32.mrb[0].mxu0
    %v5905 = vadd.f32 0.0, %v5904
    %5906 = vmatprep.mubr.bf16.mxu0 %v5330
    %5907 = vmatmul.mubr.bf16.gmra.mrb[0].mxu0 %v5329
    %v5908 = vpop.f32.mrb[0].mxu0
    %v5909 = vadd.f32 0.0, %v5908
    %v5910 = vpop.f32.mrb[0].mxu0
    %v5911 = vadd.f32 0.0, %v5910
    %v5912 = vpop.f32.mrb[0].mxu0
    %v5913 = vadd.f32 0.0, %v5912
    %v5914 = vpop.f32.mrb[0].mxu0
    %v5915 = vadd.f32 0.0, %v5914
    %5916 = vmatprep.mubr.bf16.mxu0 %v5332
    %5917 = vmatmul.mubr.bf16.gmra.mrb[0].mxu0 %v5331
    %v5918 = vpop.f32.mrb[0].mxu0
    %v5919 = vadd.f32 0.0, %v5918
    %v5920 = vpop.f32.mrb[0].mxu0
    %v5921 = vadd.f32 0.0, %v5920
    %v5922 = vpop.f32.mrb[0].mxu0
    %v5923 = vadd.f32 0.0, %v5922
    %v5924 = vpop.f32.mrb[0].mxu0
    %v5925 = vadd.f32 0.0, %v5924
    %5926 = vmatprep.mubr.bf16.mxu0 %v5334
    %5927 = vmatmul.mubr.bf16.gmra.mrb[0].mxu0 %v5333
    %v5928 = vpop.f32.mrb[0].mxu0
    %v5929 = vadd.f32 0.0, %v5928
    %v5930 = vpop.f32.mrb[0].mxu0
    %v5931 = vadd.f32 0.0, %v5930
    %v5932 = vpop.f32.mrb[0].mxu0
    %v5933 = vadd.f32 0.0, %v5932
    %v5934 = vpop.f32.mrb[0].mxu0
    %v5935 = vadd.f32 0.0, %v5934
    %5936 = vmatprep.mubr.bf16.mxu0 %v5336
    %5937 = vmatmul.mubr.bf16.gmra.mrb[0].mxu0 %v5335
    %v5938 = vpop.f32.mrb[0].mxu0
    %v5939 = vadd.f32 0.0, %v5938
    %v5940 = vpop.f32.mrb[0].mxu0
    %v5941 = vadd.f32 0.0, %v5940
    %v5942 = vpop.f32.mrb[0].mxu0
    %v5943 = vadd.f32 0.0, %v5942
    %v5944 = vpop.f32.mrb[0].mxu0
    %v5945 = vadd.f32 0.0, %v5944
    %5946 = vmatprep.mubr.bf16.mxu0 %v5338
    %5947 = vmatmul.mubr.bf16.gmra.mrb[0].mxu0 %v5337
    %v5948 = vpop.f32.mrb[0].mxu0
    %v5949 = vadd.f32 0.0, %v5948
    %v5950 = vpop.f32.mrb[0].mxu0
    %v5951 = vadd.f32 0.0, %v5950
    %v5952 = vpop.f32.mrb[0].mxu0
    %v5953 = vadd.f32 0.0, %v5952
    %v5954 = vpop.f32.mrb[0].mxu0
    %v5955 = vadd.f32 0.0, %v5954
    %5956 = vmatprep.mubr.bf16.mxu0 %v5340
    %5957 = vmatmul.mubr.bf16.gmra.mrb[0].mxu0 %v5339
    %v5958 = vpop.f32.mrb[0].mxu0
    %v5959 = vadd.f32 0.0, %v5958
    %v5960 = vpop.f32.mrb[0].mxu0
    %v5961 = vadd.f32 0.0, %v5960
    %v5962 = vpop.f32.mrb[0].mxu0
    %v5963 = vadd.f32 0.0, %v5962
    %v5964 = vpop.f32.mrb[0].mxu0
    %v5965 = vadd.f32 0.0, %v5964
    %5966 = vmatprep.mubr.bf16.mxu0 %v5342
    %5967 = vmatmul.mubr.bf16.gmra.mrb[0].mxu0 %v5341
    %v5968 = vpop.f32.mrb[0].mxu0
    %v5969 = vadd.f32 0.0, %v5968
    %v5970 = vpop.f32.mrb[0].mxu0
    %v5971 = vadd.f32 0.0, %v5970
    %v5972 = vpop.f32.mrb[0].mxu0
    %v5973 = vadd.f32 0.0, %v5972
    %v5974 = vpop.f32.mrb[0].mxu0
    %v5975 = vadd.f32 0.0, %v5974
    %5976 = vmatprep.mubr.bf16.mxu0 %v5344
    %5977 = vmatmul.mubr.bf16.gmra.mrb[0].mxu0 %v5343
    %v5978 = vpop.f32.mrb[0].mxu0
    %v5979 = vadd.f32 0.0, %v5978
    %v5980 = vpop.f32.mrb[0].mxu0
    %v5981 = vadd.f32 0.0, %v5980
    %v5982 = vpop.f32.mrb[0].mxu0
    %v5983 = vadd.f32 0.0, %v5982
    %v5984 = vpop.f32.mrb[0].mxu0
    %v5985 = vadd.f32 0.0, %v5984
    %5986 = vmatprep.mubr.bf16.mxu0 %v5346
    %5987 = vmatmul.mubr.bf16.gmra.mrb[0].mxu0 %v5345
    %v5988 = vpop.f32.mrb[0].mxu0
    %v5989 = vadd.f32 0.0, %v5988
    %v5990 = vpop.f32.mrb[0].mxu0
    %v5991 = vadd.f32 0.0, %v5990
    %v5992 = vpop.f32.mrb[0].mxu0
    %v5993 = vadd.f32 0.0, %v5992
    %v5994 = vpop.f32.mrb[0].mxu0
    %v5995 = vadd.f32 0.0, %v5994
    %5996 = vmatprep.mubr.bf16.mxu0 %v5348
    %5997 = vmatmul.mubr.bf16.gmra.mrb[0].mxu0 %v5347
    %v5998 = vpop.f32.mrb[0].mxu0
    %v5999 = vadd.f32 0.0, %v5998
    %v6000 = vpop.f32.mrb[0].mxu0
    %v6001 = vadd.f32 0.0, %v6000
    %v6002 = vpop.f32.mrb[0].mxu0
    %v6003 = vadd.f32 0.0, %v6002
    %v6004 = vpop.f32.mrb[0].mxu0
    %v6005 = vadd.f32 0.0, %v6004
    %6006 = vmatprep.mubr.bf16.mxu0 %v5350
    %6007 = vmatmul.mubr.bf16.gmra.mrb[0].mxu0 %v5349
    %v6008 = vpop.f32.mrb[0].mxu0
    %v6009 = vadd.f32 0.0, %v6008
    %v6010 = vpop.f32.mrb[0].mxu0
    %v6011 = vadd.f32 0.0, %v6010
    %v6012 = vpop.f32.mrb[0].mxu0
    %v6013 = vadd.f32 0.0, %v6012
    %v6014 = vpop.f32.mrb[0].mxu0
    %v6015 = vadd.f32 0.0, %v6014
    %6016 = vmatprep.mubr.bf16.mxu0 %v5352
    %6017 = vmatmul.mubr.bf16.gmra.mrb[0].mxu0 %v5351
    %v6018 = vpop.f32.mrb[0].mxu0
    %v6019 = vadd.f32 0.0, %v6018
    %v6020 = vpop.f32.mrb[0].mxu0
    %v6021 = vadd.f32 0.0, %v6020
    %v6022 = vpop.f32.mrb[0].mxu0
    %v6023 = vadd.f32 0.0, %v6022
    %v6024 = vpop.f32.mrb[0].mxu0
    %v6025 = vadd.f32 0.0, %v6024
    %6026 = vmatprep.mubr.bf16.mxu0 %v5354
    %6027 = vmatmul.mubr.bf16.gmra.mrb[0].mxu0 %v5353
    %v6028 = vpop.f32.mrb[0].mxu0
    %v6029 = vadd.f32 0.0, %v6028
    %v6030 = vpop.f32.mrb[0].mxu0
    %v6031 = vadd.f32 0.0, %v6030
    %v6032 = vpop.f32.mrb[0].mxu0
    %v6033 = vadd.f32 0.0, %v6032
    %v6034 = vpop.f32.mrb[0].mxu0
    %v6035 = vadd.f32 0.0, %v6034
    %6036 = vmatprep.mubr.bf16.mxu0 %v5356
    %6037 = vmatmul.mubr.bf16.gmra.mrb[0].mxu0 %v5355
    %v6038 = vpop.f32.mrb[0].mxu0
    %v6039 = vadd.f32 0.0, %v6038
    %v6040 = vpop.f32.mrb[0].mxu0
    %v6041 = vadd.f32 0.0, %v6040
    %v6042 = vpop.f32.mrb[0].mxu0
    %v6043 = vadd.f32 0.0, %v6042
    %v6044 = vpop.f32.mrb[0].mxu0
    %v6045 = vadd.f32 0.0, %v6044
    %6046 = vmatprep.mubr.bf16.mxu0 %v5358
    %6047 = vmatmul.mubr.bf16.gmra.mrb[0].mxu0 %v5357
    %v6048 = vpop.f32.mrb[0].mxu0
    %v6049 = vadd.f32 0.0, %v6048
    %v6050 = vpop.f32.mrb[0].mxu0
    %v6051 = vadd.f32 0.0, %v6050
    %v6052 = vpop.f32.mrb[0].mxu0
    %v6053 = vadd.f32 0.0, %v6052
    %v6054 = vpop.f32.mrb[0].mxu0
    %v6055 = vadd.f32 0.0, %v6054
    %6056 = vmatprep.mubr.bf16.mxu0 %v5360
    %6057 = vmatmul.mubr.bf16.gmra.mrb[0].mxu0 %v5359
    %v6058 = vpop.f32.mrb[0].mxu0
    %v6059 = vadd.f32 0.0, %v6058
    %v6060 = vpop.f32.mrb[0].mxu0
    %v6061 = vadd.f32 0.0, %v6060
    %v6062 = vpop.f32.mrb[0].mxu0
    %v6063 = vadd.f32 0.0, %v6062
    %v6064 = vpop.f32.mrb[0].mxu0
    %v6065 = vadd.f32 0.0, %v6064
    %6066 = vmatprep.mubr.bf16.mxu0 %v5362
    %6067 = vmatmul.mubr.bf16.gmra.mrb[0].mxu0 %v5361
    %v6068 = vpop.f32.mrb[0].mxu0
    %v6069 = vadd.f32 0.0, %v6068
    %v6070 = vpop.f32.mrb[0].mxu0
    %v6071 = vadd.f32 0.0, %v6070
    %v6072 = vpop.f32.mrb[0].mxu0
    %v6073 = vadd.f32 0.0, %v6072
    %v6074 = vpop.f32.mrb[0].mxu0
    %v6075 = vadd.f32 0.0, %v6074
    %6076 = vmatprep.mubr.bf16.mxu0 %v5364
    %6077 = vmatmul.mubr.bf16.gmra.mrb[0].mxu0 %v5363
    %v6078 = vpop.f32.mrb[0].mxu0
    %v6079 = vadd.f32 0.0, %v6078
    %v6080 = vpop.f32.mrb[0].mxu0
    %v6081 = vadd.f32 0.0, %v6080
    %v6082 = vpop.f32.mrb[0].mxu0
    %v6083 = vadd.f32 0.0, %v6082
    %v6084 = vpop.f32.mrb[0].mxu0
    %v6085 = vadd.f32 0.0, %v6084
    %6086 = vmatprep.mubr.bf16.mxu0 %v5366
    %6087 = vmatmul.mubr.bf16.gmra.mrb[0].mxu0 %v5365
    %v6088 = vpop.f32.mrb[0].mxu0
    %v6089 = vadd.f32 0.0, %v6088
    %v6090 = vpop.f32.mrb[0].mxu0
    %v6091 = vadd.f32 0.0, %v6090
    %v6092 = vpop.f32.mrb[0].mxu0
    %v6093 = vadd.f32 0.0, %v6092
    %v6094 = vpop.f32.mrb[0].mxu0
    %v6095 = vadd.f32 0.0, %v6094
    %6096 = vmatprep.mubr.bf16.mxu0 %v5368
    %6097 = vmatmul.mubr.bf16.gmra.mrb[0].mxu0 %v5367
    %v6098 = vpop.f32.mrb[0].mxu0
    %v6099 = vadd.f32 0.0, %v6098
    %v6100 = vpop.f32.mrb[0].mxu0
    %v6101 = vadd.f32 0.0, %v6100
    %v6102 = vpop.f32.mrb[0].mxu0
    %v6103 = vadd.f32 0.0, %v6102
    %v6104 = vpop.f32.mrb[0].mxu0
    %v6105 = vadd.f32 0.0, %v6104
    %6106 = vmatprep.mubr.bf16.mxu0 %v5370
    %6107 = vmatmul.mubr.bf16.gmra.mrb[0].mxu0 %v5369
    %v6108 = vpop.f32.mrb[0].mxu0
    %v6109 = vadd.f32 0.0, %v6108
    %v6110 = vpop.f32.mrb[0].mxu0
    %v6111 = vadd.f32 0.0, %v6110
    %v6112 = vpop.f32.mrb[0].mxu0
    %v6113 = vadd.f32 0.0, %v6112
    %v6114 = vpop.f32.mrb[0].mxu0
    %v6115 = vadd.f32 0.0, %v6114
    %6116 = vmatprep.mubr.bf16.mxu0 %v5372
    %6117 = vmatmul.mubr.bf16.gmra.mrb[0].mxu0 %v5371
    %v6118 = vpop.f32.mrb[0].mxu0
    %v6119 = vadd.f32 0.0, %v6118
    %v6120 = vpop.f32.mrb[0].mxu0
    %v6121 = vadd.f32 0.0, %v6120
    %v6122 = vpop.f32.mrb[0].mxu0
    %v6123 = vadd.f32 0.0, %v6122
    %v6124 = vpop.f32.mrb[0].mxu0
    %v6125 = vadd.f32 0.0, %v6124
    %6126 = vmatprep.mubr.bf16.mxu0 %v5374
    %6127 = vmatmul.mubr.bf16.gmra.mrb[0].mxu0 %v5373
    %v6128 = vpop.f32.mrb[0].mxu0
    %v6129 = vadd.f32 0.0, %v6128
    %v6130 = vpop.f32.mrb[0].mxu0
    %v6131 = vadd.f32 0.0, %v6130
    %v6132 = vpop.f32.mrb[0].mxu0
    %v6133 = vadd.f32 0.0, %v6132
    %v6134 = vpop.f32.mrb[0].mxu0
    %v6135 = vadd.f32 0.0, %v6134
    %6136 = vmatprep.mubr.bf16.mxu0 %v5376
    %6137 = vmatmul.mubr.bf16.gmra.mrb[0].mxu0 %v5375
    %v6138 = vpop.f32.mrb[0].mxu0
    %v6139 = vadd.f32 0.0, %v6138
    %v6140 = vpop.f32.mrb[0].mxu0
    %v6141 = vadd.f32 0.0, %v6140
    %v6142 = vpop.f32.mrb[0].mxu0
    %v6143 = vadd.f32 0.0, %v6142
    %v6144 = vpop.f32.mrb[0].mxu0
    %v6145 = vadd.f32 0.0, %v6144
    %6146 = vmatprep.mubr.bf16.mxu0 %v5378
    %6147 = vmatmul.mubr.bf16.gmra.mrb[0].mxu0 %v5377
    %v6148 = vpop.f32.mrb[0].mxu0
    %v6149 = vadd.f32 0.0, %v6148
    %v6150 = vpop.f32.mrb[0].mxu0
    %v6151 = vadd.f32 0.0, %v6150
    %v6152 = vpop.f32.mrb[0].mxu0
    %v6153 = vadd.f32 0.0, %v6152
    %v6154 = vpop.f32.mrb[0].mxu0
    %v6155 = vadd.f32 0.0, %v6154
    %6156 = vmatprep.mubr.bf16.mxu0 %v5380
    %6157 = vmatmul.mubr.bf16.gmra.mrb[0].mxu0 %v5379
    %v6158 = vpop.f32.mrb[0].mxu0
    %v6159 = vadd.f32 0.0, %v6158
    %v6160 = vpop.f32.mrb[0].mxu0
    %v6161 = vadd.f32 0.0, %v6160
    %v6162 = vpop.f32.mrb[0].mxu0
    %v6163 = vadd.f32 0.0, %v6162
    %v6164 = vpop.f32.mrb[0].mxu0
    %v6165 = vadd.f32 0.0, %v6164
    %6166 = vmatprep.mubr.bf16.mxu0 %v5382
    %6167 = vmatmul.mubr.bf16.gmra.mrb[0].mxu0 %v5381
    %v6168 = vpop.f32.mrb[0].mxu0
    %v6169 = vadd.f32 0.0, %v6168
    %v6170 = vpop.f32.mrb[0].mxu0
    %v6171 = vadd.f32 0.0, %v6170
    %v6172 = vpop.f32.mrb[0].mxu0
    %v6173 = vadd.f32 0.0, %v6172
    %v6174 = vpop.f32.mrb[0].mxu0
    %v6175 = vadd.f32 0.0, %v6174
    %6176 = vmatprep.mubr.bf16.mxu0 %v5384
    %6177 = vmatmul.mubr.bf16.gmra.mrb[0].mxu0 %v5383
    %v6178 = vpop.f32.mrb[0].mxu0
    %v6179 = vadd.f32 0.0, %v6178
    %v6180 = vpop.f32.mrb[0].mxu0
    %v6181 = vadd.f32 0.0, %v6180
    %v6182 = vpop.f32.mrb[0].mxu0
    %v6183 = vadd.f32 0.0, %v6182
    %v6184 = vpop.f32.mrb[0].mxu0
    %v6185 = vadd.f32 0.0, %v6184
    %6186 = vmatprep.mubr.bf16.mxu0 %v5386
    %6187 = vmatmul.mubr.bf16.gmra.mrb[0].mxu0 %v5385
    %v6188 = vpop.f32.mrb[0].mxu0
    %v6189 = vadd.f32 0.0, %v6188
    %v6190 = vpop.f32.mrb[0].mxu0
    %v6191 = vadd.f32 0.0, %v6190
    %v6192 = vpop.f32.mrb[0].mxu0
    %v6193 = vadd.f32 0.0, %v6192
    %v6194 = vpop.f32.mrb[0].mxu0
    %v6195 = vadd.f32 0.0, %v6194
    %6196 = vmatprep.mubr.bf16.mxu0 %v5388
    %6197 = vmatmul.mubr.bf16.gmra.mrb[0].mxu0 %v5387
    %v6198 = vpop.f32.mrb[0].mxu0
    %v6199 = vadd.f32 0.0, %v6198
    %v6200 = vpop.f32.mrb[0].mxu0
    %v6201 = vadd.f32 0.0, %v6200
    %v6202 = vpop.f32.mrb[0].mxu0
    %v6203 = vadd.f32 0.0, %v6202
    %v6204 = vpop.f32.mrb[0].mxu0
    %v6205 = vadd.f32 0.0, %v6204
    %6206 = vmatprep.mubr.bf16.mxu0 %v5390
    %6207 = vmatmul.mubr.bf16.gmra.mrb[0].mxu0 %v5389
    %v6208 = vpop.f32.mrb[0].mxu0
    %v6209 = vadd.f32 0.0, %v6208
    %v6210 = vpop.f32.mrb[0].mxu0
    %v6211 = vadd.f32 0.0, %v6210
    %v6212 = vpop.f32.mrb[0].mxu0
    %v6213 = vadd.f32 0.0, %v6212
    %v6214 = vpop.f32.mrb[0].mxu0
    %v6215 = vadd.f32 0.0, %v6214
    %6216 = vmatprep.mubr.bf16.mxu0 %v5392
    %6217 = vmatmul.mubr.bf16.gmra.mrb[0].mxu0 %v5391
    %v6218 = vpop.f32.mrb[0].mxu0
    %v6219 = vadd.f32 0.0, %v6218
    %v6220 = vpop.f32.mrb[0].mxu0
    %v6221 = vadd.f32 0.0, %v6220
    %v6222 = vpop.f32.mrb[0].mxu0
    %v6223 = vadd.f32 0.0, %v6222
    %v6224 = vpop.f32.mrb[0].mxu0
    %v6225 = vadd.f32 0.0, %v6224
    %6226 = vmatprep.mubr.bf16.mxu0 %v5394
    %6227 = vmatmul.mubr.bf16.gmra.mrb[0].mxu0 %v5393
    %v6228 = vpop.f32.mrb[0].mxu0
    %v6229 = vadd.f32 0.0, %v6228
    %v6230 = vpop.f32.mrb[0].mxu0
    %v6231 = vadd.f32 0.0, %v6230
    %v6232 = vpop.f32.mrb[0].mxu0
    %v6233 = vadd.f32 0.0, %v6232
    %v6234 = vpop.f32.mrb[0].mxu0
    %v6235 = vadd.f32 0.0, %v6234
    %6236 = vmatprep.mubr.bf16.mxu0 %v5396
    %6237 = vmatmul.mubr.bf16.gmra.mrb[0].mxu0 %v5395
    %v6238 = vpop.f32.mrb[0].mxu0
    %v6239 = vadd.f32 0.0, %v6238
    %v6240 = vpop.f32.mrb[0].mxu0
    %v6241 = vadd.f32 0.0, %v6240
    %v6242 = vpop.f32.mrb[0].mxu0
    %v6243 = vadd.f32 0.0, %v6242
    %v6244 = vpop.f32.mrb[0].mxu0
    %v6245 = vadd.f32 0.0, %v6244
    %6246 = vmatprep.mubr.bf16.mxu0 %v5398
    %6247 = vmatmul.mubr.bf16.gmra.mrb[0].mxu0 %v5397
    %v6248 = vpop.f32.mrb[0].mxu0
    %v6249 = vadd.f32 0.0, %v6248
    %v6250 = vpop.f32.mrb[0].mxu0
    %v6251 = vadd.f32 0.0, %v6250
    %v6252 = vpop.f32.mrb[0].mxu0
    %v6253 = vadd.f32 0.0, %v6252
    %v6254 = vpop.f32.mrb[0].mxu0
    %v6255 = vadd.f32 0.0, %v6254
    %6256 = vmatprep.mubr.bf16.mxu0 %v5400
    %6257 = vmatmul.mubr.bf16.gmra.mrb[0].mxu0 %v5399
    %v6258 = vpop.f32.mrb[0].mxu0
    %v6259 = vadd.f32 0.0, %v6258
    %v6260 = vpop.f32.mrb[0].mxu0
    %v6261 = vadd.f32 0.0, %v6260
    %v6262 = vpop.f32.mrb[0].mxu0
    %v6263 = vadd.f32 0.0, %v6262
    %v6264 = vpop.f32.mrb[0].mxu0
    %v6265 = vadd.f32 0.0, %v6264
    %6266 = vdwg.mxu0
    %v6267 = vpack.c.bf16 %v5633, %v5629
    %v6268 = vpack.c.bf16 %v5635, %v5631
    %v6269 = vpack.c.bf16 %v5643, %v5639
    %v6270 = vpack.c.bf16 %v5645, %v5641
    %v6271 = vpack.c.bf16 %v5653, %v5649
    %v6272 = vpack.c.bf16 %v5655, %v5651
    %v6273 = vpack.c.bf16 %v5663, %v5659
    %v6274 = vpack.c.bf16 %v5665, %v5661
    %v6275 = vpack.c.bf16 %v5673, %v5669
    %v6276 = vpack.c.bf16 %v5675, %v5671
    %v6277 = vpack.c.bf16 %v5683, %v5679
    %v6278 = vpack.c.bf16 %v5685, %v5681
    %v6279 = vpack.c.bf16 %v5693, %v5689
    %v6280 = vpack.c.bf16 %v5695, %v5691
    %v6281 = vpack.c.bf16 %v5703, %v5699
    %v6282 = vpack.c.bf16 %v5705, %v5701
    %v6283 = vpack.c.bf16 %v5713, %v5709
    %v6284 = vpack.c.bf16 %v5715, %v5711
    %v6285 = vpack.c.bf16 %v5723, %v5719
    %v6286 = vpack.c.bf16 %v5725, %v5721
    %v6287 = vpack.c.bf16 %v5733, %v5729
    %v6288 = vpack.c.bf16 %v5735, %v5731
    %v6289 = vpack.c.bf16 %v5743, %v5739
    %v6290 = vpack.c.bf16 %v5745, %v5741
    %v6291 = vpack.c.bf16 %v5753, %v5749
    %v6292 = vpack.c.bf16 %v5755, %v5751
    %v6293 = vpack.c.bf16 %v5763, %v5759
    %v6294 = vpack.c.bf16 %v5765, %v5761
    %v6295 = vpack.c.bf16 %v5773, %v5769
    %v6296 = vpack.c.bf16 %v5775, %v5771
    %v6297 = vpack.c.bf16 %v5783, %v5779
    %v6298 = vpack.c.bf16 %v5785, %v5781
    %v6299 = vpack.c.bf16 %v5793, %v5789
    %v6300 = vpack.c.bf16 %v5795, %v5791
    %v6301 = vpack.c.bf16 %v5803, %v5799
    %v6302 = vpack.c.bf16 %v5805, %v5801
    %v6303 = vpack.c.bf16 %v5813, %v5809
    %v6304 = vpack.c.bf16 %v5815, %v5811
    %v6305 = vpack.c.bf16 %v5823, %v5819
    %v6306 = vpack.c.bf16 %v5825, %v5821
    %v6307 = vpack.c.bf16 %v5833, %v5829
    %v6308 = vpack.c.bf16 %v5835, %v5831
    %v6309 = vpack.c.bf16 %v5843, %v5839
    %v6310 = vpack.c.bf16 %v5845, %v5841
    %v6311 = vpack.c.bf16 %v5853, %v5849
    %v6312 = vpack.c.bf16 %v5855, %v5851
    %v6313 = vpack.c.bf16 %v5863, %v5859
    %v6314 = vpack.c.bf16 %v5865, %v5861
    %v6315 = vpack.c.bf16 %v5873, %v5869
    %v6316 = vpack.c.bf16 %v5875, %v5871
    %v6317 = vpack.c.bf16 %v5883, %v5879
    %v6318 = vpack.c.bf16 %v5885, %v5881
    %v6319 = vpack.c.bf16 %v5893, %v5889
    %v6320 = vpack.c.bf16 %v5895, %v5891
    %v6321 = vpack.c.bf16 %v5903, %v5899
    %v6322 = vpack.c.bf16 %v5905, %v5901
    %v6323 = vpack.c.bf16 %v5913, %v5909
    %v6324 = vpack.c.bf16 %v5915, %v5911
    %v6325 = vpack.c.bf16 %v5923, %v5919
    %v6326 = vpack.c.bf16 %v5925, %v5921
    %v6327 = vpack.c.bf16 %v5933, %v5929
    %v6328 = vpack.c.bf16 %v5935, %v5931
    %v6329 = vpack.c.bf16 %v5943, %v5939
    %v6330 = vpack.c.bf16 %v5945, %v5941
    %v6331 = vpack.c.bf16 %v5953, %v5949
    %v6332 = vpack.c.bf16 %v5955, %v5951
    %v6333 = vpack.c.bf16 %v5963, %v5959
    %v6334 = vpack.c.bf16 %v5965, %v5961
    %v6335 = vpack.c.bf16 %v5973, %v5969
    %v6336 = vpack.c.bf16 %v5975, %v5971
    %v6337 = vpack.c.bf16 %v5983, %v5979
    %v6338 = vpack.c.bf16 %v5985, %v5981
    %v6339 = vpack.c.bf16 %v5993, %v5989
    %v6340 = vpack.c.bf16 %v5995, %v5991
    %v6341 = vpack.c.bf16 %v6003, %v5999
    %v6342 = vpack.c.bf16 %v6005, %v6001
    %v6343 = vpack.c.bf16 %v6013, %v6009
    %v6344 = vpack.c.bf16 %v6015, %v6011
    %v6345 = vpack.c.bf16 %v6023, %v6019
    %v6346 = vpack.c.bf16 %v6025, %v6021
    %v6347 = vpack.c.bf16 %v6033, %v6029
    %v6348 = vpack.c.bf16 %v6035, %v6031
    %v6349 = vpack.c.bf16 %v6043, %v6039
    %v6350 = vpack.c.bf16 %v6045, %v6041
    %v6351 = vpack.c.bf16 %v6053, %v6049
    %v6352 = vpack.c.bf16 %v6055, %v6051
    %v6353 = vpack.c.bf16 %v6063, %v6059
    %v6354 = vpack.c.bf16 %v6065, %v6061
    %v6355 = vpack.c.bf16 %v6073, %v6069
    %v6356 = vpack.c.bf16 %v6075, %v6071
    %v6357 = vpack.c.bf16 %v6083, %v6079
    %v6358 = vpack.c.bf16 %v6085, %v6081
    %v6359 = vpack.c.bf16 %v6093, %v6089
    %v6360 = vpack.c.bf16 %v6095, %v6091
    %v6361 = vpack.c.bf16 %v6103, %v6099
    %v6362 = vpack.c.bf16 %v6105, %v6101
    %v6363 = vpack.c.bf16 %v6113, %v6109
    %v6364 = vpack.c.bf16 %v6115, %v6111
    %v6365 = vpack.c.bf16 %v6123, %v6119
    %v6366 = vpack.c.bf16 %v6125, %v6121
    %v6367 = vpack.c.bf16 %v6133, %v6129
    %v6368 = vpack.c.bf16 %v6135, %v6131
    %v6369 = vpack.c.bf16 %v6143, %v6139
    %v6370 = vpack.c.bf16 %v6145, %v6141
    %v6371 = vpack.c.bf16 %v6153, %v6149
    %v6372 = vpack.c.bf16 %v6155, %v6151
    %v6373 = vpack.c.bf16 %v6163, %v6159
    %v6374 = vpack.c.bf16 %v6165, %v6161
    %v6375 = vpack.c.bf16 %v6173, %v6169
    %v6376 = vpack.c.bf16 %v6175, %v6171
    %v6377 = vpack.c.bf16 %v6183, %v6179
    %v6378 = vpack.c.bf16 %v6185, %v6181
    %v6379 = vpack.c.bf16 %v6193, %v6189
    %v6380 = vpack.c.bf16 %v6195, %v6191
    %v6381 = vpack.c.bf16 %v6203, %v6199
    %v6382 = vpack.c.bf16 %v6205, %v6201
    %v6383 = vpack.c.bf16 %v6213, %v6209
    %v6384 = vpack.c.bf16 %v6215, %v6211
    %v6385 = vpack.c.bf16 %v6223, %v6219
    %v6386 = vpack.c.bf16 %v6225, %v6221
    %v6387 = vpack.c.bf16 %v6233, %v6229
    %v6388 = vpack.c.bf16 %v6235, %v6231
    %v6389 = vpack.c.bf16 %v6243, %v6239
    %v6390 = vpack.c.bf16 %v6245, %v6241
    %v6391 = vpack.c.bf16 %v6253, %v6249
    %v6392 = vpack.c.bf16 %v6255, %v6251
    %v6393 = vpack.c.bf16 %v6263, %v6259
    %v6394 = vpack.c.bf16 %v6265, %v6261
    %s6395 = scalar_lea.vmem %s4, 6
    %v6396 = vld [vmem:[%s6395] sm:$0x3]
    %v6399 = vunpack.c.l.s4 1966171168
    %v6400 = vunpack.c.0.s8 %v6399
    %v6401 = vlaneseq
    %v6402 = vshrl.u32 %v6401, 7
    %v6403 = vsub.s32 %v6400, %v6402
    %v6404 = vrot.slane %v6396, %v6403
    %v6405 = vcombine.high %v6404, %v6404
    %v6407 = vunpack.c.l.s4 1966171168
    %v6408 = vunpack.c.0.s8 %v6407
    %v6409 = vlaneseq
    %v6410 = vshrl.u32 %v6409, 7
    %v6411 = vsub.s32 %v6408, %v6410
    %v6412 = vrot.slane %v6404, %v6411
    %v6414 = vunpack.c.l.s4 1966171168
    %v6415 = vunpack.c.0.s8 %v6414
    %v6416 = vlaneseq
    %v6417 = vshrl.u32 %v6416, 7
    %v6418 = vsub.s32 %v6415, %v6417
    %v6419 = vrot.slane %v6405, %v6418
    %v6421 = vpack.i.b16 %v6412, %v6412
    %v6423 = vlaneseq
    %v6424 = vshrl.u32 %v6423, 7
    %v6425 = vsub.s32 0, %v6424
    %v6426 = vrot.slane %v6421, %v6425
    %v6428 = vpack.i.b16 %v6419, %v6419
    %v6430 = vlaneseq
    %v6431 = vshrl.u32 %v6430, 7
    %v6432 = vsub.s32 0, %v6431
    %v6433 = vrot.slane %v6428, %v6432
    %v6434 = vadd.bf16 %v6267, %v6426
    %v6435 = vadd.bf16 %v6268, %v6433
    %v6436 = vadd.bf16 %v6269, %v6426
    %v6437 = vadd.bf16 %v6270, %v6433
    %v6438 = vadd.bf16 %v6271, %v6426
    %v6439 = vadd.bf16 %v6272, %v6433
    %v6440 = vadd.bf16 %v6273, %v6426
    %v6441 = vadd.bf16 %v6274, %v6433
    %v6442 = vadd.bf16 %v6275, %v6426
    %v6443 = vadd.bf16 %v6276, %v6433
    %v6444 = vadd.bf16 %v6277, %v6426
    %v6445 = vadd.bf16 %v6278, %v6433
    %v6446 = vadd.bf16 %v6279, %v6426
    %v6447 = vadd.bf16 %v6280, %v6433
    %v6448 = vadd.bf16 %v6281, %v6426
    %v6449 = vadd.bf16 %v6282, %v6433
    %v6450 = vadd.bf16 %v6283, %v6426
    %v6451 = vadd.bf16 %v6284, %v6433
    %v6452 = vadd.bf16 %v6285, %v6426
    %v6453 = vadd.bf16 %v6286, %v6433
    %v6454 = vadd.bf16 %v6287, %v6426
    %v6455 = vadd.bf16 %v6288, %v6433
    %v6456 = vadd.bf16 %v6289, %v6426
    %v6457 = vadd.bf16 %v6290, %v6433
    %v6458 = vadd.bf16 %v6291, %v6426
    %v6459 = vadd.bf16 %v6292, %v6433
    %v6460 = vadd.bf16 %v6293, %v6426
    %v6461 = vadd.bf16 %v6294, %v6433
    %v6462 = vadd.bf16 %v6295, %v6426
    %v6463 = vadd.bf16 %v6296, %v6433
    %v6464 = vadd.bf16 %v6297, %v6426
    %v6465 = vadd.bf16 %v6298, %v6433
    %v6466 = vadd.bf16 %v6299, %v6426
    %v6467 = vadd.bf16 %v6300, %v6433
    %v6468 = vadd.bf16 %v6301, %v6426
    %v6469 = vadd.bf16 %v6302, %v6433
    %v6470 = vadd.bf16 %v6303, %v6426
    %v6471 = vadd.bf16 %v6304, %v6433
    %v6472 = vadd.bf16 %v6305, %v6426
    %v6473 = vadd.bf16 %v6306, %v6433
    %v6474 = vadd.bf16 %v6307, %v6426
    %v6475 = vadd.bf16 %v6308, %v6433
    %v6476 = vadd.bf16 %v6309, %v6426
    %v6477 = vadd.bf16 %v6310, %v6433
    %v6478 = vadd.bf16 %v6311, %v6426
    %v6479 = vadd.bf16 %v6312, %v6433
    %v6480 = vadd.bf16 %v6313, %v6426
    %v6481 = vadd.bf16 %v6314, %v6433
    %v6482 = vadd.bf16 %v6315, %v6426
    %v6483 = vadd.bf16 %v6316, %v6433
    %v6484 = vadd.bf16 %v6317, %v6426
    %v6485 = vadd.bf16 %v6318, %v6433
    %v6486 = vadd.bf16 %v6319, %v6426
    %v6487 = vadd.bf16 %v6320, %v6433
    %v6488 = vadd.bf16 %v6321, %v6426
    %v6489 = vadd.bf16 %v6322, %v6433
    %v6490 = vadd.bf16 %v6323, %v6426
    %v6491 = vadd.bf16 %v6324, %v6433
    %v6492 = vadd.bf16 %v6325, %v6426
    %v6493 = vadd.bf16 %v6326, %v6433
    %v6494 = vadd.bf16 %v6327, %v6426
    %v6495 = vadd.bf16 %v6328, %v6433
    %v6496 = vadd.bf16 %v6329, %v6426
    %v6497 = vadd.bf16 %v6330, %v6433
    %v6498 = vadd.bf16 %v6331, %v6426
    %v6499 = vadd.bf16 %v6332, %v6433
    %v6500 = vadd.bf16 %v6333, %v6426
    %v6501 = vadd.bf16 %v6334, %v6433
    %v6502 = vadd.bf16 %v6335, %v6426
    %v6503 = vadd.bf16 %v6336, %v6433
    %v6504 = vadd.bf16 %v6337, %v6426
    %v6505 = vadd.bf16 %v6338, %v6433
    %v6506 = vadd.bf16 %v6339, %v6426
    %v6507 = vadd.bf16 %v6340, %v6433
    %v6508 = vadd.bf16 %v6341, %v6426
    %v6509 = vadd.bf16 %v6342, %v6433
    %v6510 = vadd.bf16 %v6343, %v6426
    %v6511 = vadd.bf16 %v6344, %v6433
    %v6512 = vadd.bf16 %v6345, %v6426
    %v6513 = vadd.bf16 %v6346, %v6433
    %v6514 = vadd.bf16 %v6347, %v6426
    %v6515 = vadd.bf16 %v6348, %v6433
    %v6516 = vadd.bf16 %v6349, %v6426
    %v6517 = vadd.bf16 %v6350, %v6433
    %v6518 = vadd.bf16 %v6351, %v6426
    %v6519 = vadd.bf16 %v6352, %v6433
    %v6520 = vadd.bf16 %v6353, %v6426
    %v6521 = vadd.bf16 %v6354, %v6433
    %v6522 = vadd.bf16 %v6355, %v6426
    %v6523 = vadd.bf16 %v6356, %v6433
    %v6524 = vadd.bf16 %v6357, %v6426
    %v6525 = vadd.bf16 %v6358, %v6433
    %v6526 = vadd.bf16 %v6359, %v6426
    %v6527 = vadd.bf16 %v6360, %v6433
    %v6528 = vadd.bf16 %v6361, %v6426
    %v6529 = vadd.bf16 %v6362, %v6433
    %v6530 = vadd.bf16 %v6363, %v6426
    %v6531 = vadd.bf16 %v6364, %v6433
    %v6532 = vadd.bf16 %v6365, %v6426
    %v6533 = vadd.bf16 %v6366, %v6433
    %v6534 = vadd.bf16 %v6367, %v6426
    %v6535 = vadd.bf16 %v6368, %v6433
    %v6536 = vadd.bf16 %v6369, %v6426
    %v6537 = vadd.bf16 %v6370, %v6433
    %v6538 = vadd.bf16 %v6371, %v6426
    %v6539 = vadd.bf16 %v6372, %v6433
    %v6540 = vadd.bf16 %v6373, %v6426
    %v6541 = vadd.bf16 %v6374, %v6433
    %v6542 = vadd.bf16 %v6375, %v6426
    %v6543 = vadd.bf16 %v6376, %v6433
    %v6544 = vadd.bf16 %v6377, %v6426
    %v6545 = vadd.bf16 %v6378, %v6433
    %v6546 = vadd.bf16 %v6379, %v6426
    %v6547 = vadd.bf16 %v6380, %v6433
    %v6548 = vadd.bf16 %v6381, %v6426
    %v6549 = vadd.bf16 %v6382, %v6433
    %v6550 = vadd.bf16 %v6383, %v6426
    %v6551 = vadd.bf16 %v6384, %v6433
    %v6552 = vadd.bf16 %v6385, %v6426
    %v6553 = vadd.bf16 %v6386, %v6433
    %v6554 = vadd.bf16 %v6387, %v6426
    %v6555 = vadd.bf16 %v6388, %v6433
    %v6556 = vadd.bf16 %v6389, %v6426
    %v6557 = vadd.bf16 %v6390, %v6433
    %v6558 = vadd.bf16 %v6391, %v6426
    %v6559 = vadd.bf16 %v6392, %v6433
    %v6560 = vadd.bf16 %v6393, %v6426
    %v6561 = vadd.bf16 %v6394, %v6433
    %v6562 = vmax.bf16 %v6434, 0
    %v6563 = vmax.bf16 %v6435, 0
    %v6564 = vmax.bf16 %v6436, 0
    %v6565 = vmax.bf16 %v6437, 0
    %v6566 = vmax.bf16 %v6438, 0
    %v6567 = vmax.bf16 %v6439, 0
    %v6568 = vmax.bf16 %v6440, 0
    %v6569 = vmax.bf16 %v6441, 0
    %v6570 = vmax.bf16 %v6442, 0
    %v6571 = vmax.bf16 %v6443, 0
    %v6572 = vmax.bf16 %v6444, 0
    %v6573 = vmax.bf16 %v6445, 0
    %v6574 = vmax.bf16 %v6446, 0
    %v6575 = vmax.bf16 %v6447, 0
    %v6576 = vmax.bf16 %v6448, 0
    %v6577 = vmax.bf16 %v6449, 0
    %v6578 = vmax.bf16 %v6450, 0
    %v6579 = vmax.bf16 %v6451, 0
    %v6580 = vmax.bf16 %v6452, 0
    %v6581 = vmax.bf16 %v6453, 0
    %v6582 = vmax.bf16 %v6454, 0
    %v6583 = vmax.bf16 %v6455, 0
    %v6584 = vmax.bf16 %v6456, 0
    %v6585 = vmax.bf16 %v6457, 0
    %v6586 = vmax.bf16 %v6458, 0
    %v6587 = vmax.bf16 %v6459, 0
    %v6588 = vmax.bf16 %v6460, 0
    %v6589 = vmax.bf16 %v6461, 0
    %v6590 = vmax.bf16 %v6462, 0
    %v6591 = vmax.bf16 %v6463, 0
    %v6592 = vmax.bf16 %v6464, 0
    %v6593 = vmax.bf16 %v6465, 0
    %v6594 = vmax.bf16 %v6466, 0
    %v6595 = vmax.bf16 %v6467, 0
    %v6596 = vmax.bf16 %v6468, 0
    %v6597 = vmax.bf16 %v6469, 0
    %v6598 = vmax.bf16 %v6470, 0
    %v6599 = vmax.bf16 %v6471, 0
    %v6600 = vmax.bf16 %v6472, 0
    %v6601 = vmax.bf16 %v6473, 0
    %v6602 = vmax.bf16 %v6474, 0
    %v6603 = vmax.bf16 %v6475, 0
    %v6604 = vmax.bf16 %v6476, 0
    %v6605 = vmax.bf16 %v6477, 0
    %v6606 = vmax.bf16 %v6478, 0
    %v6607 = vmax.bf16 %v6479, 0
    %v6608 = vmax.bf16 %v6480, 0
    %v6609 = vmax.bf16 %v6481, 0
    %v6610 = vmax.bf16 %v6482, 0
    %v6611 = vmax.bf16 %v6483, 0
    %v6612 = vmax.bf16 %v6484, 0
    %v6613 = vmax.bf16 %v6485, 0
    %v6614 = vmax.bf16 %v6486, 0
    %v6615 = vmax.bf16 %v6487, 0
    %v6616 = vmax.bf16 %v6488, 0
    %v6617 = vmax.bf16 %v6489, 0
    %v6618 = vmax.bf16 %v6490, 0
    %v6619 = vmax.bf16 %v6491, 0
    %v6620 = vmax.bf16 %v6492, 0
    %v6621 = vmax.bf16 %v6493, 0
    %v6622 = vmax.bf16 %v6494, 0
    %v6623 = vmax.bf16 %v6495, 0
    %v6624 = vmax.bf16 %v6496, 0
    %v6625 = vmax.bf16 %v6497, 0
    %v6626 = vmax.bf16 %v6498, 0
    %v6627 = vmax.bf16 %v6499, 0
    %v6628 = vmax.bf16 %v6500, 0
    %v6629 = vmax.bf16 %v6501, 0
    %v6630 = vmax.bf16 %v6502, 0
    %v6631 = vmax.bf16 %v6503, 0
    %v6632 = vmax.bf16 %v6504, 0
    %v6633 = vmax.bf16 %v6505, 0
    %v6634 = vmax.bf16 %v6506, 0
    %v6635 = vmax.bf16 %v6507, 0
    %v6636 = vmax.bf16 %v6508, 0
    %v6637 = vmax.bf16 %v6509, 0
    %v6638 = vmax.bf16 %v6510, 0
    %v6639 = vmax.bf16 %v6511, 0
    %v6640 = vmax.bf16 %v6512, 0
    %v6641 = vmax.bf16 %v6513, 0
    %v6642 = vmax.bf16 %v6514, 0
    %v6643 = vmax.bf16 %v6515, 0
    %v6644 = vmax.bf16 %v6516, 0
    %v6645 = vmax.bf16 %v6517, 0
    %v6646 = vmax.bf16 %v6518, 0
    %v6647 = vmax.bf16 %v6519, 0
    %v6648 = vmax.bf16 %v6520, 0
    %v6649 = vmax.bf16 %v6521, 0
    %v6650 = vmax.bf16 %v6522, 0
    %v6651 = vmax.bf16 %v6523, 0
    %v6652 = vmax.bf16 %v6524, 0
    %v6653 = vmax.bf16 %v6525, 0
    %v6654 = vmax.bf16 %v6526, 0
    %v6655 = vmax.bf16 %v6527, 0
    %v6656 = vmax.bf16 %v6528, 0
    %v6657 = vmax.bf16 %v6529, 0
    %v6658 = vmax.bf16 %v6530, 0
    %v6659 = vmax.bf16 %v6531, 0
    %v6660 = vmax.bf16 %v6532, 0
    %v6661 = vmax.bf16 %v6533, 0
    %v6662 = vmax.bf16 %v6534, 0
    %v6663 = vmax.bf16 %v6535, 0
    %v6664 = vmax.bf16 %v6536, 0
    %v6665 = vmax.bf16 %v6537, 0
    %v6666 = vmax.bf16 %v6538, 0
    %v6667 = vmax.bf16 %v6539, 0
    %v6668 = vmax.bf16 %v6540, 0
    %v6669 = vmax.bf16 %v6541, 0
    %v6670 = vmax.bf16 %v6542, 0
    %v6671 = vmax.bf16 %v6543, 0
    %v6672 = vmax.bf16 %v6544, 0
    %v6673 = vmax.bf16 %v6545, 0
    %v6674 = vmax.bf16 %v6546, 0
    %v6675 = vmax.bf16 %v6547, 0
    %v6676 = vmax.bf16 %v6548, 0
    %v6677 = vmax.bf16 %v6549, 0
    %v6678 = vmax.bf16 %v6550, 0
    %v6679 = vmax.bf16 %v6551, 0
    %v6680 = vmax.bf16 %v6552, 0
    %v6681 = vmax.bf16 %v6553, 0
    %v6682 = vmax.bf16 %v6554, 0
    %v6683 = vmax.bf16 %v6555, 0
    %v6684 = vmax.bf16 %v6556, 0
    %v6685 = vmax.bf16 %v6557, 0
    %v6686 = vmax.bf16 %v6558, 0
    %v6687 = vmax.bf16 %v6559, 0
    %v6688 = vmax.bf16 %v6560, 0
    %v6689 = vmax.bf16 %v6561, 0
    %s6690 = scalar_lea.vmem [#allocation3], 1024
    %v6691 = vld [vmem:[%s6690] sm:$0xff]
    %v6692 = vld [vmem:[%s6690 + $0x8] sm:$0xff]
    %v6693 = vld [vmem:[%s6690 + $0x10] sm:$0xff]
    %v6694 = vld [vmem:[%s6690 + $0x18] sm:$0xff]
    %v6695 = vld [vmem:[%s6690 + $0x20] sm:$0xff]
    %v6696 = vld [vmem:[%s6690 + $0x28] sm:$0xff]
    %v6697 = vld [vmem:[%s6690 + $0x30] sm:$0xff]
    %v6698 = vld [vmem:[%s6690 + $0x38] sm:$0xff]
    %v6699 = vld [vmem:[%s6690 + $0x40] sm:$0xff]
    %v6700 = vld [vmem:[%s6690 + $0x48] sm:$0xff]
    %v6701 = vld [vmem:[%s6690 + $0x50] sm:$0xff]
    %v6702 = vld [vmem:[%s6690 + $0x58] sm:$0xff]
    %v6703 = vld [vmem:[%s6690 + $0x60] sm:$0xff]
    %v6704 = vld [vmem:[%s6690 + $0x68] sm:$0xff]
    %v6705 = vld [vmem:[%s6690 + $0x70] sm:$0xff]
    %v6706 = vld [vmem:[%s6690 + $0x78] sm:$0xff]
    %v6707 = vld [vmem:[%s6690 + $0x80] sm:$0xff]
    %v6708 = vld [vmem:[%s6690 + $0x88] sm:$0xff]
    %v6709 = vld [vmem:[%s6690 + $0x90] sm:$0xff]
    %v6710 = vld [vmem:[%s6690 + $0x98] sm:$0xff]
    %v6711 = vld [vmem:[%s6690 + $0xa0] sm:$0xff]
    %v6712 = vld [vmem:[%s6690 + $0xa8] sm:$0xff]
    %v6713 = vld [vmem:[%s6690 + $0xb0] sm:$0xff]
    %v6714 = vld [vmem:[%s6690 + $0xb8] sm:$0xff]
    %v6715 = vld [vmem:[%s6690 + $0xc0] sm:$0xff]
    %v6716 = vld [vmem:[%s6690 + $0xc8] sm:$0xff]
    %v6717 = vld [vmem:[%s6690 + $0xd0] sm:$0xff]
    %v6718 = vld [vmem:[%s6690 + $0xd8] sm:$0xff]
    %v6719 = vld [vmem:[%s6690 + $0xe0] sm:$0xff]
    %v6720 = vld [vmem:[%s6690 + $0xe8] sm:$0xff]
    %v6721 = vld [vmem:[%s6690 + $0xf0] sm:$0xff]
    %v6722 = vld [vmem:[%s6690 + $0xf8] sm:$0xff]
    %v6755 = vunpack.c.l.b16 %v6691
    %v6756 = vunpack.c.h.b16 %v6691
    %v6757 = vunpack.c.l.b16 %v6692
    %v6758 = vunpack.c.h.b16 %v6692
    %v6759 = vunpack.c.l.b16 %v6693
    %v6760 = vunpack.c.h.b16 %v6693
    %v6761 = vunpack.c.l.b16 %v6694
    %v6762 = vunpack.c.h.b16 %v6694
    %v6763 = vunpack.c.l.b16 %v6695
    %v6764 = vunpack.c.h.b16 %v6695
    %v6765 = vunpack.c.l.b16 %v6696
    %v6766 = vunpack.c.h.b16 %v6696
    %v6767 = vunpack.c.l.b16 %v6697
    %v6768 = vunpack.c.h.b16 %v6697
    %v6769 = vunpack.c.l.b16 %v6698
    %v6770 = vunpack.c.h.b16 %v6698
    %v6771 = vunpack.c.l.b16 %v6699
    %v6772 = vunpack.c.h.b16 %v6699
    %v6773 = vunpack.c.l.b16 %v6700
    %v6774 = vunpack.c.h.b16 %v6700
    %v6775 = vunpack.c.l.b16 %v6701
    %v6776 = vunpack.c.h.b16 %v6701
    %v6777 = vunpack.c.l.b16 %v6702
    %v6778 = vunpack.c.h.b16 %v6702
    %v6779 = vunpack.c.l.b16 %v6703
    %v6780 = vunpack.c.h.b16 %v6703
    %v6781 = vunpack.c.l.b16 %v6704
    %v6782 = vunpack.c.h.b16 %v6704
    %v6783 = vunpack.c.l.b16 %v6705
    %v6784 = vunpack.c.h.b16 %v6705
    %v6785 = vunpack.c.l.b16 %v6706
    %v6786 = vunpack.c.h.b16 %v6706
    %v6787 = vunpack.c.l.b16 %v6707
    %v6788 = vunpack.c.h.b16 %v6707
    %v6789 = vunpack.c.l.b16 %v6708
    %v6790 = vunpack.c.h.b16 %v6708
    %v6791 = vunpack.c.l.b16 %v6709
    %v6792 = vunpack.c.h.b16 %v6709
    %v6793 = vunpack.c.l.b16 %v6710
    %v6794 = vunpack.c.h.b16 %v6710
    %v6795 = vunpack.c.l.b16 %v6711
    %v6796 = vunpack.c.h.b16 %v6711
    %v6797 = vunpack.c.l.b16 %v6712
    %v6798 = vunpack.c.h.b16 %v6712
    %v6799 = vunpack.c.l.b16 %v6713
    %v6800 = vunpack.c.h.b16 %v6713
    %v6801 = vunpack.c.l.b16 %v6714
    %v6802 = vunpack.c.h.b16 %v6714
    %v6803 = vunpack.c.l.b16 %v6715
    %v6804 = vunpack.c.h.b16 %v6715
    %v6805 = vunpack.c.l.b16 %v6716
    %v6806 = vunpack.c.h.b16 %v6716
    %v6807 = vunpack.c.l.b16 %v6717
    %v6808 = vunpack.c.h.b16 %v6717
    %v6809 = vunpack.c.l.b16 %v6718
    %v6810 = vunpack.c.h.b16 %v6718
    %v6811 = vunpack.c.l.b16 %v6719
    %v6812 = vunpack.c.h.b16 %v6719
    %v6813 = vunpack.c.l.b16 %v6720
    %v6814 = vunpack.c.h.b16 %v6720
    %v6815 = vunpack.c.l.b16 %v6721
    %v6816 = vunpack.c.h.b16 %v6721
    %v6817 = vunpack.c.l.b16 %v6722
    %v6818 = vunpack.c.h.b16 %v6722
    %v6819 = vpack.c.b16 %v6757, %v6755
    %v6820 = vpack.c.b16 %v6758, %v6756
    %v6821 = vpack.c.b16 %v6761, %v6759
    %v6822 = vpack.c.b16 %v6762, %v6760
    %v6823 = vpack.c.b16 %v6765, %v6763
    %v6824 = vpack.c.b16 %v6766, %v6764
    %v6825 = vpack.c.b16 %v6769, %v6767
    %v6826 = vpack.c.b16 %v6770, %v6768
    %v6827 = vpack.c.b16 %v6773, %v6771
    %v6828 = vpack.c.b16 %v6774, %v6772
    %v6829 = vpack.c.b16 %v6777, %v6775
    %v6830 = vpack.c.b16 %v6778, %v6776
    %v6831 = vpack.c.b16 %v6781, %v6779
    %v6832 = vpack.c.b16 %v6782, %v6780
    %v6833 = vpack.c.b16 %v6785, %v6783
    %v6834 = vpack.c.b16 %v6786, %v6784
    %v6835 = vpack.c.b16 %v6789, %v6787
    %v6836 = vpack.c.b16 %v6790, %v6788
    %v6837 = vpack.c.b16 %v6793, %v6791
    %v6838 = vpack.c.b16 %v6794, %v6792
    %v6839 = vpack.c.b16 %v6797, %v6795
    %v6840 = vpack.c.b16 %v6798, %v6796
    %v6841 = vpack.c.b16 %v6801, %v6799
    %v6842 = vpack.c.b16 %v6802, %v6800
    %v6843 = vpack.c.b16 %v6805, %v6803
    %v6844 = vpack.c.b16 %v6806, %v6804
    %v6845 = vpack.c.b16 %v6809, %v6807
    %v6846 = vpack.c.b16 %v6810, %v6808
    %v6847 = vpack.c.b16 %v6813, %v6811
    %v6848 = vpack.c.b16 %v6814, %v6812
    %v6849 = vpack.c.b16 %v6817, %v6815
    %v6850 = vpack.c.b16 %v6818, %v6816
    %6883 = vmatprep.subr.bf16.mxu0 %v6820
    %6884 = vmatpush1.bf16.msra.mxu0 %v6819
    %6885 = vmatprep.subr.bf16.mxu0 %v6822
    %6886 = vmatpush1.bf16.msra.mxu0 %v6821
    %6887 = vmatprep.subr.bf16.mxu0 %v6824
    %6888 = vmatpush1.bf16.msra.mxu0 %v6823
    %6889 = vmatprep.subr.bf16.mxu0 %v6826
    %6890 = vmatpush1.bf16.msra.mxu0 %v6825
    %6891 = vmatprep.subr.bf16.mxu0 %v6828
    %6892 = vmatpush1.bf16.msra.mxu0 %v6827
    %6893 = vmatprep.subr.bf16.mxu0 %v6830
    %6894 = vmatpush1.bf16.msra.mxu0 %v6829
    %6895 = vmatprep.subr.bf16.mxu0 %v6832
    %6896 = vmatpush1.bf16.msra.mxu0 %v6831
    %6897 = vmatprep.subr.bf16.mxu0 %v6834
    %6898 = vmatpush1.bf16.msra.mxu0 %v6833
    %6899 = vmatprep.subr.bf16.mxu0 %v6836
    %6900 = vmatpush1.bf16.msra.mxu0 %v6835
    %6901 = vmatprep.subr.bf16.mxu0 %v6838
    %6902 = vmatpush1.bf16.msra.mxu0 %v6837
    %6903 = vmatprep.subr.bf16.mxu0 %v6840
    %6904 = vmatpush1.bf16.msra.mxu0 %v6839
    %6905 = vmatprep.subr.bf16.mxu0 %v6842
    %6906 = vmatpush1.bf16.msra.mxu0 %v6841
    %6907 = vmatprep.subr.bf16.mxu0 %v6844
    %6908 = vmatpush1.bf16.msra.mxu0 %v6843
    %6909 = vmatprep.subr.bf16.mxu0 %v6846
    %6910 = vmatpush1.bf16.msra.mxu0 %v6845
    %6911 = vmatprep.subr.bf16.mxu0 %v6848
    %6912 = vmatpush1.bf16.msra.mxu0 %v6847
    %6913 = vmatprep.subr.bf16.mxu0 %v6850
    %6914 = vmatpush1.bf16.msra.mxu0 %v6849
    %6915 = vmatprep.mubr.bf16.mxu0 %v6563
    %6916 = vmatmul.mubr.bf16.gmra.mrb[0].mxu0 %v6562
    %v6917 = vpop.f32.mrb[0].mxu0
    %v6918 = vadd.f32 0.0, %v6917
    %v6919 = vpop.f32.mrb[0].mxu0
    %v6920 = vadd.f32 0.0, %v6919
    %v6921 = vpop.f32.mrb[0].mxu0
    %v6922 = vadd.f32 0.0, %v6921
    %v6923 = vpop.f32.mrb[0].mxu0
    %v6924 = vadd.f32 0.0, %v6923
    %6925 = vmatprep.mubr.bf16.mxu0 %v6565
    %6926 = vmatmul.mubr.bf16.gmra.mrb[0].mxu0 %v6564
    %v6927 = vpop.f32.mrb[0].mxu0
    %v6928 = vadd.f32 0.0, %v6927
    %v6929 = vpop.f32.mrb[0].mxu0
    %v6930 = vadd.f32 0.0, %v6929
    %v6931 = vpop.f32.mrb[0].mxu0
    %v6932 = vadd.f32 0.0, %v6931
    %v6933 = vpop.f32.mrb[0].mxu0
    %v6934 = vadd.f32 0.0, %v6933
    %6935 = vmatprep.mubr.bf16.mxu0 %v6567
    %6936 = vmatmul.mubr.bf16.gmra.mrb[0].mxu0 %v6566
    %v6937 = vpop.f32.mrb[0].mxu0
    %v6938 = vadd.f32 0.0, %v6937
    %v6939 = vpop.f32.mrb[0].mxu0
    %v6940 = vadd.f32 0.0, %v6939
    %v6941 = vpop.f32.mrb[0].mxu0
    %v6942 = vadd.f32 0.0, %v6941
    %v6943 = vpop.f32.mrb[0].mxu0
    %v6944 = vadd.f32 0.0, %v6943
    %6945 = vmatprep.mubr.bf16.mxu0 %v6569
    %6946 = vmatmul.mubr.bf16.gmra.mrb[0].mxu0 %v6568
    %v6947 = vpop.f32.mrb[0].mxu0
    %v6948 = vadd.f32 0.0, %v6947
    %v6949 = vpop.f32.mrb[0].mxu0
    %v6950 = vadd.f32 0.0, %v6949
    %v6951 = vpop.f32.mrb[0].mxu0
    %v6952 = vadd.f32 0.0, %v6951
    %v6953 = vpop.f32.mrb[0].mxu0
    %v6954 = vadd.f32 0.0, %v6953
    %6955 = vmatprep.mubr.bf16.mxu0 %v6571
    %6956 = vmatmul.mubr.bf16.gmra.mrb[0].mxu0 %v6570
    %v6957 = vpop.f32.mrb[0].mxu0
    %v6958 = vadd.f32 0.0, %v6957
    %v6959 = vpop.f32.mrb[0].mxu0
    %v6960 = vadd.f32 0.0, %v6959
    %v6961 = vpop.f32.mrb[0].mxu0
    %v6962 = vadd.f32 0.0, %v6961
    %v6963 = vpop.f32.mrb[0].mxu0
    %v6964 = vadd.f32 0.0, %v6963
    %6965 = vmatprep.mubr.bf16.mxu0 %v6573
    %6966 = vmatmul.mubr.bf16.gmra.mrb[0].mxu0 %v6572
    %v6967 = vpop.f32.mrb[0].mxu0
    %v6968 = vadd.f32 0.0, %v6967
    %v6969 = vpop.f32.mrb[0].mxu0
    %v6970 = vadd.f32 0.0, %v6969
    %v6971 = vpop.f32.mrb[0].mxu0
    %v6972 = vadd.f32 0.0, %v6971
    %v6973 = vpop.f32.mrb[0].mxu0
    %v6974 = vadd.f32 0.0, %v6973
    %6975 = vmatprep.mubr.bf16.mxu0 %v6575
    %6976 = vmatmul.mubr.bf16.gmra.mrb[0].mxu0 %v6574
    %v6977 = vpop.f32.mrb[0].mxu0
    %v6978 = vadd.f32 0.0, %v6977
    %v6979 = vpop.f32.mrb[0].mxu0
    %v6980 = vadd.f32 0.0, %v6979
    %v6981 = vpop.f32.mrb[0].mxu0
    %v6982 = vadd.f32 0.0, %v6981
    %v6983 = vpop.f32.mrb[0].mxu0
    %v6984 = vadd.f32 0.0, %v6983
    %6985 = vmatprep.mubr.bf16.mxu0 %v6577
    %6986 = vmatmul.mubr.bf16.gmra.mrb[0].mxu0 %v6576
    %v6987 = vpop.f32.mrb[0].mxu0
    %v6988 = vadd.f32 0.0, %v6987
    %v6989 = vpop.f32.mrb[0].mxu0
    %v6990 = vadd.f32 0.0, %v6989
    %v6991 = vpop.f32.mrb[0].mxu0
    %v6992 = vadd.f32 0.0, %v6991
    %v6993 = vpop.f32.mrb[0].mxu0
    %v6994 = vadd.f32 0.0, %v6993
    %6995 = vmatprep.mubr.bf16.mxu0 %v6579
    %6996 = vmatmul.mubr.bf16.gmra.mrb[0].mxu0 %v6578
    %v6997 = vpop.f32.mrb[0].mxu0
    %v6998 = vadd.f32 0.0, %v6997
    %v6999 = vpop.f32.mrb[0].mxu0
    %v7000 = vadd.f32 0.0, %v6999
    %v7001 = vpop.f32.mrb[0].mxu0
    %v7002 = vadd.f32 0.0, %v7001
    %v7003 = vpop.f32.mrb[0].mxu0
    %v7004 = vadd.f32 0.0, %v7003
    %7005 = vmatprep.mubr.bf16.mxu0 %v6581
    %7006 = vmatmul.mubr.bf16.gmra.mrb[0].mxu0 %v6580
    %v7007 = vpop.f32.mrb[0].mxu0
    %v7008 = vadd.f32 0.0, %v7007
    %v7009 = vpop.f32.mrb[0].mxu0
    %v7010 = vadd.f32 0.0, %v7009
    %v7011 = vpop.f32.mrb[0].mxu0
    %v7012 = vadd.f32 0.0, %v7011
    %v7013 = vpop.f32.mrb[0].mxu0
    %v7014 = vadd.f32 0.0, %v7013
    %7015 = vmatprep.mubr.bf16.mxu0 %v6583
    %7016 = vmatmul.mubr.bf16.gmra.mrb[0].mxu0 %v6582
    %v7017 = vpop.f32.mrb[0].mxu0
    %v7018 = vadd.f32 0.0, %v7017
    %v7019 = vpop.f32.mrb[0].mxu0
    %v7020 = vadd.f32 0.0, %v7019
    %v7021 = vpop.f32.mrb[0].mxu0
    %v7022 = vadd.f32 0.0, %v7021
    %v7023 = vpop.f32.mrb[0].mxu0
    %v7024 = vadd.f32 0.0, %v7023
    %7025 = vmatprep.mubr.bf16.mxu0 %v6585
    %7026 = vmatmul.mubr.bf16.gmra.mrb[0].mxu0 %v6584
    %v7027 = vpop.f32.mrb[0].mxu0
    %v7028 = vadd.f32 0.0, %v7027
    %v7029 = vpop.f32.mrb[0].mxu0
    %v7030 = vadd.f32 0.0, %v7029
    %v7031 = vpop.f32.mrb[0].mxu0
    %v7032 = vadd.f32 0.0, %v7031
    %v7033 = vpop.f32.mrb[0].mxu0
    %v7034 = vadd.f32 0.0, %v7033
    %7035 = vmatprep.mubr.bf16.mxu0 %v6587
    %7036 = vmatmul.mubr.bf16.gmra.mrb[0].mxu0 %v6586
    %v7037 = vpop.f32.mrb[0].mxu0
    %v7038 = vadd.f32 0.0, %v7037
    %v7039 = vpop.f32.mrb[0].mxu0
    %v7040 = vadd.f32 0.0, %v7039
    %v7041 = vpop.f32.mrb[0].mxu0
    %v7042 = vadd.f32 0.0, %v7041
    %v7043 = vpop.f32.mrb[0].mxu0
    %v7044 = vadd.f32 0.0, %v7043
    %7045 = vmatprep.mubr.bf16.mxu0 %v6589
    %7046 = vmatmul.mubr.bf16.gmra.mrb[0].mxu0 %v6588
    %v7047 = vpop.f32.mrb[0].mxu0
    %v7048 = vadd.f32 0.0, %v7047
    %v7049 = vpop.f32.mrb[0].mxu0
    %v7050 = vadd.f32 0.0, %v7049
    %v7051 = vpop.f32.mrb[0].mxu0
    %v7052 = vadd.f32 0.0, %v7051
    %v7053 = vpop.f32.mrb[0].mxu0
    %v7054 = vadd.f32 0.0, %v7053
    %7055 = vmatprep.mubr.bf16.mxu0 %v6591
    %7056 = vmatmul.mubr.bf16.gmra.mrb[0].mxu0 %v6590
    %v7057 = vpop.f32.mrb[0].mxu0
    %v7058 = vadd.f32 0.0, %v7057
    %v7059 = vpop.f32.mrb[0].mxu0
    %v7060 = vadd.f32 0.0, %v7059
    %v7061 = vpop.f32.mrb[0].mxu0
    %v7062 = vadd.f32 0.0, %v7061
    %v7063 = vpop.f32.mrb[0].mxu0
    %v7064 = vadd.f32 0.0, %v7063
    %7065 = vmatprep.mubr.bf16.mxu0 %v6593
    %7066 = vmatmul.mubr.bf16.gmra.mrb[0].mxu0 %v6592
    %v7067 = vpop.f32.mrb[0].mxu0
    %v7068 = vadd.f32 0.0, %v7067
    %v7069 = vpop.f32.mrb[0].mxu0
    %v7070 = vadd.f32 0.0, %v7069
    %v7071 = vpop.f32.mrb[0].mxu0
    %v7072 = vadd.f32 0.0, %v7071
    %v7073 = vpop.f32.mrb[0].mxu0
    %v7074 = vadd.f32 0.0, %v7073
    %7075 = vmatprep.mubr.bf16.mxu0 %v6595
    %7076 = vmatmul.mubr.bf16.gmra.mrb[0].mxu0 %v6594
    %v7077 = vpop.f32.mrb[0].mxu0
    %v7078 = vadd.f32 0.0, %v7077
    %v7079 = vpop.f32.mrb[0].mxu0
    %v7080 = vadd.f32 0.0, %v7079
    %v7081 = vpop.f32.mrb[0].mxu0
    %v7082 = vadd.f32 0.0, %v7081
    %v7083 = vpop.f32.mrb[0].mxu0
    %v7084 = vadd.f32 0.0, %v7083
    %7085 = vmatprep.mubr.bf16.mxu0 %v6597
    %7086 = vmatmul.mubr.bf16.gmra.mrb[0].mxu0 %v6596
    %v7087 = vpop.f32.mrb[0].mxu0
    %v7088 = vadd.f32 0.0, %v7087
    %v7089 = vpop.f32.mrb[0].mxu0
    %v7090 = vadd.f32 0.0, %v7089
    %v7091 = vpop.f32.mrb[0].mxu0
    %v7092 = vadd.f32 0.0, %v7091
    %v7093 = vpop.f32.mrb[0].mxu0
    %v7094 = vadd.f32 0.0, %v7093
    %7095 = vmatprep.mubr.bf16.mxu0 %v6599
    %7096 = vmatmul.mubr.bf16.gmra.mrb[0].mxu0 %v6598
    %v7097 = vpop.f32.mrb[0].mxu0
    %v7098 = vadd.f32 0.0, %v7097
    %v7099 = vpop.f32.mrb[0].mxu0
    %v7100 = vadd.f32 0.0, %v7099
    %v7101 = vpop.f32.mrb[0].mxu0
    %v7102 = vadd.f32 0.0, %v7101
    %v7103 = vpop.f32.mrb[0].mxu0
    %v7104 = vadd.f32 0.0, %v7103
    %7105 = vmatprep.mubr.bf16.mxu0 %v6601
    %7106 = vmatmul.mubr.bf16.gmra.mrb[0].mxu0 %v6600
    %v7107 = vpop.f32.mrb[0].mxu0
    %v7108 = vadd.f32 0.0, %v7107
    %v7109 = vpop.f32.mrb[0].mxu0
    %v7110 = vadd.f32 0.0, %v7109
    %v7111 = vpop.f32.mrb[0].mxu0
    %v7112 = vadd.f32 0.0, %v7111
    %v7113 = vpop.f32.mrb[0].mxu0
    %v7114 = vadd.f32 0.0, %v7113
    %7115 = vmatprep.mubr.bf16.mxu0 %v6603
    %7116 = vmatmul.mubr.bf16.gmra.mrb[0].mxu0 %v6602
    %v7117 = vpop.f32.mrb[0].mxu0
    %v7118 = vadd.f32 0.0, %v7117
    %v7119 = vpop.f32.mrb[0].mxu0
    %v7120 = vadd.f32 0.0, %v7119
    %v7121 = vpop.f32.mrb[0].mxu0
    %v7122 = vadd.f32 0.0, %v7121
    %v7123 = vpop.f32.mrb[0].mxu0
    %v7124 = vadd.f32 0.0, %v7123
    %7125 = vmatprep.mubr.bf16.mxu0 %v6605
    %7126 = vmatmul.mubr.bf16.gmra.mrb[0].mxu0 %v6604
    %v7127 = vpop.f32.mrb[0].mxu0
    %v7128 = vadd.f32 0.0, %v7127
    %v7129 = vpop.f32.mrb[0].mxu0
    %v7130 = vadd.f32 0.0, %v7129
    %v7131 = vpop.f32.mrb[0].mxu0
    %v7132 = vadd.f32 0.0, %v7131
    %v7133 = vpop.f32.mrb[0].mxu0
    %v7134 = vadd.f32 0.0, %v7133
    %7135 = vmatprep.mubr.bf16.mxu0 %v6607
    %7136 = vmatmul.mubr.bf16.gmra.mrb[0].mxu0 %v6606
    %v7137 = vpop.f32.mrb[0].mxu0
    %v7138 = vadd.f32 0.0, %v7137
    %v7139 = vpop.f32.mrb[0].mxu0
    %v7140 = vadd.f32 0.0, %v7139
    %v7141 = vpop.f32.mrb[0].mxu0
    %v7142 = vadd.f32 0.0, %v7141
    %v7143 = vpop.f32.mrb[0].mxu0
    %v7144 = vadd.f32 0.0, %v7143
    %7145 = vmatprep.mubr.bf16.mxu0 %v6609
    %7146 = vmatmul.mubr.bf16.gmra.mrb[0].mxu0 %v6608
    %v7147 = vpop.f32.mrb[0].mxu0
    %v7148 = vadd.f32 0.0, %v7147
    %v7149 = vpop.f32.mrb[0].mxu0
    %v7150 = vadd.f32 0.0, %v7149
    %v7151 = vpop.f32.mrb[0].mxu0
    %v7152 = vadd.f32 0.0, %v7151
    %v7153 = vpop.f32.mrb[0].mxu0
    %v7154 = vadd.f32 0.0, %v7153
    %7155 = vmatprep.mubr.bf16.mxu0 %v6611
    %7156 = vmatmul.mubr.bf16.gmra.mrb[0].mxu0 %v6610
    %v7157 = vpop.f32.mrb[0].mxu0
    %v7158 = vadd.f32 0.0, %v7157
    %v7159 = vpop.f32.mrb[0].mxu0
    %v7160 = vadd.f32 0.0, %v7159
    %v7161 = vpop.f32.mrb[0].mxu0
    %v7162 = vadd.f32 0.0, %v7161
    %v7163 = vpop.f32.mrb[0].mxu0
    %v7164 = vadd.f32 0.0, %v7163
    %7165 = vmatprep.mubr.bf16.mxu0 %v6613
    %7166 = vmatmul.mubr.bf16.gmra.mrb[0].mxu0 %v6612
    %v7167 = vpop.f32.mrb[0].mxu0
    %v7168 = vadd.f32 0.0, %v7167
    %v7169 = vpop.f32.mrb[0].mxu0
    %v7170 = vadd.f32 0.0, %v7169
    %v7171 = vpop.f32.mrb[0].mxu0
    %v7172 = vadd.f32 0.0, %v7171
    %v7173 = vpop.f32.mrb[0].mxu0
    %v7174 = vadd.f32 0.0, %v7173
    %7175 = vmatprep.mubr.bf16.mxu0 %v6615
    %7176 = vmatmul.mubr.bf16.gmra.mrb[0].mxu0 %v6614
    %v7177 = vpop.f32.mrb[0].mxu0
    %v7178 = vadd.f32 0.0, %v7177
    %v7179 = vpop.f32.mrb[0].mxu0
    %v7180 = vadd.f32 0.0, %v7179
    %v7181 = vpop.f32.mrb[0].mxu0
    %v7182 = vadd.f32 0.0, %v7181
    %v7183 = vpop.f32.mrb[0].mxu0
    %v7184 = vadd.f32 0.0, %v7183
    %7185 = vmatprep.mubr.bf16.mxu0 %v6617
    %7186 = vmatmul.mubr.bf16.gmra.mrb[0].mxu0 %v6616
    %v7187 = vpop.f32.mrb[0].mxu0
    %v7188 = vadd.f32 0.0, %v7187
    %v7189 = vpop.f32.mrb[0].mxu0
    %v7190 = vadd.f32 0.0, %v7189
    %v7191 = vpop.f32.mrb[0].mxu0
    %v7192 = vadd.f32 0.0, %v7191
    %v7193 = vpop.f32.mrb[0].mxu0
    %v7194 = vadd.f32 0.0, %v7193
    %7195 = vmatprep.mubr.bf16.mxu0 %v6619
    %7196 = vmatmul.mubr.bf16.gmra.mrb[0].mxu0 %v6618
    %v7197 = vpop.f32.mrb[0].mxu0
    %v7198 = vadd.f32 0.0, %v7197
    %v7199 = vpop.f32.mrb[0].mxu0
    %v7200 = vadd.f32 0.0, %v7199
    %v7201 = vpop.f32.mrb[0].mxu0
    %v7202 = vadd.f32 0.0, %v7201
    %v7203 = vpop.f32.mrb[0].mxu0
    %v7204 = vadd.f32 0.0, %v7203
    %7205 = vmatprep.mubr.bf16.mxu0 %v6621
    %7206 = vmatmul.mubr.bf16.gmra.mrb[0].mxu0 %v6620
    %v7207 = vpop.f32.mrb[0].mxu0
    %v7208 = vadd.f32 0.0, %v7207
    %v7209 = vpop.f32.mrb[0].mxu0
    %v7210 = vadd.f32 0.0, %v7209
    %v7211 = vpop.f32.mrb[0].mxu0
    %v7212 = vadd.f32 0.0, %v7211
    %v7213 = vpop.f32.mrb[0].mxu0
    %v7214 = vadd.f32 0.0, %v7213
    %7215 = vmatprep.mubr.bf16.mxu0 %v6623
    %7216 = vmatmul.mubr.bf16.gmra.mrb[0].mxu0 %v6622
    %v7217 = vpop.f32.mrb[0].mxu0
    %v7218 = vadd.f32 0.0, %v7217
    %v7219 = vpop.f32.mrb[0].mxu0
    %v7220 = vadd.f32 0.0, %v7219
    %v7221 = vpop.f32.mrb[0].mxu0
    %v7222 = vadd.f32 0.0, %v7221
    %v7223 = vpop.f32.mrb[0].mxu0
    %v7224 = vadd.f32 0.0, %v7223
    %7225 = vmatprep.mubr.bf16.mxu0 %v6625
    %7226 = vmatmul.mubr.bf16.gmra.mrb[0].mxu0 %v6624
    %v7227 = vpop.f32.mrb[0].mxu0
    %v7228 = vadd.f32 0.0, %v7227
    %v7229 = vpop.f32.mrb[0].mxu0
    %v7230 = vadd.f32 0.0, %v7229
    %v7231 = vpop.f32.mrb[0].mxu0
    %v7232 = vadd.f32 0.0, %v7231
    %v7233 = vpop.f32.mrb[0].mxu0
    %v7234 = vadd.f32 0.0, %v7233
    %7235 = vmatprep.mubr.bf16.mxu0 %v6627
    %7236 = vmatmul.mubr.bf16.gmra.mrb[0].mxu0 %v6626
    %v7237 = vpop.f32.mrb[0].mxu0
    %v7238 = vadd.f32 0.0, %v7237
    %v7239 = vpop.f32.mrb[0].mxu0
    %v7240 = vadd.f32 0.0, %v7239
    %v7241 = vpop.f32.mrb[0].mxu0
    %v7242 = vadd.f32 0.0, %v7241
    %v7243 = vpop.f32.mrb[0].mxu0
    %v7244 = vadd.f32 0.0, %v7243
    %7245 = vmatprep.mubr.bf16.mxu0 %v6629
    %7246 = vmatmul.mubr.bf16.gmra.mrb[0].mxu0 %v6628
    %v7247 = vpop.f32.mrb[0].mxu0
    %v7248 = vadd.f32 0.0, %v7247
    %v7249 = vpop.f32.mrb[0].mxu0
    %v7250 = vadd.f32 0.0, %v7249
    %v7251 = vpop.f32.mrb[0].mxu0
    %v7252 = vadd.f32 0.0, %v7251
    %v7253 = vpop.f32.mrb[0].mxu0
    %v7254 = vadd.f32 0.0, %v7253
    %7255 = vmatprep.mubr.bf16.mxu0 %v6631
    %7256 = vmatmul.mubr.bf16.gmra.mrb[0].mxu0 %v6630
    %v7257 = vpop.f32.mrb[0].mxu0
    %v7258 = vadd.f32 0.0, %v7257
    %v7259 = vpop.f32.mrb[0].mxu0
    %v7260 = vadd.f32 0.0, %v7259
    %v7261 = vpop.f32.mrb[0].mxu0
    %v7262 = vadd.f32 0.0, %v7261
    %v7263 = vpop.f32.mrb[0].mxu0
    %v7264 = vadd.f32 0.0, %v7263
    %7265 = vmatprep.mubr.bf16.mxu0 %v6633
    %7266 = vmatmul.mubr.bf16.gmra.mrb[0].mxu0 %v6632
    %v7267 = vpop.f32.mrb[0].mxu0
    %v7268 = vadd.f32 0.0, %v7267
    %v7269 = vpop.f32.mrb[0].mxu0
    %v7270 = vadd.f32 0.0, %v7269
    %v7271 = vpop.f32.mrb[0].mxu0
    %v7272 = vadd.f32 0.0, %v7271
    %v7273 = vpop.f32.mrb[0].mxu0
    %v7274 = vadd.f32 0.0, %v7273
    %7275 = vmatprep.mubr.bf16.mxu0 %v6635
    %7276 = vmatmul.mubr.bf16.gmra.mrb[0].mxu0 %v6634
    %v7277 = vpop.f32.mrb[0].mxu0
    %v7278 = vadd.f32 0.0, %v7277
    %v7279 = vpop.f32.mrb[0].mxu0
    %v7280 = vadd.f32 0.0, %v7279
    %v7281 = vpop.f32.mrb[0].mxu0
    %v7282 = vadd.f32 0.0, %v7281
    %v7283 = vpop.f32.mrb[0].mxu0
    %v7284 = vadd.f32 0.0, %v7283
    %7285 = vmatprep.mubr.bf16.mxu0 %v6637
    %7286 = vmatmul.mubr.bf16.gmra.mrb[0].mxu0 %v6636
    %v7287 = vpop.f32.mrb[0].mxu0
    %v7288 = vadd.f32 0.0, %v7287
    %v7289 = vpop.f32.mrb[0].mxu0
    %v7290 = vadd.f32 0.0, %v7289
    %v7291 = vpop.f32.mrb[0].mxu0
    %v7292 = vadd.f32 0.0, %v7291
    %v7293 = vpop.f32.mrb[0].mxu0
    %v7294 = vadd.f32 0.0, %v7293
    %7295 = vmatprep.mubr.bf16.mxu0 %v6639
    %7296 = vmatmul.mubr.bf16.gmra.mrb[0].mxu0 %v6638
    %v7297 = vpop.f32.mrb[0].mxu0
    %v7298 = vadd.f32 0.0, %v7297
    %v7299 = vpop.f32.mrb[0].mxu0
    %v7300 = vadd.f32 0.0, %v7299
    %v7301 = vpop.f32.mrb[0].mxu0
    %v7302 = vadd.f32 0.0, %v7301
    %v7303 = vpop.f32.mrb[0].mxu0
    %v7304 = vadd.f32 0.0, %v7303
    %7305 = vmatprep.mubr.bf16.mxu0 %v6641
    %7306 = vmatmul.mubr.bf16.gmra.mrb[0].mxu0 %v6640
    %v7307 = vpop.f32.mrb[0].mxu0
    %v7308 = vadd.f32 0.0, %v7307
    %v7309 = vpop.f32.mrb[0].mxu0
    %v7310 = vadd.f32 0.0, %v7309
    %v7311 = vpop.f32.mrb[0].mxu0
    %v7312 = vadd.f32 0.0, %v7311
    %v7313 = vpop.f32.mrb[0].mxu0
    %v7314 = vadd.f32 0.0, %v7313
    %7315 = vmatprep.mubr.bf16.mxu0 %v6643
    %7316 = vmatmul.mubr.bf16.gmra.mrb[0].mxu0 %v6642
    %v7317 = vpop.f32.mrb[0].mxu0
    %v7318 = vadd.f32 0.0, %v7317
    %v7319 = vpop.f32.mrb[0].mxu0
    %v7320 = vadd.f32 0.0, %v7319
    %v7321 = vpop.f32.mrb[0].mxu0
    %v7322 = vadd.f32 0.0, %v7321
    %v7323 = vpop.f32.mrb[0].mxu0
    %v7324 = vadd.f32 0.0, %v7323
    %7325 = vmatprep.mubr.bf16.mxu0 %v6645
    %7326 = vmatmul.mubr.bf16.gmra.mrb[0].mxu0 %v6644
    %v7327 = vpop.f32.mrb[0].mxu0
    %v7328 = vadd.f32 0.0, %v7327
    %v7329 = vpop.f32.mrb[0].mxu0
    %v7330 = vadd.f32 0.0, %v7329
    %v7331 = vpop.f32.mrb[0].mxu0
    %v7332 = vadd.f32 0.0, %v7331
    %v7333 = vpop.f32.mrb[0].mxu0
    %v7334 = vadd.f32 0.0, %v7333
    %7335 = vmatprep.mubr.bf16.mxu0 %v6647
    %7336 = vmatmul.mubr.bf16.gmra.mrb[0].mxu0 %v6646
    %v7337 = vpop.f32.mrb[0].mxu0
    %v7338 = vadd.f32 0.0, %v7337
    %v7339 = vpop.f32.mrb[0].mxu0
    %v7340 = vadd.f32 0.0, %v7339
    %v7341 = vpop.f32.mrb[0].mxu0
    %v7342 = vadd.f32 0.0, %v7341
    %v7343 = vpop.f32.mrb[0].mxu0
    %v7344 = vadd.f32 0.0, %v7343
    %7345 = vmatprep.mubr.bf16.mxu0 %v6649
    %7346 = vmatmul.mubr.bf16.gmra.mrb[0].mxu0 %v6648
    %v7347 = vpop.f32.mrb[0].mxu0
    %v7348 = vadd.f32 0.0, %v7347
    %v7349 = vpop.f32.mrb[0].mxu0
    %v7350 = vadd.f32 0.0, %v7349
    %v7351 = vpop.f32.mrb[0].mxu0
    %v7352 = vadd.f32 0.0, %v7351
    %v7353 = vpop.f32.mrb[0].mxu0
    %v7354 = vadd.f32 0.0, %v7353
    %7355 = vmatprep.mubr.bf16.mxu0 %v6651
    %7356 = vmatmul.mubr.bf16.gmra.mrb[0].mxu0 %v6650
    %v7357 = vpop.f32.mrb[0].mxu0
    %v7358 = vadd.f32 0.0, %v7357
    %v7359 = vpop.f32.mrb[0].mxu0
    %v7360 = vadd.f32 0.0, %v7359
    %v7361 = vpop.f32.mrb[0].mxu0
    %v7362 = vadd.f32 0.0, %v7361
    %v7363 = vpop.f32.mrb[0].mxu0
    %v7364 = vadd.f32 0.0, %v7363
    %7365 = vmatprep.mubr.bf16.mxu0 %v6653
    %7366 = vmatmul.mubr.bf16.gmra.mrb[0].mxu0 %v6652
    %v7367 = vpop.f32.mrb[0].mxu0
    %v7368 = vadd.f32 0.0, %v7367
    %v7369 = vpop.f32.mrb[0].mxu0
    %v7370 = vadd.f32 0.0, %v7369
    %v7371 = vpop.f32.mrb[0].mxu0
    %v7372 = vadd.f32 0.0, %v7371
    %v7373 = vpop.f32.mrb[0].mxu0
    %v7374 = vadd.f32 0.0, %v7373
    %7375 = vmatprep.mubr.bf16.mxu0 %v6655
    %7376 = vmatmul.mubr.bf16.gmra.mrb[0].mxu0 %v6654
    %v7377 = vpop.f32.mrb[0].mxu0
    %v7378 = vadd.f32 0.0, %v7377
    %v7379 = vpop.f32.mrb[0].mxu0
    %v7380 = vadd.f32 0.0, %v7379
    %v7381 = vpop.f32.mrb[0].mxu0
    %v7382 = vadd.f32 0.0, %v7381
    %v7383 = vpop.f32.mrb[0].mxu0
    %v7384 = vadd.f32 0.0, %v7383
    %7385 = vmatprep.mubr.bf16.mxu0 %v6657
    %7386 = vmatmul.mubr.bf16.gmra.mrb[0].mxu0 %v6656
    %v7387 = vpop.f32.mrb[0].mxu0
    %v7388 = vadd.f32 0.0, %v7387
    %v7389 = vpop.f32.mrb[0].mxu0
    %v7390 = vadd.f32 0.0, %v7389
    %v7391 = vpop.f32.mrb[0].mxu0
    %v7392 = vadd.f32 0.0, %v7391
    %v7393 = vpop.f32.mrb[0].mxu0
    %v7394 = vadd.f32 0.0, %v7393
    %7395 = vmatprep.mubr.bf16.mxu0 %v6659
    %7396 = vmatmul.mubr.bf16.gmra.mrb[0].mxu0 %v6658
    %v7397 = vpop.f32.mrb[0].mxu0
    %v7398 = vadd.f32 0.0, %v7397
    %v7399 = vpop.f32.mrb[0].mxu0
    %v7400 = vadd.f32 0.0, %v7399
    %v7401 = vpop.f32.mrb[0].mxu0
    %v7402 = vadd.f32 0.0, %v7401
    %v7403 = vpop.f32.mrb[0].mxu0
    %v7404 = vadd.f32 0.0, %v7403
    %7405 = vmatprep.mubr.bf16.mxu0 %v6661
    %7406 = vmatmul.mubr.bf16.gmra.mrb[0].mxu0 %v6660
    %v7407 = vpop.f32.mrb[0].mxu0
    %v7408 = vadd.f32 0.0, %v7407
    %v7409 = vpop.f32.mrb[0].mxu0
    %v7410 = vadd.f32 0.0, %v7409
    %v7411 = vpop.f32.mrb[0].mxu0
    %v7412 = vadd.f32 0.0, %v7411
    %v7413 = vpop.f32.mrb[0].mxu0
    %v7414 = vadd.f32 0.0, %v7413
    %7415 = vmatprep.mubr.bf16.mxu0 %v6663
    %7416 = vmatmul.mubr.bf16.gmra.mrb[0].mxu0 %v6662
    %v7417 = vpop.f32.mrb[0].mxu0
    %v7418 = vadd.f32 0.0, %v7417
    %v7419 = vpop.f32.mrb[0].mxu0
    %v7420 = vadd.f32 0.0, %v7419
    %v7421 = vpop.f32.mrb[0].mxu0
    %v7422 = vadd.f32 0.0, %v7421
    %v7423 = vpop.f32.mrb[0].mxu0
    %v7424 = vadd.f32 0.0, %v7423
    %7425 = vmatprep.mubr.bf16.mxu0 %v6665
    %7426 = vmatmul.mubr.bf16.gmra.mrb[0].mxu0 %v6664
    %v7427 = vpop.f32.mrb[0].mxu0
    %v7428 = vadd.f32 0.0, %v7427
    %v7429 = vpop.f32.mrb[0].mxu0
    %v7430 = vadd.f32 0.0, %v7429
    %v7431 = vpop.f32.mrb[0].mxu0
    %v7432 = vadd.f32 0.0, %v7431
    %v7433 = vpop.f32.mrb[0].mxu0
    %v7434 = vadd.f32 0.0, %v7433
    %7435 = vmatprep.mubr.bf16.mxu0 %v6667
    %7436 = vmatmul.mubr.bf16.gmra.mrb[0].mxu0 %v6666
    %v7437 = vpop.f32.mrb[0].mxu0
    %v7438 = vadd.f32 0.0, %v7437
    %v7439 = vpop.f32.mrb[0].mxu0
    %v7440 = vadd.f32 0.0, %v7439
    %v7441 = vpop.f32.mrb[0].mxu0
    %v7442 = vadd.f32 0.0, %v7441
    %v7443 = vpop.f32.mrb[0].mxu0
    %v7444 = vadd.f32 0.0, %v7443
    %7445 = vmatprep.mubr.bf16.mxu0 %v6669
    %7446 = vmatmul.mubr.bf16.gmra.mrb[0].mxu0 %v6668
    %v7447 = vpop.f32.mrb[0].mxu0
    %v7448 = vadd.f32 0.0, %v7447
    %v7449 = vpop.f32.mrb[0].mxu0
    %v7450 = vadd.f32 0.0, %v7449
    %v7451 = vpop.f32.mrb[0].mxu0
    %v7452 = vadd.f32 0.0, %v7451
    %v7453 = vpop.f32.mrb[0].mxu0
    %v7454 = vadd.f32 0.0, %v7453
    %7455 = vmatprep.mubr.bf16.mxu0 %v6671
    %7456 = vmatmul.mubr.bf16.gmra.mrb[0].mxu0 %v6670
    %v7457 = vpop.f32.mrb[0].mxu0
    %v7458 = vadd.f32 0.0, %v7457
    %v7459 = vpop.f32.mrb[0].mxu0
    %v7460 = vadd.f32 0.0, %v7459
    %v7461 = vpop.f32.mrb[0].mxu0
    %v7462 = vadd.f32 0.0, %v7461
    %v7463 = vpop.f32.mrb[0].mxu0
    %v7464 = vadd.f32 0.0, %v7463
    %7465 = vmatprep.mubr.bf16.mxu0 %v6673
    %7466 = vmatmul.mubr.bf16.gmra.mrb[0].mxu0 %v6672
    %v7467 = vpop.f32.mrb[0].mxu0
    %v7468 = vadd.f32 0.0, %v7467
    %v7469 = vpop.f32.mrb[0].mxu0
    %v7470 = vadd.f32 0.0, %v7469
    %v7471 = vpop.f32.mrb[0].mxu0
    %v7472 = vadd.f32 0.0, %v7471
    %v7473 = vpop.f32.mrb[0].mxu0
    %v7474 = vadd.f32 0.0, %v7473
    %7475 = vmatprep.mubr.bf16.mxu0 %v6675
    %7476 = vmatmul.mubr.bf16.gmra.mrb[0].mxu0 %v6674
    %v7477 = vpop.f32.mrb[0].mxu0
    %v7478 = vadd.f32 0.0, %v7477
    %v7479 = vpop.f32.mrb[0].mxu0
    %v7480 = vadd.f32 0.0, %v7479
    %v7481 = vpop.f32.mrb[0].mxu0
    %v7482 = vadd.f32 0.0, %v7481
    %v7483 = vpop.f32.mrb[0].mxu0
    %v7484 = vadd.f32 0.0, %v7483
    %7485 = vmatprep.mubr.bf16.mxu0 %v6677
    %7486 = vmatmul.mubr.bf16.gmra.mrb[0].mxu0 %v6676
    %v7487 = vpop.f32.mrb[0].mxu0
    %v7488 = vadd.f32 0.0, %v7487
    %v7489 = vpop.f32.mrb[0].mxu0
    %v7490 = vadd.f32 0.0, %v7489
    %v7491 = vpop.f32.mrb[0].mxu0
    %v7492 = vadd.f32 0.0, %v7491
    %v7493 = vpop.f32.mrb[0].mxu0
    %v7494 = vadd.f32 0.0, %v7493
    %7495 = vmatprep.mubr.bf16.mxu0 %v6679
    %7496 = vmatmul.mubr.bf16.gmra.mrb[0].mxu0 %v6678
    %v7497 = vpop.f32.mrb[0].mxu0
    %v7498 = vadd.f32 0.0, %v7497
    %v7499 = vpop.f32.mrb[0].mxu0
    %v7500 = vadd.f32 0.0, %v7499
    %v7501 = vpop.f32.mrb[0].mxu0
    %v7502 = vadd.f32 0.0, %v7501
    %v7503 = vpop.f32.mrb[0].mxu0
    %v7504 = vadd.f32 0.0, %v7503
    %7505 = vmatprep.mubr.bf16.mxu0 %v6681
    %7506 = vmatmul.mubr.bf16.gmra.mrb[0].mxu0 %v6680
    %v7507 = vpop.f32.mrb[0].mxu0
    %v7508 = vadd.f32 0.0, %v7507
    %v7509 = vpop.f32.mrb[0].mxu0
    %v7510 = vadd.f32 0.0, %v7509
    %v7511 = vpop.f32.mrb[0].mxu0
    %v7512 = vadd.f32 0.0, %v7511
    %v7513 = vpop.f32.mrb[0].mxu0
    %v7514 = vadd.f32 0.0, %v7513
    %7515 = vmatprep.mubr.bf16.mxu0 %v6683
    %7516 = vmatmul.mubr.bf16.gmra.mrb[0].mxu0 %v6682
    %v7517 = vpop.f32.mrb[0].mxu0
    %v7518 = vadd.f32 0.0, %v7517
    %v7519 = vpop.f32.mrb[0].mxu0
    %v7520 = vadd.f32 0.0, %v7519
    %v7521 = vpop.f32.mrb[0].mxu0
    %v7522 = vadd.f32 0.0, %v7521
    %v7523 = vpop.f32.mrb[0].mxu0
    %v7524 = vadd.f32 0.0, %v7523
    %7525 = vmatprep.mubr.bf16.mxu0 %v6685
    %7526 = vmatmul.mubr.bf16.gmra.mrb[0].mxu0 %v6684
    %v7527 = vpop.f32.mrb[0].mxu0
    %v7528 = vadd.f32 0.0, %v7527
    %v7529 = vpop.f32.mrb[0].mxu0
    %v7530 = vadd.f32 0.0, %v7529
    %v7531 = vpop.f32.mrb[0].mxu0
    %v7532 = vadd.f32 0.0, %v7531
    %v7533 = vpop.f32.mrb[0].mxu0
    %v7534 = vadd.f32 0.0, %v7533
    %7535 = vmatprep.mubr.bf16.mxu0 %v6687
    %7536 = vmatmul.mubr.bf16.gmra.mrb[0].mxu0 %v6686
    %v7537 = vpop.f32.mrb[0].mxu0
    %v7538 = vadd.f32 0.0, %v7537
    %v7539 = vpop.f32.mrb[0].mxu0
    %v7540 = vadd.f32 0.0, %v7539
    %v7541 = vpop.f32.mrb[0].mxu0
    %v7542 = vadd.f32 0.0, %v7541
    %v7543 = vpop.f32.mrb[0].mxu0
    %v7544 = vadd.f32 0.0, %v7543
    %7545 = vmatprep.mubr.bf16.mxu0 %v6689
    %7546 = vmatmul.mubr.bf16.gmra.mrb[0].mxu0 %v6688
    %v7547 = vpop.f32.mrb[0].mxu0
    %v7548 = vadd.f32 0.0, %v7547
    %v7549 = vpop.f32.mrb[0].mxu0
    %v7550 = vadd.f32 0.0, %v7549
    %v7551 = vpop.f32.mrb[0].mxu0
    %v7552 = vadd.f32 0.0, %v7551
    %v7553 = vpop.f32.mrb[0].mxu0
    %v7554 = vadd.f32 0.0, %v7553
    %7555 = vdwg.mxu0
    %v7556 = vpack.c.bf16 %v6922, %v6918
    %v7557 = vpack.c.bf16 %v6924, %v6920
    %v7558 = vpack.c.bf16 %v6932, %v6928
    %v7559 = vpack.c.bf16 %v6934, %v6930
    %v7560 = vpack.c.bf16 %v6942, %v6938
    %v7561 = vpack.c.bf16 %v6944, %v6940
    %v7562 = vpack.c.bf16 %v6952, %v6948
    %v7563 = vpack.c.bf16 %v6954, %v6950
    %v7564 = vpack.c.bf16 %v6962, %v6958
    %v7565 = vpack.c.bf16 %v6964, %v6960
    %v7566 = vpack.c.bf16 %v6972, %v6968
    %v7567 = vpack.c.bf16 %v6974, %v6970
    %v7568 = vpack.c.bf16 %v6982, %v6978
    %v7569 = vpack.c.bf16 %v6984, %v6980
    %v7570 = vpack.c.bf16 %v6992, %v6988
    %v7571 = vpack.c.bf16 %v6994, %v6990
    %v7572 = vpack.c.bf16 %v7002, %v6998
    %v7573 = vpack.c.bf16 %v7004, %v7000
    %v7574 = vpack.c.bf16 %v7012, %v7008
    %v7575 = vpack.c.bf16 %v7014, %v7010
    %v7576 = vpack.c.bf16 %v7022, %v7018
    %v7577 = vpack.c.bf16 %v7024, %v7020
    %v7578 = vpack.c.bf16 %v7032, %v7028
    %v7579 = vpack.c.bf16 %v7034, %v7030
    %v7580 = vpack.c.bf16 %v7042, %v7038
    %v7581 = vpack.c.bf16 %v7044, %v7040
    %v7582 = vpack.c.bf16 %v7052, %v7048
    %v7583 = vpack.c.bf16 %v7054, %v7050
    %v7584 = vpack.c.bf16 %v7062, %v7058
    %v7585 = vpack.c.bf16 %v7064, %v7060
    %v7586 = vpack.c.bf16 %v7072, %v7068
    %v7587 = vpack.c.bf16 %v7074, %v7070
    %v7588 = vpack.c.bf16 %v7082, %v7078
    %v7589 = vpack.c.bf16 %v7084, %v7080
    %v7590 = vpack.c.bf16 %v7092, %v7088
    %v7591 = vpack.c.bf16 %v7094, %v7090
    %v7592 = vpack.c.bf16 %v7102, %v7098
    %v7593 = vpack.c.bf16 %v7104, %v7100
    %v7594 = vpack.c.bf16 %v7112, %v7108
    %v7595 = vpack.c.bf16 %v7114, %v7110
    %v7596 = vpack.c.bf16 %v7122, %v7118
    %v7597 = vpack.c.bf16 %v7124, %v7120
    %v7598 = vpack.c.bf16 %v7132, %v7128
    %v7599 = vpack.c.bf16 %v7134, %v7130
    %v7600 = vpack.c.bf16 %v7142, %v7138
    %v7601 = vpack.c.bf16 %v7144, %v7140
    %v7602 = vpack.c.bf16 %v7152, %v7148
    %v7603 = vpack.c.bf16 %v7154, %v7150
    %v7604 = vpack.c.bf16 %v7162, %v7158
    %v7605 = vpack.c.bf16 %v7164, %v7160
    %v7606 = vpack.c.bf16 %v7172, %v7168
    %v7607 = vpack.c.bf16 %v7174, %v7170
    %v7608 = vpack.c.bf16 %v7182, %v7178
    %v7609 = vpack.c.bf16 %v7184, %v7180
    %v7610 = vpack.c.bf16 %v7192, %v7188
    %v7611 = vpack.c.bf16 %v7194, %v7190
    %v7612 = vpack.c.bf16 %v7202, %v7198
    %v7613 = vpack.c.bf16 %v7204, %v7200
    %v7614 = vpack.c.bf16 %v7212, %v7208
    %v7615 = vpack.c.bf16 %v7214, %v7210
    %v7616 = vpack.c.bf16 %v7222, %v7218
    %v7617 = vpack.c.bf16 %v7224, %v7220
    %v7618 = vpack.c.bf16 %v7232, %v7228
    %v7619 = vpack.c.bf16 %v7234, %v7230
    %v7620 = vpack.c.bf16 %v7242, %v7238
    %v7621 = vpack.c.bf16 %v7244, %v7240
    %v7622 = vpack.c.bf16 %v7252, %v7248
    %v7623 = vpack.c.bf16 %v7254, %v7250
    %v7624 = vpack.c.bf16 %v7262, %v7258
    %v7625 = vpack.c.bf16 %v7264, %v7260
    %v7626 = vpack.c.bf16 %v7272, %v7268
    %v7627 = vpack.c.bf16 %v7274, %v7270
    %v7628 = vpack.c.bf16 %v7282, %v7278
    %v7629 = vpack.c.bf16 %v7284, %v7280
    %v7630 = vpack.c.bf16 %v7292, %v7288
    %v7631 = vpack.c.bf16 %v7294, %v7290
    %v7632 = vpack.c.bf16 %v7302, %v7298
    %v7633 = vpack.c.bf16 %v7304, %v7300
    %v7634 = vpack.c.bf16 %v7312, %v7308
    %v7635 = vpack.c.bf16 %v7314, %v7310
    %v7636 = vpack.c.bf16 %v7322, %v7318
    %v7637 = vpack.c.bf16 %v7324, %v7320
    %v7638 = vpack.c.bf16 %v7332, %v7328
    %v7639 = vpack.c.bf16 %v7334, %v7330
    %v7640 = vpack.c.bf16 %v7342, %v7338
    %v7641 = vpack.c.bf16 %v7344, %v7340
    %v7642 = vpack.c.bf16 %v7352, %v7348
    %v7643 = vpack.c.bf16 %v7354, %v7350
    %v7644 = vpack.c.bf16 %v7362, %v7358
    %v7645 = vpack.c.bf16 %v7364, %v7360
    %v7646 = vpack.c.bf16 %v7372, %v7368
    %v7647 = vpack.c.bf16 %v7374, %v7370
    %v7648 = vpack.c.bf16 %v7382, %v7378
    %v7649 = vpack.c.bf16 %v7384, %v7380
    %v7650 = vpack.c.bf16 %v7392, %v7388
    %v7651 = vpack.c.bf16 %v7394, %v7390
    %v7652 = vpack.c.bf16 %v7402, %v7398
    %v7653 = vpack.c.bf16 %v7404, %v7400
    %v7654 = vpack.c.bf16 %v7412, %v7408
    %v7655 = vpack.c.bf16 %v7414, %v7410
    %v7656 = vpack.c.bf16 %v7422, %v7418
    %v7657 = vpack.c.bf16 %v7424, %v7420
    %v7658 = vpack.c.bf16 %v7432, %v7428
    %v7659 = vpack.c.bf16 %v7434, %v7430
    %v7660 = vpack.c.bf16 %v7442, %v7438
    %v7661 = vpack.c.bf16 %v7444, %v7440
    %v7662 = vpack.c.bf16 %v7452, %v7448
    %v7663 = vpack.c.bf16 %v7454, %v7450
    %v7664 = vpack.c.bf16 %v7462, %v7458
    %v7665 = vpack.c.bf16 %v7464, %v7460
    %v7666 = vpack.c.bf16 %v7472, %v7468
    %v7667 = vpack.c.bf16 %v7474, %v7470
    %v7668 = vpack.c.bf16 %v7482, %v7478
    %v7669 = vpack.c.bf16 %v7484, %v7480
    %v7670 = vpack.c.bf16 %v7492, %v7488
    %v7671 = vpack.c.bf16 %v7494, %v7490
    %v7672 = vpack.c.bf16 %v7502, %v7498
    %v7673 = vpack.c.bf16 %v7504, %v7500
    %v7674 = vpack.c.bf16 %v7512, %v7508
    %v7675 = vpack.c.bf16 %v7514, %v7510
    %v7676 = vpack.c.bf16 %v7522, %v7518
    %v7677 = vpack.c.bf16 %v7524, %v7520
    %v7678 = vpack.c.bf16 %v7532, %v7528
    %v7679 = vpack.c.bf16 %v7534, %v7530
    %v7680 = vpack.c.bf16 %v7542, %v7538
    %v7681 = vpack.c.bf16 %v7544, %v7540
    %v7682 = vpack.c.bf16 %v7552, %v7548
    %v7683 = vpack.c.bf16 %v7554, %v7550
    %s7684 = scalar_lea.vmem %s4, 8
    %v7685 = vld [vmem:[%s7684] sm:$0x3]
    %v7688 = vunpack.c.l.s4 1966171168
    %v7689 = vunpack.c.0.s8 %v7688
    %v7690 = vlaneseq
    %v7691 = vshrl.u32 %v7690, 7
    %v7692 = vsub.s32 %v7689, %v7691
    %v7693 = vrot.slane %v7685, %v7692
    %v7694 = vcombine.high %v7693, %v7693
    %v7696 = vunpack.c.l.s4 1966171168
    %v7697 = vunpack.c.0.s8 %v7696
    %v7698 = vlaneseq
    %v7699 = vshrl.u32 %v7698, 7
    %v7700 = vsub.s32 %v7697, %v7699
    %v7701 = vrot.slane %v7693, %v7700
    %v7703 = vunpack.c.l.s4 1966171168
    %v7704 = vunpack.c.0.s8 %v7703
    %v7705 = vlaneseq
    %v7706 = vshrl.u32 %v7705, 7
    %v7707 = vsub.s32 %v7704, %v7706
    %v7708 = vrot.slane %v7694, %v7707
    %v7710 = vpack.i.b16 %v7701, %v7701
    %v7712 = vlaneseq
    %v7713 = vshrl.u32 %v7712, 7
    %v7714 = vsub.s32 0, %v7713
    %v7715 = vrot.slane %v7710, %v7714
    %v7717 = vpack.i.b16 %v7708, %v7708
    %v7719 = vlaneseq
    %v7720 = vshrl.u32 %v7719, 7
    %v7721 = vsub.s32 0, %v7720
    %v7722 = vrot.slane %v7717, %v7721
    %v7723 = vadd.bf16 %v7556, %v7715
    %v7724 = vadd.bf16 %v7557, %v7722
    %v7725 = vadd.bf16 %v7558, %v7715
    %v7726 = vadd.bf16 %v7559, %v7722
    %v7727 = vadd.bf16 %v7560, %v7715
    %v7728 = vadd.bf16 %v7561, %v7722
    %v7729 = vadd.bf16 %v7562, %v7715
    %v7730 = vadd.bf16 %v7563, %v7722
    %v7731 = vadd.bf16 %v7564, %v7715
    %v7732 = vadd.bf16 %v7565, %v7722
    %v7733 = vadd.bf16 %v7566, %v7715
    %v7734 = vadd.bf16 %v7567, %v7722
    %v7735 = vadd.bf16 %v7568, %v7715
    %v7736 = vadd.bf16 %v7569, %v7722
    %v7737 = vadd.bf16 %v7570, %v7715
    %v7738 = vadd.bf16 %v7571, %v7722
    %v7739 = vadd.bf16 %v7572, %v7715
    %v7740 = vadd.bf16 %v7573, %v7722
    %v7741 = vadd.bf16 %v7574, %v7715
    %v7742 = vadd.bf16 %v7575, %v7722
    %v7743 = vadd.bf16 %v7576, %v7715
    %v7744 = vadd.bf16 %v7577, %v7722
    %v7745 = vadd.bf16 %v7578, %v7715
    %v7746 = vadd.bf16 %v7579, %v7722
    %v7747 = vadd.bf16 %v7580, %v7715
    %v7748 = vadd.bf16 %v7581, %v7722
    %v7749 = vadd.bf16 %v7582, %v7715
    %v7750 = vadd.bf16 %v7583, %v7722
    %v7751 = vadd.bf16 %v7584, %v7715
    %v7752 = vadd.bf16 %v7585, %v7722
    %v7753 = vadd.bf16 %v7586, %v7715
    %v7754 = vadd.bf16 %v7587, %v7722
    %v7755 = vadd.bf16 %v7588, %v7715
    %v7756 = vadd.bf16 %v7589, %v7722
    %v7757 = vadd.bf16 %v7590, %v7715
    %v7758 = vadd.bf16 %v7591, %v7722
    %v7759 = vadd.bf16 %v7592, %v7715
    %v7760 = vadd.bf16 %v7593, %v7722
    %v7761 = vadd.bf16 %v7594, %v7715
    %v7762 = vadd.bf16 %v7595, %v7722
    %v7763 = vadd.bf16 %v7596, %v7715
    %v7764 = vadd.bf16 %v7597, %v7722
    %v7765 = vadd.bf16 %v7598, %v7715
    %v7766 = vadd.bf16 %v7599, %v7722
    %v7767 = vadd.bf16 %v7600, %v7715
    %v7768 = vadd.bf16 %v7601, %v7722
    %v7769 = vadd.bf16 %v7602, %v7715
    %v7770 = vadd.bf16 %v7603, %v7722
    %v7771 = vadd.bf16 %v7604, %v7715
    %v7772 = vadd.bf16 %v7605, %v7722
    %v7773 = vadd.bf16 %v7606, %v7715
    %v7774 = vadd.bf16 %v7607, %v7722
    %v7775 = vadd.bf16 %v7608, %v7715
    %v7776 = vadd.bf16 %v7609, %v7722
    %v7777 = vadd.bf16 %v7610, %v7715
    %v7778 = vadd.bf16 %v7611, %v7722
    %v7779 = vadd.bf16 %v7612, %v7715
    %v7780 = vadd.bf16 %v7613, %v7722
    %v7781 = vadd.bf16 %v7614, %v7715
    %v7782 = vadd.bf16 %v7615, %v7722
    %v7783 = vadd.bf16 %v7616, %v7715
    %v7784 = vadd.bf16 %v7617, %v7722
    %v7785 = vadd.bf16 %v7618, %v7715
    %v7786 = vadd.bf16 %v7619, %v7722
    %v7787 = vadd.bf16 %v7620, %v7715
    %v7788 = vadd.bf16 %v7621, %v7722
    %v7789 = vadd.bf16 %v7622, %v7715
    %v7790 = vadd.bf16 %v7623, %v7722
    %v7791 = vadd.bf16 %v7624, %v7715
    %v7792 = vadd.bf16 %v7625, %v7722
    %v7793 = vadd.bf16 %v7626, %v7715
    %v7794 = vadd.bf16 %v7627, %v7722
    %v7795 = vadd.bf16 %v7628, %v7715
    %v7796 = vadd.bf16 %v7629, %v7722
    %v7797 = vadd.bf16 %v7630, %v7715
    %v7798 = vadd.bf16 %v7631, %v7722
    %v7799 = vadd.bf16 %v7632, %v7715
    %v7800 = vadd.bf16 %v7633, %v7722
    %v7801 = vadd.bf16 %v7634, %v7715
    %v7802 = vadd.bf16 %v7635, %v7722
    %v7803 = vadd.bf16 %v7636, %v7715
    %v7804 = vadd.bf16 %v7637, %v7722
    %v7805 = vadd.bf16 %v7638, %v7715
    %v7806 = vadd.bf16 %v7639, %v7722
    %v7807 = vadd.bf16 %v7640, %v7715
    %v7808 = vadd.bf16 %v7641, %v7722
    %v7809 = vadd.bf16 %v7642, %v7715
    %v7810 = vadd.bf16 %v7643, %v7722
    %v7811 = vadd.bf16 %v7644, %v7715
    %v7812 = vadd.bf16 %v7645, %v7722
    %v7813 = vadd.bf16 %v7646, %v7715
    %v7814 = vadd.bf16 %v7647, %v7722
    %v7815 = vadd.bf16 %v7648, %v7715
    %v7816 = vadd.bf16 %v7649, %v7722
    %v7817 = vadd.bf16 %v7650, %v7715
    %v7818 = vadd.bf16 %v7651, %v7722
    %v7819 = vadd.bf16 %v7652, %v7715
    %v7820 = vadd.bf16 %v7653, %v7722
    %v7821 = vadd.bf16 %v7654, %v7715
    %v7822 = vadd.bf16 %v7655, %v7722
    %v7823 = vadd.bf16 %v7656, %v7715
    %v7824 = vadd.bf16 %v7657, %v7722
    %v7825 = vadd.bf16 %v7658, %v7715
    %v7826 = vadd.bf16 %v7659, %v7722
    %v7827 = vadd.bf16 %v7660, %v7715
    %v7828 = vadd.bf16 %v7661, %v7722
    %v7829 = vadd.bf16 %v7662, %v7715
    %v7830 = vadd.bf16 %v7663, %v7722
    %v7831 = vadd.bf16 %v7664, %v7715
    %v7832 = vadd.bf16 %v7665, %v7722
    %v7833 = vadd.bf16 %v7666, %v7715
    %v7834 = vadd.bf16 %v7667, %v7722
    %v7835 = vadd.bf16 %v7668, %v7715
    %v7836 = vadd.bf16 %v7669, %v7722
    %v7837 = vadd.bf16 %v7670, %v7715
    %v7838 = vadd.bf16 %v7671, %v7722
    %v7839 = vadd.bf16 %v7672, %v7715
    %v7840 = vadd.bf16 %v7673, %v7722
    %v7841 = vadd.bf16 %v7674, %v7715
    %v7842 = vadd.bf16 %v7675, %v7722
    %v7843 = vadd.bf16 %v7676, %v7715
    %v7844 = vadd.bf16 %v7677, %v7722
    %v7845 = vadd.bf16 %v7678, %v7715
    %v7846 = vadd.bf16 %v7679, %v7722
    %v7847 = vadd.bf16 %v7680, %v7715
    %v7848 = vadd.bf16 %v7681, %v7722
    %v7849 = vadd.bf16 %v7682, %v7715
    %v7850 = vadd.bf16 %v7683, %v7722
    %v7851 = vmax.bf16 %v7723, 0
    %v7852 = vmax.bf16 %v7724, 0
    %v7853 = vmax.bf16 %v7725, 0
    %v7854 = vmax.bf16 %v7726, 0
    %v7855 = vmax.bf16 %v7727, 0
    %v7856 = vmax.bf16 %v7728, 0
    %v7857 = vmax.bf16 %v7729, 0
    %v7858 = vmax.bf16 %v7730, 0
    %v7859 = vmax.bf16 %v7731, 0
    %v7860 = vmax.bf16 %v7732, 0
    %v7861 = vmax.bf16 %v7733, 0
    %v7862 = vmax.bf16 %v7734, 0
    %v7863 = vmax.bf16 %v7735, 0
    %v7864 = vmax.bf16 %v7736, 0
    %v7865 = vmax.bf16 %v7737, 0
    %v7866 = vmax.bf16 %v7738, 0
    %v7867 = vmax.bf16 %v7739, 0
    %v7868 = vmax.bf16 %v7740, 0
    %v7869 = vmax.bf16 %v7741, 0
    %v7870 = vmax.bf16 %v7742, 0
    %v7871 = vmax.bf16 %v7743, 0
    %v7872 = vmax.bf16 %v7744, 0
    %v7873 = vmax.bf16 %v7745, 0
    %v7874 = vmax.bf16 %v7746, 0
    %v7875 = vmax.bf16 %v7747, 0
    %v7876 = vmax.bf16 %v7748, 0
    %v7877 = vmax.bf16 %v7749, 0
    %v7878 = vmax.bf16 %v7750, 0
    %v7879 = vmax.bf16 %v7751, 0
    %v7880 = vmax.bf16 %v7752, 0
    %v7881 = vmax.bf16 %v7753, 0
    %v7882 = vmax.bf16 %v7754, 0
    %v7883 = vmax.bf16 %v7755, 0
    %v7884 = vmax.bf16 %v7756, 0
    %v7885 = vmax.bf16 %v7757, 0
    %v7886 = vmax.bf16 %v7758, 0
    %v7887 = vmax.bf16 %v7759, 0
    %v7888 = vmax.bf16 %v7760, 0
    %v7889 = vmax.bf16 %v7761, 0
    %v7890 = vmax.bf16 %v7762, 0
    %v7891 = vmax.bf16 %v7763, 0
    %v7892 = vmax.bf16 %v7764, 0
    %v7893 = vmax.bf16 %v7765, 0
    %v7894 = vmax.bf16 %v7766, 0
    %v7895 = vmax.bf16 %v7767, 0
    %v7896 = vmax.bf16 %v7768, 0
    %v7897 = vmax.bf16 %v7769, 0
    %v7898 = vmax.bf16 %v7770, 0
    %v7899 = vmax.bf16 %v7771, 0
    %v7900 = vmax.bf16 %v7772, 0
    %v7901 = vmax.bf16 %v7773, 0
    %v7902 = vmax.bf16 %v7774, 0
    %v7903 = vmax.bf16 %v7775, 0
    %v7904 = vmax.bf16 %v7776, 0
    %v7905 = vmax.bf16 %v7777, 0
    %v7906 = vmax.bf16 %v7778, 0
    %v7907 = vmax.bf16 %v7779, 0
    %v7908 = vmax.bf16 %v7780, 0
    %v7909 = vmax.bf16 %v7781, 0
    %v7910 = vmax.bf16 %v7782, 0
    %v7911 = vmax.bf16 %v7783, 0
    %v7912 = vmax.bf16 %v7784, 0
    %v7913 = vmax.bf16 %v7785, 0
    %v7914 = vmax.bf16 %v7786, 0
    %v7915 = vmax.bf16 %v7787, 0
    %v7916 = vmax.bf16 %v7788, 0
    %v7917 = vmax.bf16 %v7789, 0
    %v7918 = vmax.bf16 %v7790, 0
    %v7919 = vmax.bf16 %v7791, 0
    %v7920 = vmax.bf16 %v7792, 0
    %v7921 = vmax.bf16 %v7793, 0
    %v7922 = vmax.bf16 %v7794, 0
    %v7923 = vmax.bf16 %v7795, 0
    %v7924 = vmax.bf16 %v7796, 0
    %v7925 = vmax.bf16 %v7797, 0
    %v7926 = vmax.bf16 %v7798, 0
    %v7927 = vmax.bf16 %v7799, 0
    %v7928 = vmax.bf16 %v7800, 0
    %v7929 = vmax.bf16 %v7801, 0
    %v7930 = vmax.bf16 %v7802, 0
    %v7931 = vmax.bf16 %v7803, 0
    %v7932 = vmax.bf16 %v7804, 0
    %v7933 = vmax.bf16 %v7805, 0
    %v7934 = vmax.bf16 %v7806, 0
    %v7935 = vmax.bf16 %v7807, 0
    %v7936 = vmax.bf16 %v7808, 0
    %v7937 = vmax.bf16 %v7809, 0
    %v7938 = vmax.bf16 %v7810, 0
    %v7939 = vmax.bf16 %v7811, 0
    %v7940 = vmax.bf16 %v7812, 0
    %v7941 = vmax.bf16 %v7813, 0
    %v7942 = vmax.bf16 %v7814, 0
    %v7943 = vmax.bf16 %v7815, 0
    %v7944 = vmax.bf16 %v7816, 0
    %v7945 = vmax.bf16 %v7817, 0
    %v7946 = vmax.bf16 %v7818, 0
    %v7947 = vmax.bf16 %v7819, 0
    %v7948 = vmax.bf16 %v7820, 0
    %v7949 = vmax.bf16 %v7821, 0
    %v7950 = vmax.bf16 %v7822, 0
    %v7951 = vmax.bf16 %v7823, 0
    %v7952 = vmax.bf16 %v7824, 0
    %v7953 = vmax.bf16 %v7825, 0
    %v7954 = vmax.bf16 %v7826, 0
    %v7955 = vmax.bf16 %v7827, 0
    %v7956 = vmax.bf16 %v7828, 0
    %v7957 = vmax.bf16 %v7829, 0
    %v7958 = vmax.bf16 %v7830, 0
    %v7959 = vmax.bf16 %v7831, 0
    %v7960 = vmax.bf16 %v7832, 0
    %v7961 = vmax.bf16 %v7833, 0
    %v7962 = vmax.bf16 %v7834, 0
    %v7963 = vmax.bf16 %v7835, 0
    %v7964 = vmax.bf16 %v7836, 0
    %v7965 = vmax.bf16 %v7837, 0
    %v7966 = vmax.bf16 %v7838, 0
    %v7967 = vmax.bf16 %v7839, 0
    %v7968 = vmax.bf16 %v7840, 0
    %v7969 = vmax.bf16 %v7841, 0
    %v7970 = vmax.bf16 %v7842, 0
    %v7971 = vmax.bf16 %v7843, 0
    %v7972 = vmax.bf16 %v7844, 0
    %v7973 = vmax.bf16 %v7845, 0
    %v7974 = vmax.bf16 %v7846, 0
    %v7975 = vmax.bf16 %v7847, 0
    %v7976 = vmax.bf16 %v7848, 0
    %v7977 = vmax.bf16 %v7849, 0
    %v7978 = vmax.bf16 %v7850, 0
    %s7979 = scalar_lea.vmem [#allocation3], 1280
    %v7980 = vld [vmem:[%s7979] sm:$0xff]
    %v7981 = vld [vmem:[%s7979 + $0x8] sm:$0xff]
    %v7982 = vld [vmem:[%s7979 + $0x10] sm:$0xff]
    %v7983 = vld [vmem:[%s7979 + $0x18] sm:$0xff]
    %v7984 = vld [vmem:[%s7979 + $0x20] sm:$0xff]
    %v7985 = vld [vmem:[%s7979 + $0x28] sm:$0xff]
    %v7986 = vld [vmem:[%s7979 + $0x30] sm:$0xff]
    %v7987 = vld [vmem:[%s7979 + $0x38] sm:$0xff]
    %v7988 = vld [vmem:[%s7979 + $0x40] sm:$0xff]
    %v7989 = vld [vmem:[%s7979 + $0x48] sm:$0xff]
    %v7990 = vld [vmem:[%s7979 + $0x50] sm:$0xff]
    %v7991 = vld [vmem:[%s7979 + $0x58] sm:$0xff]
    %v7992 = vld [vmem:[%s7979 + $0x60] sm:$0xff]
    %v7993 = vld [vmem:[%s7979 + $0x68] sm:$0xff]
    %v7994 = vld [vmem:[%s7979 + $0x70] sm:$0xff]
    %v7995 = vld [vmem:[%s7979 + $0x78] sm:$0xff]
    %v7996 = vld [vmem:[%s7979 + $0x80] sm:$0xff]
    %v7997 = vld [vmem:[%s7979 + $0x88] sm:$0xff]
    %v7998 = vld [vmem:[%s7979 + $0x90] sm:$0xff]
    %v7999 = vld [vmem:[%s7979 + $0x98] sm:$0xff]
    %v8000 = vld [vmem:[%s7979 + $0xa0] sm:$0xff]
    %v8001 = vld [vmem:[%s7979 + $0xa8] sm:$0xff]
    %v8002 = vld [vmem:[%s7979 + $0xb0] sm:$0xff]
    %v8003 = vld [vmem:[%s7979 + $0xb8] sm:$0xff]
    %v8004 = vld [vmem:[%s7979 + $0xc0] sm:$0xff]
    %v8005 = vld [vmem:[%s7979 + $0xc8] sm:$0xff]
    %v8006 = vld [vmem:[%s7979 + $0xd0] sm:$0xff]
    %v8007 = vld [vmem:[%s7979 + $0xd8] sm:$0xff]
    %v8008 = vld [vmem:[%s7979 + $0xe0] sm:$0xff]
    %v8009 = vld [vmem:[%s7979 + $0xe8] sm:$0xff]
    %v8010 = vld [vmem:[%s7979 + $0xf0] sm:$0xff]
    %v8011 = vld [vmem:[%s7979 + $0xf8] sm:$0xff]
    %v8044 = vunpack.c.l.b16 %v7980
    %v8045 = vunpack.c.h.b16 %v7980
    %v8046 = vunpack.c.l.b16 %v7981
    %v8047 = vunpack.c.h.b16 %v7981
    %v8048 = vunpack.c.l.b16 %v7982
    %v8049 = vunpack.c.h.b16 %v7982
    %v8050 = vunpack.c.l.b16 %v7983
    %v8051 = vunpack.c.h.b16 %v7983
    %v8052 = vunpack.c.l.b16 %v7984
    %v8053 = vunpack.c.h.b16 %v7984
    %v8054 = vunpack.c.l.b16 %v7985
    %v8055 = vunpack.c.h.b16 %v7985
    %v8056 = vunpack.c.l.b16 %v7986
    %v8057 = vunpack.c.h.b16 %v7986
    %v8058 = vunpack.c.l.b16 %v7987
    %v8059 = vunpack.c.h.b16 %v7987
    %v8060 = vunpack.c.l.b16 %v7988
    %v8061 = vunpack.c.h.b16 %v7988
    %v8062 = vunpack.c.l.b16 %v7989
    %v8063 = vunpack.c.h.b16 %v7989
    %v8064 = vunpack.c.l.b16 %v7990
    %v8065 = vunpack.c.h.b16 %v7990
    %v8066 = vunpack.c.l.b16 %v7991
    %v8067 = vunpack.c.h.b16 %v7991
    %v8068 = vunpack.c.l.b16 %v7992
    %v8069 = vunpack.c.h.b16 %v7992
    %v8070 = vunpack.c.l.b16 %v7993
    %v8071 = vunpack.c.h.b16 %v7993
    %v8072 = vunpack.c.l.b16 %v7994
    %v8073 = vunpack.c.h.b16 %v7994
    %v8074 = vunpack.c.l.b16 %v7995
    %v8075 = vunpack.c.h.b16 %v7995
    %v8076 = vunpack.c.l.b16 %v7996
    %v8077 = vunpack.c.h.b16 %v7996
    %v8078 = vunpack.c.l.b16 %v7997
    %v8079 = vunpack.c.h.b16 %v7997
    %v8080 = vunpack.c.l.b16 %v7998
    %v8081 = vunpack.c.h.b16 %v7998
    %v8082 = vunpack.c.l.b16 %v7999
    %v8083 = vunpack.c.h.b16 %v7999
    %v8084 = vunpack.c.l.b16 %v8000
    %v8085 = vunpack.c.h.b16 %v8000
    %v8086 = vunpack.c.l.b16 %v8001
    %v8087 = vunpack.c.h.b16 %v8001
    %v8088 = vunpack.c.l.b16 %v8002
    %v8089 = vunpack.c.h.b16 %v8002
    %v8090 = vunpack.c.l.b16 %v8003
    %v8091 = vunpack.c.h.b16 %v8003
    %v8092 = vunpack.c.l.b16 %v8004
    %v8093 = vunpack.c.h.b16 %v8004
    %v8094 = vunpack.c.l.b16 %v8005
    %v8095 = vunpack.c.h.b16 %v8005
    %v8096 = vunpack.c.l.b16 %v8006
    %v8097 = vunpack.c.h.b16 %v8006
    %v8098 = vunpack.c.l.b16 %v8007
    %v8099 = vunpack.c.h.b16 %v8007
    %v8100 = vunpack.c.l.b16 %v8008
    %v8101 = vunpack.c.h.b16 %v8008
    %v8102 = vunpack.c.l.b16 %v8009
    %v8103 = vunpack.c.h.b16 %v8009
    %v8104 = vunpack.c.l.b16 %v8010
    %v8105 = vunpack.c.h.b16 %v8010
    %v8106 = vunpack.c.l.b16 %v8011
    %v8107 = vunpack.c.h.b16 %v8011
    %v8108 = vpack.c.b16 %v8046, %v8044
    %v8109 = vpack.c.b16 %v8047, %v8045
    %v8110 = vpack.c.b16 %v8050, %v8048
    %v8111 = vpack.c.b16 %v8051, %v8049
    %v8112 = vpack.c.b16 %v8054, %v8052
    %v8113 = vpack.c.b16 %v8055, %v8053
    %v8114 = vpack.c.b16 %v8058, %v8056
    %v8115 = vpack.c.b16 %v8059, %v8057
    %v8116 = vpack.c.b16 %v8062, %v8060
    %v8117 = vpack.c.b16 %v8063, %v8061
    %v8118 = vpack.c.b16 %v8066, %v8064
    %v8119 = vpack.c.b16 %v8067, %v8065
    %v8120 = vpack.c.b16 %v8070, %v8068
    %v8121 = vpack.c.b16 %v8071, %v8069
    %v8122 = vpack.c.b16 %v8074, %v8072
    %v8123 = vpack.c.b16 %v8075, %v8073
    %v8124 = vpack.c.b16 %v8078, %v8076
    %v8125 = vpack.c.b16 %v8079, %v8077
    %v8126 = vpack.c.b16 %v8082, %v8080
    %v8127 = vpack.c.b16 %v8083, %v8081
    %v8128 = vpack.c.b16 %v8086, %v8084
    %v8129 = vpack.c.b16 %v8087, %v8085
    %v8130 = vpack.c.b16 %v8090, %v8088
    %v8131 = vpack.c.b16 %v8091, %v8089
    %v8132 = vpack.c.b16 %v8094, %v8092
    %v8133 = vpack.c.b16 %v8095, %v8093
    %v8134 = vpack.c.b16 %v8098, %v8096
    %v8135 = vpack.c.b16 %v8099, %v8097
    %v8136 = vpack.c.b16 %v8102, %v8100
    %v8137 = vpack.c.b16 %v8103, %v8101
    %v8138 = vpack.c.b16 %v8106, %v8104
    %v8139 = vpack.c.b16 %v8107, %v8105
    %8172 = vmatprep.subr.bf16.mxu0 %v8109
    %8173 = vmatpush1.bf16.msra.mxu0 %v8108
    %8174 = vmatprep.subr.bf16.mxu0 %v8111
    %8175 = vmatpush1.bf16.msra.mxu0 %v8110
    %8176 = vmatprep.subr.bf16.mxu0 %v8113
    %8177 = vmatpush1.bf16.msra.mxu0 %v8112
    %8178 = vmatprep.subr.bf16.mxu0 %v8115
    %8179 = vmatpush1.bf16.msra.mxu0 %v8114
    %8180 = vmatprep.subr.bf16.mxu0 %v8117
    %8181 = vmatpush1.bf16.msra.mxu0 %v8116
    %8182 = vmatprep.subr.bf16.mxu0 %v8119
    %8183 = vmatpush1.bf16.msra.mxu0 %v8118
    %8184 = vmatprep.subr.bf16.mxu0 %v8121
    %8185 = vmatpush1.bf16.msra.mxu0 %v8120
    %8186 = vmatprep.subr.bf16.mxu0 %v8123
    %8187 = vmatpush1.bf16.msra.mxu0 %v8122
    %8188 = vmatprep.subr.bf16.mxu0 %v8125
    %8189 = vmatpush1.bf16.msra.mxu0 %v8124
    %8190 = vmatprep.subr.bf16.mxu0 %v8127
    %8191 = vmatpush1.bf16.msra.mxu0 %v8126
    %8192 = vmatprep.subr.bf16.mxu0 %v8129
    %8193 = vmatpush1.bf16.msra.mxu0 %v8128
    %8194 = vmatprep.subr.bf16.mxu0 %v8131
    %8195 = vmatpush1.bf16.msra.mxu0 %v8130
    %8196 = vmatprep.subr.bf16.mxu0 %v8133
    %8197 = vmatpush1.bf16.msra.mxu0 %v8132
    %8198 = vmatprep.subr.bf16.mxu0 %v8135
    %8199 = vmatpush1.bf16.msra.mxu0 %v8134
    %8200 = vmatprep.subr.bf16.mxu0 %v8137
    %8201 = vmatpush1.bf16.msra.mxu0 %v8136
    %8202 = vmatprep.subr.bf16.mxu0 %v8139
    %8203 = vmatpush1.bf16.msra.mxu0 %v8138
    %8204 = vmatprep.mubr.bf16.mxu0 %v7852
    %8205 = vmatmul.mubr.bf16.gmra.mrb[0].mxu0 %v7851
    %v8206 = vpop.f32.mrb[0].mxu0
    %v8207 = vadd.f32 0.0, %v8206
    %v8208 = vpop.f32.mrb[0].mxu0
    %v8209 = vadd.f32 0.0, %v8208
    %v8210 = vpop.f32.mrb[0].mxu0
    %v8211 = vadd.f32 0.0, %v8210
    %v8212 = vpop.f32.mrb[0].mxu0
    %v8213 = vadd.f32 0.0, %v8212
    %8214 = vmatprep.mubr.bf16.mxu0 %v7854
    %8215 = vmatmul.mubr.bf16.gmra.mrb[0].mxu0 %v7853
    %v8216 = vpop.f32.mrb[0].mxu0
    %v8217 = vadd.f32 0.0, %v8216
    %v8218 = vpop.f32.mrb[0].mxu0
    %v8219 = vadd.f32 0.0, %v8218
    %v8220 = vpop.f32.mrb[0].mxu0
    %v8221 = vadd.f32 0.0, %v8220
    %v8222 = vpop.f32.mrb[0].mxu0
    %v8223 = vadd.f32 0.0, %v8222
    %8224 = vmatprep.mubr.bf16.mxu0 %v7856
    %8225 = vmatmul.mubr.bf16.gmra.mrb[0].mxu0 %v7855
    %v8226 = vpop.f32.mrb[0].mxu0
    %v8227 = vadd.f32 0.0, %v8226
    %v8228 = vpop.f32.mrb[0].mxu0
    %v8229 = vadd.f32 0.0, %v8228
    %v8230 = vpop.f32.mrb[0].mxu0
    %v8231 = vadd.f32 0.0, %v8230
    %v8232 = vpop.f32.mrb[0].mxu0
    %v8233 = vadd.f32 0.0, %v8232
    %8234 = vmatprep.mubr.bf16.mxu0 %v7858
    %8235 = vmatmul.mubr.bf16.gmra.mrb[0].mxu0 %v7857
    %v8236 = vpop.f32.mrb[0].mxu0
    %v8237 = vadd.f32 0.0, %v8236
    %v8238 = vpop.f32.mrb[0].mxu0
    %v8239 = vadd.f32 0.0, %v8238
    %v8240 = vpop.f32.mrb[0].mxu0
    %v8241 = vadd.f32 0.0, %v8240
    %v8242 = vpop.f32.mrb[0].mxu0
    %v8243 = vadd.f32 0.0, %v8242
    %8244 = vmatprep.mubr.bf16.mxu0 %v7860
    %8245 = vmatmul.mubr.bf16.gmra.mrb[0].mxu0 %v7859
    %v8246 = vpop.f32.mrb[0].mxu0
    %v8247 = vadd.f32 0.0, %v8246
    %v8248 = vpop.f32.mrb[0].mxu0
    %v8249 = vadd.f32 0.0, %v8248
    %v8250 = vpop.f32.mrb[0].mxu0
    %v8251 = vadd.f32 0.0, %v8250
    %v8252 = vpop.f32.mrb[0].mxu0
    %v8253 = vadd.f32 0.0, %v8252
    %8254 = vmatprep.mubr.bf16.mxu0 %v7862
    %8255 = vmatmul.mubr.bf16.gmra.mrb[0].mxu0 %v7861
    %v8256 = vpop.f32.mrb[0].mxu0
    %v8257 = vadd.f32 0.0, %v8256
    %v8258 = vpop.f32.mrb[0].mxu0
    %v8259 = vadd.f32 0.0, %v8258
    %v8260 = vpop.f32.mrb[0].mxu0
    %v8261 = vadd.f32 0.0, %v8260
    %v8262 = vpop.f32.mrb[0].mxu0
    %v8263 = vadd.f32 0.0, %v8262
    %8264 = vmatprep.mubr.bf16.mxu0 %v7864
    %8265 = vmatmul.mubr.bf16.gmra.mrb[0].mxu0 %v7863
    %v8266 = vpop.f32.mrb[0].mxu0
    %v8267 = vadd.f32 0.0, %v8266
    %v8268 = vpop.f32.mrb[0].mxu0
    %v8269 = vadd.f32 0.0, %v8268
    %v8270 = vpop.f32.mrb[0].mxu0
    %v8271 = vadd.f32 0.0, %v8270
    %v8272 = vpop.f32.mrb[0].mxu0
    %v8273 = vadd.f32 0.0, %v8272
    %8274 = vmatprep.mubr.bf16.mxu0 %v7866
    %8275 = vmatmul.mubr.bf16.gmra.mrb[0].mxu0 %v7865
    %v8276 = vpop.f32.mrb[0].mxu0
    %v8277 = vadd.f32 0.0, %v8276
    %v8278 = vpop.f32.mrb[0].mxu0
    %v8279 = vadd.f32 0.0, %v8278
    %v8280 = vpop.f32.mrb[0].mxu0
    %v8281 = vadd.f32 0.0, %v8280
    %v8282 = vpop.f32.mrb[0].mxu0
    %v8283 = vadd.f32 0.0, %v8282
    %8284 = vmatprep.mubr.bf16.mxu0 %v7868
    %8285 = vmatmul.mubr.bf16.gmra.mrb[0].mxu0 %v7867
    %v8286 = vpop.f32.mrb[0].mxu0
    %v8287 = vadd.f32 0.0, %v8286
    %v8288 = vpop.f32.mrb[0].mxu0
    %v8289 = vadd.f32 0.0, %v8288
    %v8290 = vpop.f32.mrb[0].mxu0
    %v8291 = vadd.f32 0.0, %v8290
    %v8292 = vpop.f32.mrb[0].mxu0
    %v8293 = vadd.f32 0.0, %v8292
    %8294 = vmatprep.mubr.bf16.mxu0 %v7870
    %8295 = vmatmul.mubr.bf16.gmra.mrb[0].mxu0 %v7869
    %v8296 = vpop.f32.mrb[0].mxu0
    %v8297 = vadd.f32 0.0, %v8296
    %v8298 = vpop.f32.mrb[0].mxu0
    %v8299 = vadd.f32 0.0, %v8298
    %v8300 = vpop.f32.mrb[0].mxu0
    %v8301 = vadd.f32 0.0, %v8300
    %v8302 = vpop.f32.mrb[0].mxu0
    %v8303 = vadd.f32 0.0, %v8302
    %8304 = vmatprep.mubr.bf16.mxu0 %v7872
    %8305 = vmatmul.mubr.bf16.gmra.mrb[0].mxu0 %v7871
    %v8306 = vpop.f32.mrb[0].mxu0
    %v8307 = vadd.f32 0.0, %v8306
    %v8308 = vpop.f32.mrb[0].mxu0
    %v8309 = vadd.f32 0.0, %v8308
    %v8310 = vpop.f32.mrb[0].mxu0
    %v8311 = vadd.f32 0.0, %v8310
    %v8312 = vpop.f32.mrb[0].mxu0
    %v8313 = vadd.f32 0.0, %v8312
    %8314 = vmatprep.mubr.bf16.mxu0 %v7874
    %8315 = vmatmul.mubr.bf16.gmra.mrb[0].mxu0 %v7873
    %v8316 = vpop.f32.mrb[0].mxu0
    %v8317 = vadd.f32 0.0, %v8316
    %v8318 = vpop.f32.mrb[0].mxu0
    %v8319 = vadd.f32 0.0, %v8318
    %v8320 = vpop.f32.mrb[0].mxu0
    %v8321 = vadd.f32 0.0, %v8320
    %v8322 = vpop.f32.mrb[0].mxu0
    %v8323 = vadd.f32 0.0, %v8322
    %8324 = vmatprep.mubr.bf16.mxu0 %v7876
    %8325 = vmatmul.mubr.bf16.gmra.mrb[0].mxu0 %v7875
    %v8326 = vpop.f32.mrb[0].mxu0
    %v8327 = vadd.f32 0.0, %v8326
    %v8328 = vpop.f32.mrb[0].mxu0
    %v8329 = vadd.f32 0.0, %v8328
    %v8330 = vpop.f32.mrb[0].mxu0
    %v8331 = vadd.f32 0.0, %v8330
    %v8332 = vpop.f32.mrb[0].mxu0
    %v8333 = vadd.f32 0.0, %v8332
    %8334 = vmatprep.mubr.bf16.mxu0 %v7878
    %8335 = vmatmul.mubr.bf16.gmra.mrb[0].mxu0 %v7877
    %v8336 = vpop.f32.mrb[0].mxu0
    %v8337 = vadd.f32 0.0, %v8336
    %v8338 = vpop.f32.mrb[0].mxu0
    %v8339 = vadd.f32 0.0, %v8338
    %v8340 = vpop.f32.mrb[0].mxu0
    %v8341 = vadd.f32 0.0, %v8340
    %v8342 = vpop.f32.mrb[0].mxu0
    %v8343 = vadd.f32 0.0, %v8342
    %8344 = vmatprep.mubr.bf16.mxu0 %v7880
    %8345 = vmatmul.mubr.bf16.gmra.mrb[0].mxu0 %v7879
    %v8346 = vpop.f32.mrb[0].mxu0
    %v8347 = vadd.f32 0.0, %v8346
    %v8348 = vpop.f32.mrb[0].mxu0
    %v8349 = vadd.f32 0.0, %v8348
    %v8350 = vpop.f32.mrb[0].mxu0
    %v8351 = vadd.f32 0.0, %v8350
    %v8352 = vpop.f32.mrb[0].mxu0
    %v8353 = vadd.f32 0.0, %v8352
    %8354 = vmatprep.mubr.bf16.mxu0 %v7882
    %8355 = vmatmul.mubr.bf16.gmra.mrb[0].mxu0 %v7881
    %v8356 = vpop.f32.mrb[0].mxu0
    %v8357 = vadd.f32 0.0, %v8356
    %v8358 = vpop.f32.mrb[0].mxu0
    %v8359 = vadd.f32 0.0, %v8358
    %v8360 = vpop.f32.mrb[0].mxu0
    %v8361 = vadd.f32 0.0, %v8360
    %v8362 = vpop.f32.mrb[0].mxu0
    %v8363 = vadd.f32 0.0, %v8362
    %8364 = vmatprep.mubr.bf16.mxu0 %v7884
    %8365 = vmatmul.mubr.bf16.gmra.mrb[0].mxu0 %v7883
    %v8366 = vpop.f32.mrb[0].mxu0
    %v8367 = vadd.f32 0.0, %v8366
    %v8368 = vpop.f32.mrb[0].mxu0
    %v8369 = vadd.f32 0.0, %v8368
    %v8370 = vpop.f32.mrb[0].mxu0
    %v8371 = vadd.f32 0.0, %v8370
    %v8372 = vpop.f32.mrb[0].mxu0
    %v8373 = vadd.f32 0.0, %v8372
    %8374 = vmatprep.mubr.bf16.mxu0 %v7886
    %8375 = vmatmul.mubr.bf16.gmra.mrb[0].mxu0 %v7885
    %v8376 = vpop.f32.mrb[0].mxu0
    %v8377 = vadd.f32 0.0, %v8376
    %v8378 = vpop.f32.mrb[0].mxu0
    %v8379 = vadd.f32 0.0, %v8378
    %v8380 = vpop.f32.mrb[0].mxu0
    %v8381 = vadd.f32 0.0, %v8380
    %v8382 = vpop.f32.mrb[0].mxu0
    %v8383 = vadd.f32 0.0, %v8382
    %8384 = vmatprep.mubr.bf16.mxu0 %v7888
    %8385 = vmatmul.mubr.bf16.gmra.mrb[0].mxu0 %v7887
    %v8386 = vpop.f32.mrb[0].mxu0
    %v8387 = vadd.f32 0.0, %v8386
    %v8388 = vpop.f32.mrb[0].mxu0
    %v8389 = vadd.f32 0.0, %v8388
    %v8390 = vpop.f32.mrb[0].mxu0
    %v8391 = vadd.f32 0.0, %v8390
    %v8392 = vpop.f32.mrb[0].mxu0
    %v8393 = vadd.f32 0.0, %v8392
    %8394 = vmatprep.mubr.bf16.mxu0 %v7890
    %8395 = vmatmul.mubr.bf16.gmra.mrb[0].mxu0 %v7889
    %v8396 = vpop.f32.mrb[0].mxu0
    %v8397 = vadd.f32 0.0, %v8396
    %v8398 = vpop.f32.mrb[0].mxu0
    %v8399 = vadd.f32 0.0, %v8398
    %v8400 = vpop.f32.mrb[0].mxu0
    %v8401 = vadd.f32 0.0, %v8400
    %v8402 = vpop.f32.mrb[0].mxu0
    %v8403 = vadd.f32 0.0, %v8402
    %8404 = vmatprep.mubr.bf16.mxu0 %v7892
    %8405 = vmatmul.mubr.bf16.gmra.mrb[0].mxu0 %v7891
    %v8406 = vpop.f32.mrb[0].mxu0
    %v8407 = vadd.f32 0.0, %v8406
    %v8408 = vpop.f32.mrb[0].mxu0
    %v8409 = vadd.f32 0.0, %v8408
    %v8410 = vpop.f32.mrb[0].mxu0
    %v8411 = vadd.f32 0.0, %v8410
    %v8412 = vpop.f32.mrb[0].mxu0
    %v8413 = vadd.f32 0.0, %v8412
    %8414 = vmatprep.mubr.bf16.mxu0 %v7894
    %8415 = vmatmul.mubr.bf16.gmra.mrb[0].mxu0 %v7893
    %v8416 = vpop.f32.mrb[0].mxu0
    %v8417 = vadd.f32 0.0, %v8416
    %v8418 = vpop.f32.mrb[0].mxu0
    %v8419 = vadd.f32 0.0, %v8418
    %v8420 = vpop.f32.mrb[0].mxu0
    %v8421 = vadd.f32 0.0, %v8420
    %v8422 = vpop.f32.mrb[0].mxu0
    %v8423 = vadd.f32 0.0, %v8422
    %8424 = vmatprep.mubr.bf16.mxu0 %v7896
    %8425 = vmatmul.mubr.bf16.gmra.mrb[0].mxu0 %v7895
    %v8426 = vpop.f32.mrb[0].mxu0
    %v8427 = vadd.f32 0.0, %v8426
    %v8428 = vpop.f32.mrb[0].mxu0
    %v8429 = vadd.f32 0.0, %v8428
    %v8430 = vpop.f32.mrb[0].mxu0
    %v8431 = vadd.f32 0.0, %v8430
    %v8432 = vpop.f32.mrb[0].mxu0
    %v8433 = vadd.f32 0.0, %v8432
    %8434 = vmatprep.mubr.bf16.mxu0 %v7898
    %8435 = vmatmul.mubr.bf16.gmra.mrb[0].mxu0 %v7897
    %v8436 = vpop.f32.mrb[0].mxu0
    %v8437 = vadd.f32 0.0, %v8436
    %v8438 = vpop.f32.mrb[0].mxu0
    %v8439 = vadd.f32 0.0, %v8438
    %v8440 = vpop.f32.mrb[0].mxu0
    %v8441 = vadd.f32 0.0, %v8440
    %v8442 = vpop.f32.mrb[0].mxu0
    %v8443 = vadd.f32 0.0, %v8442
    %8444 = vmatprep.mubr.bf16.mxu0 %v7900
    %8445 = vmatmul.mubr.bf16.gmra.mrb[0].mxu0 %v7899
    %v8446 = vpop.f32.mrb[0].mxu0
    %v8447 = vadd.f32 0.0, %v8446
    %v8448 = vpop.f32.mrb[0].mxu0
    %v8449 = vadd.f32 0.0, %v8448
    %v8450 = vpop.f32.mrb[0].mxu0
    %v8451 = vadd.f32 0.0, %v8450
    %v8452 = vpop.f32.mrb[0].mxu0
    %v8453 = vadd.f32 0.0, %v8452
    %8454 = vmatprep.mubr.bf16.mxu0 %v7902
    %8455 = vmatmul.mubr.bf16.gmra.mrb[0].mxu0 %v7901
    %v8456 = vpop.f32.mrb[0].mxu0
    %v8457 = vadd.f32 0.0, %v8456
    %v8458 = vpop.f32.mrb[0].mxu0
    %v8459 = vadd.f32 0.0, %v8458
    %v8460 = vpop.f32.mrb[0].mxu0
    %v8461 = vadd.f32 0.0, %v8460
    %v8462 = vpop.f32.mrb[0].mxu0
    %v8463 = vadd.f32 0.0, %v8462
    %8464 = vmatprep.mubr.bf16.mxu0 %v7904
    %8465 = vmatmul.mubr.bf16.gmra.mrb[0].mxu0 %v7903
    %v8466 = vpop.f32.mrb[0].mxu0
    %v8467 = vadd.f32 0.0, %v8466
    %v8468 = vpop.f32.mrb[0].mxu0
    %v8469 = vadd.f32 0.0, %v8468
    %v8470 = vpop.f32.mrb[0].mxu0
    %v8471 = vadd.f32 0.0, %v8470
    %v8472 = vpop.f32.mrb[0].mxu0
    %v8473 = vadd.f32 0.0, %v8472
    %8474 = vmatprep.mubr.bf16.mxu0 %v7906
    %8475 = vmatmul.mubr.bf16.gmra.mrb[0].mxu0 %v7905
    %v8476 = vpop.f32.mrb[0].mxu0
    %v8477 = vadd.f32 0.0, %v8476
    %v8478 = vpop.f32.mrb[0].mxu0
    %v8479 = vadd.f32 0.0, %v8478
    %v8480 = vpop.f32.mrb[0].mxu0
    %v8481 = vadd.f32 0.0, %v8480
    %v8482 = vpop.f32.mrb[0].mxu0
    %v8483 = vadd.f32 0.0, %v8482
    %8484 = vmatprep.mubr.bf16.mxu0 %v7908
    %8485 = vmatmul.mubr.bf16.gmra.mrb[0].mxu0 %v7907
    %v8486 = vpop.f32.mrb[0].mxu0
    %v8487 = vadd.f32 0.0, %v8486
    %v8488 = vpop.f32.mrb[0].mxu0
    %v8489 = vadd.f32 0.0, %v8488
    %v8490 = vpop.f32.mrb[0].mxu0
    %v8491 = vadd.f32 0.0, %v8490
    %v8492 = vpop.f32.mrb[0].mxu0
    %v8493 = vadd.f32 0.0, %v8492
    %8494 = vmatprep.mubr.bf16.mxu0 %v7910
    %8495 = vmatmul.mubr.bf16.gmra.mrb[0].mxu0 %v7909
    %v8496 = vpop.f32.mrb[0].mxu0
    %v8497 = vadd.f32 0.0, %v8496
    %v8498 = vpop.f32.mrb[0].mxu0
    %v8499 = vadd.f32 0.0, %v8498
    %v8500 = vpop.f32.mrb[0].mxu0
    %v8501 = vadd.f32 0.0, %v8500
    %v8502 = vpop.f32.mrb[0].mxu0
    %v8503 = vadd.f32 0.0, %v8502
    %8504 = vmatprep.mubr.bf16.mxu0 %v7912
    %8505 = vmatmul.mubr.bf16.gmra.mrb[0].mxu0 %v7911
    %v8506 = vpop.f32.mrb[0].mxu0
    %v8507 = vadd.f32 0.0, %v8506
    %v8508 = vpop.f32.mrb[0].mxu0
    %v8509 = vadd.f32 0.0, %v8508
    %v8510 = vpop.f32.mrb[0].mxu0
    %v8511 = vadd.f32 0.0, %v8510
    %v8512 = vpop.f32.mrb[0].mxu0
    %v8513 = vadd.f32 0.0, %v8512
    %8514 = vmatprep.mubr.bf16.mxu0 %v7914
    %8515 = vmatmul.mubr.bf16.gmra.mrb[0].mxu0 %v7913
    %v8516 = vpop.f32.mrb[0].mxu0
    %v8517 = vadd.f32 0.0, %v8516
    %v8518 = vpop.f32.mrb[0].mxu0
    %v8519 = vadd.f32 0.0, %v8518
    %v8520 = vpop.f32.mrb[0].mxu0
    %v8521 = vadd.f32 0.0, %v8520
    %v8522 = vpop.f32.mrb[0].mxu0
    %v8523 = vadd.f32 0.0, %v8522
    %8524 = vmatprep.mubr.bf16.mxu0 %v7916
    %8525 = vmatmul.mubr.bf16.gmra.mrb[0].mxu0 %v7915
    %v8526 = vpop.f32.mrb[0].mxu0
    %v8527 = vadd.f32 0.0, %v8526
    %v8528 = vpop.f32.mrb[0].mxu0
    %v8529 = vadd.f32 0.0, %v8528
    %v8530 = vpop.f32.mrb[0].mxu0
    %v8531 = vadd.f32 0.0, %v8530
    %v8532 = vpop.f32.mrb[0].mxu0
    %v8533 = vadd.f32 0.0, %v8532
    %8534 = vmatprep.mubr.bf16.mxu0 %v7918
    %8535 = vmatmul.mubr.bf16.gmra.mrb[0].mxu0 %v7917
    %v8536 = vpop.f32.mrb[0].mxu0
    %v8537 = vadd.f32 0.0, %v8536
    %v8538 = vpop.f32.mrb[0].mxu0
    %v8539 = vadd.f32 0.0, %v8538
    %v8540 = vpop.f32.mrb[0].mxu0
    %v8541 = vadd.f32 0.0, %v8540
    %v8542 = vpop.f32.mrb[0].mxu0
    %v8543 = vadd.f32 0.0, %v8542
    %8544 = vmatprep.mubr.bf16.mxu0 %v7920
    %8545 = vmatmul.mubr.bf16.gmra.mrb[0].mxu0 %v7919
    %v8546 = vpop.f32.mrb[0].mxu0
    %v8547 = vadd.f32 0.0, %v8546
    %v8548 = vpop.f32.mrb[0].mxu0
    %v8549 = vadd.f32 0.0, %v8548
    %v8550 = vpop.f32.mrb[0].mxu0
    %v8551 = vadd.f32 0.0, %v8550
    %v8552 = vpop.f32.mrb[0].mxu0
    %v8553 = vadd.f32 0.0, %v8552
    %8554 = vmatprep.mubr.bf16.mxu0 %v7922
    %8555 = vmatmul.mubr.bf16.gmra.mrb[0].mxu0 %v7921
    %v8556 = vpop.f32.mrb[0].mxu0
    %v8557 = vadd.f32 0.0, %v8556
    %v8558 = vpop.f32.mrb[0].mxu0
    %v8559 = vadd.f32 0.0, %v8558
    %v8560 = vpop.f32.mrb[0].mxu0
    %v8561 = vadd.f32 0.0, %v8560
    %v8562 = vpop.f32.mrb[0].mxu0
    %v8563 = vadd.f32 0.0, %v8562
    %8564 = vmatprep.mubr.bf16.mxu0 %v7924
    %8565 = vmatmul.mubr.bf16.gmra.mrb[0].mxu0 %v7923
    %v8566 = vpop.f32.mrb[0].mxu0
    %v8567 = vadd.f32 0.0, %v8566
    %v8568 = vpop.f32.mrb[0].mxu0
    %v8569 = vadd.f32 0.0, %v8568
    %v8570 = vpop.f32.mrb[0].mxu0
    %v8571 = vadd.f32 0.0, %v8570
    %v8572 = vpop.f32.mrb[0].mxu0
    %v8573 = vadd.f32 0.0, %v8572
    %8574 = vmatprep.mubr.bf16.mxu0 %v7926
    %8575 = vmatmul.mubr.bf16.gmra.mrb[0].mxu0 %v7925
    %v8576 = vpop.f32.mrb[0].mxu0
    %v8577 = vadd.f32 0.0, %v8576
    %v8578 = vpop.f32.mrb[0].mxu0
    %v8579 = vadd.f32 0.0, %v8578
    %v8580 = vpop.f32.mrb[0].mxu0
    %v8581 = vadd.f32 0.0, %v8580
    %v8582 = vpop.f32.mrb[0].mxu0
    %v8583 = vadd.f32 0.0, %v8582
    %8584 = vmatprep.mubr.bf16.mxu0 %v7928
    %8585 = vmatmul.mubr.bf16.gmra.mrb[0].mxu0 %v7927
    %v8586 = vpop.f32.mrb[0].mxu0
    %v8587 = vadd.f32 0.0, %v8586
    %v8588 = vpop.f32.mrb[0].mxu0
    %v8589 = vadd.f32 0.0, %v8588
    %v8590 = vpop.f32.mrb[0].mxu0
    %v8591 = vadd.f32 0.0, %v8590
    %v8592 = vpop.f32.mrb[0].mxu0
    %v8593 = vadd.f32 0.0, %v8592
    %8594 = vmatprep.mubr.bf16.mxu0 %v7930
    %8595 = vmatmul.mubr.bf16.gmra.mrb[0].mxu0 %v7929
    %v8596 = vpop.f32.mrb[0].mxu0
    %v8597 = vadd.f32 0.0, %v8596
    %v8598 = vpop.f32.mrb[0].mxu0
    %v8599 = vadd.f32 0.0, %v8598
    %v8600 = vpop.f32.mrb[0].mxu0
    %v8601 = vadd.f32 0.0, %v8600
    %v8602 = vpop.f32.mrb[0].mxu0
    %v8603 = vadd.f32 0.0, %v8602
    %8604 = vmatprep.mubr.bf16.mxu0 %v7932
    %8605 = vmatmul.mubr.bf16.gmra.mrb[0].mxu0 %v7931
    %v8606 = vpop.f32.mrb[0].mxu0
    %v8607 = vadd.f32 0.0, %v8606
    %v8608 = vpop.f32.mrb[0].mxu0
    %v8609 = vadd.f32 0.0, %v8608
    %v8610 = vpop.f32.mrb[0].mxu0
    %v8611 = vadd.f32 0.0, %v8610
    %v8612 = vpop.f32.mrb[0].mxu0
    %v8613 = vadd.f32 0.0, %v8612
    %8614 = vmatprep.mubr.bf16.mxu0 %v7934
    %8615 = vmatmul.mubr.bf16.gmra.mrb[0].mxu0 %v7933
    %v8616 = vpop.f32.mrb[0].mxu0
    %v8617 = vadd.f32 0.0, %v8616
    %v8618 = vpop.f32.mrb[0].mxu0
    %v8619 = vadd.f32 0.0, %v8618
    %v8620 = vpop.f32.mrb[0].mxu0
    %v8621 = vadd.f32 0.0, %v8620
    %v8622 = vpop.f32.mrb[0].mxu0
    %v8623 = vadd.f32 0.0, %v8622
    %8624 = vmatprep.mubr.bf16.mxu0 %v7936
    %8625 = vmatmul.mubr.bf16.gmra.mrb[0].mxu0 %v7935
    %v8626 = vpop.f32.mrb[0].mxu0
    %v8627 = vadd.f32 0.0, %v8626
    %v8628 = vpop.f32.mrb[0].mxu0
    %v8629 = vadd.f32 0.0, %v8628
    %v8630 = vpop.f32.mrb[0].mxu0
    %v8631 = vadd.f32 0.0, %v8630
    %v8632 = vpop.f32.mrb[0].mxu0
    %v8633 = vadd.f32 0.0, %v8632
    %8634 = vmatprep.mubr.bf16.mxu0 %v7938
    %8635 = vmatmul.mubr.bf16.gmra.mrb[0].mxu0 %v7937
    %v8636 = vpop.f32.mrb[0].mxu0
    %v8637 = vadd.f32 0.0, %v8636
    %v8638 = vpop.f32.mrb[0].mxu0
    %v8639 = vadd.f32 0.0, %v8638
    %v8640 = vpop.f32.mrb[0].mxu0
    %v8641 = vadd.f32 0.0, %v8640
    %v8642 = vpop.f32.mrb[0].mxu0
    %v8643 = vadd.f32 0.0, %v8642
    %8644 = vmatprep.mubr.bf16.mxu0 %v7940
    %8645 = vmatmul.mubr.bf16.gmra.mrb[0].mxu0 %v7939
    %v8646 = vpop.f32.mrb[0].mxu0
    %v8647 = vadd.f32 0.0, %v8646
    %v8648 = vpop.f32.mrb[0].mxu0
    %v8649 = vadd.f32 0.0, %v8648
    %v8650 = vpop.f32.mrb[0].mxu0
    %v8651 = vadd.f32 0.0, %v8650
    %v8652 = vpop.f32.mrb[0].mxu0
    %v8653 = vadd.f32 0.0, %v8652
    %8654 = vmatprep.mubr.bf16.mxu0 %v7942
    %8655 = vmatmul.mubr.bf16.gmra.mrb[0].mxu0 %v7941
    %v8656 = vpop.f32.mrb[0].mxu0
    %v8657 = vadd.f32 0.0, %v8656
    %v8658 = vpop.f32.mrb[0].mxu0
    %v8659 = vadd.f32 0.0, %v8658
    %v8660 = vpop.f32.mrb[0].mxu0
    %v8661 = vadd.f32 0.0, %v8660
    %v8662 = vpop.f32.mrb[0].mxu0
    %v8663 = vadd.f32 0.0, %v8662
    %8664 = vmatprep.mubr.bf16.mxu0 %v7944
    %8665 = vmatmul.mubr.bf16.gmra.mrb[0].mxu0 %v7943
    %v8666 = vpop.f32.mrb[0].mxu0
    %v8667 = vadd.f32 0.0, %v8666
    %v8668 = vpop.f32.mrb[0].mxu0
    %v8669 = vadd.f32 0.0, %v8668
    %v8670 = vpop.f32.mrb[0].mxu0
    %v8671 = vadd.f32 0.0, %v8670
    %v8672 = vpop.f32.mrb[0].mxu0
    %v8673 = vadd.f32 0.0, %v8672
    %8674 = vmatprep.mubr.bf16.mxu0 %v7946
    %8675 = vmatmul.mubr.bf16.gmra.mrb[0].mxu0 %v7945
    %v8676 = vpop.f32.mrb[0].mxu0
    %v8677 = vadd.f32 0.0, %v8676
    %v8678 = vpop.f32.mrb[0].mxu0
    %v8679 = vadd.f32 0.0, %v8678
    %v8680 = vpop.f32.mrb[0].mxu0
    %v8681 = vadd.f32 0.0, %v8680
    %v8682 = vpop.f32.mrb[0].mxu0
    %v8683 = vadd.f32 0.0, %v8682
    %8684 = vmatprep.mubr.bf16.mxu0 %v7948
    %8685 = vmatmul.mubr.bf16.gmra.mrb[0].mxu0 %v7947
    %v8686 = vpop.f32.mrb[0].mxu0
    %v8687 = vadd.f32 0.0, %v8686
    %v8688 = vpop.f32.mrb[0].mxu0
    %v8689 = vadd.f32 0.0, %v8688
    %v8690 = vpop.f32.mrb[0].mxu0
    %v8691 = vadd.f32 0.0, %v8690
    %v8692 = vpop.f32.mrb[0].mxu0
    %v8693 = vadd.f32 0.0, %v8692
    %8694 = vmatprep.mubr.bf16.mxu0 %v7950
    %8695 = vmatmul.mubr.bf16.gmra.mrb[0].mxu0 %v7949
    %v8696 = vpop.f32.mrb[0].mxu0
    %v8697 = vadd.f32 0.0, %v8696
    %v8698 = vpop.f32.mrb[0].mxu0
    %v8699 = vadd.f32 0.0, %v8698
    %v8700 = vpop.f32.mrb[0].mxu0
    %v8701 = vadd.f32 0.0, %v8700
    %v8702 = vpop.f32.mrb[0].mxu0
    %v8703 = vadd.f32 0.0, %v8702
    %8704 = vmatprep.mubr.bf16.mxu0 %v7952
    %8705 = vmatmul.mubr.bf16.gmra.mrb[0].mxu0 %v7951
    %v8706 = vpop.f32.mrb[0].mxu0
    %v8707 = vadd.f32 0.0, %v8706
    %v8708 = vpop.f32.mrb[0].mxu0
    %v8709 = vadd.f32 0.0, %v8708
    %v8710 = vpop.f32.mrb[0].mxu0
    %v8711 = vadd.f32 0.0, %v8710
    %v8712 = vpop.f32.mrb[0].mxu0
    %v8713 = vadd.f32 0.0, %v8712
    %8714 = vmatprep.mubr.bf16.mxu0 %v7954
    %8715 = vmatmul.mubr.bf16.gmra.mrb[0].mxu0 %v7953
    %v8716 = vpop.f32.mrb[0].mxu0
    %v8717 = vadd.f32 0.0, %v8716
    %v8718 = vpop.f32.mrb[0].mxu0
    %v8719 = vadd.f32 0.0, %v8718
    %v8720 = vpop.f32.mrb[0].mxu0
    %v8721 = vadd.f32 0.0, %v8720
    %v8722 = vpop.f32.mrb[0].mxu0
    %v8723 = vadd.f32 0.0, %v8722
    %8724 = vmatprep.mubr.bf16.mxu0 %v7956
    %8725 = vmatmul.mubr.bf16.gmra.mrb[0].mxu0 %v7955
    %v8726 = vpop.f32.mrb[0].mxu0
    %v8727 = vadd.f32 0.0, %v8726
    %v8728 = vpop.f32.mrb[0].mxu0
    %v8729 = vadd.f32 0.0, %v8728
    %v8730 = vpop.f32.mrb[0].mxu0
    %v8731 = vadd.f32 0.0, %v8730
    %v8732 = vpop.f32.mrb[0].mxu0
    %v8733 = vadd.f32 0.0, %v8732
    %8734 = vmatprep.mubr.bf16.mxu0 %v7958
    %8735 = vmatmul.mubr.bf16.gmra.mrb[0].mxu0 %v7957
    %v8736 = vpop.f32.mrb[0].mxu0
    %v8737 = vadd.f32 0.0, %v8736
    %v8738 = vpop.f32.mrb[0].mxu0
    %v8739 = vadd.f32 0.0, %v8738
    %v8740 = vpop.f32.mrb[0].mxu0
    %v8741 = vadd.f32 0.0, %v8740
    %v8742 = vpop.f32.mrb[0].mxu0
    %v8743 = vadd.f32 0.0, %v8742
    %8744 = vmatprep.mubr.bf16.mxu0 %v7960
    %8745 = vmatmul.mubr.bf16.gmra.mrb[0].mxu0 %v7959
    %v8746 = vpop.f32.mrb[0].mxu0
    %v8747 = vadd.f32 0.0, %v8746
    %v8748 = vpop.f32.mrb[0].mxu0
    %v8749 = vadd.f32 0.0, %v8748
    %v8750 = vpop.f32.mrb[0].mxu0
    %v8751 = vadd.f32 0.0, %v8750
    %v8752 = vpop.f32.mrb[0].mxu0
    %v8753 = vadd.f32 0.0, %v8752
    %8754 = vmatprep.mubr.bf16.mxu0 %v7962
    %8755 = vmatmul.mubr.bf16.gmra.mrb[0].mxu0 %v7961
    %v8756 = vpop.f32.mrb[0].mxu0
    %v8757 = vadd.f32 0.0, %v8756
    %v8758 = vpop.f32.mrb[0].mxu0
    %v8759 = vadd.f32 0.0, %v8758
    %v8760 = vpop.f32.mrb[0].mxu0
    %v8761 = vadd.f32 0.0, %v8760
    %v8762 = vpop.f32.mrb[0].mxu0
    %v8763 = vadd.f32 0.0, %v8762
    %8764 = vmatprep.mubr.bf16.mxu0 %v7964
    %8765 = vmatmul.mubr.bf16.gmra.mrb[0].mxu0 %v7963
    %v8766 = vpop.f32.mrb[0].mxu0
    %v8767 = vadd.f32 0.0, %v8766
    %v8768 = vpop.f32.mrb[0].mxu0
    %v8769 = vadd.f32 0.0, %v8768
    %v8770 = vpop.f32.mrb[0].mxu0
    %v8771 = vadd.f32 0.0, %v8770
    %v8772 = vpop.f32.mrb[0].mxu0
    %v8773 = vadd.f32 0.0, %v8772
    %8774 = vmatprep.mubr.bf16.mxu0 %v7966
    %8775 = vmatmul.mubr.bf16.gmra.mrb[0].mxu0 %v7965
    %v8776 = vpop.f32.mrb[0].mxu0
    %v8777 = vadd.f32 0.0, %v8776
    %v8778 = vpop.f32.mrb[0].mxu0
    %v8779 = vadd.f32 0.0, %v8778
    %v8780 = vpop.f32.mrb[0].mxu0
    %v8781 = vadd.f32 0.0, %v8780
    %v8782 = vpop.f32.mrb[0].mxu0
    %v8783 = vadd.f32 0.0, %v8782
    %8784 = vmatprep.mubr.bf16.mxu0 %v7968
    %8785 = vmatmul.mubr.bf16.gmra.mrb[0].mxu0 %v7967
    %v8786 = vpop.f32.mrb[0].mxu0
    %v8787 = vadd.f32 0.0, %v8786
    %v8788 = vpop.f32.mrb[0].mxu0
    %v8789 = vadd.f32 0.0, %v8788
    %v8790 = vpop.f32.mrb[0].mxu0
    %v8791 = vadd.f32 0.0, %v8790
    %v8792 = vpop.f32.mrb[0].mxu0
    %v8793 = vadd.f32 0.0, %v8792
    %8794 = vmatprep.mubr.bf16.mxu0 %v7970
    %8795 = vmatmul.mubr.bf16.gmra.mrb[0].mxu0 %v7969
    %v8796 = vpop.f32.mrb[0].mxu0
    %v8797 = vadd.f32 0.0, %v8796
    %v8798 = vpop.f32.mrb[0].mxu0
    %v8799 = vadd.f32 0.0, %v8798
    %v8800 = vpop.f32.mrb[0].mxu0
    %v8801 = vadd.f32 0.0, %v8800
    %v8802 = vpop.f32.mrb[0].mxu0
    %v8803 = vadd.f32 0.0, %v8802
    %8804 = vmatprep.mubr.bf16.mxu0 %v7972
    %8805 = vmatmul.mubr.bf16.gmra.mrb[0].mxu0 %v7971
    %v8806 = vpop.f32.mrb[0].mxu0
    %v8807 = vadd.f32 0.0, %v8806
    %v8808 = vpop.f32.mrb[0].mxu0
    %v8809 = vadd.f32 0.0, %v8808
    %v8810 = vpop.f32.mrb[0].mxu0
    %v8811 = vadd.f32 0.0, %v8810
    %v8812 = vpop.f32.mrb[0].mxu0
    %v8813 = vadd.f32 0.0, %v8812
    %8814 = vmatprep.mubr.bf16.mxu0 %v7974
    %8815 = vmatmul.mubr.bf16.gmra.mrb[0].mxu0 %v7973
    %v8816 = vpop.f32.mrb[0].mxu0
    %v8817 = vadd.f32 0.0, %v8816
    %v8818 = vpop.f32.mrb[0].mxu0
    %v8819 = vadd.f32 0.0, %v8818
    %v8820 = vpop.f32.mrb[0].mxu0
    %v8821 = vadd.f32 0.0, %v8820
    %v8822 = vpop.f32.mrb[0].mxu0
    %v8823 = vadd.f32 0.0, %v8822
    %8824 = vmatprep.mubr.bf16.mxu0 %v7976
    %8825 = vmatmul.mubr.bf16.gmra.mrb[0].mxu0 %v7975
    %v8826 = vpop.f32.mrb[0].mxu0
    %v8827 = vadd.f32 0.0, %v8826
    %v8828 = vpop.f32.mrb[0].mxu0
    %v8829 = vadd.f32 0.0, %v8828
    %v8830 = vpop.f32.mrb[0].mxu0
    %v8831 = vadd.f32 0.0, %v8830
    %v8832 = vpop.f32.mrb[0].mxu0
    %v8833 = vadd.f32 0.0, %v8832
    %8834 = vmatprep.mubr.bf16.mxu0 %v7978
    %8835 = vmatmul.mubr.bf16.gmra.mrb[0].mxu0 %v7977
    %v8836 = vpop.f32.mrb[0].mxu0
    %v8837 = vadd.f32 0.0, %v8836
    %v8838 = vpop.f32.mrb[0].mxu0
    %v8839 = vadd.f32 0.0, %v8838
    %v8840 = vpop.f32.mrb[0].mxu0
    %v8841 = vadd.f32 0.0, %v8840
    %v8842 = vpop.f32.mrb[0].mxu0
    %v8843 = vadd.f32 0.0, %v8842
    %8844 = vdwg.mxu0
    %v8845 = vpack.c.bf16 %v8211, %v8207
    %v8846 = vpack.c.bf16 %v8213, %v8209
    %v8847 = vpack.c.bf16 %v8221, %v8217
    %v8848 = vpack.c.bf16 %v8223, %v8219
    %v8849 = vpack.c.bf16 %v8231, %v8227
    %v8850 = vpack.c.bf16 %v8233, %v8229
    %v8851 = vpack.c.bf16 %v8241, %v8237
    %v8852 = vpack.c.bf16 %v8243, %v8239
    %v8853 = vpack.c.bf16 %v8251, %v8247
    %v8854 = vpack.c.bf16 %v8253, %v8249
    %v8855 = vpack.c.bf16 %v8261, %v8257
    %v8856 = vpack.c.bf16 %v8263, %v8259
    %v8857 = vpack.c.bf16 %v8271, %v8267
    %v8858 = vpack.c.bf16 %v8273, %v8269
    %v8859 = vpack.c.bf16 %v8281, %v8277
    %v8860 = vpack.c.bf16 %v8283, %v8279
    %v8861 = vpack.c.bf16 %v8291, %v8287
    %v8862 = vpack.c.bf16 %v8293, %v8289
    %v8863 = vpack.c.bf16 %v8301, %v8297
    %v8864 = vpack.c.bf16 %v8303, %v8299
    %v8865 = vpack.c.bf16 %v8311, %v8307
    %v8866 = vpack.c.bf16 %v8313, %v8309
    %v8867 = vpack.c.bf16 %v8321, %v8317
    %v8868 = vpack.c.bf16 %v8323, %v8319
    %v8869 = vpack.c.bf16 %v8331, %v8327
    %v8870 = vpack.c.bf16 %v8333, %v8329
    %v8871 = vpack.c.bf16 %v8341, %v8337
    %v8872 = vpack.c.bf16 %v8343, %v8339
    %v8873 = vpack.c.bf16 %v8351, %v8347
    %v8874 = vpack.c.bf16 %v8353, %v8349
    %v8875 = vpack.c.bf16 %v8361, %v8357
    %v8876 = vpack.c.bf16 %v8363, %v8359
    %v8877 = vpack.c.bf16 %v8371, %v8367
    %v8878 = vpack.c.bf16 %v8373, %v8369
    %v8879 = vpack.c.bf16 %v8381, %v8377
    %v8880 = vpack.c.bf16 %v8383, %v8379
    %v8881 = vpack.c.bf16 %v8391, %v8387
    %v8882 = vpack.c.bf16 %v8393, %v8389
    %v8883 = vpack.c.bf16 %v8401, %v8397
    %v8884 = vpack.c.bf16 %v8403, %v8399
    %v8885 = vpack.c.bf16 %v8411, %v8407
    %v8886 = vpack.c.bf16 %v8413, %v8409
    %v8887 = vpack.c.bf16 %v8421, %v8417
    %v8888 = vpack.c.bf16 %v8423, %v8419
    %v8889 = vpack.c.bf16 %v8431, %v8427
    %v8890 = vpack.c.bf16 %v8433, %v8429
    %v8891 = vpack.c.bf16 %v8441, %v8437
    %v8892 = vpack.c.bf16 %v8443, %v8439
    %v8893 = vpack.c.bf16 %v8451, %v8447
    %v8894 = vpack.c.bf16 %v8453, %v8449
    %v8895 = vpack.c.bf16 %v8461, %v8457
    %v8896 = vpack.c.bf16 %v8463, %v8459
    %v8897 = vpack.c.bf16 %v8471, %v8467
    %v8898 = vpack.c.bf16 %v8473, %v8469
    %v8899 = vpack.c.bf16 %v8481, %v8477
    %v8900 = vpack.c.bf16 %v8483, %v8479
    %v8901 = vpack.c.bf16 %v8491, %v8487
    %v8902 = vpack.c.bf16 %v8493, %v8489
    %v8903 = vpack.c.bf16 %v8501, %v8497
    %v8904 = vpack.c.bf16 %v8503, %v8499
    %v8905 = vpack.c.bf16 %v8511, %v8507
    %v8906 = vpack.c.bf16 %v8513, %v8509
    %v8907 = vpack.c.bf16 %v8521, %v8517
    %v8908 = vpack.c.bf16 %v8523, %v8519
    %v8909 = vpack.c.bf16 %v8531, %v8527
    %v8910 = vpack.c.bf16 %v8533, %v8529
    %v8911 = vpack.c.bf16 %v8541, %v8537
    %v8912 = vpack.c.bf16 %v8543, %v8539
    %v8913 = vpack.c.bf16 %v8551, %v8547
    %v8914 = vpack.c.bf16 %v8553, %v8549
    %v8915 = vpack.c.bf16 %v8561, %v8557
    %v8916 = vpack.c.bf16 %v8563, %v8559
    %v8917 = vpack.c.bf16 %v8571, %v8567
    %v8918 = vpack.c.bf16 %v8573, %v8569
    %v8919 = vpack.c.bf16 %v8581, %v8577
    %v8920 = vpack.c.bf16 %v8583, %v8579
    %v8921 = vpack.c.bf16 %v8591, %v8587
    %v8922 = vpack.c.bf16 %v8593, %v8589
    %v8923 = vpack.c.bf16 %v8601, %v8597
    %v8924 = vpack.c.bf16 %v8603, %v8599
    %v8925 = vpack.c.bf16 %v8611, %v8607
    %v8926 = vpack.c.bf16 %v8613, %v8609
    %v8927 = vpack.c.bf16 %v8621, %v8617
    %v8928 = vpack.c.bf16 %v8623, %v8619
    %v8929 = vpack.c.bf16 %v8631, %v8627
    %v8930 = vpack.c.bf16 %v8633, %v8629
    %v8931 = vpack.c.bf16 %v8641, %v8637
    %v8932 = vpack.c.bf16 %v8643, %v8639
    %v8933 = vpack.c.bf16 %v8651, %v8647
    %v8934 = vpack.c.bf16 %v8653, %v8649
    %v8935 = vpack.c.bf16 %v8661, %v8657
    %v8936 = vpack.c.bf16 %v8663, %v8659
    %v8937 = vpack.c.bf16 %v8671, %v8667
    %v8938 = vpack.c.bf16 %v8673, %v8669
    %v8939 = vpack.c.bf16 %v8681, %v8677
    %v8940 = vpack.c.bf16 %v8683, %v8679
    %v8941 = vpack.c.bf16 %v8691, %v8687
    %v8942 = vpack.c.bf16 %v8693, %v8689
    %v8943 = vpack.c.bf16 %v8701, %v8697
    %v8944 = vpack.c.bf16 %v8703, %v8699
    %v8945 = vpack.c.bf16 %v8711, %v8707
    %v8946 = vpack.c.bf16 %v8713, %v8709
    %v8947 = vpack.c.bf16 %v8721, %v8717
    %v8948 = vpack.c.bf16 %v8723, %v8719
    %v8949 = vpack.c.bf16 %v8731, %v8727
    %v8950 = vpack.c.bf16 %v8733, %v8729
    %v8951 = vpack.c.bf16 %v8741, %v8737
    %v8952 = vpack.c.bf16 %v8743, %v8739
    %v8953 = vpack.c.bf16 %v8751, %v8747
    %v8954 = vpack.c.bf16 %v8753, %v8749
    %v8955 = vpack.c.bf16 %v8761, %v8757
    %v8956 = vpack.c.bf16 %v8763, %v8759
    %v8957 = vpack.c.bf16 %v8771, %v8767
    %v8958 = vpack.c.bf16 %v8773, %v8769
    %v8959 = vpack.c.bf16 %v8781, %v8777
    %v8960 = vpack.c.bf16 %v8783, %v8779
    %v8961 = vpack.c.bf16 %v8791, %v8787
    %v8962 = vpack.c.bf16 %v8793, %v8789
    %v8963 = vpack.c.bf16 %v8801, %v8797
    %v8964 = vpack.c.bf16 %v8803, %v8799
    %v8965 = vpack.c.bf16 %v8811, %v8807
    %v8966 = vpack.c.bf16 %v8813, %v8809
    %v8967 = vpack.c.bf16 %v8821, %v8817
    %v8968 = vpack.c.bf16 %v8823, %v8819
    %v8969 = vpack.c.bf16 %v8831, %v8827
    %v8970 = vpack.c.bf16 %v8833, %v8829
    %v8971 = vpack.c.bf16 %v8841, %v8837
    %v8972 = vpack.c.bf16 %v8843, %v8839
    %s8973 = scalar_lea.vmem %s4, 10
    %v8974 = vld [vmem:[%s8973] sm:$0x3]
    %v8977 = vunpack.c.l.s4 1966171168
    %v8978 = vunpack.c.0.s8 %v8977
    %v8979 = vlaneseq
    %v8980 = vshrl.u32 %v8979, 7
    %v8981 = vsub.s32 %v8978, %v8980
    %v8982 = vrot.slane %v8974, %v8981
    %v8983 = vcombine.high %v8982, %v8982
    %v8985 = vunpack.c.l.s4 1966171168
    %v8986 = vunpack.c.0.s8 %v8985
    %v8987 = vlaneseq
    %v8988 = vshrl.u32 %v8987, 7
    %v8989 = vsub.s32 %v8986, %v8988
    %v8990 = vrot.slane %v8982, %v8989
    %v8992 = vunpack.c.l.s4 1966171168
    %v8993 = vunpack.c.0.s8 %v8992
    %v8994 = vlaneseq
    %v8995 = vshrl.u32 %v8994, 7
    %v8996 = vsub.s32 %v8993, %v8995
    %v8997 = vrot.slane %v8983, %v8996
    %v8999 = vpack.i.b16 %v8990, %v8990
    %v9001 = vlaneseq
    %v9002 = vshrl.u32 %v9001, 7
    %v9003 = vsub.s32 0, %v9002
    %v9004 = vrot.slane %v8999, %v9003
    %v9006 = vpack.i.b16 %v8997, %v8997
    %v9008 = vlaneseq
    %v9009 = vshrl.u32 %v9008, 7
    %v9010 = vsub.s32 0, %v9009
    %v9011 = vrot.slane %v9006, %v9010
    %v9012 = vadd.bf16 %v8845, %v9004
    %v9013 = vadd.bf16 %v8846, %v9011
    %v9014 = vadd.bf16 %v8847, %v9004
    %v9015 = vadd.bf16 %v8848, %v9011
    %v9016 = vadd.bf16 %v8849, %v9004
    %v9017 = vadd.bf16 %v8850, %v9011
    %v9018 = vadd.bf16 %v8851, %v9004
    %v9019 = vadd.bf16 %v8852, %v9011
    %v9020 = vadd.bf16 %v8853, %v9004
    %v9021 = vadd.bf16 %v8854, %v9011
    %v9022 = vadd.bf16 %v8855, %v9004
    %v9023 = vadd.bf16 %v8856, %v9011
    %v9024 = vadd.bf16 %v8857, %v9004
    %v9025 = vadd.bf16 %v8858, %v9011
    %v9026 = vadd.bf16 %v8859, %v9004
    %v9027 = vadd.bf16 %v8860, %v9011
    %v9028 = vadd.bf16 %v8861, %v9004
    %v9029 = vadd.bf16 %v8862, %v9011
    %v9030 = vadd.bf16 %v8863, %v9004
    %v9031 = vadd.bf16 %v8864, %v9011
    %v9032 = vadd.bf16 %v8865, %v9004
    %v9033 = vadd.bf16 %v8866, %v9011
    %v9034 = vadd.bf16 %v8867, %v9004
    %v9035 = vadd.bf16 %v8868, %v9011
    %v9036 = vadd.bf16 %v8869, %v9004
    %v9037 = vadd.bf16 %v8870, %v9011
    %v9038 = vadd.bf16 %v8871, %v9004
    %v9039 = vadd.bf16 %v8872, %v9011
    %v9040 = vadd.bf16 %v8873, %v9004
    %v9041 = vadd.bf16 %v8874, %v9011
    %v9042 = vadd.bf16 %v8875, %v9004
    %v9043 = vadd.bf16 %v8876, %v9011
    %v9044 = vadd.bf16 %v8877, %v9004
    %v9045 = vadd.bf16 %v8878, %v9011
    %v9046 = vadd.bf16 %v8879, %v9004
    %v9047 = vadd.bf16 %v8880, %v9011
    %v9048 = vadd.bf16 %v8881, %v9004
    %v9049 = vadd.bf16 %v8882, %v9011
    %v9050 = vadd.bf16 %v8883, %v9004
    %v9051 = vadd.bf16 %v8884, %v9011
    %v9052 = vadd.bf16 %v8885, %v9004
    %v9053 = vadd.bf16 %v8886, %v9011
    %v9054 = vadd.bf16 %v8887, %v9004
    %v9055 = vadd.bf16 %v8888, %v9011
    %v9056 = vadd.bf16 %v8889, %v9004
    %v9057 = vadd.bf16 %v8890, %v9011
    %v9058 = vadd.bf16 %v8891, %v9004
    %v9059 = vadd.bf16 %v8892, %v9011
    %v9060 = vadd.bf16 %v8893, %v9004
    %v9061 = vadd.bf16 %v8894, %v9011
    %v9062 = vadd.bf16 %v8895, %v9004
    %v9063 = vadd.bf16 %v8896, %v9011
    %v9064 = vadd.bf16 %v8897, %v9004
    %v9065 = vadd.bf16 %v8898, %v9011
    %v9066 = vadd.bf16 %v8899, %v9004
    %v9067 = vadd.bf16 %v8900, %v9011
    %v9068 = vadd.bf16 %v8901, %v9004
    %v9069 = vadd.bf16 %v8902, %v9011
    %v9070 = vadd.bf16 %v8903, %v9004
    %v9071 = vadd.bf16 %v8904, %v9011
    %v9072 = vadd.bf16 %v8905, %v9004
    %v9073 = vadd.bf16 %v8906, %v9011
    %v9074 = vadd.bf16 %v8907, %v9004
    %v9075 = vadd.bf16 %v8908, %v9011
    %v9076 = vadd.bf16 %v8909, %v9004
    %v9077 = vadd.bf16 %v8910, %v9011
    %v9078 = vadd.bf16 %v8911, %v9004
    %v9079 = vadd.bf16 %v8912, %v9011
    %v9080 = vadd.bf16 %v8913, %v9004
    %v9081 = vadd.bf16 %v8914, %v9011
    %v9082 = vadd.bf16 %v8915, %v9004
    %v9083 = vadd.bf16 %v8916, %v9011
    %v9084 = vadd.bf16 %v8917, %v9004
    %v9085 = vadd.bf16 %v8918, %v9011
    %v9086 = vadd.bf16 %v8919, %v9004
    %v9087 = vadd.bf16 %v8920, %v9011
    %v9088 = vadd.bf16 %v8921, %v9004
    %v9089 = vadd.bf16 %v8922, %v9011
    %v9090 = vadd.bf16 %v8923, %v9004
    %v9091 = vadd.bf16 %v8924, %v9011
    %v9092 = vadd.bf16 %v8925, %v9004
    %v9093 = vadd.bf16 %v8926, %v9011
    %v9094 = vadd.bf16 %v8927, %v9004
    %v9095 = vadd.bf16 %v8928, %v9011
    %v9096 = vadd.bf16 %v8929, %v9004
    %v9097 = vadd.bf16 %v8930, %v9011
    %v9098 = vadd.bf16 %v8931, %v9004
    %v9099 = vadd.bf16 %v8932, %v9011
    %v9100 = vadd.bf16 %v8933, %v9004
    %v9101 = vadd.bf16 %v8934, %v9011
    %v9102 = vadd.bf16 %v8935, %v9004
    %v9103 = vadd.bf16 %v8936, %v9011
    %v9104 = vadd.bf16 %v8937, %v9004
    %v9105 = vadd.bf16 %v8938, %v9011
    %v9106 = vadd.bf16 %v8939, %v9004
    %v9107 = vadd.bf16 %v8940, %v9011
    %v9108 = vadd.bf16 %v8941, %v9004
    %v9109 = vadd.bf16 %v8942, %v9011
    %v9110 = vadd.bf16 %v8943, %v9004
    %v9111 = vadd.bf16 %v8944, %v9011
    %v9112 = vadd.bf16 %v8945, %v9004
    %v9113 = vadd.bf16 %v8946, %v9011
    %v9114 = vadd.bf16 %v8947, %v9004
    %v9115 = vadd.bf16 %v8948, %v9011
    %v9116 = vadd.bf16 %v8949, %v9004
    %v9117 = vadd.bf16 %v8950, %v9011
    %v9118 = vadd.bf16 %v8951, %v9004
    %v9119 = vadd.bf16 %v8952, %v9011
    %v9120 = vadd.bf16 %v8953, %v9004
    %v9121 = vadd.bf16 %v8954, %v9011
    %v9122 = vadd.bf16 %v8955, %v9004
    %v9123 = vadd.bf16 %v8956, %v9011
    %v9124 = vadd.bf16 %v8957, %v9004
    %v9125 = vadd.bf16 %v8958, %v9011
    %v9126 = vadd.bf16 %v8959, %v9004
    %v9127 = vadd.bf16 %v8960, %v9011
    %v9128 = vadd.bf16 %v8961, %v9004
    %v9129 = vadd.bf16 %v8962, %v9011
    %v9130 = vadd.bf16 %v8963, %v9004
    %v9131 = vadd.bf16 %v8964, %v9011
    %v9132 = vadd.bf16 %v8965, %v9004
    %v9133 = vadd.bf16 %v8966, %v9011
    %v9134 = vadd.bf16 %v8967, %v9004
    %v9135 = vadd.bf16 %v8968, %v9011
    %v9136 = vadd.bf16 %v8969, %v9004
    %v9137 = vadd.bf16 %v8970, %v9011
    %v9138 = vadd.bf16 %v8971, %v9004
    %v9139 = vadd.bf16 %v8972, %v9011
    %v9140 = vmax.bf16 %v9012, 0
    %v9141 = vmax.bf16 %v9013, 0
    %v9142 = vmax.bf16 %v9014, 0
    %v9143 = vmax.bf16 %v9015, 0
    %v9144 = vmax.bf16 %v9016, 0
    %v9145 = vmax.bf16 %v9017, 0
    %v9146 = vmax.bf16 %v9018, 0
    %v9147 = vmax.bf16 %v9019, 0
    %v9148 = vmax.bf16 %v9020, 0
    %v9149 = vmax.bf16 %v9021, 0
    %v9150 = vmax.bf16 %v9022, 0
    %v9151 = vmax.bf16 %v9023, 0
    %v9152 = vmax.bf16 %v9024, 0
    %v9153 = vmax.bf16 %v9025, 0
    %v9154 = vmax.bf16 %v9026, 0
    %v9155 = vmax.bf16 %v9027, 0
    %v9156 = vmax.bf16 %v9028, 0
    %v9157 = vmax.bf16 %v9029, 0
    %v9158 = vmax.bf16 %v9030, 0
    %v9159 = vmax.bf16 %v9031, 0
    %v9160 = vmax.bf16 %v9032, 0
    %v9161 = vmax.bf16 %v9033, 0
    %v9162 = vmax.bf16 %v9034, 0
    %v9163 = vmax.bf16 %v9035, 0
    %v9164 = vmax.bf16 %v9036, 0
    %v9165 = vmax.bf16 %v9037, 0
    %v9166 = vmax.bf16 %v9038, 0
    %v9167 = vmax.bf16 %v9039, 0
    %v9168 = vmax.bf16 %v9040, 0
    %v9169 = vmax.bf16 %v9041, 0
    %v9170 = vmax.bf16 %v9042, 0
    %v9171 = vmax.bf16 %v9043, 0
    %v9172 = vmax.bf16 %v9044, 0
    %v9173 = vmax.bf16 %v9045, 0
    %v9174 = vmax.bf16 %v9046, 0
    %v9175 = vmax.bf16 %v9047, 0
    %v9176 = vmax.bf16 %v9048, 0
    %v9177 = vmax.bf16 %v9049, 0
    %v9178 = vmax.bf16 %v9050, 0
    %v9179 = vmax.bf16 %v9051, 0
    %v9180 = vmax.bf16 %v9052, 0
    %v9181 = vmax.bf16 %v9053, 0
    %v9182 = vmax.bf16 %v9054, 0
    %v9183 = vmax.bf16 %v9055, 0
    %v9184 = vmax.bf16 %v9056, 0
    %v9185 = vmax.bf16 %v9057, 0
    %v9186 = vmax.bf16 %v9058, 0
    %v9187 = vmax.bf16 %v9059, 0
    %v9188 = vmax.bf16 %v9060, 0
    %v9189 = vmax.bf16 %v9061, 0
    %v9190 = vmax.bf16 %v9062, 0
    %v9191 = vmax.bf16 %v9063, 0
    %v9192 = vmax.bf16 %v9064, 0
    %v9193 = vmax.bf16 %v9065, 0
    %v9194 = vmax.bf16 %v9066, 0
    %v9195 = vmax.bf16 %v9067, 0
    %v9196 = vmax.bf16 %v9068, 0
    %v9197 = vmax.bf16 %v9069, 0
    %v9198 = vmax.bf16 %v9070, 0
    %v9199 = vmax.bf16 %v9071, 0
    %v9200 = vmax.bf16 %v9072, 0
    %v9201 = vmax.bf16 %v9073, 0
    %v9202 = vmax.bf16 %v9074, 0
    %v9203 = vmax.bf16 %v9075, 0
    %v9204 = vmax.bf16 %v9076, 0
    %v9205 = vmax.bf16 %v9077, 0
    %v9206 = vmax.bf16 %v9078, 0
    %v9207 = vmax.bf16 %v9079, 0
    %v9208 = vmax.bf16 %v9080, 0
    %v9209 = vmax.bf16 %v9081, 0
    %v9210 = vmax.bf16 %v9082, 0
    %v9211 = vmax.bf16 %v9083, 0
    %v9212 = vmax.bf16 %v9084, 0
    %v9213 = vmax.bf16 %v9085, 0
    %v9214 = vmax.bf16 %v9086, 0
    %v9215 = vmax.bf16 %v9087, 0
    %v9216 = vmax.bf16 %v9088, 0
    %v9217 = vmax.bf16 %v9089, 0
    %v9218 = vmax.bf16 %v9090, 0
    %v9219 = vmax.bf16 %v9091, 0
    %v9220 = vmax.bf16 %v9092, 0
    %v9221 = vmax.bf16 %v9093, 0
    %v9222 = vmax.bf16 %v9094, 0
    %v9223 = vmax.bf16 %v9095, 0
    %v9224 = vmax.bf16 %v9096, 0
    %v9225 = vmax.bf16 %v9097, 0
    %v9226 = vmax.bf16 %v9098, 0
    %v9227 = vmax.bf16 %v9099, 0
    %v9228 = vmax.bf16 %v9100, 0
    %v9229 = vmax.bf16 %v9101, 0
    %v9230 = vmax.bf16 %v9102, 0
    %v9231 = vmax.bf16 %v9103, 0
    %v9232 = vmax.bf16 %v9104, 0
    %v9233 = vmax.bf16 %v9105, 0
    %v9234 = vmax.bf16 %v9106, 0
    %v9235 = vmax.bf16 %v9107, 0
    %v9236 = vmax.bf16 %v9108, 0
    %v9237 = vmax.bf16 %v9109, 0
    %v9238 = vmax.bf16 %v9110, 0
    %v9239 = vmax.bf16 %v9111, 0
    %v9240 = vmax.bf16 %v9112, 0
    %v9241 = vmax.bf16 %v9113, 0
    %v9242 = vmax.bf16 %v9114, 0
    %v9243 = vmax.bf16 %v9115, 0
    %v9244 = vmax.bf16 %v9116, 0
    %v9245 = vmax.bf16 %v9117, 0
    %v9246 = vmax.bf16 %v9118, 0
    %v9247 = vmax.bf16 %v9119, 0
    %v9248 = vmax.bf16 %v9120, 0
    %v9249 = vmax.bf16 %v9121, 0
    %v9250 = vmax.bf16 %v9122, 0
    %v9251 = vmax.bf16 %v9123, 0
    %v9252 = vmax.bf16 %v9124, 0
    %v9253 = vmax.bf16 %v9125, 0
    %v9254 = vmax.bf16 %v9126, 0
    %v9255 = vmax.bf16 %v9127, 0
    %v9256 = vmax.bf16 %v9128, 0
    %v9257 = vmax.bf16 %v9129, 0
    %v9258 = vmax.bf16 %v9130, 0
    %v9259 = vmax.bf16 %v9131, 0
    %v9260 = vmax.bf16 %v9132, 0
    %v9261 = vmax.bf16 %v9133, 0
    %v9262 = vmax.bf16 %v9134, 0
    %v9263 = vmax.bf16 %v9135, 0
    %v9264 = vmax.bf16 %v9136, 0
    %v9265 = vmax.bf16 %v9137, 0
    %v9266 = vmax.bf16 %v9138, 0
    %v9267 = vmax.bf16 %v9139, 0
    %s9268 = scalar_lea.vmem [#allocation3], 1536
    %v9269 = vld [vmem:[%s9268] sm:$0xff]
    %v9270 = vld [vmem:[%s9268 + $0x8] sm:$0xff]
    %v9271 = vld [vmem:[%s9268 + $0x10] sm:$0xff]
    %v9272 = vld [vmem:[%s9268 + $0x18] sm:$0xff]
    %v9273 = vld [vmem:[%s9268 + $0x20] sm:$0xff]
    %v9274 = vld [vmem:[%s9268 + $0x28] sm:$0xff]
    %v9275 = vld [vmem:[%s9268 + $0x30] sm:$0xff]
    %v9276 = vld [vmem:[%s9268 + $0x38] sm:$0xff]
    %v9277 = vld [vmem:[%s9268 + $0x40] sm:$0xff]
    %v9278 = vld [vmem:[%s9268 + $0x48] sm:$0xff]
    %v9279 = vld [vmem:[%s9268 + $0x50] sm:$0xff]
    %v9280 = vld [vmem:[%s9268 + $0x58] sm:$0xff]
    %v9281 = vld [vmem:[%s9268 + $0x60] sm:$0xff]
    %v9282 = vld [vmem:[%s9268 + $0x68] sm:$0xff]
    %v9283 = vld [vmem:[%s9268 + $0x70] sm:$0xff]
    %v9284 = vld [vmem:[%s9268 + $0x78] sm:$0xff]
    %v9285 = vld [vmem:[%s9268 + $0x80] sm:$0xff]
    %v9286 = vld [vmem:[%s9268 + $0x88] sm:$0xff]
    %v9287 = vld [vmem:[%s9268 + $0x90] sm:$0xff]
    %v9288 = vld [vmem:[%s9268 + $0x98] sm:$0xff]
    %v9289 = vld [vmem:[%s9268 + $0xa0] sm:$0xff]
    %v9290 = vld [vmem:[%s9268 + $0xa8] sm:$0xff]
    %v9291 = vld [vmem:[%s9268 + $0xb0] sm:$0xff]
    %v9292 = vld [vmem:[%s9268 + $0xb8] sm:$0xff]
    %v9293 = vld [vmem:[%s9268 + $0xc0] sm:$0xff]
    %v9294 = vld [vmem:[%s9268 + $0xc8] sm:$0xff]
    %v9295 = vld [vmem:[%s9268 + $0xd0] sm:$0xff]
    %v9296 = vld [vmem:[%s9268 + $0xd8] sm:$0xff]
    %v9297 = vld [vmem:[%s9268 + $0xe0] sm:$0xff]
    %v9298 = vld [vmem:[%s9268 + $0xe8] sm:$0xff]
    %v9299 = vld [vmem:[%s9268 + $0xf0] sm:$0xff]
    %v9300 = vld [vmem:[%s9268 + $0xf8] sm:$0xff]
    %v9333 = vunpack.c.l.b16 %v9269
    %v9334 = vunpack.c.h.b16 %v9269
    %v9335 = vunpack.c.l.b16 %v9270
    %v9336 = vunpack.c.h.b16 %v9270
    %v9337 = vunpack.c.l.b16 %v9271
    %v9338 = vunpack.c.h.b16 %v9271
    %v9339 = vunpack.c.l.b16 %v9272
    %v9340 = vunpack.c.h.b16 %v9272
    %v9341 = vunpack.c.l.b16 %v9273
    %v9342 = vunpack.c.h.b16 %v9273
    %v9343 = vunpack.c.l.b16 %v9274
    %v9344 = vunpack.c.h.b16 %v9274
    %v9345 = vunpack.c.l.b16 %v9275
    %v9346 = vunpack.c.h.b16 %v9275
    %v9347 = vunpack.c.l.b16 %v9276
    %v9348 = vunpack.c.h.b16 %v9276
    %v9349 = vunpack.c.l.b16 %v9277
    %v9350 = vunpack.c.h.b16 %v9277
    %v9351 = vunpack.c.l.b16 %v9278
    %v9352 = vunpack.c.h.b16 %v9278
    %v9353 = vunpack.c.l.b16 %v9279
    %v9354 = vunpack.c.h.b16 %v9279
    %v9355 = vunpack.c.l.b16 %v9280
    %v9356 = vunpack.c.h.b16 %v9280
    %v9357 = vunpack.c.l.b16 %v9281
    %v9358 = vunpack.c.h.b16 %v9281
    %v9359 = vunpack.c.l.b16 %v9282
    %v9360 = vunpack.c.h.b16 %v9282
    %v9361 = vunpack.c.l.b16 %v9283
    %v9362 = vunpack.c.h.b16 %v9283
    %v9363 = vunpack.c.l.b16 %v9284
    %v9364 = vunpack.c.h.b16 %v9284
    %v9365 = vunpack.c.l.b16 %v9285
    %v9366 = vunpack.c.h.b16 %v9285
    %v9367 = vunpack.c.l.b16 %v9286
    %v9368 = vunpack.c.h.b16 %v9286
    %v9369 = vunpack.c.l.b16 %v9287
    %v9370 = vunpack.c.h.b16 %v9287
    %v9371 = vunpack.c.l.b16 %v9288
    %v9372 = vunpack.c.h.b16 %v9288
    %v9373 = vunpack.c.l.b16 %v9289
    %v9374 = vunpack.c.h.b16 %v9289
    %v9375 = vunpack.c.l.b16 %v9290
    %v9376 = vunpack.c.h.b16 %v9290
    %v9377 = vunpack.c.l.b16 %v9291
    %v9378 = vunpack.c.h.b16 %v9291
    %v9379 = vunpack.c.l.b16 %v9292
    %v9380 = vunpack.c.h.b16 %v9292
    %v9381 = vunpack.c.l.b16 %v9293
    %v9382 = vunpack.c.h.b16 %v9293
    %v9383 = vunpack.c.l.b16 %v9294
    %v9384 = vunpack.c.h.b16 %v9294
    %v9385 = vunpack.c.l.b16 %v9295
    %v9386 = vunpack.c.h.b16 %v9295
    %v9387 = vunpack.c.l.b16 %v9296
    %v9388 = vunpack.c.h.b16 %v9296
    %v9389 = vunpack.c.l.b16 %v9297
    %v9390 = vunpack.c.h.b16 %v9297
    %v9391 = vunpack.c.l.b16 %v9298
    %v9392 = vunpack.c.h.b16 %v9298
    %v9393 = vunpack.c.l.b16 %v9299
    %v9394 = vunpack.c.h.b16 %v9299
    %v9395 = vunpack.c.l.b16 %v9300
    %v9396 = vunpack.c.h.b16 %v9300
    %v9397 = vpack.c.b16 %v9335, %v9333
    %v9398 = vpack.c.b16 %v9336, %v9334
    %v9399 = vpack.c.b16 %v9339, %v9337
    %v9400 = vpack.c.b16 %v9340, %v9338
    %v9401 = vpack.c.b16 %v9343, %v9341
    %v9402 = vpack.c.b16 %v9344, %v9342
    %v9403 = vpack.c.b16 %v9347, %v9345
    %v9404 = vpack.c.b16 %v9348, %v9346
    %v9405 = vpack.c.b16 %v9351, %v9349
    %v9406 = vpack.c.b16 %v9352, %v9350
    %v9407 = vpack.c.b16 %v9355, %v9353
    %v9408 = vpack.c.b16 %v9356, %v9354
    %v9409 = vpack.c.b16 %v9359, %v9357
    %v9410 = vpack.c.b16 %v9360, %v9358
    %v9411 = vpack.c.b16 %v9363, %v9361
    %v9412 = vpack.c.b16 %v9364, %v9362
    %v9413 = vpack.c.b16 %v9367, %v9365
    %v9414 = vpack.c.b16 %v9368, %v9366
    %v9415 = vpack.c.b16 %v9371, %v9369
    %v9416 = vpack.c.b16 %v9372, %v9370
    %v9417 = vpack.c.b16 %v9375, %v9373
    %v9418 = vpack.c.b16 %v9376, %v9374
    %v9419 = vpack.c.b16 %v9379, %v9377
    %v9420 = vpack.c.b16 %v9380, %v9378
    %v9421 = vpack.c.b16 %v9383, %v9381
    %v9422 = vpack.c.b16 %v9384, %v9382
    %v9423 = vpack.c.b16 %v9387, %v9385
    %v9424 = vpack.c.b16 %v9388, %v9386
    %v9425 = vpack.c.b16 %v9391, %v9389
    %v9426 = vpack.c.b16 %v9392, %v9390
    %v9427 = vpack.c.b16 %v9395, %v9393
    %v9428 = vpack.c.b16 %v9396, %v9394
    %9461 = vmatprep.subr.bf16.mxu0 %v9398
    %9462 = vmatpush1.bf16.msra.mxu0 %v9397
    %9463 = vmatprep.subr.bf16.mxu0 %v9400
    %9464 = vmatpush1.bf16.msra.mxu0 %v9399
    %9465 = vmatprep.subr.bf16.mxu0 %v9402
    %9466 = vmatpush1.bf16.msra.mxu0 %v9401
    %9467 = vmatprep.subr.bf16.mxu0 %v9404
    %9468 = vmatpush1.bf16.msra.mxu0 %v9403
    %9469 = vmatprep.subr.bf16.mxu0 %v9406
    %9470 = vmatpush1.bf16.msra.mxu0 %v9405
    %9471 = vmatprep.subr.bf16.mxu0 %v9408
    %9472 = vmatpush1.bf16.msra.mxu0 %v9407
    %9473 = vmatprep.subr.bf16.mxu0 %v9410
    %9474 = vmatpush1.bf16.msra.mxu0 %v9409
    %9475 = vmatprep.subr.bf16.mxu0 %v9412
    %9476 = vmatpush1.bf16.msra.mxu0 %v9411
    %9477 = vmatprep.subr.bf16.mxu0 %v9414
    %9478 = vmatpush1.bf16.msra.mxu0 %v9413
    %9479 = vmatprep.subr.bf16.mxu0 %v9416
    %9480 = vmatpush1.bf16.msra.mxu0 %v9415
    %9481 = vmatprep.subr.bf16.mxu0 %v9418
    %9482 = vmatpush1.bf16.msra.mxu0 %v9417
    %9483 = vmatprep.subr.bf16.mxu0 %v9420
    %9484 = vmatpush1.bf16.msra.mxu0 %v9419
    %9485 = vmatprep.subr.bf16.mxu0 %v9422
    %9486 = vmatpush1.bf16.msra.mxu0 %v9421
    %9487 = vmatprep.subr.bf16.mxu0 %v9424
    %9488 = vmatpush1.bf16.msra.mxu0 %v9423
    %9489 = vmatprep.subr.bf16.mxu0 %v9426
    %9490 = vmatpush1.bf16.msra.mxu0 %v9425
    %9491 = vmatprep.subr.bf16.mxu0 %v9428
    %9492 = vmatpush1.bf16.msra.mxu0 %v9427
    %9493 = vmatprep.mubr.bf16.mxu0 %v9141
    %9494 = vmatmul.mubr.bf16.gmra.mrb[0].mxu0 %v9140
    %v9495 = vpop.f32.mrb[0].mxu0
    %v9496 = vadd.f32 0.0, %v9495
    %v9497 = vpop.f32.mrb[0].mxu0
    %v9498 = vadd.f32 0.0, %v9497
    %v9499 = vpop.f32.mrb[0].mxu0
    %v9500 = vadd.f32 0.0, %v9499
    %v9501 = vpop.f32.mrb[0].mxu0
    %v9502 = vadd.f32 0.0, %v9501
    %9503 = vmatprep.mubr.bf16.mxu0 %v9143
    %9504 = vmatmul.mubr.bf16.gmra.mrb[0].mxu0 %v9142
    %v9505 = vpop.f32.mrb[0].mxu0
    %v9506 = vadd.f32 0.0, %v9505
    %v9507 = vpop.f32.mrb[0].mxu0
    %v9508 = vadd.f32 0.0, %v9507
    %v9509 = vpop.f32.mrb[0].mxu0
    %v9510 = vadd.f32 0.0, %v9509
    %v9511 = vpop.f32.mrb[0].mxu0
    %v9512 = vadd.f32 0.0, %v9511
    %9513 = vmatprep.mubr.bf16.mxu0 %v9145
    %9514 = vmatmul.mubr.bf16.gmra.mrb[0].mxu0 %v9144
    %v9515 = vpop.f32.mrb[0].mxu0
    %v9516 = vadd.f32 0.0, %v9515
    %v9517 = vpop.f32.mrb[0].mxu0
    %v9518 = vadd.f32 0.0, %v9517
    %v9519 = vpop.f32.mrb[0].mxu0
    %v9520 = vadd.f32 0.0, %v9519
    %v9521 = vpop.f32.mrb[0].mxu0
    %v9522 = vadd.f32 0.0, %v9521
    %9523 = vmatprep.mubr.bf16.mxu0 %v9147
    %9524 = vmatmul.mubr.bf16.gmra.mrb[0].mxu0 %v9146
    %v9525 = vpop.f32.mrb[0].mxu0
    %v9526 = vadd.f32 0.0, %v9525
    %v9527 = vpop.f32.mrb[0].mxu0
    %v9528 = vadd.f32 0.0, %v9527
    %v9529 = vpop.f32.mrb[0].mxu0
    %v9530 = vadd.f32 0.0, %v9529
    %v9531 = vpop.f32.mrb[0].mxu0
    %v9532 = vadd.f32 0.0, %v9531
    %9533 = vmatprep.mubr.bf16.mxu0 %v9149
    %9534 = vmatmul.mubr.bf16.gmra.mrb[0].mxu0 %v9148
    %v9535 = vpop.f32.mrb[0].mxu0
    %v9536 = vadd.f32 0.0, %v9535
    %v9537 = vpop.f32.mrb[0].mxu0
    %v9538 = vadd.f32 0.0, %v9537
    %v9539 = vpop.f32.mrb[0].mxu0
    %v9540 = vadd.f32 0.0, %v9539
    %v9541 = vpop.f32.mrb[0].mxu0
    %v9542 = vadd.f32 0.0, %v9541
    %9543 = vmatprep.mubr.bf16.mxu0 %v9151
    %9544 = vmatmul.mubr.bf16.gmra.mrb[0].mxu0 %v9150
    %v9545 = vpop.f32.mrb[0].mxu0
    %v9546 = vadd.f32 0.0, %v9545
    %v9547 = vpop.f32.mrb[0].mxu0
    %v9548 = vadd.f32 0.0, %v9547
    %v9549 = vpop.f32.mrb[0].mxu0
    %v9550 = vadd.f32 0.0, %v9549
    %v9551 = vpop.f32.mrb[0].mxu0
    %v9552 = vadd.f32 0.0, %v9551
    %9553 = vmatprep.mubr.bf16.mxu0 %v9153
    %9554 = vmatmul.mubr.bf16.gmra.mrb[0].mxu0 %v9152
    %v9555 = vpop.f32.mrb[0].mxu0
    %v9556 = vadd.f32 0.0, %v9555
    %v9557 = vpop.f32.mrb[0].mxu0
    %v9558 = vadd.f32 0.0, %v9557
    %v9559 = vpop.f32.mrb[0].mxu0
    %v9560 = vadd.f32 0.0, %v9559
    %v9561 = vpop.f32.mrb[0].mxu0
    %v9562 = vadd.f32 0.0, %v9561
    %9563 = vmatprep.mubr.bf16.mxu0 %v9155
    %9564 = vmatmul.mubr.bf16.gmra.mrb[0].mxu0 %v9154
    %v9565 = vpop.f32.mrb[0].mxu0
    %v9566 = vadd.f32 0.0, %v9565
    %v9567 = vpop.f32.mrb[0].mxu0
    %v9568 = vadd.f32 0.0, %v9567
    %v9569 = vpop.f32.mrb[0].mxu0
    %v9570 = vadd.f32 0.0, %v9569
    %v9571 = vpop.f32.mrb[0].mxu0
    %v9572 = vadd.f32 0.0, %v9571
    %9573 = vmatprep.mubr.bf16.mxu0 %v9157
    %9574 = vmatmul.mubr.bf16.gmra.mrb[0].mxu0 %v9156
    %v9575 = vpop.f32.mrb[0].mxu0
    %v9576 = vadd.f32 0.0, %v9575
    %v9577 = vpop.f32.mrb[0].mxu0
    %v9578 = vadd.f32 0.0, %v9577
    %v9579 = vpop.f32.mrb[0].mxu0
    %v9580 = vadd.f32 0.0, %v9579
    %v9581 = vpop.f32.mrb[0].mxu0
    %v9582 = vadd.f32 0.0, %v9581
    %9583 = vmatprep.mubr.bf16.mxu0 %v9159
    %9584 = vmatmul.mubr.bf16.gmra.mrb[0].mxu0 %v9158
    %v9585 = vpop.f32.mrb[0].mxu0
    %v9586 = vadd.f32 0.0, %v9585
    %v9587 = vpop.f32.mrb[0].mxu0
    %v9588 = vadd.f32 0.0, %v9587
    %v9589 = vpop.f32.mrb[0].mxu0
    %v9590 = vadd.f32 0.0, %v9589
    %v9591 = vpop.f32.mrb[0].mxu0
    %v9592 = vadd.f32 0.0, %v9591
    %9593 = vmatprep.mubr.bf16.mxu0 %v9161
    %9594 = vmatmul.mubr.bf16.gmra.mrb[0].mxu0 %v9160
    %v9595 = vpop.f32.mrb[0].mxu0
    %v9596 = vadd.f32 0.0, %v9595
    %v9597 = vpop.f32.mrb[0].mxu0
    %v9598 = vadd.f32 0.0, %v9597
    %v9599 = vpop.f32.mrb[0].mxu0
    %v9600 = vadd.f32 0.0, %v9599
    %v9601 = vpop.f32.mrb[0].mxu0
    %v9602 = vadd.f32 0.0, %v9601
    %9603 = vmatprep.mubr.bf16.mxu0 %v9163
    %9604 = vmatmul.mubr.bf16.gmra.mrb[0].mxu0 %v9162
    %v9605 = vpop.f32.mrb[0].mxu0
    %v9606 = vadd.f32 0.0, %v9605
    %v9607 = vpop.f32.mrb[0].mxu0
    %v9608 = vadd.f32 0.0, %v9607
    %v9609 = vpop.f32.mrb[0].mxu0
    %v9610 = vadd.f32 0.0, %v9609
    %v9611 = vpop.f32.mrb[0].mxu0
    %v9612 = vadd.f32 0.0, %v9611
    %9613 = vmatprep.mubr.bf16.mxu0 %v9165
    %9614 = vmatmul.mubr.bf16.gmra.mrb[0].mxu0 %v9164
    %v9615 = vpop.f32.mrb[0].mxu0
    %v9616 = vadd.f32 0.0, %v9615
    %v9617 = vpop.f32.mrb[0].mxu0
    %v9618 = vadd.f32 0.0, %v9617
    %v9619 = vpop.f32.mrb[0].mxu0
    %v9620 = vadd.f32 0.0, %v9619
    %v9621 = vpop.f32.mrb[0].mxu0
    %v9622 = vadd.f32 0.0, %v9621
    %9623 = vmatprep.mubr.bf16.mxu0 %v9167
    %9624 = vmatmul.mubr.bf16.gmra.mrb[0].mxu0 %v9166
    %v9625 = vpop.f32.mrb[0].mxu0
    %v9626 = vadd.f32 0.0, %v9625
    %v9627 = vpop.f32.mrb[0].mxu0
    %v9628 = vadd.f32 0.0, %v9627
    %v9629 = vpop.f32.mrb[0].mxu0
    %v9630 = vadd.f32 0.0, %v9629
    %v9631 = vpop.f32.mrb[0].mxu0
    %v9632 = vadd.f32 0.0, %v9631
    %9633 = vmatprep.mubr.bf16.mxu0 %v9169
    %9634 = vmatmul.mubr.bf16.gmra.mrb[0].mxu0 %v9168
    %v9635 = vpop.f32.mrb[0].mxu0
    %v9636 = vadd.f32 0.0, %v9635
    %v9637 = vpop.f32.mrb[0].mxu0
    %v9638 = vadd.f32 0.0, %v9637
    %v9639 = vpop.f32.mrb[0].mxu0
    %v9640 = vadd.f32 0.0, %v9639
    %v9641 = vpop.f32.mrb[0].mxu0
    %v9642 = vadd.f32 0.0, %v9641
    %9643 = vmatprep.mubr.bf16.mxu0 %v9171
    %9644 = vmatmul.mubr.bf16.gmra.mrb[0].mxu0 %v9170
    %v9645 = vpop.f32.mrb[0].mxu0
    %v9646 = vadd.f32 0.0, %v9645
    %v9647 = vpop.f32.mrb[0].mxu0
    %v9648 = vadd.f32 0.0, %v9647
    %v9649 = vpop.f32.mrb[0].mxu0
    %v9650 = vadd.f32 0.0, %v9649
    %v9651 = vpop.f32.mrb[0].mxu0
    %v9652 = vadd.f32 0.0, %v9651
    %9653 = vmatprep.mubr.bf16.mxu0 %v9173
    %9654 = vmatmul.mubr.bf16.gmra.mrb[0].mxu0 %v9172
    %v9655 = vpop.f32.mrb[0].mxu0
    %v9656 = vadd.f32 0.0, %v9655
    %v9657 = vpop.f32.mrb[0].mxu0
    %v9658 = vadd.f32 0.0, %v9657
    %v9659 = vpop.f32.mrb[0].mxu0
    %v9660 = vadd.f32 0.0, %v9659
    %v9661 = vpop.f32.mrb[0].mxu0
    %v9662 = vadd.f32 0.0, %v9661
    %9663 = vmatprep.mubr.bf16.mxu0 %v9175
    %9664 = vmatmul.mubr.bf16.gmra.mrb[0].mxu0 %v9174
    %v9665 = vpop.f32.mrb[0].mxu0
    %v9666 = vadd.f32 0.0, %v9665
    %v9667 = vpop.f32.mrb[0].mxu0
    %v9668 = vadd.f32 0.0, %v9667
    %v9669 = vpop.f32.mrb[0].mxu0
    %v9670 = vadd.f32 0.0, %v9669
    %v9671 = vpop.f32.mrb[0].mxu0
    %v9672 = vadd.f32 0.0, %v9671
    %9673 = vmatprep.mubr.bf16.mxu0 %v9177
    %9674 = vmatmul.mubr.bf16.gmra.mrb[0].mxu0 %v9176
    %v9675 = vpop.f32.mrb[0].mxu0
    %v9676 = vadd.f32 0.0, %v9675
    %v9677 = vpop.f32.mrb[0].mxu0
    %v9678 = vadd.f32 0.0, %v9677
    %v9679 = vpop.f32.mrb[0].mxu0
    %v9680 = vadd.f32 0.0, %v9679
    %v9681 = vpop.f32.mrb[0].mxu0
    %v9682 = vadd.f32 0.0, %v9681
    %9683 = vmatprep.mubr.bf16.mxu0 %v9179
    %9684 = vmatmul.mubr.bf16.gmra.mrb[0].mxu0 %v9178
    %v9685 = vpop.f32.mrb[0].mxu0
    %v9686 = vadd.f32 0.0, %v9685
    %v9687 = vpop.f32.mrb[0].mxu0
    %v9688 = vadd.f32 0.0, %v9687
    %v9689 = vpop.f32.mrb[0].mxu0
    %v9690 = vadd.f32 0.0, %v9689
    %v9691 = vpop.f32.mrb[0].mxu0
    %v9692 = vadd.f32 0.0, %v9691
    %9693 = vmatprep.mubr.bf16.mxu0 %v9181
    %9694 = vmatmul.mubr.bf16.gmra.mrb[0].mxu0 %v9180
    %v9695 = vpop.f32.mrb[0].mxu0
    %v9696 = vadd.f32 0.0, %v9695
    %v9697 = vpop.f32.mrb[0].mxu0
    %v9698 = vadd.f32 0.0, %v9697
    %v9699 = vpop.f32.mrb[0].mxu0
    %v9700 = vadd.f32 0.0, %v9699
    %v9701 = vpop.f32.mrb[0].mxu0
    %v9702 = vadd.f32 0.0, %v9701
    %9703 = vmatprep.mubr.bf16.mxu0 %v9183
    %9704 = vmatmul.mubr.bf16.gmra.mrb[0].mxu0 %v9182
    %v9705 = vpop.f32.mrb[0].mxu0
    %v9706 = vadd.f32 0.0, %v9705
    %v9707 = vpop.f32.mrb[0].mxu0
    %v9708 = vadd.f32 0.0, %v9707
    %v9709 = vpop.f32.mrb[0].mxu0
    %v9710 = vadd.f32 0.0, %v9709
    %v9711 = vpop.f32.mrb[0].mxu0
    %v9712 = vadd.f32 0.0, %v9711
    %9713 = vmatprep.mubr.bf16.mxu0 %v9185
    %9714 = vmatmul.mubr.bf16.gmra.mrb[0].mxu0 %v9184
    %v9715 = vpop.f32.mrb[0].mxu0
    %v9716 = vadd.f32 0.0, %v9715
    %v9717 = vpop.f32.mrb[0].mxu0
    %v9718 = vadd.f32 0.0, %v9717
    %v9719 = vpop.f32.mrb[0].mxu0
    %v9720 = vadd.f32 0.0, %v9719
    %v9721 = vpop.f32.mrb[0].mxu0
    %v9722 = vadd.f32 0.0, %v9721
    %9723 = vmatprep.mubr.bf16.mxu0 %v9187
    %9724 = vmatmul.mubr.bf16.gmra.mrb[0].mxu0 %v9186
    %v9725 = vpop.f32.mrb[0].mxu0
    %v9726 = vadd.f32 0.0, %v9725
    %v9727 = vpop.f32.mrb[0].mxu0
    %v9728 = vadd.f32 0.0, %v9727
    %v9729 = vpop.f32.mrb[0].mxu0
    %v9730 = vadd.f32 0.0, %v9729
    %v9731 = vpop.f32.mrb[0].mxu0
    %v9732 = vadd.f32 0.0, %v9731
    %9733 = vmatprep.mubr.bf16.mxu0 %v9189
    %9734 = vmatmul.mubr.bf16.gmra.mrb[0].mxu0 %v9188
    %v9735 = vpop.f32.mrb[0].mxu0
    %v9736 = vadd.f32 0.0, %v9735
    %v9737 = vpop.f32.mrb[0].mxu0
    %v9738 = vadd.f32 0.0, %v9737
    %v9739 = vpop.f32.mrb[0].mxu0
    %v9740 = vadd.f32 0.0, %v9739
    %v9741 = vpop.f32.mrb[0].mxu0
    %v9742 = vadd.f32 0.0, %v9741
    %9743 = vmatprep.mubr.bf16.mxu0 %v9191
    %9744 = vmatmul.mubr.bf16.gmra.mrb[0].mxu0 %v9190
    %v9745 = vpop.f32.mrb[0].mxu0
    %v9746 = vadd.f32 0.0, %v9745
    %v9747 = vpop.f32.mrb[0].mxu0
    %v9748 = vadd.f32 0.0, %v9747
    %v9749 = vpop.f32.mrb[0].mxu0
    %v9750 = vadd.f32 0.0, %v9749
    %v9751 = vpop.f32.mrb[0].mxu0
    %v9752 = vadd.f32 0.0, %v9751
    %9753 = vmatprep.mubr.bf16.mxu0 %v9193
    %9754 = vmatmul.mubr.bf16.gmra.mrb[0].mxu0 %v9192
    %v9755 = vpop.f32.mrb[0].mxu0
    %v9756 = vadd.f32 0.0, %v9755
    %v9757 = vpop.f32.mrb[0].mxu0
    %v9758 = vadd.f32 0.0, %v9757
    %v9759 = vpop.f32.mrb[0].mxu0
    %v9760 = vadd.f32 0.0, %v9759
    %v9761 = vpop.f32.mrb[0].mxu0
    %v9762 = vadd.f32 0.0, %v9761
    %9763 = vmatprep.mubr.bf16.mxu0 %v9195
    %9764 = vmatmul.mubr.bf16.gmra.mrb[0].mxu0 %v9194
    %v9765 = vpop.f32.mrb[0].mxu0
    %v9766 = vadd.f32 0.0, %v9765
    %v9767 = vpop.f32.mrb[0].mxu0
    %v9768 = vadd.f32 0.0, %v9767
    %v9769 = vpop.f32.mrb[0].mxu0
    %v9770 = vadd.f32 0.0, %v9769
    %v9771 = vpop.f32.mrb[0].mxu0
    %v9772 = vadd.f32 0.0, %v9771
    %9773 = vmatprep.mubr.bf16.mxu0 %v9197
    %9774 = vmatmul.mubr.bf16.gmra.mrb[0].mxu0 %v9196
    %v9775 = vpop.f32.mrb[0].mxu0
    %v9776 = vadd.f32 0.0, %v9775
    %v9777 = vpop.f32.mrb[0].mxu0
    %v9778 = vadd.f32 0.0, %v9777
    %v9779 = vpop.f32.mrb[0].mxu0
    %v9780 = vadd.f32 0.0, %v9779
    %v9781 = vpop.f32.mrb[0].mxu0
    %v9782 = vadd.f32 0.0, %v9781
    %9783 = vmatprep.mubr.bf16.mxu0 %v9199
    %9784 = vmatmul.mubr.bf16.gmra.mrb[0].mxu0 %v9198
    %v9785 = vpop.f32.mrb[0].mxu0
    %v9786 = vadd.f32 0.0, %v9785
    %v9787 = vpop.f32.mrb[0].mxu0
    %v9788 = vadd.f32 0.0, %v9787
    %v9789 = vpop.f32.mrb[0].mxu0
    %v9790 = vadd.f32 0.0, %v9789
    %v9791 = vpop.f32.mrb[0].mxu0
    %v9792 = vadd.f32 0.0, %v9791
    %9793 = vmatprep.mubr.bf16.mxu0 %v9201
    %9794 = vmatmul.mubr.bf16.gmra.mrb[0].mxu0 %v9200
    %v9795 = vpop.f32.mrb[0].mxu0
    %v9796 = vadd.f32 0.0, %v9795
    %v9797 = vpop.f32.mrb[0].mxu0
    %v9798 = vadd.f32 0.0, %v9797
    %v9799 = vpop.f32.mrb[0].mxu0
    %v9800 = vadd.f32 0.0, %v9799
    %v9801 = vpop.f32.mrb[0].mxu0
    %v9802 = vadd.f32 0.0, %v9801
    %9803 = vmatprep.mubr.bf16.mxu0 %v9203
    %9804 = vmatmul.mubr.bf16.gmra.mrb[0].mxu0 %v9202
    %v9805 = vpop.f32.mrb[0].mxu0
    %v9806 = vadd.f32 0.0, %v9805
    %v9807 = vpop.f32.mrb[0].mxu0
    %v9808 = vadd.f32 0.0, %v9807
    %v9809 = vpop.f32.mrb[0].mxu0
    %v9810 = vadd.f32 0.0, %v9809
    %v9811 = vpop.f32.mrb[0].mxu0
    %v9812 = vadd.f32 0.0, %v9811
    %9813 = vmatprep.mubr.bf16.mxu0 %v9205
    %9814 = vmatmul.mubr.bf16.gmra.mrb[0].mxu0 %v9204
    %v9815 = vpop.f32.mrb[0].mxu0
    %v9816 = vadd.f32 0.0, %v9815
    %v9817 = vpop.f32.mrb[0].mxu0
    %v9818 = vadd.f32 0.0, %v9817
    %v9819 = vpop.f32.mrb[0].mxu0
    %v9820 = vadd.f32 0.0, %v9819
    %v9821 = vpop.f32.mrb[0].mxu0
    %v9822 = vadd.f32 0.0, %v9821
    %9823 = vmatprep.mubr.bf16.mxu0 %v9207
    %9824 = vmatmul.mubr.bf16.gmra.mrb[0].mxu0 %v9206
    %v9825 = vpop.f32.mrb[0].mxu0
    %v9826 = vadd.f32 0.0, %v9825
    %v9827 = vpop.f32.mrb[0].mxu0
    %v9828 = vadd.f32 0.0, %v9827
    %v9829 = vpop.f32.mrb[0].mxu0
    %v9830 = vadd.f32 0.0, %v9829
    %v9831 = vpop.f32.mrb[0].mxu0
    %v9832 = vadd.f32 0.0, %v9831
    %9833 = vmatprep.mubr.bf16.mxu0 %v9209
    %9834 = vmatmul.mubr.bf16.gmra.mrb[0].mxu0 %v9208
    %v9835 = vpop.f32.mrb[0].mxu0
    %v9836 = vadd.f32 0.0, %v9835
    %v9837 = vpop.f32.mrb[0].mxu0
    %v9838 = vadd.f32 0.0, %v9837
    %v9839 = vpop.f32.mrb[0].mxu0
    %v9840 = vadd.f32 0.0, %v9839
    %v9841 = vpop.f32.mrb[0].mxu0
    %v9842 = vadd.f32 0.0, %v9841
    %9843 = vmatprep.mubr.bf16.mxu0 %v9211
    %9844 = vmatmul.mubr.bf16.gmra.mrb[0].mxu0 %v9210
    %v9845 = vpop.f32.mrb[0].mxu0
    %v9846 = vadd.f32 0.0, %v9845
    %v9847 = vpop.f32.mrb[0].mxu0
    %v9848 = vadd.f32 0.0, %v9847
    %v9849 = vpop.f32.mrb[0].mxu0
    %v9850 = vadd.f32 0.0, %v9849
    %v9851 = vpop.f32.mrb[0].mxu0
    %v9852 = vadd.f32 0.0, %v9851
    %9853 = vmatprep.mubr.bf16.mxu0 %v9213
    %9854 = vmatmul.mubr.bf16.gmra.mrb[0].mxu0 %v9212
    %v9855 = vpop.f32.mrb[0].mxu0
    %v9856 = vadd.f32 0.0, %v9855
    %v9857 = vpop.f32.mrb[0].mxu0
    %v9858 = vadd.f32 0.0, %v9857
    %v9859 = vpop.f32.mrb[0].mxu0
    %v9860 = vadd.f32 0.0, %v9859
    %v9861 = vpop.f32.mrb[0].mxu0
    %v9862 = vadd.f32 0.0, %v9861
    %9863 = vmatprep.mubr.bf16.mxu0 %v9215
    %9864 = vmatmul.mubr.bf16.gmra.mrb[0].mxu0 %v9214
    %v9865 = vpop.f32.mrb[0].mxu0
    %v9866 = vadd.f32 0.0, %v9865
    %v9867 = vpop.f32.mrb[0].mxu0
    %v9868 = vadd.f32 0.0, %v9867
    %v9869 = vpop.f32.mrb[0].mxu0
    %v9870 = vadd.f32 0.0, %v9869
    %v9871 = vpop.f32.mrb[0].mxu0
    %v9872 = vadd.f32 0.0, %v9871
    %9873 = vmatprep.mubr.bf16.mxu0 %v9217
    %9874 = vmatmul.mubr.bf16.gmra.mrb[0].mxu0 %v9216
    %v9875 = vpop.f32.mrb[0].mxu0
    %v9876 = vadd.f32 0.0, %v9875
    %v9877 = vpop.f32.mrb[0].mxu0
    %v9878 = vadd.f32 0.0, %v9877
    %v9879 = vpop.f32.mrb[0].mxu0
    %v9880 = vadd.f32 0.0, %v9879
    %v9881 = vpop.f32.mrb[0].mxu0
    %v9882 = vadd.f32 0.0, %v9881
    %9883 = vmatprep.mubr.bf16.mxu0 %v9219
    %9884 = vmatmul.mubr.bf16.gmra.mrb[0].mxu0 %v9218
    %v9885 = vpop.f32.mrb[0].mxu0
    %v9886 = vadd.f32 0.0, %v9885
    %v9887 = vpop.f32.mrb[0].mxu0
    %v9888 = vadd.f32 0.0, %v9887
    %v9889 = vpop.f32.mrb[0].mxu0
    %v9890 = vadd.f32 0.0, %v9889
    %v9891 = vpop.f32.mrb[0].mxu0
    %v9892 = vadd.f32 0.0, %v9891
    %9893 = vmatprep.mubr.bf16.mxu0 %v9221
    %9894 = vmatmul.mubr.bf16.gmra.mrb[0].mxu0 %v9220
    %v9895 = vpop.f32.mrb[0].mxu0
    %v9896 = vadd.f32 0.0, %v9895
    %v9897 = vpop.f32.mrb[0].mxu0
    %v9898 = vadd.f32 0.0, %v9897
    %v9899 = vpop.f32.mrb[0].mxu0
    %v9900 = vadd.f32 0.0, %v9899
    %v9901 = vpop.f32.mrb[0].mxu0
    %v9902 = vadd.f32 0.0, %v9901
    %9903 = vmatprep.mubr.bf16.mxu0 %v9223
    %9904 = vmatmul.mubr.bf16.gmra.mrb[0].mxu0 %v9222
    %v9905 = vpop.f32.mrb[0].mxu0
    %v9906 = vadd.f32 0.0, %v9905
    %v9907 = vpop.f32.mrb[0].mxu0
    %v9908 = vadd.f32 0.0, %v9907
    %v9909 = vpop.f32.mrb[0].mxu0
    %v9910 = vadd.f32 0.0, %v9909
    %v9911 = vpop.f32.mrb[0].mxu0
    %v9912 = vadd.f32 0.0, %v9911
    %9913 = vmatprep.mubr.bf16.mxu0 %v9225
    %9914 = vmatmul.mubr.bf16.gmra.mrb[0].mxu0 %v9224
    %v9915 = vpop.f32.mrb[0].mxu0
    %v9916 = vadd.f32 0.0, %v9915
    %v9917 = vpop.f32.mrb[0].mxu0
    %v9918 = vadd.f32 0.0, %v9917
    %v9919 = vpop.f32.mrb[0].mxu0
    %v9920 = vadd.f32 0.0, %v9919
    %v9921 = vpop.f32.mrb[0].mxu0
    %v9922 = vadd.f32 0.0, %v9921
    %9923 = vmatprep.mubr.bf16.mxu0 %v9227
    %9924 = vmatmul.mubr.bf16.gmra.mrb[0].mxu0 %v9226
    %v9925 = vpop.f32.mrb[0].mxu0
    %v9926 = vadd.f32 0.0, %v9925
    %v9927 = vpop.f32.mrb[0].mxu0
    %v9928 = vadd.f32 0.0, %v9927
    %v9929 = vpop.f32.mrb[0].mxu0
    %v9930 = vadd.f32 0.0, %v9929
    %v9931 = vpop.f32.mrb[0].mxu0
    %v9932 = vadd.f32 0.0, %v9931
    %9933 = vmatprep.mubr.bf16.mxu0 %v9229
    %9934 = vmatmul.mubr.bf16.gmra.mrb[0].mxu0 %v9228
    %v9935 = vpop.f32.mrb[0].mxu0
    %v9936 = vadd.f32 0.0, %v9935
    %v9937 = vpop.f32.mrb[0].mxu0
    %v9938 = vadd.f32 0.0, %v9937
    %v9939 = vpop.f32.mrb[0].mxu0
    %v9940 = vadd.f32 0.0, %v9939
    %v9941 = vpop.f32.mrb[0].mxu0
    %v9942 = vadd.f32 0.0, %v9941
    %9943 = vmatprep.mubr.bf16.mxu0 %v9231
    %9944 = vmatmul.mubr.bf16.gmra.mrb[0].mxu0 %v9230
    %v9945 = vpop.f32.mrb[0].mxu0
    %v9946 = vadd.f32 0.0, %v9945
    %v9947 = vpop.f32.mrb[0].mxu0
    %v9948 = vadd.f32 0.0, %v9947
    %v9949 = vpop.f32.mrb[0].mxu0
    %v9950 = vadd.f32 0.0, %v9949
    %v9951 = vpop.f32.mrb[0].mxu0
    %v9952 = vadd.f32 0.0, %v9951
    %9953 = vmatprep.mubr.bf16.mxu0 %v9233
    %9954 = vmatmul.mubr.bf16.gmra.mrb[0].mxu0 %v9232
    %v9955 = vpop.f32.mrb[0].mxu0
    %v9956 = vadd.f32 0.0, %v9955
    %v9957 = vpop.f32.mrb[0].mxu0
    %v9958 = vadd.f32 0.0, %v9957
    %v9959 = vpop.f32.mrb[0].mxu0
    %v9960 = vadd.f32 0.0, %v9959
    %v9961 = vpop.f32.mrb[0].mxu0
    %v9962 = vadd.f32 0.0, %v9961
    %9963 = vmatprep.mubr.bf16.mxu0 %v9235
    %9964 = vmatmul.mubr.bf16.gmra.mrb[0].mxu0 %v9234
    %v9965 = vpop.f32.mrb[0].mxu0
    %v9966 = vadd.f32 0.0, %v9965
    %v9967 = vpop.f32.mrb[0].mxu0
    %v9968 = vadd.f32 0.0, %v9967
    %v9969 = vpop.f32.mrb[0].mxu0
    %v9970 = vadd.f32 0.0, %v9969
    %v9971 = vpop.f32.mrb[0].mxu0
    %v9972 = vadd.f32 0.0, %v9971
    %9973 = vmatprep.mubr.bf16.mxu0 %v9237
    %9974 = vmatmul.mubr.bf16.gmra.mrb[0].mxu0 %v9236
    %v9975 = vpop.f32.mrb[0].mxu0
    %v9976 = vadd.f32 0.0, %v9975
    %v9977 = vpop.f32.mrb[0].mxu0
    %v9978 = vadd.f32 0.0, %v9977
    %v9979 = vpop.f32.mrb[0].mxu0
    %v9980 = vadd.f32 0.0, %v9979
    %v9981 = vpop.f32.mrb[0].mxu0
    %v9982 = vadd.f32 0.0, %v9981
    %9983 = vmatprep.mubr.bf16.mxu0 %v9239
    %9984 = vmatmul.mubr.bf16.gmra.mrb[0].mxu0 %v9238
    %v9985 = vpop.f32.mrb[0].mxu0
    %v9986 = vadd.f32 0.0, %v9985
    %v9987 = vpop.f32.mrb[0].mxu0
    %v9988 = vadd.f32 0.0, %v9987
    %v9989 = vpop.f32.mrb[0].mxu0
    %v9990 = vadd.f32 0.0, %v9989
    %v9991 = vpop.f32.mrb[0].mxu0
    %v9992 = vadd.f32 0.0, %v9991
    %9993 = vmatprep.mubr.bf16.mxu0 %v9241
    %9994 = vmatmul.mubr.bf16.gmra.mrb[0].mxu0 %v9240
    %v9995 = vpop.f32.mrb[0].mxu0
    %v9996 = vadd.f32 0.0, %v9995
    %v9997 = vpop.f32.mrb[0].mxu0
    %v9998 = vadd.f32 0.0, %v9997
    %v9999 = vpop.f32.mrb[0].mxu0
    %v10000 = vadd.f32 0.0, %v9999
    %v10001 = vpop.f32.mrb[0].mxu0
    %v10002 = vadd.f32 0.0, %v10001
    %10003 = vmatprep.mubr.bf16.mxu0 %v9243
    %10004 = vmatmul.mubr.bf16.gmra.mrb[0].mxu0 %v9242
    %v10005 = vpop.f32.mrb[0].mxu0
    %v10006 = vadd.f32 0.0, %v10005
    %v10007 = vpop.f32.mrb[0].mxu0
    %v10008 = vadd.f32 0.0, %v10007
    %v10009 = vpop.f32.mrb[0].mxu0
    %v10010 = vadd.f32 0.0, %v10009
    %v10011 = vpop.f32.mrb[0].mxu0
    %v10012 = vadd.f32 0.0, %v10011
    %10013 = vmatprep.mubr.bf16.mxu0 %v9245
    %10014 = vmatmul.mubr.bf16.gmra.mrb[0].mxu0 %v9244
    %v10015 = vpop.f32.mrb[0].mxu0
    %v10016 = vadd.f32 0.0, %v10015
    %v10017 = vpop.f32.mrb[0].mxu0
    %v10018 = vadd.f32 0.0, %v10017
    %v10019 = vpop.f32.mrb[0].mxu0
    %v10020 = vadd.f32 0.0, %v10019
    %v10021 = vpop.f32.mrb[0].mxu0
    %v10022 = vadd.f32 0.0, %v10021
    %10023 = vmatprep.mubr.bf16.mxu0 %v9247
    %10024 = vmatmul.mubr.bf16.gmra.mrb[0].mxu0 %v9246
    %v10025 = vpop.f32.mrb[0].mxu0
    %v10026 = vadd.f32 0.0, %v10025
    %v10027 = vpop.f32.mrb[0].mxu0
    %v10028 = vadd.f32 0.0, %v10027
    %v10029 = vpop.f32.mrb[0].mxu0
    %v10030 = vadd.f32 0.0, %v10029
    %v10031 = vpop.f32.mrb[0].mxu0
    %v10032 = vadd.f32 0.0, %v10031
    %10033 = vmatprep.mubr.bf16.mxu0 %v9249
    %10034 = vmatmul.mubr.bf16.gmra.mrb[0].mxu0 %v9248
    %v10035 = vpop.f32.mrb[0].mxu0
    %v10036 = vadd.f32 0.0, %v10035
    %v10037 = vpop.f32.mrb[0].mxu0
    %v10038 = vadd.f32 0.0, %v10037
    %v10039 = vpop.f32.mrb[0].mxu0
    %v10040 = vadd.f32 0.0, %v10039
    %v10041 = vpop.f32.mrb[0].mxu0
    %v10042 = vadd.f32 0.0, %v10041
    %10043 = vmatprep.mubr.bf16.mxu0 %v9251
    %10044 = vmatmul.mubr.bf16.gmra.mrb[0].mxu0 %v9250
    %v10045 = vpop.f32.mrb[0].mxu0
    %v10046 = vadd.f32 0.0, %v10045
    %v10047 = vpop.f32.mrb[0].mxu0
    %v10048 = vadd.f32 0.0, %v10047
    %v10049 = vpop.f32.mrb[0].mxu0
    %v10050 = vadd.f32 0.0, %v10049
    %v10051 = vpop.f32.mrb[0].mxu0
    %v10052 = vadd.f32 0.0, %v10051
    %10053 = vmatprep.mubr.bf16.mxu0 %v9253
    %10054 = vmatmul.mubr.bf16.gmra.mrb[0].mxu0 %v9252
    %v10055 = vpop.f32.mrb[0].mxu0
    %v10056 = vadd.f32 0.0, %v10055
    %v10057 = vpop.f32.mrb[0].mxu0
    %v10058 = vadd.f32 0.0, %v10057
    %v10059 = vpop.f32.mrb[0].mxu0
    %v10060 = vadd.f32 0.0, %v10059
    %v10061 = vpop.f32.mrb[0].mxu0
    %v10062 = vadd.f32 0.0, %v10061
    %10063 = vmatprep.mubr.bf16.mxu0 %v9255
    %10064 = vmatmul.mubr.bf16.gmra.mrb[0].mxu0 %v9254
    %v10065 = vpop.f32.mrb[0].mxu0
    %v10066 = vadd.f32 0.0, %v10065
    %v10067 = vpop.f32.mrb[0].mxu0
    %v10068 = vadd.f32 0.0, %v10067
    %v10069 = vpop.f32.mrb[0].mxu0
    %v10070 = vadd.f32 0.0, %v10069
    %v10071 = vpop.f32.mrb[0].mxu0
    %v10072 = vadd.f32 0.0, %v10071
    %10073 = vmatprep.mubr.bf16.mxu0 %v9257
    %10074 = vmatmul.mubr.bf16.gmra.mrb[0].mxu0 %v9256
    %v10075 = vpop.f32.mrb[0].mxu0
    %v10076 = vadd.f32 0.0, %v10075
    %v10077 = vpop.f32.mrb[0].mxu0
    %v10078 = vadd.f32 0.0, %v10077
    %v10079 = vpop.f32.mrb[0].mxu0
    %v10080 = vadd.f32 0.0, %v10079
    %v10081 = vpop.f32.mrb[0].mxu0
    %v10082 = vadd.f32 0.0, %v10081
    %10083 = vmatprep.mubr.bf16.mxu0 %v9259
    %10084 = vmatmul.mubr.bf16.gmra.mrb[0].mxu0 %v9258
    %v10085 = vpop.f32.mrb[0].mxu0
    %v10086 = vadd.f32 0.0, %v10085
    %v10087 = vpop.f32.mrb[0].mxu0
    %v10088 = vadd.f32 0.0, %v10087
    %v10089 = vpop.f32.mrb[0].mxu0
    %v10090 = vadd.f32 0.0, %v10089
    %v10091 = vpop.f32.mrb[0].mxu0
    %v10092 = vadd.f32 0.0, %v10091
    %10093 = vmatprep.mubr.bf16.mxu0 %v9261
    %10094 = vmatmul.mubr.bf16.gmra.mrb[0].mxu0 %v9260
    %v10095 = vpop.f32.mrb[0].mxu0
    %v10096 = vadd.f32 0.0, %v10095
    %v10097 = vpop.f32.mrb[0].mxu0
    %v10098 = vadd.f32 0.0, %v10097
    %v10099 = vpop.f32.mrb[0].mxu0
    %v10100 = vadd.f32 0.0, %v10099
    %v10101 = vpop.f32.mrb[0].mxu0
    %v10102 = vadd.f32 0.0, %v10101
    %10103 = vmatprep.mubr.bf16.mxu0 %v9263
    %10104 = vmatmul.mubr.bf16.gmra.mrb[0].mxu0 %v9262
    %v10105 = vpop.f32.mrb[0].mxu0
    %v10106 = vadd.f32 0.0, %v10105
    %v10107 = vpop.f32.mrb[0].mxu0
    %v10108 = vadd.f32 0.0, %v10107
    %v10109 = vpop.f32.mrb[0].mxu0
    %v10110 = vadd.f32 0.0, %v10109
    %v10111 = vpop.f32.mrb[0].mxu0
    %v10112 = vadd.f32 0.0, %v10111
    %10113 = vmatprep.mubr.bf16.mxu0 %v9265
    %10114 = vmatmul.mubr.bf16.gmra.mrb[0].mxu0 %v9264
    %v10115 = vpop.f32.mrb[0].mxu0
    %v10116 = vadd.f32 0.0, %v10115
    %v10117 = vpop.f32.mrb[0].mxu0
    %v10118 = vadd.f32 0.0, %v10117
    %v10119 = vpop.f32.mrb[0].mxu0
    %v10120 = vadd.f32 0.0, %v10119
    %v10121 = vpop.f32.mrb[0].mxu0
    %v10122 = vadd.f32 0.0, %v10121
    %10123 = vmatprep.mubr.bf16.mxu0 %v9267
    %10124 = vmatmul.mubr.bf16.gmra.mrb[0].mxu0 %v9266
    %v10125 = vpop.f32.mrb[0].mxu0
    %v10126 = vadd.f32 0.0, %v10125
    %v10127 = vpop.f32.mrb[0].mxu0
    %v10128 = vadd.f32 0.0, %v10127
    %v10129 = vpop.f32.mrb[0].mxu0
    %v10130 = vadd.f32 0.0, %v10129
    %v10131 = vpop.f32.mrb[0].mxu0
    %v10132 = vadd.f32 0.0, %v10131
    %10133 = vdwg.mxu0
    %v10134 = vpack.c.bf16 %v9500, %v9496
    %v10135 = vpack.c.bf16 %v9502, %v9498
    %v10136 = vpack.c.bf16 %v9510, %v9506
    %v10137 = vpack.c.bf16 %v9512, %v9508
    %v10138 = vpack.c.bf16 %v9520, %v9516
    %v10139 = vpack.c.bf16 %v9522, %v9518
    %v10140 = vpack.c.bf16 %v9530, %v9526
    %v10141 = vpack.c.bf16 %v9532, %v9528
    %v10142 = vpack.c.bf16 %v9540, %v9536
    %v10143 = vpack.c.bf16 %v9542, %v9538
    %v10144 = vpack.c.bf16 %v9550, %v9546
    %v10145 = vpack.c.bf16 %v9552, %v9548
    %v10146 = vpack.c.bf16 %v9560, %v9556
    %v10147 = vpack.c.bf16 %v9562, %v9558
    %v10148 = vpack.c.bf16 %v9570, %v9566
    %v10149 = vpack.c.bf16 %v9572, %v9568
    %v10150 = vpack.c.bf16 %v9580, %v9576
    %v10151 = vpack.c.bf16 %v9582, %v9578
    %v10152 = vpack.c.bf16 %v9590, %v9586
    %v10153 = vpack.c.bf16 %v9592, %v9588
    %v10154 = vpack.c.bf16 %v9600, %v9596
    %v10155 = vpack.c.bf16 %v9602, %v9598
    %v10156 = vpack.c.bf16 %v9610, %v9606
    %v10157 = vpack.c.bf16 %v9612, %v9608
    %v10158 = vpack.c.bf16 %v9620, %v9616
    %v10159 = vpack.c.bf16 %v9622, %v9618
    %v10160 = vpack.c.bf16 %v9630, %v9626
    %v10161 = vpack.c.bf16 %v9632, %v9628
    %v10162 = vpack.c.bf16 %v9640, %v9636
    %v10163 = vpack.c.bf16 %v9642, %v9638
    %v10164 = vpack.c.bf16 %v9650, %v9646
    %v10165 = vpack.c.bf16 %v9652, %v9648
    %v10166 = vpack.c.bf16 %v9660, %v9656
    %v10167 = vpack.c.bf16 %v9662, %v9658
    %v10168 = vpack.c.bf16 %v9670, %v9666
    %v10169 = vpack.c.bf16 %v9672, %v9668
    %v10170 = vpack.c.bf16 %v9680, %v9676
    %v10171 = vpack.c.bf16 %v9682, %v9678
    %v10172 = vpack.c.bf16 %v9690, %v9686
    %v10173 = vpack.c.bf16 %v9692, %v9688
    %v10174 = vpack.c.bf16 %v9700, %v9696
    %v10175 = vpack.c.bf16 %v9702, %v9698
    %v10176 = vpack.c.bf16 %v9710, %v9706
    %v10177 = vpack.c.bf16 %v9712, %v9708
    %v10178 = vpack.c.bf16 %v9720, %v9716
    %v10179 = vpack.c.bf16 %v9722, %v9718
    %v10180 = vpack.c.bf16 %v9730, %v9726
    %v10181 = vpack.c.bf16 %v9732, %v9728
    %v10182 = vpack.c.bf16 %v9740, %v9736
    %v10183 = vpack.c.bf16 %v9742, %v9738
    %v10184 = vpack.c.bf16 %v9750, %v9746
    %v10185 = vpack.c.bf16 %v9752, %v9748
    %v10186 = vpack.c.bf16 %v9760, %v9756
    %v10187 = vpack.c.bf16 %v9762, %v9758
    %v10188 = vpack.c.bf16 %v9770, %v9766
    %v10189 = vpack.c.bf16 %v9772, %v9768
    %v10190 = vpack.c.bf16 %v9780, %v9776
    %v10191 = vpack.c.bf16 %v9782, %v9778
    %v10192 = vpack.c.bf16 %v9790, %v9786
    %v10193 = vpack.c.bf16 %v9792, %v9788
    %v10194 = vpack.c.bf16 %v9800, %v9796
    %v10195 = vpack.c.bf16 %v9802, %v9798
    %v10196 = vpack.c.bf16 %v9810, %v9806
    %v10197 = vpack.c.bf16 %v9812, %v9808
    %v10198 = vpack.c.bf16 %v9820, %v9816
    %v10199 = vpack.c.bf16 %v9822, %v9818
    %v10200 = vpack.c.bf16 %v9830, %v9826
    %v10201 = vpack.c.bf16 %v9832, %v9828
    %v10202 = vpack.c.bf16 %v9840, %v9836
    %v10203 = vpack.c.bf16 %v9842, %v9838
    %v10204 = vpack.c.bf16 %v9850, %v9846
    %v10205 = vpack.c.bf16 %v9852, %v9848
    %v10206 = vpack.c.bf16 %v9860, %v9856
    %v10207 = vpack.c.bf16 %v9862, %v9858
    %v10208 = vpack.c.bf16 %v9870, %v9866
    %v10209 = vpack.c.bf16 %v9872, %v9868
    %v10210 = vpack.c.bf16 %v9880, %v9876
    %v10211 = vpack.c.bf16 %v9882, %v9878
    %v10212 = vpack.c.bf16 %v9890, %v9886
    %v10213 = vpack.c.bf16 %v9892, %v9888
    %v10214 = vpack.c.bf16 %v9900, %v9896
    %v10215 = vpack.c.bf16 %v9902, %v9898
    %v10216 = vpack.c.bf16 %v9910, %v9906
    %v10217 = vpack.c.bf16 %v9912, %v9908
    %v10218 = vpack.c.bf16 %v9920, %v9916
    %v10219 = vpack.c.bf16 %v9922, %v9918
    %v10220 = vpack.c.bf16 %v9930, %v9926
    %v10221 = vpack.c.bf16 %v9932, %v9928
    %v10222 = vpack.c.bf16 %v9940, %v9936
    %v10223 = vpack.c.bf16 %v9942, %v9938
    %v10224 = vpack.c.bf16 %v9950, %v9946
    %v10225 = vpack.c.bf16 %v9952, %v9948
    %v10226 = vpack.c.bf16 %v9960, %v9956
    %v10227 = vpack.c.bf16 %v9962, %v9958
    %v10228 = vpack.c.bf16 %v9970, %v9966
    %v10229 = vpack.c.bf16 %v9972, %v9968
    %v10230 = vpack.c.bf16 %v9980, %v9976
    %v10231 = vpack.c.bf16 %v9982, %v9978
    %v10232 = vpack.c.bf16 %v9990, %v9986
    %v10233 = vpack.c.bf16 %v9992, %v9988
    %v10234 = vpack.c.bf16 %v10000, %v9996
    %v10235 = vpack.c.bf16 %v10002, %v9998
    %v10236 = vpack.c.bf16 %v10010, %v10006
    %v10237 = vpack.c.bf16 %v10012, %v10008
    %v10238 = vpack.c.bf16 %v10020, %v10016
    %v10239 = vpack.c.bf16 %v10022, %v10018
    %v10240 = vpack.c.bf16 %v10030, %v10026
    %v10241 = vpack.c.bf16 %v10032, %v10028
    %v10242 = vpack.c.bf16 %v10040, %v10036
    %v10243 = vpack.c.bf16 %v10042, %v10038
    %v10244 = vpack.c.bf16 %v10050, %v10046
    %v10245 = vpack.c.bf16 %v10052, %v10048
    %v10246 = vpack.c.bf16 %v10060, %v10056
    %v10247 = vpack.c.bf16 %v10062, %v10058
    %v10248 = vpack.c.bf16 %v10070, %v10066
    %v10249 = vpack.c.bf16 %v10072, %v10068
    %v10250 = vpack.c.bf16 %v10080, %v10076
    %v10251 = vpack.c.bf16 %v10082, %v10078
    %v10252 = vpack.c.bf16 %v10090, %v10086
    %v10253 = vpack.c.bf16 %v10092, %v10088
    %v10254 = vpack.c.bf16 %v10100, %v10096
    %v10255 = vpack.c.bf16 %v10102, %v10098
    %v10256 = vpack.c.bf16 %v10110, %v10106
    %v10257 = vpack.c.bf16 %v10112, %v10108
    %v10258 = vpack.c.bf16 %v10120, %v10116
    %v10259 = vpack.c.bf16 %v10122, %v10118
    %v10260 = vpack.c.bf16 %v10130, %v10126
    %v10261 = vpack.c.bf16 %v10132, %v10128
    %s10262 = scalar_lea.vmem %s4, 12
    %v10263 = vld [vmem:[%s10262] sm:$0x3]
    %v10266 = vunpack.c.l.s4 1966171168
    %v10267 = vunpack.c.0.s8 %v10266
    %v10268 = vlaneseq
    %v10269 = vshrl.u32 %v10268, 7
    %v10270 = vsub.s32 %v10267, %v10269
    %v10271 = vrot.slane %v10263, %v10270
    %v10272 = vcombine.high %v10271, %v10271
    %v10274 = vunpack.c.l.s4 1966171168
    %v10275 = vunpack.c.0.s8 %v10274
    %v10276 = vlaneseq
    %v10277 = vshrl.u32 %v10276, 7
    %v10278 = vsub.s32 %v10275, %v10277
    %v10279 = vrot.slane %v10271, %v10278
    %v10281 = vunpack.c.l.s4 1966171168
    %v10282 = vunpack.c.0.s8 %v10281
    %v10283 = vlaneseq
    %v10284 = vshrl.u32 %v10283, 7
    %v10285 = vsub.s32 %v10282, %v10284
    %v10286 = vrot.slane %v10272, %v10285
    %v10288 = vpack.i.b16 %v10279, %v10279
    %v10290 = vlaneseq
    %v10291 = vshrl.u32 %v10290, 7
    %v10292 = vsub.s32 0, %v10291
    %v10293 = vrot.slane %v10288, %v10292
    %v10295 = vpack.i.b16 %v10286, %v10286
    %v10297 = vlaneseq
    %v10298 = vshrl.u32 %v10297, 7
    %v10299 = vsub.s32 0, %v10298
    %v10300 = vrot.slane %v10295, %v10299
    %v10301 = vadd.bf16 %v10134, %v10293
    %v10302 = vadd.bf16 %v10135, %v10300
    %v10303 = vadd.bf16 %v10136, %v10293
    %v10304 = vadd.bf16 %v10137, %v10300
    %v10305 = vadd.bf16 %v10138, %v10293
    %v10306 = vadd.bf16 %v10139, %v10300
    %v10307 = vadd.bf16 %v10140, %v10293
    %v10308 = vadd.bf16 %v10141, %v10300
    %v10309 = vadd.bf16 %v10142, %v10293
    %v10310 = vadd.bf16 %v10143, %v10300
    %v10311 = vadd.bf16 %v10144, %v10293
    %v10312 = vadd.bf16 %v10145, %v10300
    %v10313 = vadd.bf16 %v10146, %v10293
    %v10314 = vadd.bf16 %v10147, %v10300
    %v10315 = vadd.bf16 %v10148, %v10293
    %v10316 = vadd.bf16 %v10149, %v10300
    %v10317 = vadd.bf16 %v10150, %v10293
    %v10318 = vadd.bf16 %v10151, %v10300
    %v10319 = vadd.bf16 %v10152, %v10293
    %v10320 = vadd.bf16 %v10153, %v10300
    %v10321 = vadd.bf16 %v10154, %v10293
    %v10322 = vadd.bf16 %v10155, %v10300
    %v10323 = vadd.bf16 %v10156, %v10293
    %v10324 = vadd.bf16 %v10157, %v10300
    %v10325 = vadd.bf16 %v10158, %v10293
    %v10326 = vadd.bf16 %v10159, %v10300
    %v10327 = vadd.bf16 %v10160, %v10293
    %v10328 = vadd.bf16 %v10161, %v10300
    %v10329 = vadd.bf16 %v10162, %v10293
    %v10330 = vadd.bf16 %v10163, %v10300
    %v10331 = vadd.bf16 %v10164, %v10293
    %v10332 = vadd.bf16 %v10165, %v10300
    %v10333 = vadd.bf16 %v10166, %v10293
    %v10334 = vadd.bf16 %v10167, %v10300
    %v10335 = vadd.bf16 %v10168, %v10293
    %v10336 = vadd.bf16 %v10169, %v10300
    %v10337 = vadd.bf16 %v10170, %v10293
    %v10338 = vadd.bf16 %v10171, %v10300
    %v10339 = vadd.bf16 %v10172, %v10293
    %v10340 = vadd.bf16 %v10173, %v10300
    %v10341 = vadd.bf16 %v10174, %v10293
    %v10342 = vadd.bf16 %v10175, %v10300
    %v10343 = vadd.bf16 %v10176, %v10293
    %v10344 = vadd.bf16 %v10177, %v10300
    %v10345 = vadd.bf16 %v10178, %v10293
    %v10346 = vadd.bf16 %v10179, %v10300
    %v10347 = vadd.bf16 %v10180, %v10293
    %v10348 = vadd.bf16 %v10181, %v10300
    %v10349 = vadd.bf16 %v10182, %v10293
    %v10350 = vadd.bf16 %v10183, %v10300
    %v10351 = vadd.bf16 %v10184, %v10293
    %v10352 = vadd.bf16 %v10185, %v10300
    %v10353 = vadd.bf16 %v10186, %v10293
    %v10354 = vadd.bf16 %v10187, %v10300
    %v10355 = vadd.bf16 %v10188, %v10293
    %v10356 = vadd.bf16 %v10189, %v10300
    %v10357 = vadd.bf16 %v10190, %v10293
    %v10358 = vadd.bf16 %v10191, %v10300
    %v10359 = vadd.bf16 %v10192, %v10293
    %v10360 = vadd.bf16 %v10193, %v10300
    %v10361 = vadd.bf16 %v10194, %v10293
    %v10362 = vadd.bf16 %v10195, %v10300
    %v10363 = vadd.bf16 %v10196, %v10293
    %v10364 = vadd.bf16 %v10197, %v10300
    %v10365 = vadd.bf16 %v10198, %v10293
    %v10366 = vadd.bf16 %v10199, %v10300
    %v10367 = vadd.bf16 %v10200, %v10293
    %v10368 = vadd.bf16 %v10201, %v10300
    %v10369 = vadd.bf16 %v10202, %v10293
    %v10370 = vadd.bf16 %v10203, %v10300
    %v10371 = vadd.bf16 %v10204, %v10293
    %v10372 = vadd.bf16 %v10205, %v10300
    %v10373 = vadd.bf16 %v10206, %v10293
    %v10374 = vadd.bf16 %v10207, %v10300
    %v10375 = vadd.bf16 %v10208, %v10293
    %v10376 = vadd.bf16 %v10209, %v10300
    %v10377 = vadd.bf16 %v10210, %v10293
    %v10378 = vadd.bf16 %v10211, %v10300
    %v10379 = vadd.bf16 %v10212, %v10293
    %v10380 = vadd.bf16 %v10213, %v10300
    %v10381 = vadd.bf16 %v10214, %v10293
    %v10382 = vadd.bf16 %v10215, %v10300
    %v10383 = vadd.bf16 %v10216, %v10293
    %v10384 = vadd.bf16 %v10217, %v10300
    %v10385 = vadd.bf16 %v10218, %v10293
    %v10386 = vadd.bf16 %v10219, %v10300
    %v10387 = vadd.bf16 %v10220, %v10293
    %v10388 = vadd.bf16 %v10221, %v10300
    %v10389 = vadd.bf16 %v10222, %v10293
    %v10390 = vadd.bf16 %v10223, %v10300
    %v10391 = vadd.bf16 %v10224, %v10293
    %v10392 = vadd.bf16 %v10225, %v10300
    %v10393 = vadd.bf16 %v10226, %v10293
    %v10394 = vadd.bf16 %v10227, %v10300
    %v10395 = vadd.bf16 %v10228, %v10293
    %v10396 = vadd.bf16 %v10229, %v10300
    %v10397 = vadd.bf16 %v10230, %v10293
    %v10398 = vadd.bf16 %v10231, %v10300
    %v10399 = vadd.bf16 %v10232, %v10293
    %v10400 = vadd.bf16 %v10233, %v10300
    %v10401 = vadd.bf16 %v10234, %v10293
    %v10402 = vadd.bf16 %v10235, %v10300
    %v10403 = vadd.bf16 %v10236, %v10293
    %v10404 = vadd.bf16 %v10237, %v10300
    %v10405 = vadd.bf16 %v10238, %v10293
    %v10406 = vadd.bf16 %v10239, %v10300
    %v10407 = vadd.bf16 %v10240, %v10293
    %v10408 = vadd.bf16 %v10241, %v10300
    %v10409 = vadd.bf16 %v10242, %v10293
    %v10410 = vadd.bf16 %v10243, %v10300
    %v10411 = vadd.bf16 %v10244, %v10293
    %v10412 = vadd.bf16 %v10245, %v10300
    %v10413 = vadd.bf16 %v10246, %v10293
    %v10414 = vadd.bf16 %v10247, %v10300
    %v10415 = vadd.bf16 %v10248, %v10293
    %v10416 = vadd.bf16 %v10249, %v10300
    %v10417 = vadd.bf16 %v10250, %v10293
    %v10418 = vadd.bf16 %v10251, %v10300
    %v10419 = vadd.bf16 %v10252, %v10293
    %v10420 = vadd.bf16 %v10253, %v10300
    %v10421 = vadd.bf16 %v10254, %v10293
    %v10422 = vadd.bf16 %v10255, %v10300
    %v10423 = vadd.bf16 %v10256, %v10293
    %v10424 = vadd.bf16 %v10257, %v10300
    %v10425 = vadd.bf16 %v10258, %v10293
    %v10426 = vadd.bf16 %v10259, %v10300
    %v10427 = vadd.bf16 %v10260, %v10293
    %v10428 = vadd.bf16 %v10261, %v10300
    %v10429 = vmax.bf16 %v10301, 0
    %v10430 = vmax.bf16 %v10302, 0
    %v10431 = vmax.bf16 %v10303, 0
    %v10432 = vmax.bf16 %v10304, 0
    %v10433 = vmax.bf16 %v10305, 0
    %v10434 = vmax.bf16 %v10306, 0
    %v10435 = vmax.bf16 %v10307, 0
    %v10436 = vmax.bf16 %v10308, 0
    %v10437 = vmax.bf16 %v10309, 0
    %v10438 = vmax.bf16 %v10310, 0
    %v10439 = vmax.bf16 %v10311, 0
    %v10440 = vmax.bf16 %v10312, 0
    %v10441 = vmax.bf16 %v10313, 0
    %v10442 = vmax.bf16 %v10314, 0
    %v10443 = vmax.bf16 %v10315, 0
    %v10444 = vmax.bf16 %v10316, 0
    %v10445 = vmax.bf16 %v10317, 0
    %v10446 = vmax.bf16 %v10318, 0
    %v10447 = vmax.bf16 %v10319, 0
    %v10448 = vmax.bf16 %v10320, 0
    %v10449 = vmax.bf16 %v10321, 0
    %v10450 = vmax.bf16 %v10322, 0
    %v10451 = vmax.bf16 %v10323, 0
    %v10452 = vmax.bf16 %v10324, 0
    %v10453 = vmax.bf16 %v10325, 0
    %v10454 = vmax.bf16 %v10326, 0
    %v10455 = vmax.bf16 %v10327, 0
    %v10456 = vmax.bf16 %v10328, 0
    %v10457 = vmax.bf16 %v10329, 0
    %v10458 = vmax.bf16 %v10330, 0
    %v10459 = vmax.bf16 %v10331, 0
    %v10460 = vmax.bf16 %v10332, 0
    %v10461 = vmax.bf16 %v10333, 0
    %v10462 = vmax.bf16 %v10334, 0
    %v10463 = vmax.bf16 %v10335, 0
    %v10464 = vmax.bf16 %v10336, 0
    %v10465 = vmax.bf16 %v10337, 0
    %v10466 = vmax.bf16 %v10338, 0
    %v10467 = vmax.bf16 %v10339, 0
    %v10468 = vmax.bf16 %v10340, 0
    %v10469 = vmax.bf16 %v10341, 0
    %v10470 = vmax.bf16 %v10342, 0
    %v10471 = vmax.bf16 %v10343, 0
    %v10472 = vmax.bf16 %v10344, 0
    %v10473 = vmax.bf16 %v10345, 0
    %v10474 = vmax.bf16 %v10346, 0
    %v10475 = vmax.bf16 %v10347, 0
    %v10476 = vmax.bf16 %v10348, 0
    %v10477 = vmax.bf16 %v10349, 0
    %v10478 = vmax.bf16 %v10350, 0
    %v10479 = vmax.bf16 %v10351, 0
    %v10480 = vmax.bf16 %v10352, 0
    %v10481 = vmax.bf16 %v10353, 0
    %v10482 = vmax.bf16 %v10354, 0
    %v10483 = vmax.bf16 %v10355, 0
    %v10484 = vmax.bf16 %v10356, 0
    %v10485 = vmax.bf16 %v10357, 0
    %v10486 = vmax.bf16 %v10358, 0
    %v10487 = vmax.bf16 %v10359, 0
    %v10488 = vmax.bf16 %v10360, 0
    %v10489 = vmax.bf16 %v10361, 0
    %v10490 = vmax.bf16 %v10362, 0
    %v10491 = vmax.bf16 %v10363, 0
    %v10492 = vmax.bf16 %v10364, 0
    %v10493 = vmax.bf16 %v10365, 0
    %v10494 = vmax.bf16 %v10366, 0
    %v10495 = vmax.bf16 %v10367, 0
    %v10496 = vmax.bf16 %v10368, 0
    %v10497 = vmax.bf16 %v10369, 0
    %v10498 = vmax.bf16 %v10370, 0
    %v10499 = vmax.bf16 %v10371, 0
    %v10500 = vmax.bf16 %v10372, 0
    %v10501 = vmax.bf16 %v10373, 0
    %v10502 = vmax.bf16 %v10374, 0
    %v10503 = vmax.bf16 %v10375, 0
    %v10504 = vmax.bf16 %v10376, 0
    %v10505 = vmax.bf16 %v10377, 0
    %v10506 = vmax.bf16 %v10378, 0
    %v10507 = vmax.bf16 %v10379, 0
    %v10508 = vmax.bf16 %v10380, 0
    %v10509 = vmax.bf16 %v10381, 0
    %v10510 = vmax.bf16 %v10382, 0
    %v10511 = vmax.bf16 %v10383, 0
    %v10512 = vmax.bf16 %v10384, 0
    %v10513 = vmax.bf16 %v10385, 0
    %v10514 = vmax.bf16 %v10386, 0
    %v10515 = vmax.bf16 %v10387, 0
    %v10516 = vmax.bf16 %v10388, 0
    %v10517 = vmax.bf16 %v10389, 0
    %v10518 = vmax.bf16 %v10390, 0
    %v10519 = vmax.bf16 %v10391, 0
    %v10520 = vmax.bf16 %v10392, 0
    %v10521 = vmax.bf16 %v10393, 0
    %v10522 = vmax.bf16 %v10394, 0
    %v10523 = vmax.bf16 %v10395, 0
    %v10524 = vmax.bf16 %v10396, 0
    %v10525 = vmax.bf16 %v10397, 0
    %v10526 = vmax.bf16 %v10398, 0
    %v10527 = vmax.bf16 %v10399, 0
    %v10528 = vmax.bf16 %v10400, 0
    %v10529 = vmax.bf16 %v10401, 0
    %v10530 = vmax.bf16 %v10402, 0
    %v10531 = vmax.bf16 %v10403, 0
    %v10532 = vmax.bf16 %v10404, 0
    %v10533 = vmax.bf16 %v10405, 0
    %v10534 = vmax.bf16 %v10406, 0
    %v10535 = vmax.bf16 %v10407, 0
    %v10536 = vmax.bf16 %v10408, 0
    %v10537 = vmax.bf16 %v10409, 0
    %v10538 = vmax.bf16 %v10410, 0
    %v10539 = vmax.bf16 %v10411, 0
    %v10540 = vmax.bf16 %v10412, 0
    %v10541 = vmax.bf16 %v10413, 0
    %v10542 = vmax.bf16 %v10414, 0
    %v10543 = vmax.bf16 %v10415, 0
    %v10544 = vmax.bf16 %v10416, 0
    %v10545 = vmax.bf16 %v10417, 0
    %v10546 = vmax.bf16 %v10418, 0
    %v10547 = vmax.bf16 %v10419, 0
    %v10548 = vmax.bf16 %v10420, 0
    %v10549 = vmax.bf16 %v10421, 0
    %v10550 = vmax.bf16 %v10422, 0
    %v10551 = vmax.bf16 %v10423, 0
    %v10552 = vmax.bf16 %v10424, 0
    %v10553 = vmax.bf16 %v10425, 0
    %v10554 = vmax.bf16 %v10426, 0
    %v10555 = vmax.bf16 %v10427, 0
    %v10556 = vmax.bf16 %v10428, 0
    %v10557 = vld [vmem:[%s5] sm:$0xf]
    %v10558 = vld [vmem:[%s5 + $0x4] sm:$0xf]
    %v10559 = vld [vmem:[%s5 + $0x8] sm:$0xf]
    %v10560 = vld [vmem:[%s5 + $0xc] sm:$0xf]
    %v10561 = vld [vmem:[%s5 + $0x10] sm:$0xf]
    %v10562 = vld [vmem:[%s5 + $0x14] sm:$0xf]
    %v10563 = vld [vmem:[%s5 + $0x18] sm:$0xf]
    %v10564 = vld [vmem:[%s5 + $0x1c] sm:$0xf]
    %v10565 = vld [vmem:[%s5 + $0x20] sm:$0xf]
    %v10566 = vld [vmem:[%s5 + $0x24] sm:$0xf]
    %v10567 = vld [vmem:[%s5 + $0x28] sm:$0xf]
    %v10568 = vld [vmem:[%s5 + $0x2c] sm:$0xf]
    %v10569 = vld [vmem:[%s5 + $0x30] sm:$0xf]
    %v10570 = vld [vmem:[%s5 + $0x34] sm:$0xf]
    %v10571 = vld [vmem:[%s5 + $0x38] sm:$0xf]
    %v10572 = vld [vmem:[%s5 + $0x3c] sm:$0xf]
    %v10573 = vld [vmem:[%s5 + $0x40] sm:$0xf]
    %v10574 = vld [vmem:[%s5 + $0x44] sm:$0xf]
    %v10575 = vld [vmem:[%s5 + $0x48] sm:$0xf]
    %v10576 = vld [vmem:[%s5 + $0x4c] sm:$0xf]
    %v10577 = vld [vmem:[%s5 + $0x50] sm:$0xf]
    %v10578 = vld [vmem:[%s5 + $0x54] sm:$0xf]
    %v10579 = vld [vmem:[%s5 + $0x58] sm:$0xf]
    %v10580 = vld [vmem:[%s5 + $0x5c] sm:$0xf]
    %v10581 = vld [vmem:[%s5 + $0x60] sm:$0xf]
    %v10582 = vld [vmem:[%s5 + $0x64] sm:$0xf]
    %v10583 = vld [vmem:[%s5 + $0x68] sm:$0xf]
    %v10584 = vld [vmem:[%s5 + $0x6c] sm:$0xf]
    %v10585 = vld [vmem:[%s5 + $0x70] sm:$0xf]
    %v10586 = vld [vmem:[%s5 + $0x74] sm:$0xf]
    %v10587 = vld [vmem:[%s5 + $0x78] sm:$0xf]
    %v10588 = vld [vmem:[%s5 + $0x7c] sm:$0xf]
    %v10621 = vunpack.c.l.b16 %v10557
    %v10622 = vunpack.c.l.b16 %v10558
    %v10623 = vunpack.c.l.b16 %v10559
    %v10624 = vunpack.c.l.b16 %v10560
    %v10625 = vunpack.c.l.b16 %v10561
    %v10626 = vunpack.c.l.b16 %v10562
    %v10627 = vunpack.c.l.b16 %v10563
    %v10628 = vunpack.c.l.b16 %v10564
    %v10629 = vunpack.c.l.b16 %v10565
    %v10630 = vunpack.c.l.b16 %v10566
    %v10631 = vunpack.c.l.b16 %v10567
    %v10632 = vunpack.c.l.b16 %v10568
    %v10633 = vunpack.c.l.b16 %v10569
    %v10634 = vunpack.c.l.b16 %v10570
    %v10635 = vunpack.c.l.b16 %v10571
    %v10636 = vunpack.c.l.b16 %v10572
    %v10637 = vunpack.c.l.b16 %v10573
    %v10638 = vunpack.c.l.b16 %v10574
    %v10639 = vunpack.c.l.b16 %v10575
    %v10640 = vunpack.c.l.b16 %v10576
    %v10641 = vunpack.c.l.b16 %v10577
    %v10642 = vunpack.c.l.b16 %v10578
    %v10643 = vunpack.c.l.b16 %v10579
    %v10644 = vunpack.c.l.b16 %v10580
    %v10645 = vunpack.c.l.b16 %v10581
    %v10646 = vunpack.c.l.b16 %v10582
    %v10647 = vunpack.c.l.b16 %v10583
    %v10648 = vunpack.c.l.b16 %v10584
    %v10649 = vunpack.c.l.b16 %v10585
    %v10650 = vunpack.c.l.b16 %v10586
    %v10651 = vunpack.c.l.b16 %v10587
    %v10652 = vunpack.c.l.b16 %v10588
    %v10653 = vpack.c.b16 %v10622, %v10621
    %v10654 = vpack.c.b16 %v10624, %v10623
    %v10655 = vpack.c.b16 %v10626, %v10625
    %v10656 = vpack.c.b16 %v10628, %v10627
    %v10657 = vpack.c.b16 %v10630, %v10629
    %v10658 = vpack.c.b16 %v10632, %v10631
    %v10659 = vpack.c.b16 %v10634, %v10633
    %v10660 = vpack.c.b16 %v10636, %v10635
    %v10661 = vpack.c.b16 %v10638, %v10637
    %v10662 = vpack.c.b16 %v10640, %v10639
    %v10663 = vpack.c.b16 %v10642, %v10641
    %v10664 = vpack.c.b16 %v10644, %v10643
    %v10665 = vpack.c.b16 %v10646, %v10645
    %v10666 = vpack.c.b16 %v10648, %v10647
    %v10667 = vpack.c.b16 %v10650, %v10649
    %v10668 = vpack.c.b16 %v10652, %v10651
    %10685 = vmatprep.subr.bf16.mxu0 0
    %10686 = vmatpush1.bf16.msra.mxu0 %v10653
    %10687 = vmatprep.subr.bf16.mxu0 0
    %10688 = vmatpush1.bf16.msra.mxu0 %v10654
    %10689 = vmatprep.subr.bf16.mxu0 0
    %10690 = vmatpush1.bf16.msra.mxu0 %v10655
    %10691 = vmatprep.subr.bf16.mxu0 0
    %10692 = vmatpush1.bf16.msra.mxu0 %v10656
    %10693 = vmatprep.subr.bf16.mxu0 0
    %10694 = vmatpush1.bf16.msra.mxu0 %v10657
    %10695 = vmatprep.subr.bf16.mxu0 0
    %10696 = vmatpush1.bf16.msra.mxu0 %v10658
    %10697 = vmatprep.subr.bf16.mxu0 0
    %10698 = vmatpush1.bf16.msra.mxu0 %v10659
    %10699 = vmatprep.subr.bf16.mxu0 0
    %10700 = vmatpush1.bf16.msra.mxu0 %v10660
    %10701 = vmatprep.subr.bf16.mxu0 0
    %10702 = vmatpush1.bf16.msra.mxu0 %v10661
    %10703 = vmatprep.subr.bf16.mxu0 0
    %10704 = vmatpush1.bf16.msra.mxu0 %v10662
    %10705 = vmatprep.subr.bf16.mxu0 0
    %10706 = vmatpush1.bf16.msra.mxu0 %v10663
    %10707 = vmatprep.subr.bf16.mxu0 0
    %10708 = vmatpush1.bf16.msra.mxu0 %v10664
    %10709 = vmatprep.subr.bf16.mxu0 0
    %10710 = vmatpush1.bf16.msra.mxu0 %v10665
    %10711 = vmatprep.subr.bf16.mxu0 0
    %10712 = vmatpush1.bf16.msra.mxu0 %v10666
    %10713 = vmatprep.subr.bf16.mxu0 0
    %10714 = vmatpush1.bf16.msra.mxu0 %v10667
    %10715 = vmatprep.subr.bf16.mxu0 0
    %10716 = vmatpush1.bf16.msra.mxu0 %v10668
    %10717 = vmatprep.mubr.bf16.mxu0 %v10430
    %10718 = vmatmul.mubr.bf16.gmra.mrb[0].mxu0 %v10429
    %v10719 = vpop.f32.mrb[0].mxu0
    %v10720 = vadd.f32 0.0, %v10719
    %v10721 = vpop.f32.mrb[0].mxu0
    %v10722 = vpop.f32.mrb[0].mxu0
    %v10723 = vadd.f32 0.0, %v10722
    %v10724 = vpop.f32.mrb[0].mxu0
    %10725 = vmatprep.mubr.bf16.mxu0 %v10432
    %10726 = vmatmul.mubr.bf16.gmra.mrb[0].mxu0 %v10431
    %v10727 = vpop.f32.mrb[0].mxu0
    %v10728 = vadd.f32 0.0, %v10727
    %v10729 = vpop.f32.mrb[0].mxu0
    %v10730 = vpop.f32.mrb[0].mxu0
    %v10731 = vadd.f32 0.0, %v10730
    %v10732 = vpop.f32.mrb[0].mxu0
    %10733 = vmatprep.mubr.bf16.mxu0 %v10434
    %10734 = vmatmul.mubr.bf16.gmra.mrb[0].mxu0 %v10433
    %v10735 = vpop.f32.mrb[0].mxu0
    %v10736 = vadd.f32 0.0, %v10735
    %v10737 = vpop.f32.mrb[0].mxu0
    %v10738 = vpop.f32.mrb[0].mxu0
    %v10739 = vadd.f32 0.0, %v10738
    %v10740 = vpop.f32.mrb[0].mxu0
    %10741 = vmatprep.mubr.bf16.mxu0 %v10436
    %10742 = vmatmul.mubr.bf16.gmra.mrb[0].mxu0 %v10435
    %v10743 = vpop.f32.mrb[0].mxu0
    %v10744 = vadd.f32 0.0, %v10743
    %v10745 = vpop.f32.mrb[0].mxu0
    %v10746 = vpop.f32.mrb[0].mxu0
    %v10747 = vadd.f32 0.0, %v10746
    %v10748 = vpop.f32.mrb[0].mxu0
    %10749 = vmatprep.mubr.bf16.mxu0 %v10438
    %10750 = vmatmul.mubr.bf16.gmra.mrb[0].mxu0 %v10437
    %v10751 = vpop.f32.mrb[0].mxu0
    %v10752 = vadd.f32 0.0, %v10751
    %v10753 = vpop.f32.mrb[0].mxu0
    %v10754 = vpop.f32.mrb[0].mxu0
    %v10755 = vadd.f32 0.0, %v10754
    %v10756 = vpop.f32.mrb[0].mxu0
    %10757 = vmatprep.mubr.bf16.mxu0 %v10440
    %10758 = vmatmul.mubr.bf16.gmra.mrb[0].mxu0 %v10439
    %v10759 = vpop.f32.mrb[0].mxu0
    %v10760 = vadd.f32 0.0, %v10759
    %v10761 = vpop.f32.mrb[0].mxu0
    %v10762 = vpop.f32.mrb[0].mxu0
    %v10763 = vadd.f32 0.0, %v10762
    %v10764 = vpop.f32.mrb[0].mxu0
    %10765 = vmatprep.mubr.bf16.mxu0 %v10442
    %10766 = vmatmul.mubr.bf16.gmra.mrb[0].mxu0 %v10441
    %v10767 = vpop.f32.mrb[0].mxu0
    %v10768 = vadd.f32 0.0, %v10767
    %v10769 = vpop.f32.mrb[0].mxu0
    %v10770 = vpop.f32.mrb[0].mxu0
    %v10771 = vadd.f32 0.0, %v10770
    %v10772 = vpop.f32.mrb[0].mxu0
    %10773 = vmatprep.mubr.bf16.mxu0 %v10444
    %10774 = vmatmul.mubr.bf16.gmra.mrb[0].mxu0 %v10443
    %v10775 = vpop.f32.mrb[0].mxu0
    %v10776 = vadd.f32 0.0, %v10775
    %v10777 = vpop.f32.mrb[0].mxu0
    %v10778 = vpop.f32.mrb[0].mxu0
    %v10779 = vadd.f32 0.0, %v10778
    %v10780 = vpop.f32.mrb[0].mxu0
    %10781 = vmatprep.mubr.bf16.mxu0 %v10446
    %10782 = vmatmul.mubr.bf16.gmra.mrb[0].mxu0 %v10445
    %v10783 = vpop.f32.mrb[0].mxu0
    %v10784 = vadd.f32 0.0, %v10783
    %v10785 = vpop.f32.mrb[0].mxu0
    %v10786 = vpop.f32.mrb[0].mxu0
    %v10787 = vadd.f32 0.0, %v10786
    %v10788 = vpop.f32.mrb[0].mxu0
    %10789 = vmatprep.mubr.bf16.mxu0 %v10448
    %10790 = vmatmul.mubr.bf16.gmra.mrb[0].mxu0 %v10447
    %v10791 = vpop.f32.mrb[0].mxu0
    %v10792 = vadd.f32 0.0, %v10791
    %v10793 = vpop.f32.mrb[0].mxu0
    %v10794 = vpop.f32.mrb[0].mxu0
    %v10795 = vadd.f32 0.0, %v10794
    %v10796 = vpop.f32.mrb[0].mxu0
    %10797 = vmatprep.mubr.bf16.mxu0 %v10450
    %10798 = vmatmul.mubr.bf16.gmra.mrb[0].mxu0 %v10449
    %v10799 = vpop.f32.mrb[0].mxu0
    %v10800 = vadd.f32 0.0, %v10799
    %v10801 = vpop.f32.mrb[0].mxu0
    %v10802 = vpop.f32.mrb[0].mxu0
    %v10803 = vadd.f32 0.0, %v10802
    %v10804 = vpop.f32.mrb[0].mxu0
    %10805 = vmatprep.mubr.bf16.mxu0 %v10452
    %10806 = vmatmul.mubr.bf16.gmra.mrb[0].mxu0 %v10451
    %v10807 = vpop.f32.mrb[0].mxu0
    %v10808 = vadd.f32 0.0, %v10807
    %v10809 = vpop.f32.mrb[0].mxu0
    %v10810 = vpop.f32.mrb[0].mxu0
    %v10811 = vadd.f32 0.0, %v10810
    %v10812 = vpop.f32.mrb[0].mxu0
    %10813 = vmatprep.mubr.bf16.mxu0 %v10454
    %10814 = vmatmul.mubr.bf16.gmra.mrb[0].mxu0 %v10453
    %v10815 = vpop.f32.mrb[0].mxu0
    %v10816 = vadd.f32 0.0, %v10815
    %v10817 = vpop.f32.mrb[0].mxu0
    %v10818 = vpop.f32.mrb[0].mxu0
    %v10819 = vadd.f32 0.0, %v10818
    %v10820 = vpop.f32.mrb[0].mxu0
    %10821 = vmatprep.mubr.bf16.mxu0 %v10456
    %10822 = vmatmul.mubr.bf16.gmra.mrb[0].mxu0 %v10455
    %v10823 = vpop.f32.mrb[0].mxu0
    %v10824 = vadd.f32 0.0, %v10823
    %v10825 = vpop.f32.mrb[0].mxu0
    %v10826 = vpop.f32.mrb[0].mxu0
    %v10827 = vadd.f32 0.0, %v10826
    %v10828 = vpop.f32.mrb[0].mxu0
    %10829 = vmatprep.mubr.bf16.mxu0 %v10458
    %10830 = vmatmul.mubr.bf16.gmra.mrb[0].mxu0 %v10457
    %v10831 = vpop.f32.mrb[0].mxu0
    %v10832 = vadd.f32 0.0, %v10831
    %v10833 = vpop.f32.mrb[0].mxu0
    %v10834 = vpop.f32.mrb[0].mxu0
    %v10835 = vadd.f32 0.0, %v10834
    %v10836 = vpop.f32.mrb[0].mxu0
    %10837 = vmatprep.mubr.bf16.mxu0 %v10460
    %10838 = vmatmul.mubr.bf16.gmra.mrb[0].mxu0 %v10459
    %v10839 = vpop.f32.mrb[0].mxu0
    %v10840 = vadd.f32 0.0, %v10839
    %v10841 = vpop.f32.mrb[0].mxu0
    %v10842 = vpop.f32.mrb[0].mxu0
    %v10843 = vadd.f32 0.0, %v10842
    %v10844 = vpop.f32.mrb[0].mxu0
    %10845 = vmatprep.mubr.bf16.mxu0 %v10462
    %10846 = vmatmul.mubr.bf16.gmra.mrb[0].mxu0 %v10461
    %v10847 = vpop.f32.mrb[0].mxu0
    %v10848 = vadd.f32 0.0, %v10847
    %v10849 = vpop.f32.mrb[0].mxu0
    %v10850 = vpop.f32.mrb[0].mxu0
    %v10851 = vadd.f32 0.0, %v10850
    %v10852 = vpop.f32.mrb[0].mxu0
    %10853 = vmatprep.mubr.bf16.mxu0 %v10464
    %10854 = vmatmul.mubr.bf16.gmra.mrb[0].mxu0 %v10463
    %v10855 = vpop.f32.mrb[0].mxu0
    %v10856 = vadd.f32 0.0, %v10855
    %v10857 = vpop.f32.mrb[0].mxu0
    %v10858 = vpop.f32.mrb[0].mxu0
    %v10859 = vadd.f32 0.0, %v10858
    %v10860 = vpop.f32.mrb[0].mxu0
    %10861 = vmatprep.mubr.bf16.mxu0 %v10466
    %10862 = vmatmul.mubr.bf16.gmra.mrb[0].mxu0 %v10465
    %v10863 = vpop.f32.mrb[0].mxu0
    %v10864 = vadd.f32 0.0, %v10863
    %v10865 = vpop.f32.mrb[0].mxu0
    %v10866 = vpop.f32.mrb[0].mxu0
    %v10867 = vadd.f32 0.0, %v10866
    %v10868 = vpop.f32.mrb[0].mxu0
    %10869 = vmatprep.mubr.bf16.mxu0 %v10468
    %10870 = vmatmul.mubr.bf16.gmra.mrb[0].mxu0 %v10467
    %v10871 = vpop.f32.mrb[0].mxu0
    %v10872 = vadd.f32 0.0, %v10871
    %v10873 = vpop.f32.mrb[0].mxu0
    %v10874 = vpop.f32.mrb[0].mxu0
    %v10875 = vadd.f32 0.0, %v10874
    %v10876 = vpop.f32.mrb[0].mxu0
    %10877 = vmatprep.mubr.bf16.mxu0 %v10470
    %10878 = vmatmul.mubr.bf16.gmra.mrb[0].mxu0 %v10469
    %v10879 = vpop.f32.mrb[0].mxu0
    %v10880 = vadd.f32 0.0, %v10879
    %v10881 = vpop.f32.mrb[0].mxu0
    %v10882 = vpop.f32.mrb[0].mxu0
    %v10883 = vadd.f32 0.0, %v10882
    %v10884 = vpop.f32.mrb[0].mxu0
    %10885 = vmatprep.mubr.bf16.mxu0 %v10472
    %10886 = vmatmul.mubr.bf16.gmra.mrb[0].mxu0 %v10471
    %v10887 = vpop.f32.mrb[0].mxu0
    %v10888 = vadd.f32 0.0, %v10887
    %v10889 = vpop.f32.mrb[0].mxu0
    %v10890 = vpop.f32.mrb[0].mxu0
    %v10891 = vadd.f32 0.0, %v10890
    %v10892 = vpop.f32.mrb[0].mxu0
    %10893 = vmatprep.mubr.bf16.mxu0 %v10474
    %10894 = vmatmul.mubr.bf16.gmra.mrb[0].mxu0 %v10473
    %v10895 = vpop.f32.mrb[0].mxu0
    %v10896 = vadd.f32 0.0, %v10895
    %v10897 = vpop.f32.mrb[0].mxu0
    %v10898 = vpop.f32.mrb[0].mxu0
    %v10899 = vadd.f32 0.0, %v10898
    %v10900 = vpop.f32.mrb[0].mxu0
    %10901 = vmatprep.mubr.bf16.mxu0 %v10476
    %10902 = vmatmul.mubr.bf16.gmra.mrb[0].mxu0 %v10475
    %v10903 = vpop.f32.mrb[0].mxu0
    %v10904 = vadd.f32 0.0, %v10903
    %v10905 = vpop.f32.mrb[0].mxu0
    %v10906 = vpop.f32.mrb[0].mxu0
    %v10907 = vadd.f32 0.0, %v10906
    %v10908 = vpop.f32.mrb[0].mxu0
    %10909 = vmatprep.mubr.bf16.mxu0 %v10478
    %10910 = vmatmul.mubr.bf16.gmra.mrb[0].mxu0 %v10477
    %v10911 = vpop.f32.mrb[0].mxu0
    %v10912 = vadd.f32 0.0, %v10911
    %v10913 = vpop.f32.mrb[0].mxu0
    %v10914 = vpop.f32.mrb[0].mxu0
    %v10915 = vadd.f32 0.0, %v10914
    %v10916 = vpop.f32.mrb[0].mxu0
    %10917 = vmatprep.mubr.bf16.mxu0 %v10480
    %10918 = vmatmul.mubr.bf16.gmra.mrb[0].mxu0 %v10479
    %v10919 = vpop.f32.mrb[0].mxu0
    %v10920 = vadd.f32 0.0, %v10919
    %v10921 = vpop.f32.mrb[0].mxu0
    %v10922 = vpop.f32.mrb[0].mxu0
    %v10923 = vadd.f32 0.0, %v10922
    %v10924 = vpop.f32.mrb[0].mxu0
    %10925 = vmatprep.mubr.bf16.mxu0 %v10482
    %10926 = vmatmul.mubr.bf16.gmra.mrb[0].mxu0 %v10481
    %v10927 = vpop.f32.mrb[0].mxu0
    %v10928 = vadd.f32 0.0, %v10927
    %v10929 = vpop.f32.mrb[0].mxu0
    %v10930 = vpop.f32.mrb[0].mxu0
    %v10931 = vadd.f32 0.0, %v10930
    %v10932 = vpop.f32.mrb[0].mxu0
    %10933 = vmatprep.mubr.bf16.mxu0 %v10484
    %10934 = vmatmul.mubr.bf16.gmra.mrb[0].mxu0 %v10483
    %v10935 = vpop.f32.mrb[0].mxu0
    %v10936 = vadd.f32 0.0, %v10935
    %v10937 = vpop.f32.mrb[0].mxu0
    %v10938 = vpop.f32.mrb[0].mxu0
    %v10939 = vadd.f32 0.0, %v10938
    %v10940 = vpop.f32.mrb[0].mxu0
    %10941 = vmatprep.mubr.bf16.mxu0 %v10486
    %10942 = vmatmul.mubr.bf16.gmra.mrb[0].mxu0 %v10485
    %v10943 = vpop.f32.mrb[0].mxu0
    %v10944 = vadd.f32 0.0, %v10943
    %v10945 = vpop.f32.mrb[0].mxu0
    %v10946 = vpop.f32.mrb[0].mxu0
    %v10947 = vadd.f32 0.0, %v10946
    %v10948 = vpop.f32.mrb[0].mxu0
    %10949 = vmatprep.mubr.bf16.mxu0 %v10488
    %10950 = vmatmul.mubr.bf16.gmra.mrb[0].mxu0 %v10487
    %v10951 = vpop.f32.mrb[0].mxu0
    %v10952 = vadd.f32 0.0, %v10951
    %v10953 = vpop.f32.mrb[0].mxu0
    %v10954 = vpop.f32.mrb[0].mxu0
    %v10955 = vadd.f32 0.0, %v10954
    %v10956 = vpop.f32.mrb[0].mxu0
    %10957 = vmatprep.mubr.bf16.mxu0 %v10490
    %10958 = vmatmul.mubr.bf16.gmra.mrb[0].mxu0 %v10489
    %v10959 = vpop.f32.mrb[0].mxu0
    %v10960 = vadd.f32 0.0, %v10959
    %v10961 = vpop.f32.mrb[0].mxu0
    %v10962 = vpop.f32.mrb[0].mxu0
    %v10963 = vadd.f32 0.0, %v10962
    %v10964 = vpop.f32.mrb[0].mxu0
    %10965 = vmatprep.mubr.bf16.mxu0 %v10492
    %10966 = vmatmul.mubr.bf16.gmra.mrb[0].mxu0 %v10491
    %v10967 = vpop.f32.mrb[0].mxu0
    %v10968 = vadd.f32 0.0, %v10967
    %v10969 = vpop.f32.mrb[0].mxu0
    %v10970 = vpop.f32.mrb[0].mxu0
    %v10971 = vadd.f32 0.0, %v10970
    %v10972 = vpop.f32.mrb[0].mxu0
    %10973 = vmatprep.mubr.bf16.mxu0 %v10494
    %10974 = vmatmul.mubr.bf16.gmra.mrb[0].mxu0 %v10493
    %v10975 = vpop.f32.mrb[0].mxu0
    %v10976 = vadd.f32 0.0, %v10975
    %v10977 = vpop.f32.mrb[0].mxu0
    %v10978 = vpop.f32.mrb[0].mxu0
    %v10979 = vadd.f32 0.0, %v10978
    %v10980 = vpop.f32.mrb[0].mxu0
    %10981 = vmatprep.mubr.bf16.mxu0 %v10496
    %10982 = vmatmul.mubr.bf16.gmra.mrb[0].mxu0 %v10495
    %v10983 = vpop.f32.mrb[0].mxu0
    %v10984 = vadd.f32 0.0, %v10983
    %v10985 = vpop.f32.mrb[0].mxu0
    %v10986 = vpop.f32.mrb[0].mxu0
    %v10987 = vadd.f32 0.0, %v10986
    %v10988 = vpop.f32.mrb[0].mxu0
    %10989 = vmatprep.mubr.bf16.mxu0 %v10498
    %10990 = vmatmul.mubr.bf16.gmra.mrb[0].mxu0 %v10497
    %v10991 = vpop.f32.mrb[0].mxu0
    %v10992 = vadd.f32 0.0, %v10991
    %v10993 = vpop.f32.mrb[0].mxu0
    %v10994 = vpop.f32.mrb[0].mxu0
    %v10995 = vadd.f32 0.0, %v10994
    %v10996 = vpop.f32.mrb[0].mxu0
    %10997 = vmatprep.mubr.bf16.mxu0 %v10500
    %10998 = vmatmul.mubr.bf16.gmra.mrb[0].mxu0 %v10499
    %v10999 = vpop.f32.mrb[0].mxu0
    %v11000 = vadd.f32 0.0, %v10999
    %v11001 = vpop.f32.mrb[0].mxu0
    %v11002 = vpop.f32.mrb[0].mxu0
    %v11003 = vadd.f32 0.0, %v11002
    %v11004 = vpop.f32.mrb[0].mxu0
    %11005 = vmatprep.mubr.bf16.mxu0 %v10502
    %11006 = vmatmul.mubr.bf16.gmra.mrb[0].mxu0 %v10501
    %v11007 = vpop.f32.mrb[0].mxu0
    %v11008 = vadd.f32 0.0, %v11007
    %v11009 = vpop.f32.mrb[0].mxu0
    %v11010 = vpop.f32.mrb[0].mxu0
    %v11011 = vadd.f32 0.0, %v11010
    %v11012 = vpop.f32.mrb[0].mxu0
    %11013 = vmatprep.mubr.bf16.mxu0 %v10504
    %11014 = vmatmul.mubr.bf16.gmra.mrb[0].mxu0 %v10503
    %v11015 = vpop.f32.mrb[0].mxu0
    %v11016 = vadd.f32 0.0, %v11015
    %v11017 = vpop.f32.mrb[0].mxu0
    %v11018 = vpop.f32.mrb[0].mxu0
    %v11019 = vadd.f32 0.0, %v11018
    %v11020 = vpop.f32.mrb[0].mxu0
    %11021 = vmatprep.mubr.bf16.mxu0 %v10506
    %11022 = vmatmul.mubr.bf16.gmra.mrb[0].mxu0 %v10505
    %v11023 = vpop.f32.mrb[0].mxu0
    %v11024 = vadd.f32 0.0, %v11023
    %v11025 = vpop.f32.mrb[0].mxu0
    %v11026 = vpop.f32.mrb[0].mxu0
    %v11027 = vadd.f32 0.0, %v11026
    %v11028 = vpop.f32.mrb[0].mxu0
    %11029 = vmatprep.mubr.bf16.mxu0 %v10508
    %11030 = vmatmul.mubr.bf16.gmra.mrb[0].mxu0 %v10507
    %v11031 = vpop.f32.mrb[0].mxu0
    %v11032 = vadd.f32 0.0, %v11031
    %v11033 = vpop.f32.mrb[0].mxu0
    %v11034 = vpop.f32.mrb[0].mxu0
    %v11035 = vadd.f32 0.0, %v11034
    %v11036 = vpop.f32.mrb[0].mxu0
    %11037 = vmatprep.mubr.bf16.mxu0 %v10510
    %11038 = vmatmul.mubr.bf16.gmra.mrb[0].mxu0 %v10509
    %v11039 = vpop.f32.mrb[0].mxu0
    %v11040 = vadd.f32 0.0, %v11039
    %v11041 = vpop.f32.mrb[0].mxu0
    %v11042 = vpop.f32.mrb[0].mxu0
    %v11043 = vadd.f32 0.0, %v11042
    %v11044 = vpop.f32.mrb[0].mxu0
    %11045 = vmatprep.mubr.bf16.mxu0 %v10512
    %11046 = vmatmul.mubr.bf16.gmra.mrb[0].mxu0 %v10511
    %v11047 = vpop.f32.mrb[0].mxu0
    %v11048 = vadd.f32 0.0, %v11047
    %v11049 = vpop.f32.mrb[0].mxu0
    %v11050 = vpop.f32.mrb[0].mxu0
    %v11051 = vadd.f32 0.0, %v11050
    %v11052 = vpop.f32.mrb[0].mxu0
    %11053 = vmatprep.mubr.bf16.mxu0 %v10514
    %11054 = vmatmul.mubr.bf16.gmra.mrb[0].mxu0 %v10513
    %v11055 = vpop.f32.mrb[0].mxu0
    %v11056 = vadd.f32 0.0, %v11055
    %v11057 = vpop.f32.mrb[0].mxu0
    %v11058 = vpop.f32.mrb[0].mxu0
    %v11059 = vadd.f32 0.0, %v11058
    %v11060 = vpop.f32.mrb[0].mxu0
    %11061 = vmatprep.mubr.bf16.mxu0 %v10516
    %11062 = vmatmul.mubr.bf16.gmra.mrb[0].mxu0 %v10515
    %v11063 = vpop.f32.mrb[0].mxu0
    %v11064 = vadd.f32 0.0, %v11063
    %v11065 = vpop.f32.mrb[0].mxu0
    %v11066 = vpop.f32.mrb[0].mxu0
    %v11067 = vadd.f32 0.0, %v11066
    %v11068 = vpop.f32.mrb[0].mxu0
    %11069 = vmatprep.mubr.bf16.mxu0 %v10518
    %11070 = vmatmul.mubr.bf16.gmra.mrb[0].mxu0 %v10517
    %v11071 = vpop.f32.mrb[0].mxu0
    %v11072 = vadd.f32 0.0, %v11071
    %v11073 = vpop.f32.mrb[0].mxu0
    %v11074 = vpop.f32.mrb[0].mxu0
    %v11075 = vadd.f32 0.0, %v11074
    %v11076 = vpop.f32.mrb[0].mxu0
    %11077 = vmatprep.mubr.bf16.mxu0 %v10520
    %11078 = vmatmul.mubr.bf16.gmra.mrb[0].mxu0 %v10519
    %v11079 = vpop.f32.mrb[0].mxu0
    %v11080 = vadd.f32 0.0, %v11079
    %v11081 = vpop.f32.mrb[0].mxu0
    %v11082 = vpop.f32.mrb[0].mxu0
    %v11083 = vadd.f32 0.0, %v11082
    %v11084 = vpop.f32.mrb[0].mxu0
    %11085 = vmatprep.mubr.bf16.mxu0 %v10522
    %11086 = vmatmul.mubr.bf16.gmra.mrb[0].mxu0 %v10521
    %v11087 = vpop.f32.mrb[0].mxu0
    %v11088 = vadd.f32 0.0, %v11087
    %v11089 = vpop.f32.mrb[0].mxu0
    %v11090 = vpop.f32.mrb[0].mxu0
    %v11091 = vadd.f32 0.0, %v11090
    %v11092 = vpop.f32.mrb[0].mxu0
    %11093 = vmatprep.mubr.bf16.mxu0 %v10524
    %11094 = vmatmul.mubr.bf16.gmra.mrb[0].mxu0 %v10523
    %v11095 = vpop.f32.mrb[0].mxu0
    %v11096 = vadd.f32 0.0, %v11095
    %v11097 = vpop.f32.mrb[0].mxu0
    %v11098 = vpop.f32.mrb[0].mxu0
    %v11099 = vadd.f32 0.0, %v11098
    %v11100 = vpop.f32.mrb[0].mxu0
    %11101 = vmatprep.mubr.bf16.mxu0 %v10526
    %11102 = vmatmul.mubr.bf16.gmra.mrb[0].mxu0 %v10525
    %v11103 = vpop.f32.mrb[0].mxu0
    %v11104 = vadd.f32 0.0, %v11103
    %v11105 = vpop.f32.mrb[0].mxu0
    %v11106 = vpop.f32.mrb[0].mxu0
    %v11107 = vadd.f32 0.0, %v11106
    %v11108 = vpop.f32.mrb[0].mxu0
    %11109 = vmatprep.mubr.bf16.mxu0 %v10528
    %11110 = vmatmul.mubr.bf16.gmra.mrb[0].mxu0 %v10527
    %v11111 = vpop.f32.mrb[0].mxu0
    %v11112 = vadd.f32 0.0, %v11111
    %v11113 = vpop.f32.mrb[0].mxu0
    %v11114 = vpop.f32.mrb[0].mxu0
    %v11115 = vadd.f32 0.0, %v11114
    %v11116 = vpop.f32.mrb[0].mxu0
    %11117 = vmatprep.mubr.bf16.mxu0 %v10530
    %11118 = vmatmul.mubr.bf16.gmra.mrb[0].mxu0 %v10529
    %v11119 = vpop.f32.mrb[0].mxu0
    %v11120 = vadd.f32 0.0, %v11119
    %v11121 = vpop.f32.mrb[0].mxu0
    %v11122 = vpop.f32.mrb[0].mxu0
    %v11123 = vadd.f32 0.0, %v11122
    %v11124 = vpop.f32.mrb[0].mxu0
    %11125 = vmatprep.mubr.bf16.mxu0 %v10532
    %11126 = vmatmul.mubr.bf16.gmra.mrb[0].mxu0 %v10531
    %v11127 = vpop.f32.mrb[0].mxu0
    %v11128 = vadd.f32 0.0, %v11127
    %v11129 = vpop.f32.mrb[0].mxu0
    %v11130 = vpop.f32.mrb[0].mxu0
    %v11131 = vadd.f32 0.0, %v11130
    %v11132 = vpop.f32.mrb[0].mxu0
    %11133 = vmatprep.mubr.bf16.mxu0 %v10534
    %11134 = vmatmul.mubr.bf16.gmra.mrb[0].mxu0 %v10533
    %v11135 = vpop.f32.mrb[0].mxu0
    %v11136 = vadd.f32 0.0, %v11135
    %v11137 = vpop.f32.mrb[0].mxu0
    %v11138 = vpop.f32.mrb[0].mxu0
    %v11139 = vadd.f32 0.0, %v11138
    %v11140 = vpop.f32.mrb[0].mxu0
    %11141 = vmatprep.mubr.bf16.mxu0 %v10536
    %11142 = vmatmul.mubr.bf16.gmra.mrb[0].mxu0 %v10535
    %v11143 = vpop.f32.mrb[0].mxu0
    %v11144 = vadd.f32 0.0, %v11143
    %v11145 = vpop.f32.mrb[0].mxu0
    %v11146 = vpop.f32.mrb[0].mxu0
    %v11147 = vadd.f32 0.0, %v11146
    %v11148 = vpop.f32.mrb[0].mxu0
    %11149 = vmatprep.mubr.bf16.mxu0 %v10538
    %11150 = vmatmul.mubr.bf16.gmra.mrb[0].mxu0 %v10537
    %v11151 = vpop.f32.mrb[0].mxu0
    %v11152 = vadd.f32 0.0, %v11151
    %v11153 = vpop.f32.mrb[0].mxu0
    %v11154 = vpop.f32.mrb[0].mxu0
    %v11155 = vadd.f32 0.0, %v11154
    %v11156 = vpop.f32.mrb[0].mxu0
    %11157 = vmatprep.mubr.bf16.mxu0 %v10540
    %11158 = vmatmul.mubr.bf16.gmra.mrb[0].mxu0 %v10539
    %v11159 = vpop.f32.mrb[0].mxu0
    %v11160 = vadd.f32 0.0, %v11159
    %v11161 = vpop.f32.mrb[0].mxu0
    %v11162 = vpop.f32.mrb[0].mxu0
    %v11163 = vadd.f32 0.0, %v11162
    %v11164 = vpop.f32.mrb[0].mxu0
    %11165 = vmatprep.mubr.bf16.mxu0 %v10542
    %11166 = vmatmul.mubr.bf16.gmra.mrb[0].mxu0 %v10541
    %v11167 = vpop.f32.mrb[0].mxu0
    %v11168 = vadd.f32 0.0, %v11167
    %v11169 = vpop.f32.mrb[0].mxu0
    %v11170 = vpop.f32.mrb[0].mxu0
    %v11171 = vadd.f32 0.0, %v11170
    %v11172 = vpop.f32.mrb[0].mxu0
    %11173 = vmatprep.mubr.bf16.mxu0 %v10544
    %11174 = vmatmul.mubr.bf16.gmra.mrb[0].mxu0 %v10543
    %v11175 = vpop.f32.mrb[0].mxu0
    %v11176 = vadd.f32 0.0, %v11175
    %v11177 = vpop.f32.mrb[0].mxu0
    %v11178 = vpop.f32.mrb[0].mxu0
    %v11179 = vadd.f32 0.0, %v11178
    %v11180 = vpop.f32.mrb[0].mxu0
    %11181 = vmatprep.mubr.bf16.mxu0 %v10546
    %11182 = vmatmul.mubr.bf16.gmra.mrb[0].mxu0 %v10545
    %v11183 = vpop.f32.mrb[0].mxu0
    %v11184 = vadd.f32 0.0, %v11183
    %v11185 = vpop.f32.mrb[0].mxu0
    %v11186 = vpop.f32.mrb[0].mxu0
    %v11187 = vadd.f32 0.0, %v11186
    %v11188 = vpop.f32.mrb[0].mxu0
    %11189 = vmatprep.mubr.bf16.mxu0 %v10548
    %11190 = vmatmul.mubr.bf16.gmra.mrb[0].mxu0 %v10547
    %v11191 = vpop.f32.mrb[0].mxu0
    %v11192 = vadd.f32 0.0, %v11191
    %v11193 = vpop.f32.mrb[0].mxu0
    %v11194 = vpop.f32.mrb[0].mxu0
    %v11195 = vadd.f32 0.0, %v11194
    %v11196 = vpop.f32.mrb[0].mxu0
    %11197 = vmatprep.mubr.bf16.mxu0 %v10550
    %11198 = vmatmul.mubr.bf16.gmra.mrb[0].mxu0 %v10549
    %v11199 = vpop.f32.mrb[0].mxu0
    %v11200 = vadd.f32 0.0, %v11199
    %v11201 = vpop.f32.mrb[0].mxu0
    %v11202 = vpop.f32.mrb[0].mxu0
    %v11203 = vadd.f32 0.0, %v11202
    %v11204 = vpop.f32.mrb[0].mxu0
    %11205 = vmatprep.mubr.bf16.mxu0 %v10552
    %11206 = vmatmul.mubr.bf16.gmra.mrb[0].mxu0 %v10551
    %v11207 = vpop.f32.mrb[0].mxu0
    %v11208 = vadd.f32 0.0, %v11207
    %v11209 = vpop.f32.mrb[0].mxu0
    %v11210 = vpop.f32.mrb[0].mxu0
    %v11211 = vadd.f32 0.0, %v11210
    %v11212 = vpop.f32.mrb[0].mxu0
    %11213 = vmatprep.mubr.bf16.mxu0 %v10554
    %11214 = vmatmul.mubr.bf16.gmra.mrb[0].mxu0 %v10553
    %v11215 = vpop.f32.mrb[0].mxu0
    %v11216 = vadd.f32 0.0, %v11215
    %v11217 = vpop.f32.mrb[0].mxu0
    %v11218 = vpop.f32.mrb[0].mxu0
    %v11219 = vadd.f32 0.0, %v11218
    %v11220 = vpop.f32.mrb[0].mxu0
    %11221 = vmatprep.mubr.bf16.mxu0 %v10556
    %11222 = vmatmul.mubr.bf16.gmra.mrb[0].mxu0 %v10555
    %v11223 = vpop.f32.mrb[0].mxu0
    %v11224 = vadd.f32 0.0, %v11223
    %v11225 = vpop.f32.mrb[0].mxu0
    %v11226 = vpop.f32.mrb[0].mxu0
    %v11227 = vadd.f32 0.0, %v11226
    %v11228 = vpop.f32.mrb[0].mxu0
    %11229 = vdwg.mxu0
    %v11230 = vld [vmem:[#allocation2] sm:$0x1]
    %v11232 = vlaneseq
    %v11233 = vshrl.u32 %v11232, 7
    %v11234 = vsub.s32 0, %v11233
    %v11235 = vrot.slane %v11230, %v11234
    %v11237 = vadd.f32 %v10720, %v11235
    %v11238 = vadd.f32 %v10723, %v11235
    %v11239 = vadd.f32 %v10728, %v11235
    %v11240 = vadd.f32 %v10731, %v11235
    %v11241 = vadd.f32 %v10736, %v11235
    %v11242 = vadd.f32 %v10739, %v11235
    %v11243 = vadd.f32 %v10744, %v11235
    %v11244 = vadd.f32 %v10747, %v11235
    %v11245 = vadd.f32 %v10752, %v11235
    %v11246 = vadd.f32 %v10755, %v11235
    %v11247 = vadd.f32 %v10760, %v11235
    %v11248 = vadd.f32 %v10763, %v11235
    %v11249 = vadd.f32 %v10768, %v11235
    %v11250 = vadd.f32 %v10771, %v11235
    %v11251 = vadd.f32 %v10776, %v11235
    %v11252 = vadd.f32 %v10779, %v11235
    %v11253 = vadd.f32 %v10784, %v11235
    %v11254 = vadd.f32 %v10787, %v11235
    %v11255 = vadd.f32 %v10792, %v11235
    %v11256 = vadd.f32 %v10795, %v11235
    %v11257 = vadd.f32 %v10800, %v11235
    %v11258 = vadd.f32 %v10803, %v11235
    %v11259 = vadd.f32 %v10808, %v11235
    %v11260 = vadd.f32 %v10811, %v11235
    %v11261 = vadd.f32 %v10816, %v11235
    %v11262 = vadd.f32 %v10819, %v11235
    %v11263 = vadd.f32 %v10824, %v11235
    %v11264 = vadd.f32 %v10827, %v11235
    %v11265 = vadd.f32 %v10832, %v11235
    %v11266 = vadd.f32 %v10835, %v11235
    %v11267 = vadd.f32 %v10840, %v11235
    %v11268 = vadd.f32 %v10843, %v11235
    %v11269 = vadd.f32 %v10848, %v11235
    %v11270 = vadd.f32 %v10851, %v11235
    %v11271 = vadd.f32 %v10856, %v11235
    %v11272 = vadd.f32 %v10859, %v11235
    %v11273 = vadd.f32 %v10864, %v11235
    %v11274 = vadd.f32 %v10867, %v11235
    %v11275 = vadd.f32 %v10872, %v11235
    %v11276 = vadd.f32 %v10875, %v11235
    %v11277 = vadd.f32 %v10880, %v11235
    %v11278 = vadd.f32 %v10883, %v11235
    %v11279 = vadd.f32 %v10888, %v11235
    %v11280 = vadd.f32 %v10891, %v11235
    %v11281 = vadd.f32 %v10896, %v11235
    %v11282 = vadd.f32 %v10899, %v11235
    %v11283 = vadd.f32 %v10904, %v11235
    %v11284 = vadd.f32 %v10907, %v11235
    %v11285 = vadd.f32 %v10912, %v11235
    %v11286 = vadd.f32 %v10915, %v11235
    %v11287 = vadd.f32 %v10920, %v11235
    %v11288 = vadd.f32 %v10923, %v11235
    %v11289 = vadd.f32 %v10928, %v11235
    %v11290 = vadd.f32 %v10931, %v11235
    %v11291 = vadd.f32 %v10936, %v11235
    %v11292 = vadd.f32 %v10939, %v11235
    %v11293 = vadd.f32 %v10944, %v11235
    %v11294 = vadd.f32 %v10947, %v11235
    %v11295 = vadd.f32 %v10952, %v11235
    %v11296 = vadd.f32 %v10955, %v11235
    %v11297 = vadd.f32 %v10960, %v11235
    %v11298 = vadd.f32 %v10963, %v11235
    %v11299 = vadd.f32 %v10968, %v11235
    %v11300 = vadd.f32 %v10971, %v11235
    %v11301 = vadd.f32 %v10976, %v11235
    %v11302 = vadd.f32 %v10979, %v11235
    %v11303 = vadd.f32 %v10984, %v11235
    %v11304 = vadd.f32 %v10987, %v11235
    %v11305 = vadd.f32 %v10992, %v11235
    %v11306 = vadd.f32 %v10995, %v11235
    %v11307 = vadd.f32 %v11000, %v11235
    %v11308 = vadd.f32 %v11003, %v11235
    %v11309 = vadd.f32 %v11008, %v11235
    %v11310 = vadd.f32 %v11011, %v11235
    %v11311 = vadd.f32 %v11016, %v11235
    %v11312 = vadd.f32 %v11019, %v11235
    %v11313 = vadd.f32 %v11024, %v11235
    %v11314 = vadd.f32 %v11027, %v11235
    %v11315 = vadd.f32 %v11032, %v11235
    %v11316 = vadd.f32 %v11035, %v11235
    %v11317 = vadd.f32 %v11040, %v11235
    %v11318 = vadd.f32 %v11043, %v11235
    %v11319 = vadd.f32 %v11048, %v11235
    %v11320 = vadd.f32 %v11051, %v11235
    %v11321 = vadd.f32 %v11056, %v11235
    %v11322 = vadd.f32 %v11059, %v11235
    %v11323 = vadd.f32 %v11064, %v11235
    %v11324 = vadd.f32 %v11067, %v11235
    %v11325 = vadd.f32 %v11072, %v11235
    %v11326 = vadd.f32 %v11075, %v11235
    %v11327 = vadd.f32 %v11080, %v11235
    %v11328 = vadd.f32 %v11083, %v11235
    %v11329 = vadd.f32 %v11088, %v11235
    %v11330 = vadd.f32 %v11091, %v11235
    %v11331 = vadd.f32 %v11096, %v11235
    %v11332 = vadd.f32 %v11099, %v11235
    %v11333 = vadd.f32 %v11104, %v11235
    %v11334 = vadd.f32 %v11107, %v11235
    %v11335 = vadd.f32 %v11112, %v11235
    %v11336 = vadd.f32 %v11115, %v11235
    %v11337 = vadd.f32 %v11120, %v11235
    %v11338 = vadd.f32 %v11123, %v11235
    %v11339 = vadd.f32 %v11128, %v11235
    %v11340 = vadd.f32 %v11131, %v11235
    %v11341 = vadd.f32 %v11136, %v11235
    %v11342 = vadd.f32 %v11139, %v11235
    %v11343 = vadd.f32 %v11144, %v11235
    %v11344 = vadd.f32 %v11147, %v11235
    %v11345 = vadd.f32 %v11152, %v11235
    %v11346 = vadd.f32 %v11155, %v11235
    %v11347 = vadd.f32 %v11160, %v11235
    %v11348 = vadd.f32 %v11163, %v11235
    %v11349 = vadd.f32 %v11168, %v11235
    %v11350 = vadd.f32 %v11171, %v11235
    %v11351 = vadd.f32 %v11176, %v11235
    %v11352 = vadd.f32 %v11179, %v11235
    %v11353 = vadd.f32 %v11184, %v11235
    %v11354 = vadd.f32 %v11187, %v11235
    %v11355 = vadd.f32 %v11192, %v11235
    %v11356 = vadd.f32 %v11195, %v11235
    %v11357 = vadd.f32 %v11200, %v11235
    %v11358 = vadd.f32 %v11203, %v11235
    %v11359 = vadd.f32 %v11208, %v11235
    %v11360 = vadd.f32 %v11211, %v11235
    %v11361 = vadd.f32 %v11216, %v11235
    %v11362 = vadd.f32 %v11219, %v11235
    %v11363 = vadd.f32 %v11224, %v11235
    %v11364 = vadd.f32 %v11227, %v11235
    %vm11365 = vcmask 7168
    %11366 = vst.msk [vmem:[%s7] sm:$0xff] %vm11365, %v11237
    %11367 = vst.msk [vmem:[%s7 + $0x8] sm:$0xff] %vm11365, %v11238
    %11368 = vst.msk [vmem:[%s7 + $0x10] sm:$0xff] %vm11365, %v11239
    %11369 = vst.msk [vmem:[%s7 + $0x18] sm:$0xff] %vm11365, %v11240
    %11370 = vst.msk [vmem:[%s7 + $0x20] sm:$0xff] %vm11365, %v11241
    %11371 = vst.msk [vmem:[%s7 + $0x28] sm:$0xff] %vm11365, %v11242
    %11372 = vst.msk [vmem:[%s7 + $0x30] sm:$0xff] %vm11365, %v11243
    %11373 = vst.msk [vmem:[%s7 + $0x38] sm:$0xff] %vm11365, %v11244
    %11374 = vst.msk [vmem:[%s7 + $0x40] sm:$0xff] %vm11365, %v11245
    %11375 = vst.msk [vmem:[%s7 + $0x48] sm:$0xff] %vm11365, %v11246
    %11376 = vst.msk [vmem:[%s7 + $0x50] sm:$0xff] %vm11365, %v11247
    %11377 = vst.msk [vmem:[%s7 + $0x58] sm:$0xff] %vm11365, %v11248
    %11378 = vst.msk [vmem:[%s7 + $0x60] sm:$0xff] %vm11365, %v11249
    %11379 = vst.msk [vmem:[%s7 + $0x68] sm:$0xff] %vm11365, %v11250
    %11380 = vst.msk [vmem:[%s7 + $0x70] sm:$0xff] %vm11365, %v11251
    %11381 = vst.msk [vmem:[%s7 + $0x78] sm:$0xff] %vm11365, %v11252
    %11382 = vst.msk [vmem:[%s7 + $0x80] sm:$0xff] %vm11365, %v11253
    %11383 = vst.msk [vmem:[%s7 + $0x88] sm:$0xff] %vm11365, %v11254
    %11384 = vst.msk [vmem:[%s7 + $0x90] sm:$0xff] %vm11365, %v11255
    %11385 = vst.msk [vmem:[%s7 + $0x98] sm:$0xff] %vm11365, %v11256
    %11386 = vst.msk [vmem:[%s7 + $0xa0] sm:$0xff] %vm11365, %v11257
    %11387 = vst.msk [vmem:[%s7 + $0xa8] sm:$0xff] %vm11365, %v11258
    %11388 = vst.msk [vmem:[%s7 + $0xb0] sm:$0xff] %vm11365, %v11259
    %11389 = vst.msk [vmem:[%s7 + $0xb8] sm:$0xff] %vm11365, %v11260
    %11390 = vst.msk [vmem:[%s7 + $0xc0] sm:$0xff] %vm11365, %v11261
    %11391 = vst.msk [vmem:[%s7 + $0xc8] sm:$0xff] %vm11365, %v11262
    %11392 = vst.msk [vmem:[%s7 + $0xd0] sm:$0xff] %vm11365, %v11263
    %11393 = vst.msk [vmem:[%s7 + $0xd8] sm:$0xff] %vm11365, %v11264
    %11394 = vst.msk [vmem:[%s7 + $0xe0] sm:$0xff] %vm11365, %v11265
    %11395 = vst.msk [vmem:[%s7 + $0xe8] sm:$0xff] %vm11365, %v11266
    %11396 = vst.msk [vmem:[%s7 + $0xf0] sm:$0xff] %vm11365, %v11267
    %11397 = vst.msk [vmem:[%s7 + $0xf8] sm:$0xff] %vm11365, %v11268
    %11398 = vst.msk [vmem:[%s7 + $0x100] sm:$0xff] %vm11365, %v11269
    %11399 = vst.msk [vmem:[%s7 + $0x108] sm:$0xff] %vm11365, %v11270
    %11400 = vst.msk [vmem:[%s7 + $0x110] sm:$0xff] %vm11365, %v11271
    %11401 = vst.msk [vmem:[%s7 + $0x118] sm:$0xff] %vm11365, %v11272
    %11402 = vst.msk [vmem:[%s7 + $0x120] sm:$0xff] %vm11365, %v11273
    %11403 = vst.msk [vmem:[%s7 + $0x128] sm:$0xff] %vm11365, %v11274
    %11404 = vst.msk [vmem:[%s7 + $0x130] sm:$0xff] %vm11365, %v11275
    %11405 = vst.msk [vmem:[%s7 + $0x138] sm:$0xff] %vm11365, %v11276
    %11406 = vst.msk [vmem:[%s7 + $0x140] sm:$0xff] %vm11365, %v11277
    %11407 = vst.msk [vmem:[%s7 + $0x148] sm:$0xff] %vm11365, %v11278
    %11408 = vst.msk [vmem:[%s7 + $0x150] sm:$0xff] %vm11365, %v11279
    %11409 = vst.msk [vmem:[%s7 + $0x158] sm:$0xff] %vm11365, %v11280
    %11410 = vst.msk [vmem:[%s7 + $0x160] sm:$0xff] %vm11365, %v11281
    %11411 = vst.msk [vmem:[%s7 + $0x168] sm:$0xff] %vm11365, %v11282
    %11412 = vst.msk [vmem:[%s7 + $0x170] sm:$0xff] %vm11365, %v11283
    %11413 = vst.msk [vmem:[%s7 + $0x178] sm:$0xff] %vm11365, %v11284
    %11414 = vst.msk [vmem:[%s7 + $0x180] sm:$0xff] %vm11365, %v11285
    %11415 = vst.msk [vmem:[%s7 + $0x188] sm:$0xff] %vm11365, %v11286
    %11416 = vst.msk [vmem:[%s7 + $0x190] sm:$0xff] %vm11365, %v11287
    %11417 = vst.msk [vmem:[%s7 + $0x198] sm:$0xff] %vm11365, %v11288
    %11418 = vst.msk [vmem:[%s7 + $0x1a0] sm:$0xff] %vm11365, %v11289
    %11419 = vst.msk [vmem:[%s7 + $0x1a8] sm:$0xff] %vm11365, %v11290
    %11420 = vst.msk [vmem:[%s7 + $0x1b0] sm:$0xff] %vm11365, %v11291
    %11421 = vst.msk [vmem:[%s7 + $0x1b8] sm:$0xff] %vm11365, %v11292
    %11422 = vst.msk [vmem:[%s7 + $0x1c0] sm:$0xff] %vm11365, %v11293
    %11423 = vst.msk [vmem:[%s7 + $0x1c8] sm:$0xff] %vm11365, %v11294
    %11424 = vst.msk [vmem:[%s7 + $0x1d0] sm:$0xff] %vm11365, %v11295
    %11425 = vst.msk [vmem:[%s7 + $0x1d8] sm:$0xff] %vm11365, %v11296
    %11426 = vst.msk [vmem:[%s7 + $0x1e0] sm:$0xff] %vm11365, %v11297
    %11427 = vst.msk [vmem:[%s7 + $0x1e8] sm:$0xff] %vm11365, %v11298
    %11428 = vst.msk [vmem:[%s7 + $0x1f0] sm:$0xff] %vm11365, %v11299
    %11429 = vst.msk [vmem:[%s7 + $0x1f8] sm:$0xff] %vm11365, %v11300
    %11430 = vst.msk [vmem:[%s7 + $0x200] sm:$0xff] %vm11365, %v11301
    %11431 = vst.msk [vmem:[%s7 + $0x208] sm:$0xff] %vm11365, %v11302
    %11432 = vst.msk [vmem:[%s7 + $0x210] sm:$0xff] %vm11365, %v11303
    %11433 = vst.msk [vmem:[%s7 + $0x218] sm:$0xff] %vm11365, %v11304
    %11434 = vst.msk [vmem:[%s7 + $0x220] sm:$0xff] %vm11365, %v11305
    %11435 = vst.msk [vmem:[%s7 + $0x228] sm:$0xff] %vm11365, %v11306
    %11436 = vst.msk [vmem:[%s7 + $0x230] sm:$0xff] %vm11365, %v11307
    %11437 = vst.msk [vmem:[%s7 + $0x238] sm:$0xff] %vm11365, %v11308
    %11438 = vst.msk [vmem:[%s7 + $0x240] sm:$0xff] %vm11365, %v11309
    %11439 = vst.msk [vmem:[%s7 + $0x248] sm:$0xff] %vm11365, %v11310
    %11440 = vst.msk [vmem:[%s7 + $0x250] sm:$0xff] %vm11365, %v11311
    %11441 = vst.msk [vmem:[%s7 + $0x258] sm:$0xff] %vm11365, %v11312
    %11442 = vst.msk [vmem:[%s7 + $0x260] sm:$0xff] %vm11365, %v11313
    %11443 = vst.msk [vmem:[%s7 + $0x268] sm:$0xff] %vm11365, %v11314
    %11444 = vst.msk [vmem:[%s7 + $0x270] sm:$0xff] %vm11365, %v11315
    %11445 = vst.msk [vmem:[%s7 + $0x278] sm:$0xff] %vm11365, %v11316
    %11446 = vst.msk [vmem:[%s7 + $0x280] sm:$0xff] %vm11365, %v11317
    %11447 = vst.msk [vmem:[%s7 + $0x288] sm:$0xff] %vm11365, %v11318
    %11448 = vst.msk [vmem:[%s7 + $0x290] sm:$0xff] %vm11365, %v11319
    %11449 = vst.msk [vmem:[%s7 + $0x298] sm:$0xff] %vm11365, %v11320
    %11450 = vst.msk [vmem:[%s7 + $0x2a0] sm:$0xff] %vm11365, %v11321
    %11451 = vst.msk [vmem:[%s7 + $0x2a8] sm:$0xff] %vm11365, %v11322
    %11452 = vst.msk [vmem:[%s7 + $0x2b0] sm:$0xff] %vm11365, %v11323
    %11453 = vst.msk [vmem:[%s7 + $0x2b8] sm:$0xff] %vm11365, %v11324
    %11454 = vst.msk [vmem:[%s7 + $0x2c0] sm:$0xff] %vm11365, %v11325
    %11455 = vst.msk [vmem:[%s7 + $0x2c8] sm:$0xff] %vm11365, %v11326
    %11456 = vst.msk [vmem:[%s7 + $0x2d0] sm:$0xff] %vm11365, %v11327
    %11457 = vst.msk [vmem:[%s7 + $0x2d8] sm:$0xff] %vm11365, %v11328
    %11458 = vst.msk [vmem:[%s7 + $0x2e0] sm:$0xff] %vm11365, %v11329
    %11459 = vst.msk [vmem:[%s7 + $0x2e8] sm:$0xff] %vm11365, %v11330
    %11460 = vst.msk [vmem:[%s7 + $0x2f0] sm:$0xff] %vm11365, %v11331
    %11461 = vst.msk [vmem:[%s7 + $0x2f8] sm:$0xff] %vm11365, %v11332
    %11462 = vst.msk [vmem:[%s7 + $0x300] sm:$0xff] %vm11365, %v11333
    %11463 = vst.msk [vmem:[%s7 + $0x308] sm:$0xff] %vm11365, %v11334
    %11464 = vst.msk [vmem:[%s7 + $0x310] sm:$0xff] %vm11365, %v11335
    %11465 = vst.msk [vmem:[%s7 + $0x318] sm:$0xff] %vm11365, %v11336
    %11466 = vst.msk [vmem:[%s7 + $0x320] sm:$0xff] %vm11365, %v11337
    %11467 = vst.msk [vmem:[%s7 + $0x328] sm:$0xff] %vm11365, %v11338
    %11468 = vst.msk [vmem:[%s7 + $0x330] sm:$0xff] %vm11365, %v11339
    %11469 = vst.msk [vmem:[%s7 + $0x338] sm:$0xff] %vm11365, %v11340
    %11470 = vst.msk [vmem:[%s7 + $0x340] sm:$0xff] %vm11365, %v11341
    %11471 = vst.msk [vmem:[%s7 + $0x348] sm:$0xff] %vm11365, %v11342
    %11472 = vst.msk [vmem:[%s7 + $0x350] sm:$0xff] %vm11365, %v11343
    %11473 = vst.msk [vmem:[%s7 + $0x358] sm:$0xff] %vm11365, %v11344
    %11474 = vst.msk [vmem:[%s7 + $0x360] sm:$0xff] %vm11365, %v11345
    %11475 = vst.msk [vmem:[%s7 + $0x368] sm:$0xff] %vm11365, %v11346
    %11476 = vst.msk [vmem:[%s7 + $0x370] sm:$0xff] %vm11365, %v11347
    %11477 = vst.msk [vmem:[%s7 + $0x378] sm:$0xff] %vm11365, %v11348
    %11478 = vst.msk [vmem:[%s7 + $0x380] sm:$0xff] %vm11365, %v11349
    %11479 = vst.msk [vmem:[%s7 + $0x388] sm:$0xff] %vm11365, %v11350
    %11480 = vst.msk [vmem:[%s7 + $0x390] sm:$0xff] %vm11365, %v11351
    %11481 = vst.msk [vmem:[%s7 + $0x398] sm:$0xff] %vm11365, %v11352
    %11482 = vst.msk [vmem:[%s7 + $0x3a0] sm:$0xff] %vm11365, %v11353
    %11483 = vst.msk [vmem:[%s7 + $0x3a8] sm:$0xff] %vm11365, %v11354
    %11484 = vst.msk [vmem:[%s7 + $0x3b0] sm:$0xff] %vm11365, %v11355
    %11485 = vst.msk [vmem:[%s7 + $0x3b8] sm:$0xff] %vm11365, %v11356
    %11486 = vst.msk [vmem:[%s7 + $0x3c0] sm:$0xff] %vm11365, %v11357
    %11487 = vst.msk [vmem:[%s7 + $0x3c8] sm:$0xff] %vm11365, %v11358
    %11488 = vst.msk [vmem:[%s7 + $0x3d0] sm:$0xff] %vm11365, %v11359
    %11489 = vst.msk [vmem:[%s7 + $0x3d8] sm:$0xff] %vm11365, %v11360
    %11490 = vst.msk [vmem:[%s7 + $0x3e0] sm:$0xff] %vm11365, %v11361
    %11491 = vst.msk [vmem:[%s7 + $0x3e8] sm:$0xff] %vm11365, %v11362
    %11492 = vst.msk [vmem:[%s7 + $0x3f0] sm:$0xff] %vm11365, %v11363
    %11493 = vst.msk [vmem:[%s7 + $0x3f8] sm:$0xff] %vm11365, %v11364
    // Predicated region
    $region34: #{tpu_custom_call.1} parent=1 // pred_check
      _
    $region35: #{tpu_custom_call.1} parent=1 // pred_check_branch
      %11495 = sbr.rel (0) target = $region37
    $region36: #{tpu_custom_call.1} parent=1 // pred_region
      _
    $region37: #{tpu_custom_call.1} parent=1 // pred_fallthru
      _
    // Predicated region
    $region38: #{tpu_custom_call.1} parent=1 // pred_check
      _
    $region39: #{tpu_custom_call.1} parent=1 // pred_check_branch
      %11497 = sbr.rel (0) target = $region41
    $region40: #{tpu_custom_call.1} parent=1 // pred_region
      _
    $region41: #{tpu_custom_call.1} parent=1 // pred_fallthru
      _
    %11498 = vsyncpa [#allocation4], 1

</llo_original>
